<compile_context>
chip_gen: v6e
topology: v6e:2x2x1
jax: 0.10.0
libtpu: 0.0.40
codegen_flags: <defaults>
</compile_context>

<pallas_src>
import jax
import jax.numpy as jnp
from jax.experimental import pallas as pl
from jax.experimental.pallas import tpu as pltpu


# ----------------------------------------------------------------------------
# Pallas kernel 1: fused conv-as-matmul
#   out = LeakyReLU_0.2( (X @ W) * scale + bias )   (epilogue math in f32)
#   X: [tm, K] bf16 (im2col patches), W: [K, Cout] bf16, scale/bias: [1,Cout] f32
# ----------------------------------------------------------------------------
def _conv_matmul_kernel(x_ref, w_ref, s_ref, b_ref, o_ref):
    acc = jnp.dot(x_ref[...], w_ref[...], preferred_element_type=jnp.float32)
    y = acc * s_ref[...] + b_ref[...]          # folded eval-mode BatchNorm
    y = jnp.where(y > 0, y, 0.2 * y)           # LeakyReLU(0.2)
    o_ref[...] = y.astype(o_ref.dtype)


def _pick_tm(M, K, N, budget_bytes=8 << 20):
    """Largest tile dividing M (kept a multiple of 8) whose double-buffered
    bf16 patch + output tiles stay within the VMEM budget."""
    def tile_bytes(t):
        return 2 * 2 * t * (K + N)             # 2x double-buffer, bf16 in + out
    tm = M
    while tm % 16 == 0 and tile_bytes(tm) > budget_bytes:
        tm //= 2
    return tm


def conv_matmul(patches, w, scale, bias):
    """patches: [M, K] bf16, w: [K, Cout] bf16, scale/bias: [1,Cout] f32 -> [M,Cout] bf16."""
    M, K = patches.shape
    Kw, N = w.shape
    assert K == Kw, (K, Kw)
    tm = _pick_tm(M, K, N)
    assert M % tm == 0, (M, tm)

    return pl.pallas_call(
        _conv_matmul_kernel,
        out_shape=jax.ShapeDtypeStruct((M, N), jnp.bfloat16),
        grid_spec=pltpu.PrefetchScalarGridSpec(
            num_scalar_prefetch=0,
            grid=(M // tm,),
            in_specs=[
                pl.BlockSpec((tm, K), lambda i: (i, 0)),   # patch tile (real K)
                pl.BlockSpec((K, N), lambda i: (0, 0)),    # full weight (bf16)
                pl.BlockSpec((1, N), lambda i: (0, 0)),    # per-channel scale
                pl.BlockSpec((1, N), lambda i: (0, 0)),    # per-channel bias
            ],
            out_specs=pl.BlockSpec((tm, N), lambda i: (i, 0)),
        ),
        compiler_params=pltpu.CompilerParams(
            dimension_semantics=("parallel",),
            vmem_limit_bytes=32 << 20,
        ),
    )(patches, w, scale, bias)


# ----------------------------------------------------------------------------
# Pallas kernel 2: fused heads (disc Linear+Sigmoid and 3-layer classifier MLP)
# Intermediates stay in VMEM/vregs; disc head is a VPU row-dot (no padded
# weight matmul); sigmoid uses the EUP approx reciprocal (no +-30 clip).
# ----------------------------------------------------------------------------
def _heads_kernel(x_ref, wd_ref, bd_ref, w1_ref, b1_ref, w2_ref, b2_ref,
                  w3_ref, b3_ref, dis_ref, cla_ref):
    x = x_ref[...]                                           # [B, F] bf16

    # disc head: single-column Linear on the VPU/XLU + logistic on the EUP
    d = jnp.sum(x.astype(jnp.float32) * wd_ref[...], axis=-1, keepdims=True)
    d = d + bd_ref[...]
    p = pl.reciprocal(1.0 + jnp.exp(-d), approx=True)
    dis_ref[...] = jnp.clip(p, 0.0, 1.0)   # sigmoid range guard vs approx recip

    # classifier: Linear -> LReLU -> Linear -> LReLU -> Linear (f32 accum)
    h = jnp.dot(x, w1_ref[...], preferred_element_type=jnp.float32) + b1_ref[...]
    h = jnp.where(h > 0, h, 0.2 * h).astype(jnp.bfloat16)
    h = jnp.dot(h, w2_ref[...], preferred_element_type=jnp.float32) + b2_ref[...]
    h = jnp.where(h > 0, h, 0.2 * h).astype(jnp.bfloat16)
    cla_ref[...] = jnp.dot(h, w3_ref[...], preferred_element_type=jnp.float32) + b3_ref[...]


def heads_forward(flat, pp):
    B, F = flat.shape
    H1 = pp["wc1"].shape[1]
    H2 = pp["wc2"].shape[1]
    NC = pp["wc3"].shape[1]

    def full(shape):
        return pl.BlockSpec(shape, lambda i, n=len(shape): (0,) * n)

    dis, cla = pl.pallas_call(
        _heads_kernel,
        out_shape=(
            jax.ShapeDtypeStruct((B, 1), jnp.float32),     # disc probability
            jax.ShapeDtypeStruct((B, NC), jnp.float32),    # class logits
        ),
        grid_spec=pltpu.PrefetchScalarGridSpec(
            num_scalar_prefetch=0,
            grid=(1,),
            in_specs=[
                full((B, F)),
                full((1, F)), full((1, 1)),      # wd (row vector), bd
                full((F, H1)), full((1, H1)),    # wc1, bc1
                full((H1, H2)), full((1, H2)),   # wc2, bc2
                full((H2, NC)), full((1, NC)),   # wc3, bc3 (real n_class cols)
            ],
            out_specs=(full((B, 1)), full((B, NC))),
        ),
        compiler_params=pltpu.CompilerParams(
            dimension_semantics=("arbitrary",),
            vmem_limit_bytes=32 << 20,
        ),
    )(flat, pp["wd"], pp["bd"], pp["wc1"], pp["bc1"],
      pp["wc2"], pp["bc2"], pp["wc3"], pp["bc3"])
    return dis, cla


# ----------------------------------------------------------------------------
# im2col on NHWC (k=4, s=2, p=1) -- plain-JAX strided slices on REAL channels.
# TODO(synk): stride-2 patch gather is not expressible via BlockSpec index_map;
#             kept as XLA data-movement glue between pallas_calls.
# ----------------------------------------------------------------------------
def _im2col_nhwc(x):
    B, H, W, C = x.shape
    Ho, Wo = H // 2, W // 2
    xp = jnp.pad(x, ((0, 0), (1, 1), (1, 1), (0, 0)))
    taps = []
    for kh in range(4):
        for kw in range(4):
            taps.append(xp[:, kh:kh + 2 * Ho:2, kw:kw + 2 * Wo:2, :])
    p = jnp.stack(taps, axis=3)                     # [B, Ho, Wo, 16, C]
    return p.reshape(B * Ho * Wo, 16 * C), Ho, Wo


def conv_block(x_nhwc, w_kn, scale, bias):
    """Conv2d(4,2,1,bias=False) + folded BN + LeakyReLU; NHWC in, NHWC out (real channels)."""
    B = x_nhwc.shape[0]
    patches, Ho, Wo = _im2col_nhwc(x_nhwc)
    cout = w_kn.shape[1]
    y = conv_matmul(patches, w_kn, scale, bias)     # [B*Ho*Wo, cout] bf16
    return y.reshape(B, Ho, Wo, cout)


# ----------------------------------------------------------------------------
# Raw (PyTorch-layout) parameter construction -- deterministic, synthetic.
# ----------------------------------------------------------------------------
def init_params(key, nc, ndf, n_class):
    ks = iter(jax.random.split(key, 32))

    def conv_w(cout, cin):
        return jax.random.normal(next(ks), (cout, cin, 4, 4), jnp.float32) * 0.05

    def linear(fin, fout):
        w = jax.random.normal(next(ks), (fin, fout), jnp.float32) / jnp.sqrt(float(fin))
        b = jax.random.normal(next(ks), (fout,), jnp.float32) * 0.01
        return w, b

    def bn(c):
        gamma = 1.0 + 0.1 * jax.random.normal(next(ks), (c,), jnp.float32)
        beta = 0.1 * jax.random.normal(next(ks), (c,), jnp.float32)
        mean = 0.1 * jax.random.normal(next(ks), (c,), jnp.float32)
        var = 1.0 + 0.1 * jax.random.uniform(next(ks), (c,), jnp.float32)
        scale = gamma / jnp.sqrt(var + 1e-5)        # folded eval-mode BN
        bias = beta - mean * scale
        return scale, bias

    p = {}
    p["w1"] = conv_w(ndf, nc)
    p["s1"], p["b1"] = jnp.ones((ndf,), jnp.float32), jnp.zeros((ndf,), jnp.float32)
    p["w2"] = conv_w(ndf * 2, ndf)
    p["s2"], p["b2"] = bn(ndf * 2)
    p["w3"] = conv_w(ndf * 4, ndf * 2)
    p["s3"], p["b3"] = bn(ndf * 4)
    p["w4"] = conv_w(ndf * 8, ndf * 4)
    p["s4"], p["b4"] = bn(ndf * 8)

    feat = ndf * 8 * 4 * 4
    p["wd"], p["bd"] = linear(feat, 1)
    p["wc1"], p["bc1"] = linear(feat, 1024)
    p["wc2"], p["bc2"] = linear(1024, 512)
    p["wc3"], p["bc3"] = linear(512, n_class)
    return p


# ----------------------------------------------------------------------------
# One-time parameter prep: im2col weight layout (kh,kw,cin ordering, REAL
# channels -- no K padding), BN folding done, bf16 casts, head-weight row
# permutation from the NCHW-flatten order to our NHWC-flatten order.
# ----------------------------------------------------------------------------
def prepare_params(raw, ndf, n_class):
    def conv_w(w_oihw):
        cout, cin, kh, kw = w_oihw.shape
        w = jnp.transpose(w_oihw, (2, 3, 1, 0))              # (kh, kw, cin, cout)
        return w.reshape(kh * kw * cin, cout).astype(jnp.bfloat16)

    def sb(scale, bias):
        return (scale.reshape(1, -1).astype(jnp.float32),
                bias.reshape(1, -1).astype(jnp.float32))

    def head_perm(w, c_real):
        # rows are PyTorch NCHW-flatten order (c, h, w); reorder to NHWC (h, w, c)
        F, N = w.shape
        return w.reshape(c_real, 4, 4, N).transpose(1, 2, 0, 3).reshape(F, N)

    c4 = ndf * 8
    pp = {}
    pp["w1"] = conv_w(raw["w1"])
    pp["s1"], pp["b1"] = sb(raw["s1"], raw["b1"])
    pp["w2"] = conv_w(raw["w2"])
    pp["s2"], pp["b2"] = sb(raw["s2"], raw["b2"])
    pp["w3"] = conv_w(raw["w3"])
    pp["s3"], pp["b3"] = sb(raw["s3"], raw["b3"])
    pp["w4"] = conv_w(raw["w4"])
    pp["s4"], pp["b4"] = sb(raw["s4"], raw["b4"])

    # disc head as a f32 row vector (VPU row-dot in the heads kernel)
    pp["wd"] = head_perm(raw["wd"], c4).T.astype(jnp.float32)      # [1, F]
    pp["bd"] = raw["bd"].reshape(1, 1).astype(jnp.float32)
    # classifier weights (bf16) + f32 bias rows
    pp["wc1"] = head_perm(raw["wc1"], c4).astype(jnp.bfloat16)     # [F, 1024]
    pp["bc1"] = raw["bc1"].reshape(1, -1).astype(jnp.float32)
    pp["wc2"] = raw["wc2"].astype(jnp.bfloat16)                    # [1024, 512]
    pp["bc2"] = raw["bc2"].reshape(1, -1).astype(jnp.float32)
    pp["wc3"] = raw["wc3"].astype(jnp.bfloat16)                    # [512, n_class]
    pp["bc3"] = raw["bc3"].reshape(1, -1).astype(jnp.float32)
    return pp


# ----------------------------------------------------------------------------
# Forward pass (matches Discriminator.forward, eval/inference-mode BN)
# ----------------------------------------------------------------------------
def discriminator_forward(x_nchw, pp):
    B = x_nchw.shape[0]
    # single layout conversion at the boundary; NHWC + bf16 from here on
    x = jnp.transpose(x_nchw, (0, 2, 3, 1)).astype(jnp.bfloat16)

    h = conv_block(x, pp["w1"], pp["s1"], pp["b1"])   # Conv + LReLU
    h = conv_block(h, pp["w2"], pp["s2"], pp["b2"])   # Conv + BN + LReLU
    h = conv_block(h, pp["w3"], pp["s3"], pp["b3"])   # Conv + BN + LReLU
    h = conv_block(h, pp["w4"], pp["s4"], pp["b4"])   # Conv + BN + LReLU -> [B,4,4,ndf*8]

    flat = h.reshape(B, -1)                           # NHWC flatten (head rows permuted to match)

    dis, cla = heads_forward(flat, pp)                # one fused Pallas launch
    return dis[:, 0], cla                             # (.view(-1,1).squeeze(1), logits)


# ----------------------------------------------------------------------------
if __name__ == "__main__":
    # 64x64 input is required so the feature map is 4x4 before flattening
    # (as in the module); nc=1, scaled-down ndf=8, 27 classes, batch 2.
    B, NC, NDF, N_CLASS, IMG = 2, 1, 8, 27, 64

    key = jax.random.PRNGKey(0)
    k_x, k_p = jax.random.split(key)
    x = jax.random.normal(k_x, (B, NC, IMG, IMG), jnp.float32)

    raw_params = init_params(k_p, NC, NDF, N_CLASS)
    params = prepare_params(raw_params, NDF, N_CLASS)   # one-time layout prep

    fwd = jax.jit(discriminator_forward)
    dis, cla = fwd(x, params)
    jax.block_until_ready((dis, cla))

    assert dis.shape == (B,), dis.shape
    assert cla.shape == (B, N_CLASS), cla.shape
    assert bool(jnp.all(jnp.isfinite(dis))) and bool(jnp.all(jnp.isfinite(cla)))
    assert bool(jnp.all((dis >= 0.0) & (dis <= 1.0)))
    print("KERNEL_OK")
</pallas_src>

<mosaic_0001>
module attributes {stable_mosaic.version = 11 : i64} {
  func.func @_conv_matmul_kernel(%arg0: i32, %arg1: memref<2048x16xbf16, #tpu.memory_space<vmem>>, %arg2: memref<16x8xbf16, #tpu.memory_space<vmem>>, %arg3: memref<1x8xf32, #tpu.memory_space<vmem>>, %arg4: memref<1x8xf32, #tpu.memory_space<vmem>>, %arg5: memref<2048x8xbf16, #tpu.memory_space<vmem>>) attributes {dimension_semantics = [#tpu.dimension_semantics<parallel>], iteration_bounds = array<i64: 1>, scalar_prefetch = 0 : i64, scratch_operands = 0 : i64, tpu.core_type = #tpu.core_type<tc>, window_params = [{transform_indices = @transform_0, window_bounds = array<i64: 2048, 16>}, {pipeline_mode = #tpu.pipeline_mode<synchronous>, transform_indices = @transform_1, window_bounds = array<i64: 16, 8>}, {pipeline_mode = #tpu.pipeline_mode<synchronous>, transform_indices = @transform_2, window_bounds = array<i64: 1, 8>}, {pipeline_mode = #tpu.pipeline_mode<synchronous>, transform_indices = @transform_3, window_bounds = array<i64: 1, 8>}, {transform_indices = @transform_4, window_bounds = array<i64: 2048, 8>}]} {
    %c0 = arith.constant 0 : index
    %c0_0 = arith.constant 0 : index
    %0 = vector.load %arg1[%c0, %c0_0] : memref<2048x16xbf16, #tpu.memory_space<vmem>>, vector<2048x16xbf16>
    %c0_1 = arith.constant 0 : index
    %c0_2 = arith.constant 0 : index
    %1 = vector.load %arg2[%c0_1, %c0_2] : memref<16x8xbf16, #tpu.memory_space<vmem>>, vector<16x8xbf16>
    %cst = arith.constant dense<0.000000e+00> : vector<2048x8xf32>
    %2 = tpu.matmul %0, %1, %cst {dimension_numbers = #tpu.dot_dimension_numbers<[1], [0], [0], [1], [0, 0, 1, 1], [], []>} : vector<2048x16xbf16>, vector<16x8xbf16>, vector<2048x8xf32> -> vector<2048x8xf32>
    %c0_3 = arith.constant 0 : index
    %c0_4 = arith.constant 0 : index
    %3 = vector.load %arg3[%c0_3, %c0_4] : memref<1x8xf32, #tpu.memory_space<vmem>>, vector<1x8xf32>
    %4 = vector.broadcast %3 : vector<1x8xf32> to vector<2048x8xf32>
    %5 = arith.mulf %2, %4 : vector<2048x8xf32>
    %c0_5 = arith.constant 0 : index
    %c0_6 = arith.constant 0 : index
    %6 = vector.load %arg4[%c0_5, %c0_6] : memref<1x8xf32, #tpu.memory_space<vmem>>, vector<1x8xf32>
    %7 = vector.broadcast %6 : vector<1x8xf32> to vector<2048x8xf32>
    %8 = arith.addf %5, %7 : vector<2048x8xf32>
    %cst_7 = arith.constant 0.000000e+00 : f32
    %9 = vector.broadcast %cst_7 : f32 to vector<2048x8xf32>
    %10 = arith.cmpf ogt, %8, %9 : vector<2048x8xf32>
    %cst_8 = arith.constant 2.000000e-01 : f32
    %11 = vector.broadcast %cst_8 : f32 to vector<2048x8xf32>
    %12 = arith.mulf %11, %8 : vector<2048x8xf32>
    %13 = arith.select %10, %8, %12 : vector<2048x8xi1>, vector<2048x8xf32>
    %14 = arith.truncf %13 : vector<2048x8xf32> to vector<2048x8xbf16>
    %c0_9 = arith.constant 0 : index
    %c0_10 = arith.constant 0 : index
    %15 = vector.load %arg5[%c0_9, %c0_10] : memref<2048x8xbf16, #tpu.memory_space<vmem>>, vector<2048x8xbf16>
    tpu.vector_store %arg5[%c0_9, %c0_10], %14 {strides = array<i32>} : memref<2048x8xbf16, #tpu.memory_space<vmem>>, vector<2048x8xbf16>,
    return
  }
  func.func @transform_0(%arg0: i32) -> (i32, i32) {
    %c0_i32 = arith.constant 0 : i32
    %c0_i32_0 = arith.constant 0 : i32
    return %arg0, %c0_i32 : i32, i32
  }
  func.func @transform_1(%arg0: i32) -> (i32, i32) {
    %c0_i32 = arith.constant 0 : i32
    %c0_i32_0 = arith.constant 0 : i32
    %c0_i32_1 = arith.constant 0 : i32
    return %c0_i32, %c0_i32_0 : i32, i32
  }
  func.func @transform_2(%arg0: i32) -> (i32, i32) {
    %c0_i32 = arith.constant 0 : i32
    %c0_i32_0 = arith.constant 0 : i32
    %c0_i32_1 = arith.constant 0 : i32
    return %c0_i32, %c0_i32_0 : i32, i32
  }
  func.func @transform_3(%arg0: i32) -> (i32, i32) {
    %c0_i32 = arith.constant 0 : i32
    %c0_i32_0 = arith.constant 0 : i32
    %c0_i32_1 = arith.constant 0 : i32
    return %c0_i32, %c0_i32_0 : i32, i32
  }
  func.func @transform_4(%arg0: i32) -> (i32, i32) {
    %c0_i32 = arith.constant 0 : i32
    %c0_i32_0 = arith.constant 0 : i32
    return %arg0, %c0_i32 : i32, i32
  }
}

module attributes {stable_mosaic.version = 11 : i64} {
  func.func @_conv_matmul_kernel(%arg0: i32, %arg1: memref<512x128xbf16, #tpu.memory_space<vmem>>, %arg2: memref<128x16xbf16, #tpu.memory_space<vmem>>, %arg3: memref<1x16xf32, #tpu.memory_space<vmem>>, %arg4: memref<1x16xf32, #tpu.memory_space<vmem>>, %arg5: memref<512x16xbf16, #tpu.memory_space<vmem>>) attributes {dimension_semantics = [#tpu.dimension_semantics<parallel>], iteration_bounds = array<i64: 1>, scalar_prefetch = 0 : i64, scratch_operands = 0 : i64, tpu.core_type = #tpu.core_type<tc>, window_params = [{transform_indices = @transform_0, window_bounds = array<i64: 512, 128>}, {pipeline_mode = #tpu.pipeline_mode<synchronous>, transform_indices = @transform_1, window_bounds = array<i64: 128, 16>}, {pipeline_mode = #tpu.pipeline_mode<synchronous>, transform_indices = @transform_2, window_bounds = array<i64: 1, 16>}, {pipeline_mode = #tpu.pipeline_mode<synchronous>, transform_indices = @transform_3, window_bounds = array<i64: 1, 16>}, {transform_indices = @transform_4, window_bounds = array<i64: 512, 16>}]} {
    %c0 = arith.constant 0 : index
    %c0_0 = arith.constant 0 : index
    %0 = vector.load %arg1[%c0, %c0_0] : memref<512x128xbf16, #tpu.memory_space<vmem>>, vector<512x128xbf16>
    %c0_1 = arith.constant 0 : index
    %c0_2 = arith.constant 0 : index
    %1 = vector.load %arg2[%c0_1, %c0_2] : memref<128x16xbf16, #tpu.memory_space<vmem>>, vector<128x16xbf16>
    %cst = arith.constant dense<0.000000e+00> : vector<512x16xf32>
    %2 = tpu.matmul %0, %1, %cst {dimension_numbers = #tpu.dot_dimension_numbers<[1], [0], [0], [1], [0, 0, 1, 1], [], []>} : vector<512x128xbf16>, vector<128x16xbf16>, vector<512x16xf32> -> vector<512x16xf32>
    %c0_3 = arith.constant 0 : index
    %c0_4 = arith.constant 0 : index
    %3 = vector.load %arg3[%c0_3, %c0_4] : memref<1x16xf32, #tpu.memory_space<vmem>>, vector<1x16xf32>
    %4 = vector.broadcast %3 : vector<1x16xf32> to vector<512x16xf32>
    %5 = arith.mulf %2, %4 : vector<512x16xf32>
    %c0_5 = arith.constant 0 : index
    %c0_6 = arith.constant 0 : index
    %6 = vector.load %arg4[%c0_5, %c0_6] : memref<1x16xf32, #tpu.memory_space<vmem>>, vector<1x16xf32>
    %7 = vector.broadcast %6 : vector<1x16xf32> to vector<512x16xf32>
    %8 = arith.addf %5, %7 : vector<512x16xf32>
    %cst_7 = arith.constant 0.000000e+00 : f32
    %9 = vector.broadcast %cst_7 : f32 to vector<512x16xf32>
    %10 = arith.cmpf ogt, %8, %9 : vector<512x16xf32>
    %cst_8 = arith.constant 2.000000e-01 : f32
    %11 = vector.broadcast %cst_8 : f32 to vector<512x16xf32>
    %12 = arith.mulf %11, %8 : vector<512x16xf32>
    %13 = arith.select %10, %8, %12 : vector<512x16xi1>, vector<512x16xf32>
    %14 = arith.truncf %13 : vector<512x16xf32> to vector<512x16xbf16>
    %c0_9 = arith.constant 0 : index
    %c0_10 = arith.constant 0 : index
    %15 = vector.load %arg5[%c0_9, %c0_10] : memref<512x16xbf16, #tpu.memory_space<vmem>>, vector<512x16xbf16>
    tpu.vector_store %arg5[%c0_9, %c0_10], %14 {strides = array<i32>} : memref<512x16xbf16, #tpu.memory_space<vmem>>, vector<512x16xbf16>,
    return
  }
  func.func @transform_0(%arg0: i32) -> (i32, i32) {
    %c0_i32 = arith.constant 0 : i32
    %c0_i32_0 = arith.constant 0 : i32
    return %arg0, %c0_i32 : i32, i32
  }
  func.func @transform_1(%arg0: i32) -> (i32, i32) {
    %c0_i32 = arith.constant 0 : i32
    %c0_i32_0 = arith.constant 0 : i32
    %c0_i32_1 = arith.constant 0 : i32
    return %c0_i32, %c0_i32_0 : i32, i32
  }
  func.func @transform_2(%arg0: i32) -> (i32, i32) {
    %c0_i32 = arith.constant 0 : i32
    %c0_i32_0 = arith.constant 0 : i32
    %c0_i32_1 = arith.constant 0 : i32
    return %c0_i32, %c0_i32_0 : i32, i32
  }
  func.func @transform_3(%arg0: i32) -> (i32, i32) {
    %c0_i32 = arith.constant 0 : i32
    %c0_i32_0 = arith.constant 0 : i32
    %c0_i32_1 = arith.constant 0 : i32
    return %c0_i32, %c0_i32_0 : i32, i32
  }
  func.func @transform_4(%arg0: i32) -> (i32, i32) {
    %c0_i32 = arith.constant 0 : i32
    %c0_i32_0 = arith.constant 0 : i32
    return %arg0, %c0_i32 : i32, i32
  }
}

module attributes {stable_mosaic.version = 11 : i64} {
  func.func @_conv_matmul_kernel(%arg0: i32, %arg1: memref<128x256xbf16, #tpu.memory_space<vmem>>, %arg2: memref<256x32xbf16, #tpu.memory_space<vmem>>, %arg3: memref<1x32xf32, #tpu.memory_space<vmem>>, %arg4: memref<1x32xf32, #tpu.memory_space<vmem>>, %arg5: memref<128x32xbf16, #tpu.memory_space<vmem>>) attributes {dimension_semantics = [#tpu.dimension_semantics<parallel>], iteration_bounds = array<i64: 1>, scalar_prefetch = 0 : i64, scratch_operands = 0 : i64, tpu.core_type = #tpu.core_type<tc>, window_params = [{transform_indices = @transform_0, window_bounds = array<i64: 128, 256>}, {pipeline_mode = #tpu.pipeline_mode<synchronous>, transform_indices = @transform_1, window_bounds = array<i64: 256, 32>}, {pipeline_mode = #tpu.pipeline_mode<synchronous>, transform_indices = @transform_2, window_bounds = array<i64: 1, 32>}, {pipeline_mode = #tpu.pipeline_mode<synchronous>, transform_indices = @transform_3, window_bounds = array<i64: 1, 32>}, {transform_indices = @transform_4, window_bounds = array<i64: 128, 32>}]} {
    %c0 = arith.constant 0 : index
    %c0_0 = arith.constant 0 : index
    %0 = vector.load %arg1[%c0, %c0_0] : memref<128x256xbf16, #tpu.memory_space<vmem>>, vector<128x256xbf16>
    %c0_1 = arith.constant 0 : index
    %c0_2 = arith.constant 0 : index
    %1 = vector.load %arg2[%c0_1, %c0_2] : memref<256x32xbf16, #tpu.memory_space<vmem>>, vector<256x32xbf16>
    %cst = arith.constant dense<0.000000e+00> : vector<128x32xf32>
    %2 = tpu.matmul %0, %1, %cst {dimension_numbers = #tpu.dot_dimension_numbers<[1], [0], [0], [1], [0, 0, 1, 1], [], []>} : vector<128x256xbf16>, vector<256x32xbf16>, vector<128x32xf32> -> vector<128x32xf32>
    %c0_3 = arith.constant 0 : index
    %c0_4 = arith.constant 0 : index
    %3 = vector.load %arg3[%c0_3, %c0_4] : memref<1x32xf32, #tpu.memory_space<vmem>>, vector<1x32xf32>
    %4 = vector.broadcast %3 : vector<1x32xf32> to vector<128x32xf32>
    %5 = arith.mulf %2, %4 : vector<128x32xf32>
    %c0_5 = arith.constant 0 : index
    %c0_6 = arith.constant 0 : index
    %6 = vector.load %arg4[%c0_5, %c0_6] : memref<1x32xf32, #tpu.memory_space<vmem>>, vector<1x32xf32>
    %7 = vector.broadcast %6 : vector<1x32xf32> to vector<128x32xf32>
    %8 = arith.addf %5, %7 : vector<128x32xf32>
    %cst_7 = arith.constant 0.000000e+00 : f32
    %9 = vector.broadcast %cst_7 : f32 to vector<128x32xf32>
    %10 = arith.cmpf ogt, %8, %9 : vector<128x32xf32>
    %cst_8 = arith.constant 2.000000e-01 : f32
    %11 = vector.broadcast %cst_8 : f32 to vector<128x32xf32>
    %12 = arith.mulf %11, %8 : vector<128x32xf32>
    %13 = arith.select %10, %8, %12 : vector<128x32xi1>, vector<128x32xf32>
    %14 = arith.truncf %13 : vector<128x32xf32> to vector<128x32xbf16>
    %c0_9 = arith.constant 0 : index
    %c0_10 = arith.constant 0 : index
    %15 = vector.load %arg5[%c0_9, %c0_10] : memref<128x32xbf16, #tpu.memory_space<vmem>>, vector<128x32xbf16>
    tpu.vector_store %arg5[%c0_9, %c0_10], %14 {strides = array<i32>} : memref<128x32xbf16, #tpu.memory_space<vmem>>, vector<128x32xbf16>,
    return
  }
  func.func @transform_0(%arg0: i32) -> (i32, i32) {
    %c0_i32 = arith.constant 0 : i32
    %c0_i32_0 = arith.constant 0 : i32
    return %arg0, %c0_i32 : i32, i32
  }
  func.func @transform_1(%arg0: i32) -> (i32, i32) {
    %c0_i32 = arith.constant 0 : i32
    %c0_i32_0 = arith.constant 0 : i32
    %c0_i32_1 = arith.constant 0 : i32
    return %c0_i32, %c0_i32_0 : i32, i32
  }
  func.func @transform_2(%arg0: i32) -> (i32, i32) {
    %c0_i32 = arith.constant 0 : i32
    %c0_i32_0 = arith.constant 0 : i32
    %c0_i32_1 = arith.constant 0 : i32
    return %c0_i32, %c0_i32_0 : i32, i32
  }
  func.func @transform_3(%arg0: i32) -> (i32, i32) {
    %c0_i32 = arith.constant 0 : i32
    %c0_i32_0 = arith.constant 0 : i32
    %c0_i32_1 = arith.constant 0 : i32
    return %c0_i32, %c0_i32_0 : i32, i32
  }
  func.func @transform_4(%arg0: i32) -> (i32, i32) {
    %c0_i32 = arith.constant 0 : i32
    %c0_i32_0 = arith.constant 0 : i32
    return %arg0, %c0_i32 : i32, i32
  }
}

module attributes {stable_mosaic.version = 11 : i64} {
  func.func @_conv_matmul_kernel(%arg0: i32, %arg1: memref<32x512xbf16, #tpu.memory_space<vmem>>, %arg2: memref<512x64xbf16, #tpu.memory_space<vmem>>, %arg3: memref<1x64xf32, #tpu.memory_space<vmem>>, %arg4: memref<1x64xf32, #tpu.memory_space<vmem>>, %arg5: memref<32x64xbf16, #tpu.memory_space<vmem>>) attributes {dimension_semantics = [#tpu.dimension_semantics<parallel>], iteration_bounds = array<i64: 1>, scalar_prefetch = 0 : i64, scratch_operands = 0 : i64, tpu.core_type = #tpu.core_type<tc>, window_params = [{transform_indices = @transform_0, window_bounds = array<i64: 32, 512>}, {pipeline_mode = #tpu.pipeline_mode<synchronous>, transform_indices = @transform_1, window_bounds = array<i64: 512, 64>}, {pipeline_mode = #tpu.pipeline_mode<synchronous>, transform_indices = @transform_2, window_bounds = array<i64: 1, 64>}, {pipeline_mode = #tpu.pipeline_mode<synchronous>, transform_indices = @transform_3, window_bounds = array<i64: 1, 64>}, {transform_indices = @transform_4, window_bounds = array<i64: 32, 64>}]} {
    %c0 = arith.constant 0 : index
    %c0_0 = arith.constant 0 : index
    %0 = vector.load %arg1[%c0, %c0_0] : memref<32x512xbf16, #tpu.memory_space<vmem>>, vector<32x512xbf16>
    %c0_1 = arith.constant 0 : index
    %c0_2 = arith.constant 0 : index
    %1 = vector.load %arg2[%c0_1, %c0_2] : memref<512x64xbf16, #tpu.memory_space<vmem>>, vector<512x64xbf16>
    %cst = arith.constant dense<0.000000e+00> : vector<32x64xf32>
    %2 = tpu.matmul %0, %1, %cst {dimension_numbers = #tpu.dot_dimension_numbers<[1], [0], [0], [1], [0, 0, 1, 1], [], []>} : vector<32x512xbf16>, vector<512x64xbf16>, vector<32x64xf32> -> vector<32x64xf32>
    %c0_3 = arith.constant 0 : index
    %c0_4 = arith.constant 0 : index
    %3 = vector.load %arg3[%c0_3, %c0_4] : memref<1x64xf32, #tpu.memory_space<vmem>>, vector<1x64xf32>
    %4 = vector.broadcast %3 : vector<1x64xf32> to vector<32x64xf32>
    %5 = arith.mulf %2, %4 : vector<32x64xf32>
    %c0_5 = arith.constant 0 : index
    %c0_6 = arith.constant 0 : index
    %6 = vector.load %arg4[%c0_5, %c0_6] : memref<1x64xf32, #tpu.memory_space<vmem>>, vector<1x64xf32>
    %7 = vector.broadcast %6 : vector<1x64xf32> to vector<32x64xf32>
    %8 = arith.addf %5, %7 : vector<32x64xf32>
    %cst_7 = arith.constant 0.000000e+00 : f32
    %9 = vector.broadcast %cst_7 : f32 to vector<32x64xf32>
    %10 = arith.cmpf ogt, %8, %9 : vector<32x64xf32>
    %cst_8 = arith.constant 2.000000e-01 : f32
    %11 = vector.broadcast %cst_8 : f32 to vector<32x64xf32>
    %12 = arith.mulf %11, %8 : vector<32x64xf32>
    %13 = arith.select %10, %8, %12 : vector<32x64xi1>, vector<32x64xf32>
    %14 = arith.truncf %13 : vector<32x64xf32> to vector<32x64xbf16>
    %c0_9 = arith.constant 0 : index
    %c0_10 = arith.constant 0 : index
    %15 = vector.load %arg5[%c0_9, %c0_10] : memref<32x64xbf16, #tpu.memory_space<vmem>>, vector<32x64xbf16>
    tpu.vector_store %arg5[%c0_9, %c0_10], %14 {strides = array<i32>} : memref<32x64xbf16, #tpu.memory_space<vmem>>, vector<32x64xbf16>,
    return
  }
  func.func @transform_0(%arg0: i32) -> (i32, i32) {
    %c0_i32 = arith.constant 0 : i32
    %c0_i32_0 = arith.constant 0 : i32
    return %arg0, %c0_i32 : i32, i32
  }
  func.func @transform_1(%arg0: i32) -> (i32, i32) {
    %c0_i32 = arith.constant 0 : i32
    %c0_i32_0 = arith.constant 0 : i32
    %c0_i32_1 = arith.constant 0 : i32
    return %c0_i32, %c0_i32_0 : i32, i32
  }
  func.func @transform_2(%arg0: i32) -> (i32, i32) {
    %c0_i32 = arith.constant 0 : i32
    %c0_i32_0 = arith.constant 0 : i32
    %c0_i32_1 = arith.constant 0 : i32
    return %c0_i32, %c0_i32_0 : i32, i32
  }
  func.func @transform_3(%arg0: i32) -> (i32, i32) {
    %c0_i32 = arith.constant 0 : i32
    %c0_i32_0 = arith.constant 0 : i32
    %c0_i32_1 = arith.constant 0 : i32
    return %c0_i32, %c0_i32_0 : i32, i32
  }
  func.func @transform_4(%arg0: i32) -> (i32, i32) {
    %c0_i32 = arith.constant 0 : i32
    %c0_i32_0 = arith.constant 0 : i32
    return %arg0, %c0_i32 : i32, i32
  }
}

module attributes {stable_mosaic.version = 11 : i64} {
  func.func @_heads_kernel(%arg0: i32, %arg1: memref<2x1024xbf16, #tpu.memory_space<vmem>>, %arg2: memref<1x1024xf32, #tpu.memory_space<vmem>>, %arg3: memref<1x1xf32, #tpu.memory_space<vmem>>, %arg4: memref<1024x1024xbf16, #tpu.memory_space<vmem>>, %arg5: memref<1x1024xf32, #tpu.memory_space<vmem>>, %arg6: memref<1024x512xbf16, #tpu.memory_space<vmem>>, %arg7: memref<1x512xf32, #tpu.memory_space<vmem>>, %arg8: memref<512x27xbf16, #tpu.memory_space<vmem>>, %arg9: memref<1x27xf32, #tpu.memory_space<vmem>>, %arg10: memref<2x1xf32, #tpu.memory_space<vmem>>, %arg11: memref<2x27xf32, #tpu.memory_space<vmem>>) attributes {dimension_semantics = [#tpu.dimension_semantics<arbitrary>], iteration_bounds = array<i64: 1>, scalar_prefetch = 0 : i64, scratch_operands = 0 : i64, tpu.core_type = #tpu.core_type<tc>, window_params = [{pipeline_mode = #tpu.pipeline_mode<synchronous>, transform_indices = @transform_0, window_bounds = array<i64: 2, 1024>}, {pipeline_mode = #tpu.pipeline_mode<synchronous>, transform_indices = @transform_1, window_bounds = array<i64: 1, 1024>}, {pipeline_mode = #tpu.pipeline_mode<synchronous>, transform_indices = @transform_2, window_bounds = array<i64: 1, 1>}, {pipeline_mode = #tpu.pipeline_mode<synchronous>, transform_indices = @transform_3, window_bounds = array<i64: 1024, 1024>}, {pipeline_mode = #tpu.pipeline_mode<synchronous>, transform_indices = @transform_4, window_bounds = array<i64: 1, 1024>}, {pipeline_mode = #tpu.pipeline_mode<synchronous>, transform_indices = @transform_5, window_bounds = array<i64: 1024, 512>}, {pipeline_mode = #tpu.pipeline_mode<synchronous>, transform_indices = @transform_6, window_bounds = array<i64: 1, 512>}, {pipeline_mode = #tpu.pipeline_mode<synchronous>, transform_indices = @transform_7, window_bounds = array<i64: 512, 27>}, {pipeline_mode = #tpu.pipeline_mode<synchronous>, transform_indices = @transform_8, window_bounds = array<i64: 1, 27>}, {pipeline_mode = #tpu.pipeline_mode<synchronous>, transform_indices = @transform_9, window_bounds = array<i64: 2, 1>}, {pipeline_mode = #tpu.pipeline_mode<synchronous>, transform_indices = @transform_10, window_bounds = array<i64: 2, 27>}]} {
    %c0 = arith.constant 0 : index
    %c0_0 = arith.constant 0 : index
    %0 = vector.load %arg1[%c0, %c0_0] : memref<2x1024xbf16, #tpu.memory_space<vmem>>, vector<2x1024xbf16>
    %1 = arith.extf %0 : vector<2x1024xbf16> to vector<2x1024xf32>
    %c0_1 = arith.constant 0 : index
    %c0_2 = arith.constant 0 : index
    %2 = vector.load %arg2[%c0_1, %c0_2] : memref<1x1024xf32, #tpu.memory_space<vmem>>, vector<1x1024xf32>
    %3 = vector.broadcast %2 : vector<1x1024xf32> to vector<2x1024xf32>
    %4 = arith.mulf %1, %3 : vector<2x1024xf32>
    %cst = arith.constant dense<0.000000e+00> : vector<2xf32>
    %5 = vector.multi_reduction <add>, %4, %cst [1] : vector<2x1024xf32> to vector<2xf32>
    %6 = vector.shape_cast %5 : vector<2xf32> to vector<2x1xf32>
    %c0_3 = arith.constant 0 : index
    %c0_4 = arith.constant 0 : index
    %7 = vector.load %arg3[%c0_3, %c0_4] : memref<1x1xf32, #tpu.memory_space<vmem>>, vector<1x1xf32>
    %8 = vector.broadcast %7 : vector<1x1xf32> to vector<2x1xf32>
    %9 = arith.addf %6, %8 : vector<2x1xf32>
    %cst_5 = arith.constant 0.000000e+00 : f32
    %10 = vector.broadcast %cst_5 : f32 to vector<2x1xf32>
    %11 = arith.subf %10, %9 : vector<2x1xf32>
    %12 = math.exp %11 : vector<2x1xf32>
    %cst_6 = arith.constant 1.000000e+00 : f32
    %13 = vector.broadcast %cst_6 : f32 to vector<2x1xf32>
    %14 = arith.addf %13, %12 : vector<2x1xf32>
    %15 = tpu.reciprocal %14 {approx = true} : vector<2x1xf32> -> vector<2x1xf32>
    %cst_7 = arith.constant 0.000000e+00 : f32
    %cst_8 = arith.constant 1.000000e+00 : f32
    %16 = vector.broadcast %cst_7 : f32 to vector<2x1xf32>
    %17 = arith.maximumf %16, %15 : vector<2x1xf32>
    %18 = vector.broadcast %cst_8 : f32 to vector<2x1xf32>
    %19 = arith.minimumf %18, %17 : vector<2x1xf32>
    %c0_9 = arith.constant 0 : index
    %c0_10 = arith.constant 0 : index
    %20 = vector.load %arg10[%c0_9, %c0_10] : memref<2x1xf32, #tpu.memory_space<vmem>>, vector<2x1xf32>
    tpu.vector_store %arg10[%c0_9, %c0_10], %19 {strides = array<i32>} : memref<2x1xf32, #tpu.memory_space<vmem>>, vector<2x1xf32>,
    %c0_11 = arith.constant 0 : index
    %c0_12 = arith.constant 0 : index
    %21 = vector.load %arg4[%c0_11, %c0_12] : memref<1024x1024xbf16, #tpu.memory_space<vmem>>, vector<1024x1024xbf16>
    %cst_13 = arith.constant dense<0.000000e+00> : vector<2x1024xf32>
    %22 = tpu.matmul %0, %21, %cst_13 {dimension_numbers = #tpu.dot_dimension_numbers<[1], [0], [0], [1], [0, 0, 1, 1], [], []>} : vector<2x1024xbf16>, vector<1024x1024xbf16>, vector<2x1024xf32> -> vector<2x1024xf32>
    %c0_14 = arith.constant 0 : index
    %c0_15 = arith.constant 0 : index
    %23 = vector.load %arg5[%c0_14, %c0_15] : memref<1x1024xf32, #tpu.memory_space<vmem>>, vector<1x1024xf32>
    %24 = vector.broadcast %23 : vector<1x1024xf32> to vector<2x1024xf32>
    %25 = arith.addf %22, %24 : vector<2x1024xf32>
    %cst_16 = arith.constant 0.000000e+00 : f32
    %26 = vector.broadcast %cst_16 : f32 to vector<2x1024xf32>
    %27 = arith.cmpf ogt, %25, %26 : vector<2x1024xf32>
    %cst_17 = arith.constant 2.000000e-01 : f32
    %28 = vector.broadcast %cst_17 : f32 to vector<2x1024xf32>
    %29 = arith.mulf %28, %25 : vector<2x1024xf32>
    %30 = arith.select %27, %25, %29 : vector<2x1024xi1>, vector<2x1024xf32>
    %31 = arith.truncf %30 : vector<2x1024xf32> to vector<2x1024xbf16>
    %c0_18 = arith.constant 0 : index
    %c0_19 = arith.constant 0 : index
    %32 = vector.load %arg6[%c0_18, %c0_19] : memref<1024x512xbf16, #tpu.memory_space<vmem>>, vector<1024x512xbf16>
    %cst_20 = arith.constant dense<0.000000e+00> : vector<2x512xf32>
    %33 = tpu.matmul %31, %32, %cst_20 {dimension_numbers = #tpu.dot_dimension_numbers<[1], [0], [0], [1], [0, 0, 1, 1], [], []>} : vector<2x1024xbf16>, vector<1024x512xbf16>, vector<2x512xf32> -> vector<2x512xf32>
    %c0_21 = arith.constant 0 : index
    %c0_22 = arith.constant 0 : index
    %34 = vector.load %arg7[%c0_21, %c0_22] : memref<1x512xf32, #tpu.memory_space<vmem>>, vector<1x512xf32>
    %35 = vector.broadcast %34 : vector<1x512xf32> to vector<2x512xf32>
    %36 = arith.addf %33, %35 : vector<2x512xf32>
    %cst_23 = arith.constant 0.000000e+00 : f32
    %37 = vector.broadcast %cst_23 : f32 to vector<2x512xf32>
    %38 = arith.cmpf ogt, %36, %37 : vector<2x512xf32>
    %cst_24 = arith.constant 2.000000e-01 : f32
    %39 = vector.broadcast %cst_24 : f32 to vector<2x512xf32>
    %40 = arith.mulf %39, %36 : vector<2x512xf32>
    %41 = arith.select %38, %36, %40 : vector<2x512xi1>, vector<2x512xf32>
    %42 = arith.truncf %41 : vector<2x512xf32> to vector<2x512xbf16>
    %c0_25 = arith.constant 0 : index
    %c0_26 = arith.constant 0 : index
    %43 = vector.load %arg8[%c0_25, %c0_26] : memref<512x27xbf16, #tpu.memory_space<vmem>>, vector<512x27xbf16>
    %cst_27 = arith.constant dense<0.000000e+00> : vector<2x27xf32>
    %44 = tpu.matmul %42, %43, %cst_27 {dimension_numbers = #tpu.dot_dimension_numbers<[1], [0], [0], [1], [0, 0, 1, 1], [], []>} : vector<2x512xbf16>, vector<512x27xbf16>, vector<2x27xf32> -> vector<2x27xf32>
    %c0_28 = arith.constant 0 : index
    %c0_29 = arith.constant 0 : index
    %45 = vector.load %arg9[%c0_28, %c0_29] : memref<1x27xf32, #tpu.memory_space<vmem>>, vector<1x27xf32>
    %46 = vector.broadcast %45 : vector<1x27xf32> to vector<2x27xf32>
    %47 = arith.addf %44, %46 : vector<2x27xf32>
    %c0_30 = arith.constant 0 : index
    %c0_31 = arith.constant 0 : index
    %48 = vector.load %arg11[%c0_30, %c0_31] : memref<2x27xf32, #tpu.memory_space<vmem>>, vector<2x27xf32>
    tpu.vector_store %arg11[%c0_30, %c0_31], %47 {strides = array<i32>} : memref<2x27xf32, #tpu.memory_space<vmem>>, vector<2x27xf32>,
    return
  }
  func.func @transform_0(%arg0: i32) -> (i32, i32) {
    %c0_i32 = arith.constant 0 : i32
    %c0_i32_0 = arith.constant 0 : i32
    %c0_i32_1 = arith.constant 0 : i32
    return %c0_i32, %c0_i32_0 : i32, i32
  }
  func.func @transform_1(%arg0: i32) -> (i32, i32) {
    %c0_i32 = arith.constant 0 : i32
    %c0_i32_0 = arith.constant 0 : i32
    %c0_i32_1 = arith.constant 0 : i32
    return %c0_i32, %c0_i32_0 : i32, i32
  }
  func.func @transform_2(%arg0: i32) -> (i32, i32) {
    %c0_i32 = arith.constant 0 : i32
    %c0_i32_0 = arith.constant 0 : i32
    %c0_i32_1 = arith.constant 0 : i32
    return %c0_i32, %c0_i32_0 : i32, i32
  }
  func.func @transform_3(%arg0: i32) -> (i32, i32) {
    %c0_i32 = arith.constant 0 : i32
    %c0_i32_0 = arith.constant 0 : i32
    %c0_i32_1 = arith.constant 0 : i32
    return %c0_i32, %c0_i32_0 : i32, i32
  }
  func.func @transform_4(%arg0: i32) -> (i32, i32) {
    %c0_i32 = arith.constant 0 : i32
    %c0_i32_0 = arith.constant 0 : i32
    %c0_i32_1 = arith.constant 0 : i32
    return %c0_i32, %c0_i32_0 : i32, i32
  }
  func.func @transform_5(%arg0: i32) -> (i32, i32) {
    %c0_i32 = arith.constant 0 : i32
    %c0_i32_0 = arith.constant 0 : i32
    %c0_i32_1 = arith.constant 0 : i32
    return %c0_i32, %c0_i32_0 : i32, i32
  }
  func.func @transform_6(%arg0: i32) -> (i32, i32) {
    %c0_i32 = arith.constant 0 : i32
    %c0_i32_0 = arith.constant 0 : i32
    %c0_i32_1 = arith.constant 0 : i32
    return %c0_i32, %c0_i32_0 : i32, i32
  }
  func.func @transform_7(%arg0: i32) -> (i32, i32) {
    %c0_i32 = arith.constant 0 : i32
    %c0_i32_0 = arith.constant 0 : i32
    %c0_i32_1 = arith.constant 0 : i32
    return %c0_i32, %c0_i32_0 : i32, i32
  }
  func.func @transform_8(%arg0: i32) -> (i32, i32) {
    %c0_i32 = arith.constant 0 : i32
    %c0_i32_0 = arith.constant 0 : i32
    %c0_i32_1 = arith.constant 0 : i32
    return %c0_i32, %c0_i32_0 : i32, i32
  }
  func.func @transform_9(%arg0: i32) -> (i32, i32) {
    %c0_i32 = arith.constant 0 : i32
    %c0_i32_0 = arith.constant 0 : i32
    %c0_i32_1 = arith.constant 0 : i32
    return %c0_i32, %c0_i32_0 : i32, i32
  }
  func.func @transform_10(%arg0: i32) -> (i32, i32) {
    %c0_i32 = arith.constant 0 : i32
    %c0_i32_0 = arith.constant 0 : i32
    %c0_i32_1 = arith.constant 0 : i32
    return %c0_i32, %c0_i32_0 : i32, i32
  }
}

</mosaic_0001>

<llo_original>
// kernel: discriminator_forward.5
$region0: #{discriminator_forward.5}
  #allocation0 [shape = 'u32[]', space=smem, size = 0x4, offset = 0x4, fixed_abs, tag = 'smem constant byte address 0x4 - core index']
  #allocation1 [shape = 'u32[144,128]{1,0:T(1,128)}', space=vmem, size = 0x12000, scoped, tag = 'internal scratch']
  %s0 = inlined_call_operand.vmem [shape: bf16[2048,16], index: 0, kind: input, shape index: {}]
  %s1 = inlined_call_operand.vmem [shape: bf16[16,8], index: 1, kind: input, shape index: {}]
  %s2 = inlined_call_operand.hbm [shape: f32[1,8], index: 2, kind: input, shape index: {}]
  %s3 = inlined_call_operand.hbm [shape: f32[1,8], index: 3, kind: input, shape index: {}]
  %s4 = inlined_call_operand.vmem [shape: bf16[2048,8], index: 4, kind: output, shape index: {}]
  %s5 = sld [smem:[#allocation0]]
  $region34: #{discriminator_forward.5} parent=0
    _
  %s7 = ssub.s32 1, %s5
  %s8 = scalar_select 0, %s7, %s5
  $region1: #{discriminator_forward.5} parent=0
    #allocation2 [shape = 'u8[512]{0}', space=vmem, size = 0x400, scoped, tag = 'input window, operand 2, single buffered']
    #allocation3 [shape = 's32[1]{0}', space=sflag, size = 0x4, scoped, tag = 'scoped memory for discriminator_forward.5']
    #allocation4 [shape = 'u8[512]{0}', space=vmem, size = 0x400, scoped, tag = 'input window, operand 3, single buffered']
    #allocation5 [shape = 's32[1]{0}', space=sflag, size = 0x4, scoped, tag = 'scoped memory for discriminator_forward.5']
    %9 = vsyncpa [#allocation3], 0
    %10 = vsyncpa [#allocation5], 0
    // Predicated region
    $region2: #{discriminator_forward.5} parent=1 // pred_check
      _
    $region3: #{discriminator_forward.5} parent=1 // pred_check_branch
      %12 = sbr.rel (0) target = $region5
    $region4: #{discriminator_forward.5} parent=1 // pred_region
      _
    $region5: #{discriminator_forward.5} parent=1 // pred_fallthru
      _
    // Predicated region
    $region6: #{discriminator_forward.5} parent=1 // pred_check
      _
    $region7: #{discriminator_forward.5} parent=1 // pred_check_branch
      %14 = sbr.rel (0) target = $region9
    $region8: #{discriminator_forward.5} parent=1 // pred_region
      _
    $region9: #{discriminator_forward.5} parent=1 // pred_fallthru
      _
    // Predicated region
    $region10: #{discriminator_forward.5} parent=1 // pred_check
      _
    $region11: #{discriminator_forward.5} parent=1 // pred_check_branch
      %16 = sbr.rel (0) target = $region13
    $region12: #{discriminator_forward.5} parent=1 // pred_region
      %s18 = ssub.s32 16, 16
      %19 = vsyncadd [#allocation3], %s18
      %s21 = sshll.u32 [#allocation2], 4
      %s22 = int_to_ptr.vmem [resolvable:$true] %s21
      %24 = dma.hbm_to_vmem [thread:$0]  %s2, 16, %s22, [#allocation3]
    $region13: #{discriminator_forward.5} parent=1 // pred_fallthru
      _
    // Predicated region
    $region14: #{discriminator_forward.5} parent=1 // pred_check
      _
    $region15: #{discriminator_forward.5} parent=1 // pred_check_branch
      %26 = sbr.rel (0) target = $region17
    $region16: #{discriminator_forward.5} parent=1 // pred_region
      %s28 = ssub.s32 16, 16
      %29 = vsyncadd [#allocation5], %s28
      %s31 = sshll.u32 [#allocation4], 4
      %s32 = int_to_ptr.vmem [resolvable:$true] %s31
      %34 = dma.hbm_to_vmem [thread:$0]  %s3, 16, %s32, [#allocation5]
    $region17: #{discriminator_forward.5} parent=1 // pred_fallthru
      _
    // Predicated region
    $region18: #{discriminator_forward.5} parent=1 // pred_check
      _
    $region19: #{discriminator_forward.5} parent=1 // pred_check_branch
      %36 = sbr.rel (0) target = $region21
    $region20: #{discriminator_forward.5} parent=1 // pred_region
      %37 = dma.done [#allocation3], 16
    $region21: #{discriminator_forward.5} parent=1 // pred_fallthru
      _
    // Predicated region
    $region22: #{discriminator_forward.5} parent=1 // pred_check
      _
    $region23: #{discriminator_forward.5} parent=1 // pred_check_branch
      %39 = sbr.rel (0) target = $region25
    $region24: #{discriminator_forward.5} parent=1 // pred_region
      %40 = dma.done [#allocation5], 16
    $region25: #{discriminator_forward.5} parent=1 // pred_fallthru
      _
    %v42 = vld [vmem:[%s0] sm:$0xf]
    %v43 = vld [vmem:[%s0 + $0x4] sm:$0xf]
    %v44 = vld [vmem:[%s0 + $0x8] sm:$0xf]
    %v45 = vld [vmem:[%s0 + $0xc] sm:$0xf]
    %v46 = vld [vmem:[%s0 + $0x10] sm:$0xf]
    %v47 = vld [vmem:[%s0 + $0x14] sm:$0xf]
    %v48 = vld [vmem:[%s0 + $0x18] sm:$0xf]
    %v49 = vld [vmem:[%s0 + $0x1c] sm:$0xf]
    %v50 = vld [vmem:[%s0 + $0x20] sm:$0xf]
    %v51 = vld [vmem:[%s0 + $0x24] sm:$0xf]
    %v52 = vld [vmem:[%s0 + $0x28] sm:$0xf]
    %v53 = vld [vmem:[%s0 + $0x2c] sm:$0xf]
    %v54 = vld [vmem:[%s0 + $0x30] sm:$0xf]
    %v55 = vld [vmem:[%s0 + $0x34] sm:$0xf]
    %v56 = vld [vmem:[%s0 + $0x38] sm:$0xf]
    %v57 = vld [vmem:[%s0 + $0x3c] sm:$0xf]
    %v58 = vld [vmem:[%s0 + $0x40] sm:$0xf]
    %v59 = vld [vmem:[%s0 + $0x44] sm:$0xf]
    %v60 = vld [vmem:[%s0 + $0x48] sm:$0xf]
    %v61 = vld [vmem:[%s0 + $0x4c] sm:$0xf]
    %v62 = vld [vmem:[%s0 + $0x50] sm:$0xf]
    %v63 = vld [vmem:[%s0 + $0x54] sm:$0xf]
    %v64 = vld [vmem:[%s0 + $0x58] sm:$0xf]
    %v65 = vld [vmem:[%s0 + $0x5c] sm:$0xf]
    %v66 = vld [vmem:[%s0 + $0x60] sm:$0xf]
    %v67 = vld [vmem:[%s0 + $0x64] sm:$0xf]
    %v68 = vld [vmem:[%s0 + $0x68] sm:$0xf]
    %v69 = vld [vmem:[%s0 + $0x6c] sm:$0xf]
    %v70 = vld [vmem:[%s0 + $0x70] sm:$0xf]
    %v71 = vld [vmem:[%s0 + $0x74] sm:$0xf]
    %v72 = vld [vmem:[%s0 + $0x78] sm:$0xf]
    %v73 = vld [vmem:[%s0 + $0x7c] sm:$0xf]
    %v74 = vld [vmem:[%s0 + $0x80] sm:$0xf]
    %v75 = vld [vmem:[%s0 + $0x84] sm:$0xf]
    %v76 = vld [vmem:[%s0 + $0x88] sm:$0xf]
    %v77 = vld [vmem:[%s0 + $0x8c] sm:$0xf]
    %v78 = vld [vmem:[%s0 + $0x90] sm:$0xf]
    %v79 = vld [vmem:[%s0 + $0x94] sm:$0xf]
    %v80 = vld [vmem:[%s0 + $0x98] sm:$0xf]
    %v81 = vld [vmem:[%s0 + $0x9c] sm:$0xf]
    %v82 = vld [vmem:[%s0 + $0xa0] sm:$0xf]
    %v83 = vld [vmem:[%s0 + $0xa4] sm:$0xf]
    %v84 = vld [vmem:[%s0 + $0xa8] sm:$0xf]
    %v85 = vld [vmem:[%s0 + $0xac] sm:$0xf]
    %v86 = vld [vmem:[%s0 + $0xb0] sm:$0xf]
    %v87 = vld [vmem:[%s0 + $0xb4] sm:$0xf]
    %v88 = vld [vmem:[%s0 + $0xb8] sm:$0xf]
    %v89 = vld [vmem:[%s0 + $0xbc] sm:$0xf]
    %v90 = vld [vmem:[%s0 + $0xc0] sm:$0xf]
    %v91 = vld [vmem:[%s0 + $0xc4] sm:$0xf]
    %v92 = vld [vmem:[%s0 + $0xc8] sm:$0xf]
    %v93 = vld [vmem:[%s0 + $0xcc] sm:$0xf]
    %v94 = vld [vmem:[%s0 + $0xd0] sm:$0xf]
    %v95 = vld [vmem:[%s0 + $0xd4] sm:$0xf]
    %v96 = vld [vmem:[%s0 + $0xd8] sm:$0xf]
    %v97 = vld [vmem:[%s0 + $0xdc] sm:$0xf]
    %v98 = vld [vmem:[%s0 + $0xe0] sm:$0xf]
    %v99 = vld [vmem:[%s0 + $0xe4] sm:$0xf]
    %v100 = vld [vmem:[%s0 + $0xe8] sm:$0xf]
    %v101 = vld [vmem:[%s0 + $0xec] sm:$0xf]
    %v102 = vld [vmem:[%s0 + $0xf0] sm:$0xf]
    %v103 = vld [vmem:[%s0 + $0xf4] sm:$0xf]
    %v104 = vld [vmem:[%s0 + $0xf8] sm:$0xf]
    %v105 = vld [vmem:[%s0 + $0xfc] sm:$0xf]
    %v106 = vld [vmem:[%s0 + $0x100] sm:$0xf]
    %v107 = vld [vmem:[%s0 + $0x104] sm:$0xf]
    %v108 = vld [vmem:[%s0 + $0x108] sm:$0xf]
    %v109 = vld [vmem:[%s0 + $0x10c] sm:$0xf]
    %v110 = vld [vmem:[%s0 + $0x110] sm:$0xf]
    %v111 = vld [vmem:[%s0 + $0x114] sm:$0xf]
    %v112 = vld [vmem:[%s0 + $0x118] sm:$0xf]
    %v113 = vld [vmem:[%s0 + $0x11c] sm:$0xf]
    %v114 = vld [vmem:[%s0 + $0x120] sm:$0xf]
    %v115 = vld [vmem:[%s0 + $0x124] sm:$0xf]
    %v116 = vld [vmem:[%s0 + $0x128] sm:$0xf]
    %v117 = vld [vmem:[%s0 + $0x12c] sm:$0xf]
    %v118 = vld [vmem:[%s0 + $0x130] sm:$0xf]
    %v119 = vld [vmem:[%s0 + $0x134] sm:$0xf]
    %v120 = vld [vmem:[%s0 + $0x138] sm:$0xf]
    %v121 = vld [vmem:[%s0 + $0x13c] sm:$0xf]
    %v122 = vld [vmem:[%s0 + $0x140] sm:$0xf]
    %v123 = vld [vmem:[%s0 + $0x144] sm:$0xf]
    %v124 = vld [vmem:[%s0 + $0x148] sm:$0xf]
    %v125 = vld [vmem:[%s0 + $0x14c] sm:$0xf]
    %v126 = vld [vmem:[%s0 + $0x150] sm:$0xf]
    %v127 = vld [vmem:[%s0 + $0x154] sm:$0xf]
    %v128 = vld [vmem:[%s0 + $0x158] sm:$0xf]
    %v129 = vld [vmem:[%s0 + $0x15c] sm:$0xf]
    %v130 = vld [vmem:[%s0 + $0x160] sm:$0xf]
    %v131 = vld [vmem:[%s0 + $0x164] sm:$0xf]
    %v132 = vld [vmem:[%s0 + $0x168] sm:$0xf]
    %v133 = vld [vmem:[%s0 + $0x16c] sm:$0xf]
    %v134 = vld [vmem:[%s0 + $0x170] sm:$0xf]
    %v135 = vld [vmem:[%s0 + $0x174] sm:$0xf]
    %v136 = vld [vmem:[%s0 + $0x178] sm:$0xf]
    %v137 = vld [vmem:[%s0 + $0x17c] sm:$0xf]
    %v138 = vld [vmem:[%s0 + $0x180] sm:$0xf]
    %v139 = vld [vmem:[%s0 + $0x184] sm:$0xf]
    %v140 = vld [vmem:[%s0 + $0x188] sm:$0xf]
    %v141 = vld [vmem:[%s0 + $0x18c] sm:$0xf]
    %v142 = vld [vmem:[%s0 + $0x190] sm:$0xf]
    %v143 = vld [vmem:[%s0 + $0x194] sm:$0xf]
    %v144 = vld [vmem:[%s0 + $0x198] sm:$0xf]
    %v145 = vld [vmem:[%s0 + $0x19c] sm:$0xf]
    %v146 = vld [vmem:[%s0 + $0x1a0] sm:$0xf]
    %v147 = vld [vmem:[%s0 + $0x1a4] sm:$0xf]
    %v148 = vld [vmem:[%s0 + $0x1a8] sm:$0xf]
    %v149 = vld [vmem:[%s0 + $0x1ac] sm:$0xf]
    %v150 = vld [vmem:[%s0 + $0x1b0] sm:$0xf]
    %v151 = vld [vmem:[%s0 + $0x1b4] sm:$0xf]
    %v152 = vld [vmem:[%s0 + $0x1b8] sm:$0xf]
    %v153 = vld [vmem:[%s0 + $0x1bc] sm:$0xf]
    %v154 = vld [vmem:[%s0 + $0x1c0] sm:$0xf]
    %v155 = vld [vmem:[%s0 + $0x1c4] sm:$0xf]
    %v156 = vld [vmem:[%s0 + $0x1c8] sm:$0xf]
    %v157 = vld [vmem:[%s0 + $0x1cc] sm:$0xf]
    %v158 = vld [vmem:[%s0 + $0x1d0] sm:$0xf]
    %v159 = vld [vmem:[%s0 + $0x1d4] sm:$0xf]
    %v160 = vld [vmem:[%s0 + $0x1d8] sm:$0xf]
    %v161 = vld [vmem:[%s0 + $0x1dc] sm:$0xf]
    %v162 = vld [vmem:[%s0 + $0x1e0] sm:$0xf]
    %v163 = vld [vmem:[%s0 + $0x1e4] sm:$0xf]
    %v164 = vld [vmem:[%s0 + $0x1e8] sm:$0xf]
    %v165 = vld [vmem:[%s0 + $0x1ec] sm:$0xf]
    %v166 = vld [vmem:[%s0 + $0x1f0] sm:$0xf]
    %v167 = vld [vmem:[%s0 + $0x1f4] sm:$0xf]
    %v168 = vld [vmem:[%s0 + $0x1f8] sm:$0xf]
    %v169 = vld [vmem:[%s0 + $0x1fc] sm:$0xf]
    %v170 = vld [vmem:[%s0 + $0x200] sm:$0xf]
    %v171 = vld [vmem:[%s0 + $0x204] sm:$0xf]
    %v172 = vld [vmem:[%s0 + $0x208] sm:$0xf]
    %v173 = vld [vmem:[%s0 + $0x20c] sm:$0xf]
    %v174 = vld [vmem:[%s0 + $0x210] sm:$0xf]
    %v175 = vld [vmem:[%s0 + $0x214] sm:$0xf]
    %v176 = vld [vmem:[%s0 + $0x218] sm:$0xf]
    %v177 = vld [vmem:[%s0 + $0x21c] sm:$0xf]
    %v178 = vld [vmem:[%s0 + $0x220] sm:$0xf]
    %v179 = vld [vmem:[%s0 + $0x224] sm:$0xf]
    %v180 = vld [vmem:[%s0 + $0x228] sm:$0xf]
    %v181 = vld [vmem:[%s0 + $0x22c] sm:$0xf]
    %v182 = vld [vmem:[%s0 + $0x230] sm:$0xf]
    %v183 = vld [vmem:[%s0 + $0x234] sm:$0xf]
    %v184 = vld [vmem:[%s0 + $0x238] sm:$0xf]
    %v185 = vld [vmem:[%s0 + $0x23c] sm:$0xf]
    %v186 = vld [vmem:[%s0 + $0x240] sm:$0xf]
    %v187 = vld [vmem:[%s0 + $0x244] sm:$0xf]
    %v188 = vld [vmem:[%s0 + $0x248] sm:$0xf]
    %v189 = vld [vmem:[%s0 + $0x24c] sm:$0xf]
    %v190 = vld [vmem:[%s0 + $0x250] sm:$0xf]
    %v191 = vld [vmem:[%s0 + $0x254] sm:$0xf]
    %v192 = vld [vmem:[%s0 + $0x258] sm:$0xf]
    %v193 = vld [vmem:[%s0 + $0x25c] sm:$0xf]
    %v194 = vld [vmem:[%s0 + $0x260] sm:$0xf]
    %v195 = vld [vmem:[%s0 + $0x264] sm:$0xf]
    %v196 = vld [vmem:[%s0 + $0x268] sm:$0xf]
    %v197 = vld [vmem:[%s0 + $0x26c] sm:$0xf]
    %v198 = vld [vmem:[%s0 + $0x270] sm:$0xf]
    %v199 = vld [vmem:[%s0 + $0x274] sm:$0xf]
    %v200 = vld [vmem:[%s0 + $0x278] sm:$0xf]
    %v201 = vld [vmem:[%s0 + $0x27c] sm:$0xf]
    %v202 = vld [vmem:[%s0 + $0x280] sm:$0xf]
    %v203 = vld [vmem:[%s0 + $0x284] sm:$0xf]
    %v204 = vld [vmem:[%s0 + $0x288] sm:$0xf]
    %v205 = vld [vmem:[%s0 + $0x28c] sm:$0xf]
    %v206 = vld [vmem:[%s0 + $0x290] sm:$0xf]
    %v207 = vld [vmem:[%s0 + $0x294] sm:$0xf]
    %v208 = vld [vmem:[%s0 + $0x298] sm:$0xf]
    %v209 = vld [vmem:[%s0 + $0x29c] sm:$0xf]
    %v210 = vld [vmem:[%s0 + $0x2a0] sm:$0xf]
    %v211 = vld [vmem:[%s0 + $0x2a4] sm:$0xf]
    %v212 = vld [vmem:[%s0 + $0x2a8] sm:$0xf]
    %v213 = vld [vmem:[%s0 + $0x2ac] sm:$0xf]
    %v214 = vld [vmem:[%s0 + $0x2b0] sm:$0xf]
    %v215 = vld [vmem:[%s0 + $0x2b4] sm:$0xf]
    %v216 = vld [vmem:[%s0 + $0x2b8] sm:$0xf]
    %v217 = vld [vmem:[%s0 + $0x2bc] sm:$0xf]
    %v218 = vld [vmem:[%s0 + $0x2c0] sm:$0xf]
    %v219 = vld [vmem:[%s0 + $0x2c4] sm:$0xf]
    %v220 = vld [vmem:[%s0 + $0x2c8] sm:$0xf]
    %v221 = vld [vmem:[%s0 + $0x2cc] sm:$0xf]
    %v222 = vld [vmem:[%s0 + $0x2d0] sm:$0xf]
    %v223 = vld [vmem:[%s0 + $0x2d4] sm:$0xf]
    %v224 = vld [vmem:[%s0 + $0x2d8] sm:$0xf]
    %v225 = vld [vmem:[%s0 + $0x2dc] sm:$0xf]
    %v226 = vld [vmem:[%s0 + $0x2e0] sm:$0xf]
    %v227 = vld [vmem:[%s0 + $0x2e4] sm:$0xf]
    %v228 = vld [vmem:[%s0 + $0x2e8] sm:$0xf]
    %v229 = vld [vmem:[%s0 + $0x2ec] sm:$0xf]
    %v230 = vld [vmem:[%s0 + $0x2f0] sm:$0xf]
    %v231 = vld [vmem:[%s0 + $0x2f4] sm:$0xf]
    %v232 = vld [vmem:[%s0 + $0x2f8] sm:$0xf]
    %v233 = vld [vmem:[%s0 + $0x2fc] sm:$0xf]
    %v234 = vld [vmem:[%s0 + $0x300] sm:$0xf]
    %v235 = vld [vmem:[%s0 + $0x304] sm:$0xf]
    %v236 = vld [vmem:[%s0 + $0x308] sm:$0xf]
    %v237 = vld [vmem:[%s0 + $0x30c] sm:$0xf]
    %v238 = vld [vmem:[%s0 + $0x310] sm:$0xf]
    %v239 = vld [vmem:[%s0 + $0x314] sm:$0xf]
    %v240 = vld [vmem:[%s0 + $0x318] sm:$0xf]
    %v241 = vld [vmem:[%s0 + $0x31c] sm:$0xf]
    %v242 = vld [vmem:[%s0 + $0x320] sm:$0xf]
    %v243 = vld [vmem:[%s0 + $0x324] sm:$0xf]
    %v244 = vld [vmem:[%s0 + $0x328] sm:$0xf]
    %v245 = vld [vmem:[%s0 + $0x32c] sm:$0xf]
    %v246 = vld [vmem:[%s0 + $0x330] sm:$0xf]
    %v247 = vld [vmem:[%s0 + $0x334] sm:$0xf]
    %v248 = vld [vmem:[%s0 + $0x338] sm:$0xf]
    %v249 = vld [vmem:[%s0 + $0x33c] sm:$0xf]
    %v250 = vld [vmem:[%s0 + $0x340] sm:$0xf]
    %v251 = vld [vmem:[%s0 + $0x344] sm:$0xf]
    %v252 = vld [vmem:[%s0 + $0x348] sm:$0xf]
    %v253 = vld [vmem:[%s0 + $0x34c] sm:$0xf]
    %v254 = vld [vmem:[%s0 + $0x350] sm:$0xf]
    %v255 = vld [vmem:[%s0 + $0x354] sm:$0xf]
    %v256 = vld [vmem:[%s0 + $0x358] sm:$0xf]
    %v257 = vld [vmem:[%s0 + $0x35c] sm:$0xf]
    %v258 = vld [vmem:[%s0 + $0x360] sm:$0xf]
    %v259 = vld [vmem:[%s0 + $0x364] sm:$0xf]
    %v260 = vld [vmem:[%s0 + $0x368] sm:$0xf]
    %v261 = vld [vmem:[%s0 + $0x36c] sm:$0xf]
    %v262 = vld [vmem:[%s0 + $0x370] sm:$0xf]
    %v263 = vld [vmem:[%s0 + $0x374] sm:$0xf]
    %v264 = vld [vmem:[%s0 + $0x378] sm:$0xf]
    %v265 = vld [vmem:[%s0 + $0x37c] sm:$0xf]
    %v266 = vld [vmem:[%s0 + $0x380] sm:$0xf]
    %v267 = vld [vmem:[%s0 + $0x384] sm:$0xf]
    %v268 = vld [vmem:[%s0 + $0x388] sm:$0xf]
    %v269 = vld [vmem:[%s0 + $0x38c] sm:$0xf]
    %v270 = vld [vmem:[%s0 + $0x390] sm:$0xf]
    %v271 = vld [vmem:[%s0 + $0x394] sm:$0xf]
    %v272 = vld [vmem:[%s0 + $0x398] sm:$0xf]
    %v273 = vld [vmem:[%s0 + $0x39c] sm:$0xf]
    %v274 = vld [vmem:[%s0 + $0x3a0] sm:$0xf]
    %v275 = vld [vmem:[%s0 + $0x3a4] sm:$0xf]
    %v276 = vld [vmem:[%s0 + $0x3a8] sm:$0xf]
    %v277 = vld [vmem:[%s0 + $0x3ac] sm:$0xf]
    %v278 = vld [vmem:[%s0 + $0x3b0] sm:$0xf]
    %v279 = vld [vmem:[%s0 + $0x3b4] sm:$0xf]
    %v280 = vld [vmem:[%s0 + $0x3b8] sm:$0xf]
    %v281 = vld [vmem:[%s0 + $0x3bc] sm:$0xf]
    %v282 = vld [vmem:[%s0 + $0x3c0] sm:$0xf]
    %v283 = vld [vmem:[%s0 + $0x3c4] sm:$0xf]
    %v284 = vld [vmem:[%s0 + $0x3c8] sm:$0xf]
    %v285 = vld [vmem:[%s0 + $0x3cc] sm:$0xf]
    %v286 = vld [vmem:[%s0 + $0x3d0] sm:$0xf]
    %v287 = vld [vmem:[%s0 + $0x3d4] sm:$0xf]
    %v288 = vld [vmem:[%s0 + $0x3d8] sm:$0xf]
    %v289 = vld [vmem:[%s0 + $0x3dc] sm:$0xf]
    %v290 = vld [vmem:[%s0 + $0x3e0] sm:$0xf]
    %v291 = vld [vmem:[%s0 + $0x3e4] sm:$0xf]
    %v292 = vld [vmem:[%s0 + $0x3e8] sm:$0xf]
    %v293 = vld [vmem:[%s0 + $0x3ec] sm:$0xf]
    %v294 = vld [vmem:[%s0 + $0x3f0] sm:$0xf]
    %v295 = vld [vmem:[%s0 + $0x3f4] sm:$0xf]
    %v296 = vld [vmem:[%s0 + $0x3f8] sm:$0xf]
    %v297 = vld [vmem:[%s0 + $0x3fc] sm:$0xf]
    %v298 = vld [vmem:[%s1] sm:$0xf]
    %v299 = vld [vmem:[%s1 + $0x4] sm:$0xf]
    %v556 = vunpack.c.l.b16 %v42
    %v557 = vunpack.c.l.b16 %v43
    %v558 = vunpack.c.l.b16 %v44
    %v559 = vunpack.c.l.b16 %v45
    %v560 = vunpack.c.l.b16 %v46
    %v561 = vunpack.c.l.b16 %v47
    %v562 = vunpack.c.l.b16 %v48
    %v563 = vunpack.c.l.b16 %v49
    %v564 = vunpack.c.l.b16 %v50
    %v565 = vunpack.c.l.b16 %v51
    %v566 = vunpack.c.l.b16 %v52
    %v567 = vunpack.c.l.b16 %v53
    %v568 = vunpack.c.l.b16 %v54
    %v569 = vunpack.c.l.b16 %v55
    %v570 = vunpack.c.l.b16 %v56
    %v571 = vunpack.c.l.b16 %v57
    %v572 = vunpack.c.l.b16 %v58
    %v573 = vunpack.c.l.b16 %v59
    %v574 = vunpack.c.l.b16 %v60
    %v575 = vunpack.c.l.b16 %v61
    %v576 = vunpack.c.l.b16 %v62
    %v577 = vunpack.c.l.b16 %v63
    %v578 = vunpack.c.l.b16 %v64
    %v579 = vunpack.c.l.b16 %v65
    %v580 = vunpack.c.l.b16 %v66
    %v581 = vunpack.c.l.b16 %v67
    %v582 = vunpack.c.l.b16 %v68
    %v583 = vunpack.c.l.b16 %v69
    %v584 = vunpack.c.l.b16 %v70
    %v585 = vunpack.c.l.b16 %v71
    %v586 = vunpack.c.l.b16 %v72
    %v587 = vunpack.c.l.b16 %v73
    %v588 = vunpack.c.l.b16 %v74
    %v589 = vunpack.c.l.b16 %v75
    %v590 = vunpack.c.l.b16 %v76
    %v591 = vunpack.c.l.b16 %v77
    %v592 = vunpack.c.l.b16 %v78
    %v593 = vunpack.c.l.b16 %v79
    %v594 = vunpack.c.l.b16 %v80
    %v595 = vunpack.c.l.b16 %v81
    %v596 = vunpack.c.l.b16 %v82
    %v597 = vunpack.c.l.b16 %v83
    %v598 = vunpack.c.l.b16 %v84
    %v599 = vunpack.c.l.b16 %v85
    %v600 = vunpack.c.l.b16 %v86
    %v601 = vunpack.c.l.b16 %v87
    %v602 = vunpack.c.l.b16 %v88
    %v603 = vunpack.c.l.b16 %v89
    %v604 = vunpack.c.l.b16 %v90
    %v605 = vunpack.c.l.b16 %v91
    %v606 = vunpack.c.l.b16 %v92
    %v607 = vunpack.c.l.b16 %v93
    %v608 = vunpack.c.l.b16 %v94
    %v609 = vunpack.c.l.b16 %v95
    %v610 = vunpack.c.l.b16 %v96
    %v611 = vunpack.c.l.b16 %v97
    %v612 = vunpack.c.l.b16 %v98
    %v613 = vunpack.c.l.b16 %v99
    %v614 = vunpack.c.l.b16 %v100
    %v615 = vunpack.c.l.b16 %v101
    %v616 = vunpack.c.l.b16 %v102
    %v617 = vunpack.c.l.b16 %v103
    %v618 = vunpack.c.l.b16 %v104
    %v619 = vunpack.c.l.b16 %v105
    %v620 = vunpack.c.l.b16 %v106
    %v621 = vunpack.c.l.b16 %v107
    %v622 = vunpack.c.l.b16 %v108
    %v623 = vunpack.c.l.b16 %v109
    %v624 = vunpack.c.l.b16 %v110
    %v625 = vunpack.c.l.b16 %v111
    %v626 = vunpack.c.l.b16 %v112
    %v627 = vunpack.c.l.b16 %v113
    %v628 = vunpack.c.l.b16 %v114
    %v629 = vunpack.c.l.b16 %v115
    %v630 = vunpack.c.l.b16 %v116
    %v631 = vunpack.c.l.b16 %v117
    %v632 = vunpack.c.l.b16 %v118
    %v633 = vunpack.c.l.b16 %v119
    %v634 = vunpack.c.l.b16 %v120
    %v635 = vunpack.c.l.b16 %v121
    %v636 = vunpack.c.l.b16 %v122
    %v637 = vunpack.c.l.b16 %v123
    %v638 = vunpack.c.l.b16 %v124
    %v639 = vunpack.c.l.b16 %v125
    %v640 = vunpack.c.l.b16 %v126
    %v641 = vunpack.c.l.b16 %v127
    %v642 = vunpack.c.l.b16 %v128
    %v643 = vunpack.c.l.b16 %v129
    %v644 = vunpack.c.l.b16 %v130
    %v645 = vunpack.c.l.b16 %v131
    %v646 = vunpack.c.l.b16 %v132
    %v647 = vunpack.c.l.b16 %v133
    %v648 = vunpack.c.l.b16 %v134
    %v649 = vunpack.c.l.b16 %v135
    %v650 = vunpack.c.l.b16 %v136
    %v651 = vunpack.c.l.b16 %v137
    %v652 = vunpack.c.l.b16 %v138
    %v653 = vunpack.c.l.b16 %v139
    %v654 = vunpack.c.l.b16 %v140
    %v655 = vunpack.c.l.b16 %v141
    %v656 = vunpack.c.l.b16 %v142
    %v657 = vunpack.c.l.b16 %v143
    %v658 = vunpack.c.l.b16 %v144
    %v659 = vunpack.c.l.b16 %v145
    %v660 = vunpack.c.l.b16 %v146
    %v661 = vunpack.c.l.b16 %v147
    %v662 = vunpack.c.l.b16 %v148
    %v663 = vunpack.c.l.b16 %v149
    %v664 = vunpack.c.l.b16 %v150
    %v665 = vunpack.c.l.b16 %v151
    %v666 = vunpack.c.l.b16 %v152
    %v667 = vunpack.c.l.b16 %v153
    %v668 = vunpack.c.l.b16 %v154
    %v669 = vunpack.c.l.b16 %v155
    %v670 = vunpack.c.l.b16 %v156
    %v671 = vunpack.c.l.b16 %v157
    %v672 = vunpack.c.l.b16 %v158
    %v673 = vunpack.c.l.b16 %v159
    %v674 = vunpack.c.l.b16 %v160
    %v675 = vunpack.c.l.b16 %v161
    %v676 = vunpack.c.l.b16 %v162
    %v677 = vunpack.c.l.b16 %v163
    %v678 = vunpack.c.l.b16 %v164
    %v679 = vunpack.c.l.b16 %v165
    %v680 = vunpack.c.l.b16 %v166
    %v681 = vunpack.c.l.b16 %v167
    %v682 = vunpack.c.l.b16 %v168
    %v683 = vunpack.c.l.b16 %v169
    %v684 = vunpack.c.l.b16 %v170
    %v685 = vunpack.c.l.b16 %v171
    %v686 = vunpack.c.l.b16 %v172
    %v687 = vunpack.c.l.b16 %v173
    %v688 = vunpack.c.l.b16 %v174
    %v689 = vunpack.c.l.b16 %v175
    %v690 = vunpack.c.l.b16 %v176
    %v691 = vunpack.c.l.b16 %v177
    %v692 = vunpack.c.l.b16 %v178
    %v693 = vunpack.c.l.b16 %v179
    %v694 = vunpack.c.l.b16 %v180
    %v695 = vunpack.c.l.b16 %v181
    %v696 = vunpack.c.l.b16 %v182
    %v697 = vunpack.c.l.b16 %v183
    %v698 = vunpack.c.l.b16 %v184
    %v699 = vunpack.c.l.b16 %v185
    %v700 = vunpack.c.l.b16 %v186
    %v701 = vunpack.c.l.b16 %v187
    %v702 = vunpack.c.l.b16 %v188
    %v703 = vunpack.c.l.b16 %v189
    %v704 = vunpack.c.l.b16 %v190
    %v705 = vunpack.c.l.b16 %v191
    %v706 = vunpack.c.l.b16 %v192
    %v707 = vunpack.c.l.b16 %v193
    %v708 = vunpack.c.l.b16 %v194
    %v709 = vunpack.c.l.b16 %v195
    %v710 = vunpack.c.l.b16 %v196
    %v711 = vunpack.c.l.b16 %v197
    %v712 = vunpack.c.l.b16 %v198
    %v713 = vunpack.c.l.b16 %v199
    %v714 = vunpack.c.l.b16 %v200
    %v715 = vunpack.c.l.b16 %v201
    %v716 = vunpack.c.l.b16 %v202
    %v717 = vunpack.c.l.b16 %v203
    %v718 = vunpack.c.l.b16 %v204
    %v719 = vunpack.c.l.b16 %v205
    %v720 = vunpack.c.l.b16 %v206
    %v721 = vunpack.c.l.b16 %v207
    %v722 = vunpack.c.l.b16 %v208
    %v723 = vunpack.c.l.b16 %v209
    %v724 = vunpack.c.l.b16 %v210
    %v725 = vunpack.c.l.b16 %v211
    %v726 = vunpack.c.l.b16 %v212
    %v727 = vunpack.c.l.b16 %v213
    %v728 = vunpack.c.l.b16 %v214
    %v729 = vunpack.c.l.b16 %v215
    %v730 = vunpack.c.l.b16 %v216
    %v731 = vunpack.c.l.b16 %v217
    %v732 = vunpack.c.l.b16 %v218
    %v733 = vunpack.c.l.b16 %v219
    %v734 = vunpack.c.l.b16 %v220
    %v735 = vunpack.c.l.b16 %v221
    %v736 = vunpack.c.l.b16 %v222
    %v737 = vunpack.c.l.b16 %v223
    %v738 = vunpack.c.l.b16 %v224
    %v739 = vunpack.c.l.b16 %v225
    %v740 = vunpack.c.l.b16 %v226
    %v741 = vunpack.c.l.b16 %v227
    %v742 = vunpack.c.l.b16 %v228
    %v743 = vunpack.c.l.b16 %v229
    %v744 = vunpack.c.l.b16 %v230
    %v745 = vunpack.c.l.b16 %v231
    %v746 = vunpack.c.l.b16 %v232
    %v747 = vunpack.c.l.b16 %v233
    %v748 = vunpack.c.l.b16 %v234
    %v749 = vunpack.c.l.b16 %v235
    %v750 = vunpack.c.l.b16 %v236
    %v751 = vunpack.c.l.b16 %v237
    %v752 = vunpack.c.l.b16 %v238
    %v753 = vunpack.c.l.b16 %v239
    %v754 = vunpack.c.l.b16 %v240
    %v755 = vunpack.c.l.b16 %v241
    %v756 = vunpack.c.l.b16 %v242
    %v757 = vunpack.c.l.b16 %v243
    %v758 = vunpack.c.l.b16 %v244
    %v759 = vunpack.c.l.b16 %v245
    %v760 = vunpack.c.l.b16 %v246
    %v761 = vunpack.c.l.b16 %v247
    %v762 = vunpack.c.l.b16 %v248
    %v763 = vunpack.c.l.b16 %v249
    %v764 = vunpack.c.l.b16 %v250
    %v765 = vunpack.c.l.b16 %v251
    %v766 = vunpack.c.l.b16 %v252
    %v767 = vunpack.c.l.b16 %v253
    %v768 = vunpack.c.l.b16 %v254
    %v769 = vunpack.c.l.b16 %v255
    %v770 = vunpack.c.l.b16 %v256
    %v771 = vunpack.c.l.b16 %v257
    %v772 = vunpack.c.l.b16 %v258
    %v773 = vunpack.c.l.b16 %v259
    %v774 = vunpack.c.l.b16 %v260
    %v775 = vunpack.c.l.b16 %v261
    %v776 = vunpack.c.l.b16 %v262
    %v777 = vunpack.c.l.b16 %v263
    %v778 = vunpack.c.l.b16 %v264
    %v779 = vunpack.c.l.b16 %v265
    %v780 = vunpack.c.l.b16 %v266
    %v781 = vunpack.c.l.b16 %v267
    %v782 = vunpack.c.l.b16 %v268
    %v783 = vunpack.c.l.b16 %v269
    %v784 = vunpack.c.l.b16 %v270
    %v785 = vunpack.c.l.b16 %v271
    %v786 = vunpack.c.l.b16 %v272
    %v787 = vunpack.c.l.b16 %v273
    %v788 = vunpack.c.l.b16 %v274
    %v789 = vunpack.c.l.b16 %v275
    %v790 = vunpack.c.l.b16 %v276
    %v791 = vunpack.c.l.b16 %v277
    %v792 = vunpack.c.l.b16 %v278
    %v793 = vunpack.c.l.b16 %v279
    %v794 = vunpack.c.l.b16 %v280
    %v795 = vunpack.c.l.b16 %v281
    %v796 = vunpack.c.l.b16 %v282
    %v797 = vunpack.c.l.b16 %v283
    %v798 = vunpack.c.l.b16 %v284
    %v799 = vunpack.c.l.b16 %v285
    %v800 = vunpack.c.l.b16 %v286
    %v801 = vunpack.c.l.b16 %v287
    %v802 = vunpack.c.l.b16 %v288
    %v803 = vunpack.c.l.b16 %v289
    %v804 = vunpack.c.l.b16 %v290
    %v805 = vunpack.c.l.b16 %v291
    %v806 = vunpack.c.l.b16 %v292
    %v807 = vunpack.c.l.b16 %v293
    %v808 = vunpack.c.l.b16 %v294
    %v809 = vunpack.c.l.b16 %v295
    %v810 = vunpack.c.l.b16 %v296
    %v811 = vunpack.c.l.b16 %v297
    %v812 = vpack.c.b16 %v557, %v556
    %v813 = vpack.c.b16 %v559, %v558
    %v814 = vpack.c.b16 %v561, %v560
    %v815 = vpack.c.b16 %v563, %v562
    %v816 = vpack.c.b16 %v565, %v564
    %v817 = vpack.c.b16 %v567, %v566
    %v818 = vpack.c.b16 %v569, %v568
    %v819 = vpack.c.b16 %v571, %v570
    %v820 = vpack.c.b16 %v573, %v572
    %v821 = vpack.c.b16 %v575, %v574
    %v822 = vpack.c.b16 %v577, %v576
    %v823 = vpack.c.b16 %v579, %v578
    %v824 = vpack.c.b16 %v581, %v580
    %v825 = vpack.c.b16 %v583, %v582
    %v826 = vpack.c.b16 %v585, %v584
    %v827 = vpack.c.b16 %v587, %v586
    %v828 = vpack.c.b16 %v589, %v588
    %v829 = vpack.c.b16 %v591, %v590
    %v830 = vpack.c.b16 %v593, %v592
    %v831 = vpack.c.b16 %v595, %v594
    %v832 = vpack.c.b16 %v597, %v596
    %v833 = vpack.c.b16 %v599, %v598
    %v834 = vpack.c.b16 %v601, %v600
    %v835 = vpack.c.b16 %v603, %v602
    %v836 = vpack.c.b16 %v605, %v604
    %v837 = vpack.c.b16 %v607, %v606
    %v838 = vpack.c.b16 %v609, %v608
    %v839 = vpack.c.b16 %v611, %v610
    %v840 = vpack.c.b16 %v613, %v612
    %v841 = vpack.c.b16 %v615, %v614
    %v842 = vpack.c.b16 %v617, %v616
    %v843 = vpack.c.b16 %v619, %v618
    %v844 = vpack.c.b16 %v621, %v620
    %v845 = vpack.c.b16 %v623, %v622
    %v846 = vpack.c.b16 %v625, %v624
    %v847 = vpack.c.b16 %v627, %v626
    %v848 = vpack.c.b16 %v629, %v628
    %v849 = vpack.c.b16 %v631, %v630
    %v850 = vpack.c.b16 %v633, %v632
    %v851 = vpack.c.b16 %v635, %v634
    %v852 = vpack.c.b16 %v637, %v636
    %v853 = vpack.c.b16 %v639, %v638
    %v854 = vpack.c.b16 %v641, %v640
    %v855 = vpack.c.b16 %v643, %v642
    %v856 = vpack.c.b16 %v645, %v644
    %v857 = vpack.c.b16 %v647, %v646
    %v858 = vpack.c.b16 %v649, %v648
    %v859 = vpack.c.b16 %v651, %v650
    %v860 = vpack.c.b16 %v653, %v652
    %v861 = vpack.c.b16 %v655, %v654
    %v862 = vpack.c.b16 %v657, %v656
    %v863 = vpack.c.b16 %v659, %v658
    %v864 = vpack.c.b16 %v661, %v660
    %v865 = vpack.c.b16 %v663, %v662
    %v866 = vpack.c.b16 %v665, %v664
    %v867 = vpack.c.b16 %v667, %v666
    %v868 = vpack.c.b16 %v669, %v668
    %v869 = vpack.c.b16 %v671, %v670
    %v870 = vpack.c.b16 %v673, %v672
    %v871 = vpack.c.b16 %v675, %v674
    %v872 = vpack.c.b16 %v677, %v676
    %v873 = vpack.c.b16 %v679, %v678
    %v874 = vpack.c.b16 %v681, %v680
    %v875 = vpack.c.b16 %v683, %v682
    %v876 = vpack.c.b16 %v685, %v684
    %v877 = vpack.c.b16 %v687, %v686
    %v878 = vpack.c.b16 %v689, %v688
    %v879 = vpack.c.b16 %v691, %v690
    %v880 = vpack.c.b16 %v693, %v692
    %v881 = vpack.c.b16 %v695, %v694
    %v882 = vpack.c.b16 %v697, %v696
    %v883 = vpack.c.b16 %v699, %v698
    %v884 = vpack.c.b16 %v701, %v700
    %v885 = vpack.c.b16 %v703, %v702
    %v886 = vpack.c.b16 %v705, %v704
    %v887 = vpack.c.b16 %v707, %v706
    %v888 = vpack.c.b16 %v709, %v708
    %v889 = vpack.c.b16 %v711, %v710
    %v890 = vpack.c.b16 %v713, %v712
    %v891 = vpack.c.b16 %v715, %v714
    %v892 = vpack.c.b16 %v717, %v716
    %v893 = vpack.c.b16 %v719, %v718
    %v894 = vpack.c.b16 %v721, %v720
    %v895 = vpack.c.b16 %v723, %v722
    %v896 = vpack.c.b16 %v725, %v724
    %v897 = vpack.c.b16 %v727, %v726
    %v898 = vpack.c.b16 %v729, %v728
    %v899 = vpack.c.b16 %v731, %v730
    %v900 = vpack.c.b16 %v733, %v732
    %v901 = vpack.c.b16 %v735, %v734
    %v902 = vpack.c.b16 %v737, %v736
    %v903 = vpack.c.b16 %v739, %v738
    %v904 = vpack.c.b16 %v741, %v740
    %v905 = vpack.c.b16 %v743, %v742
    %v906 = vpack.c.b16 %v745, %v744
    %v907 = vpack.c.b16 %v747, %v746
    %v908 = vpack.c.b16 %v749, %v748
    %v909 = vpack.c.b16 %v751, %v750
    %v910 = vpack.c.b16 %v753, %v752
    %v911 = vpack.c.b16 %v755, %v754
    %v912 = vpack.c.b16 %v757, %v756
    %v913 = vpack.c.b16 %v759, %v758
    %v914 = vpack.c.b16 %v761, %v760
    %v915 = vpack.c.b16 %v763, %v762
    %v916 = vpack.c.b16 %v765, %v764
    %v917 = vpack.c.b16 %v767, %v766
    %v918 = vpack.c.b16 %v769, %v768
    %v919 = vpack.c.b16 %v771, %v770
    %v920 = vpack.c.b16 %v773, %v772
    %v921 = vpack.c.b16 %v775, %v774
    %v922 = vpack.c.b16 %v777, %v776
    %v923 = vpack.c.b16 %v779, %v778
    %v924 = vpack.c.b16 %v781, %v780
    %v925 = vpack.c.b16 %v783, %v782
    %v926 = vpack.c.b16 %v785, %v784
    %v927 = vpack.c.b16 %v787, %v786
    %v928 = vpack.c.b16 %v789, %v788
    %v929 = vpack.c.b16 %v791, %v790
    %v930 = vpack.c.b16 %v793, %v792
    %v931 = vpack.c.b16 %v795, %v794
    %v932 = vpack.c.b16 %v797, %v796
    %v933 = vpack.c.b16 %v799, %v798
    %v934 = vpack.c.b16 %v801, %v800
    %v935 = vpack.c.b16 %v803, %v802
    %v936 = vpack.c.b16 %v805, %v804
    %v937 = vpack.c.b16 %v807, %v806
    %v938 = vpack.c.b16 %v809, %v808
    %v939 = vpack.c.b16 %v811, %v810
    %v942 = vunpack.c.l.b16 %v298
    %v943 = vunpack.c.l.b16 %v299
    %v944 = vpack.c.b16 %v943, %v942
    %vm946 = vcmask 130048
    %v948 = vsel %vm946, %v812, 0
    %v951 = vsel %vm946, %v813, 0
    %v954 = vsel %vm946, %v814, 0
    %v957 = vsel %vm946, %v815, 0
    %v960 = vsel %vm946, %v816, 0
    %v963 = vsel %vm946, %v817, 0
    %v966 = vsel %vm946, %v818, 0
    %v969 = vsel %vm946, %v819, 0
    %v972 = vsel %vm946, %v820, 0
    %v975 = vsel %vm946, %v821, 0
    %v978 = vsel %vm946, %v822, 0
    %v981 = vsel %vm946, %v823, 0
    %v984 = vsel %vm946, %v824, 0
    %v987 = vsel %vm946, %v825, 0
    %v990 = vsel %vm946, %v826, 0
    %v993 = vsel %vm946, %v827, 0
    %v996 = vsel %vm946, %v828, 0
    %v999 = vsel %vm946, %v829, 0
    %v1002 = vsel %vm946, %v830, 0
    %v1005 = vsel %vm946, %v831, 0
    %v1008 = vsel %vm946, %v832, 0
    %v1011 = vsel %vm946, %v833, 0
    %v1014 = vsel %vm946, %v834, 0
    %v1017 = vsel %vm946, %v835, 0
    %v1020 = vsel %vm946, %v836, 0
    %v1023 = vsel %vm946, %v837, 0
    %v1026 = vsel %vm946, %v838, 0
    %v1029 = vsel %vm946, %v839, 0
    %v1032 = vsel %vm946, %v840, 0
    %v1035 = vsel %vm946, %v841, 0
    %v1038 = vsel %vm946, %v842, 0
    %v1041 = vsel %vm946, %v843, 0
    %v1044 = vsel %vm946, %v844, 0
    %v1047 = vsel %vm946, %v845, 0
    %v1050 = vsel %vm946, %v846, 0
    %v1053 = vsel %vm946, %v847, 0
    %v1056 = vsel %vm946, %v848, 0
    %v1059 = vsel %vm946, %v849, 0
    %v1062 = vsel %vm946, %v850, 0
    %v1065 = vsel %vm946, %v851, 0
    %v1068 = vsel %vm946, %v852, 0
    %v1071 = vsel %vm946, %v853, 0
    %v1074 = vsel %vm946, %v854, 0
    %v1077 = vsel %vm946, %v855, 0
    %v1080 = vsel %vm946, %v856, 0
    %v1083 = vsel %vm946, %v857, 0
    %v1086 = vsel %vm946, %v858, 0
    %v1089 = vsel %vm946, %v859, 0
    %v1092 = vsel %vm946, %v860, 0
    %v1095 = vsel %vm946, %v861, 0
    %v1098 = vsel %vm946, %v862, 0
    %v1101 = vsel %vm946, %v863, 0
    %v1104 = vsel %vm946, %v864, 0
    %v1107 = vsel %vm946, %v865, 0
    %v1110 = vsel %vm946, %v866, 0
    %v1113 = vsel %vm946, %v867, 0
    %v1116 = vsel %vm946, %v868, 0
    %v1119 = vsel %vm946, %v869, 0
    %v1122 = vsel %vm946, %v870, 0
    %v1125 = vsel %vm946, %v871, 0
    %v1128 = vsel %vm946, %v872, 0
    %v1131 = vsel %vm946, %v873, 0
    %v1134 = vsel %vm946, %v874, 0
    %v1137 = vsel %vm946, %v875, 0
    %v1140 = vsel %vm946, %v876, 0
    %v1143 = vsel %vm946, %v877, 0
    %v1146 = vsel %vm946, %v878, 0
    %v1149 = vsel %vm946, %v879, 0
    %v1152 = vsel %vm946, %v880, 0
    %v1155 = vsel %vm946, %v881, 0
    %v1158 = vsel %vm946, %v882, 0
    %v1161 = vsel %vm946, %v883, 0
    %v1164 = vsel %vm946, %v884, 0
    %v1167 = vsel %vm946, %v885, 0
    %v1170 = vsel %vm946, %v886, 0
    %v1173 = vsel %vm946, %v887, 0
    %v1176 = vsel %vm946, %v888, 0
    %v1179 = vsel %vm946, %v889, 0
    %v1182 = vsel %vm946, %v890, 0
    %v1185 = vsel %vm946, %v891, 0
    %v1188 = vsel %vm946, %v892, 0
    %v1191 = vsel %vm946, %v893, 0
    %v1194 = vsel %vm946, %v894, 0
    %v1197 = vsel %vm946, %v895, 0
    %v1200 = vsel %vm946, %v896, 0
    %v1203 = vsel %vm946, %v897, 0
    %v1206 = vsel %vm946, %v898, 0
    %v1209 = vsel %vm946, %v899, 0
    %v1212 = vsel %vm946, %v900, 0
    %v1215 = vsel %vm946, %v901, 0
    %v1218 = vsel %vm946, %v902, 0
    %v1221 = vsel %vm946, %v903, 0
    %v1224 = vsel %vm946, %v904, 0
    %v1227 = vsel %vm946, %v905, 0
    %v1230 = vsel %vm946, %v906, 0
    %v1233 = vsel %vm946, %v907, 0
    %v1236 = vsel %vm946, %v908, 0
    %v1239 = vsel %vm946, %v909, 0
    %v1242 = vsel %vm946, %v910, 0
    %v1245 = vsel %vm946, %v911, 0
    %v1248 = vsel %vm946, %v912, 0
    %v1251 = vsel %vm946, %v913, 0
    %v1254 = vsel %vm946, %v914, 0
    %v1257 = vsel %vm946, %v915, 0
    %v1260 = vsel %vm946, %v916, 0
    %v1263 = vsel %vm946, %v917, 0
    %v1266 = vsel %vm946, %v918, 0
    %v1269 = vsel %vm946, %v919, 0
    %v1272 = vsel %vm946, %v920, 0
    %v1275 = vsel %vm946, %v921, 0
    %v1278 = vsel %vm946, %v922, 0
    %v1281 = vsel %vm946, %v923, 0
    %v1284 = vsel %vm946, %v924, 0
    %v1287 = vsel %vm946, %v925, 0
    %v1290 = vsel %vm946, %v926, 0
    %v1293 = vsel %vm946, %v927, 0
    %v1296 = vsel %vm946, %v928, 0
    %v1299 = vsel %vm946, %v929, 0
    %v1302 = vsel %vm946, %v930, 0
    %v1305 = vsel %vm946, %v931, 0
    %v1308 = vsel %vm946, %v932, 0
    %v1311 = vsel %vm946, %v933, 0
    %v1314 = vsel %vm946, %v934, 0
    %v1317 = vsel %vm946, %v935, 0
    %v1320 = vsel %vm946, %v936, 0
    %v1323 = vsel %vm946, %v937, 0
    %v1326 = vsel %vm946, %v938, 0
    %v1329 = vsel %vm946, %v939, 0
    %1331 = vmatprep.subr.bf16.mxu0 0
    %1332 = vmatpush1.bf16.msra.mxu0 0
    %1333 = vmatprep.subr.bf16.mxu0 0
    %1334 = vmatpush1.bf16.msra.mxu0 0
    %1335 = vmatprep.subr.bf16.mxu0 0
    %1336 = vmatpush1.bf16.msra.mxu0 0
    %1337 = vmatprep.subr.bf16.mxu0 0
    %1338 = vmatpush1.bf16.msra.mxu0 0
    %1339 = vmatprep.subr.bf16.mxu0 0
    %1340 = vmatpush1.bf16.msra.mxu0 0
    %1341 = vmatprep.subr.bf16.mxu0 0
    %1342 = vmatpush1.bf16.msra.mxu0 0
    %1343 = vmatprep.subr.bf16.mxu0 0
    %1344 = vmatpush1.bf16.msra.mxu0 0
    %1345 = vmatprep.subr.bf16.mxu0 0
    %1346 = vmatpush1.bf16.msra.mxu0 %v944
    %1347 = vmatprep.subr.bf16.mxu0 0
    %1348 = vmatpush2.bf16.msra.mxu0 0
    %1349 = vmatprep.subr.bf16.mxu0 0
    %1350 = vmatpush2.bf16.msra.mxu0 0
    %1351 = vmatprep.subr.bf16.mxu0 0
    %1352 = vmatpush2.bf16.msra.mxu0 0
    %1353 = vmatprep.subr.bf16.mxu0 0
    %1354 = vmatpush2.bf16.msra.mxu0 0
    %1355 = vmatprep.subr.bf16.mxu0 0
    %1356 = vmatpush2.bf16.msra.mxu0 0
    %1357 = vmatprep.subr.bf16.mxu0 0
    %1358 = vmatpush2.bf16.msra.mxu0 0
    %1359 = vmatprep.subr.bf16.mxu0 0
    %1360 = vmatpush2.bf16.msra.mxu0 0
    %1361 = vmatprep.subr.bf16.mxu0 0
    %1362 = vmatpush2.bf16.msra.mxu0 0
    %1363 = vmatprep.mubr.bf16.mxu0 0
    %1364 = vmatmul.mubr.bf16.gmra.mxu0 %v948
    %v1365 = vpop.f32.mrf.mxu0
    %v1366 = vadd.f32 0.0, %v1365
    %v1367 = vpop.f32.mrf.mxu0
    %v1368 = vpop.f32.mrf.mxu0
    %v1369 = vadd.f32 0.0, %v1368
    %v1370 = vpop.f32.mrf.mxu0
    %1371 = vmatprep.mubr.bf16.mxu0 0
    %1372 = vmatmul.mubr.bf16.gmra.mxu0 %v951
    %v1373 = vpop.f32.mrf.mxu0
    %v1374 = vadd.f32 0.0, %v1373
    %v1375 = vpop.f32.mrf.mxu0
    %v1376 = vpop.f32.mrf.mxu0
    %v1377 = vadd.f32 0.0, %v1376
    %v1378 = vpop.f32.mrf.mxu0
    %1379 = vmatprep.mubr.bf16.mxu0 0
    %1380 = vmatmul.mubr.bf16.gmra.mxu0 %v954
    %v1381 = vpop.f32.mrf.mxu0
    %v1382 = vadd.f32 0.0, %v1381
    %v1383 = vpop.f32.mrf.mxu0
    %v1384 = vpop.f32.mrf.mxu0
    %v1385 = vadd.f32 0.0, %v1384
    %v1386 = vpop.f32.mrf.mxu0
    %1387 = vmatprep.mubr.bf16.mxu0 0
    %1388 = vmatmul.mubr.bf16.gmra.mxu0 %v957
    %v1389 = vpop.f32.mrf.mxu0
    %v1390 = vadd.f32 0.0, %v1389
    %v1391 = vpop.f32.mrf.mxu0
    %v1392 = vpop.f32.mrf.mxu0
    %v1393 = vadd.f32 0.0, %v1392
    %v1394 = vpop.f32.mrf.mxu0
    %1395 = vmatprep.mubr.bf16.mxu0 0
    %1396 = vmatmul.mubr.bf16.gmra.mxu0 %v960
    %v1397 = vpop.f32.mrf.mxu0
    %v1398 = vadd.f32 0.0, %v1397
    %v1399 = vpop.f32.mrf.mxu0
    %v1400 = vpop.f32.mrf.mxu0
    %v1401 = vadd.f32 0.0, %v1400
    %v1402 = vpop.f32.mrf.mxu0
    %1403 = vmatprep.mubr.bf16.mxu0 0
    %1404 = vmatmul.mubr.bf16.gmra.mxu0 %v963
    %v1405 = vpop.f32.mrf.mxu0
    %v1406 = vadd.f32 0.0, %v1405
    %v1407 = vpop.f32.mrf.mxu0
    %v1408 = vpop.f32.mrf.mxu0
    %v1409 = vadd.f32 0.0, %v1408
    %v1410 = vpop.f32.mrf.mxu0
    %1411 = vmatprep.mubr.bf16.mxu0 0
    %1412 = vmatmul.mubr.bf16.gmra.mxu0 %v966
    %v1413 = vpop.f32.mrf.mxu0
    %v1414 = vadd.f32 0.0, %v1413
    %v1415 = vpop.f32.mrf.mxu0
    %v1416 = vpop.f32.mrf.mxu0
    %v1417 = vadd.f32 0.0, %v1416
    %v1418 = vpop.f32.mrf.mxu0
    %1419 = vmatprep.mubr.bf16.mxu0 0
    %1420 = vmatmul.mubr.bf16.gmra.mxu0 %v969
    %v1421 = vpop.f32.mrf.mxu0
    %v1422 = vadd.f32 0.0, %v1421
    %v1423 = vpop.f32.mrf.mxu0
    %v1424 = vpop.f32.mrf.mxu0
    %v1425 = vadd.f32 0.0, %v1424
    %v1426 = vpop.f32.mrf.mxu0
    %1427 = vmatprep.mubr.bf16.mxu0 0
    %1428 = vmatmul.mubr.bf16.gmra.mxu0 %v972
    %v1429 = vpop.f32.mrf.mxu0
    %v1430 = vadd.f32 0.0, %v1429
    %v1431 = vpop.f32.mrf.mxu0
    %v1432 = vpop.f32.mrf.mxu0
    %v1433 = vadd.f32 0.0, %v1432
    %v1434 = vpop.f32.mrf.mxu0
    %1435 = vmatprep.mubr.bf16.mxu0 0
    %1436 = vmatmul.mubr.bf16.gmra.mxu0 %v975
    %v1437 = vpop.f32.mrf.mxu0
    %v1438 = vadd.f32 0.0, %v1437
    %v1439 = vpop.f32.mrf.mxu0
    %v1440 = vpop.f32.mrf.mxu0
    %v1441 = vadd.f32 0.0, %v1440
    %v1442 = vpop.f32.mrf.mxu0
    %1443 = vmatprep.mubr.bf16.mxu0 0
    %1444 = vmatmul.mubr.bf16.gmra.mxu0 %v978
    %v1445 = vpop.f32.mrf.mxu0
    %v1446 = vadd.f32 0.0, %v1445
    %v1447 = vpop.f32.mrf.mxu0
    %v1448 = vpop.f32.mrf.mxu0
    %v1449 = vadd.f32 0.0, %v1448
    %v1450 = vpop.f32.mrf.mxu0
    %1451 = vmatprep.mubr.bf16.mxu0 0
    %1452 = vmatmul.mubr.bf16.gmra.mxu0 %v981
    %v1453 = vpop.f32.mrf.mxu0
    %v1454 = vadd.f32 0.0, %v1453
    %v1455 = vpop.f32.mrf.mxu0
    %v1456 = vpop.f32.mrf.mxu0
    %v1457 = vadd.f32 0.0, %v1456
    %v1458 = vpop.f32.mrf.mxu0
    %1459 = vmatprep.mubr.bf16.mxu0 0
    %1460 = vmatmul.mubr.bf16.gmra.mxu0 %v984
    %v1461 = vpop.f32.mrf.mxu0
    %v1462 = vadd.f32 0.0, %v1461
    %v1463 = vpop.f32.mrf.mxu0
    %v1464 = vpop.f32.mrf.mxu0
    %v1465 = vadd.f32 0.0, %v1464
    %v1466 = vpop.f32.mrf.mxu0
    %1467 = vmatprep.mubr.bf16.mxu0 0
    %1468 = vmatmul.mubr.bf16.gmra.mxu0 %v987
    %v1469 = vpop.f32.mrf.mxu0
    %v1470 = vadd.f32 0.0, %v1469
    %v1471 = vpop.f32.mrf.mxu0
    %v1472 = vpop.f32.mrf.mxu0
    %v1473 = vadd.f32 0.0, %v1472
    %v1474 = vpop.f32.mrf.mxu0
    %1475 = vmatprep.mubr.bf16.mxu0 0
    %1476 = vmatmul.mubr.bf16.gmra.mxu0 %v990
    %v1477 = vpop.f32.mrf.mxu0
    %v1478 = vadd.f32 0.0, %v1477
    %v1479 = vpop.f32.mrf.mxu0
    %v1480 = vpop.f32.mrf.mxu0
    %v1481 = vadd.f32 0.0, %v1480
    %v1482 = vpop.f32.mrf.mxu0
    %1483 = vmatprep.mubr.bf16.mxu0 0
    %1484 = vmatmul.mubr.bf16.gmra.mxu0 %v993
    %v1485 = vpop.f32.mrf.mxu0
    %v1486 = vadd.f32 0.0, %v1485
    %v1487 = vpop.f32.mrf.mxu0
    %v1488 = vpop.f32.mrf.mxu0
    %v1489 = vadd.f32 0.0, %v1488
    %v1490 = vpop.f32.mrf.mxu0
    %1491 = vmatprep.mubr.bf16.mxu0 0
    %1492 = vmatmul.mubr.bf16.gmra.mxu0 %v996
    %v1493 = vpop.f32.mrf.mxu0
    %v1494 = vadd.f32 0.0, %v1493
    %v1495 = vpop.f32.mrf.mxu0
    %v1496 = vpop.f32.mrf.mxu0
    %v1497 = vadd.f32 0.0, %v1496
    %v1498 = vpop.f32.mrf.mxu0
    %1499 = vmatprep.mubr.bf16.mxu0 0
    %1500 = vmatmul.mubr.bf16.gmra.mxu0 %v999
    %v1501 = vpop.f32.mrf.mxu0
    %v1502 = vadd.f32 0.0, %v1501
    %v1503 = vpop.f32.mrf.mxu0
    %v1504 = vpop.f32.mrf.mxu0
    %v1505 = vadd.f32 0.0, %v1504
    %v1506 = vpop.f32.mrf.mxu0
    %1507 = vmatprep.mubr.bf16.mxu0 0
    %1508 = vmatmul.mubr.bf16.gmra.mxu0 %v1002
    %v1509 = vpop.f32.mrf.mxu0
    %v1510 = vadd.f32 0.0, %v1509
    %v1511 = vpop.f32.mrf.mxu0
    %v1512 = vpop.f32.mrf.mxu0
    %v1513 = vadd.f32 0.0, %v1512
    %v1514 = vpop.f32.mrf.mxu0
    %1515 = vmatprep.mubr.bf16.mxu0 0
    %1516 = vmatmul.mubr.bf16.gmra.mxu0 %v1005
    %v1517 = vpop.f32.mrf.mxu0
    %v1518 = vadd.f32 0.0, %v1517
    %v1519 = vpop.f32.mrf.mxu0
    %v1520 = vpop.f32.mrf.mxu0
    %v1521 = vadd.f32 0.0, %v1520
    %v1522 = vpop.f32.mrf.mxu0
    %1523 = vmatprep.mubr.bf16.mxu0 0
    %1524 = vmatmul.mubr.bf16.gmra.mxu0 %v1008
    %v1525 = vpop.f32.mrf.mxu0
    %v1526 = vadd.f32 0.0, %v1525
    %v1527 = vpop.f32.mrf.mxu0
    %v1528 = vpop.f32.mrf.mxu0
    %v1529 = vadd.f32 0.0, %v1528
    %v1530 = vpop.f32.mrf.mxu0
    %1531 = vmatprep.mubr.bf16.mxu0 0
    %1532 = vmatmul.mubr.bf16.gmra.mxu0 %v1011
    %v1533 = vpop.f32.mrf.mxu0
    %v1534 = vadd.f32 0.0, %v1533
    %v1535 = vpop.f32.mrf.mxu0
    %v1536 = vpop.f32.mrf.mxu0
    %v1537 = vadd.f32 0.0, %v1536
    %v1538 = vpop.f32.mrf.mxu0
    %1539 = vmatprep.mubr.bf16.mxu0 0
    %1540 = vmatmul.mubr.bf16.gmra.mxu0 %v1014
    %v1541 = vpop.f32.mrf.mxu0
    %v1542 = vadd.f32 0.0, %v1541
    %v1543 = vpop.f32.mrf.mxu0
    %v1544 = vpop.f32.mrf.mxu0
    %v1545 = vadd.f32 0.0, %v1544
    %v1546 = vpop.f32.mrf.mxu0
    %1547 = vmatprep.mubr.bf16.mxu0 0
    %1548 = vmatmul.mubr.bf16.gmra.mxu0 %v1017
    %v1549 = vpop.f32.mrf.mxu0
    %v1550 = vadd.f32 0.0, %v1549
    %v1551 = vpop.f32.mrf.mxu0
    %v1552 = vpop.f32.mrf.mxu0
    %v1553 = vadd.f32 0.0, %v1552
    %v1554 = vpop.f32.mrf.mxu0
    %1555 = vmatprep.mubr.bf16.mxu0 0
    %1556 = vmatmul.mubr.bf16.gmra.mxu0 %v1020
    %v1557 = vpop.f32.mrf.mxu0
    %v1558 = vadd.f32 0.0, %v1557
    %v1559 = vpop.f32.mrf.mxu0
    %v1560 = vpop.f32.mrf.mxu0
    %v1561 = vadd.f32 0.0, %v1560
    %v1562 = vpop.f32.mrf.mxu0
    %1563 = vmatprep.mubr.bf16.mxu0 0
    %1564 = vmatmul.mubr.bf16.gmra.mxu0 %v1023
    %v1565 = vpop.f32.mrf.mxu0
    %v1566 = vadd.f32 0.0, %v1565
    %v1567 = vpop.f32.mrf.mxu0
    %v1568 = vpop.f32.mrf.mxu0
    %v1569 = vadd.f32 0.0, %v1568
    %v1570 = vpop.f32.mrf.mxu0
    %1571 = vmatprep.mubr.bf16.mxu0 0
    %1572 = vmatmul.mubr.bf16.gmra.mxu0 %v1026
    %v1573 = vpop.f32.mrf.mxu0
    %v1574 = vadd.f32 0.0, %v1573
    %v1575 = vpop.f32.mrf.mxu0
    %v1576 = vpop.f32.mrf.mxu0
    %v1577 = vadd.f32 0.0, %v1576
    %v1578 = vpop.f32.mrf.mxu0
    %1579 = vmatprep.mubr.bf16.mxu0 0
    %1580 = vmatmul.mubr.bf16.gmra.mxu0 %v1029
    %v1581 = vpop.f32.mrf.mxu0
    %v1582 = vadd.f32 0.0, %v1581
    %v1583 = vpop.f32.mrf.mxu0
    %v1584 = vpop.f32.mrf.mxu0
    %v1585 = vadd.f32 0.0, %v1584
    %v1586 = vpop.f32.mrf.mxu0
    %1587 = vmatprep.mubr.bf16.mxu0 0
    %1588 = vmatmul.mubr.bf16.gmra.mxu0 %v1032
    %v1589 = vpop.f32.mrf.mxu0
    %v1590 = vadd.f32 0.0, %v1589
    %v1591 = vpop.f32.mrf.mxu0
    %v1592 = vpop.f32.mrf.mxu0
    %v1593 = vadd.f32 0.0, %v1592
    %v1594 = vpop.f32.mrf.mxu0
    %1595 = vmatprep.mubr.bf16.mxu0 0
    %1596 = vmatmul.mubr.bf16.gmra.mxu0 %v1035
    %v1597 = vpop.f32.mrf.mxu0
    %v1598 = vadd.f32 0.0, %v1597
    %v1599 = vpop.f32.mrf.mxu0
    %v1600 = vpop.f32.mrf.mxu0
    %v1601 = vadd.f32 0.0, %v1600
    %v1602 = vpop.f32.mrf.mxu0
    %1603 = vmatprep.mubr.bf16.mxu0 0
    %1604 = vmatmul.mubr.bf16.gmra.mxu0 %v1038
    %v1605 = vpop.f32.mrf.mxu0
    %v1606 = vadd.f32 0.0, %v1605
    %v1607 = vpop.f32.mrf.mxu0
    %v1608 = vpop.f32.mrf.mxu0
    %v1609 = vadd.f32 0.0, %v1608
    %v1610 = vpop.f32.mrf.mxu0
    %1611 = vmatprep.mubr.bf16.mxu0 0
    %1612 = vmatmul.mubr.bf16.gmra.mxu0 %v1041
    %v1613 = vpop.f32.mrf.mxu0
    %v1614 = vadd.f32 0.0, %v1613
    %v1615 = vpop.f32.mrf.mxu0
    %v1616 = vpop.f32.mrf.mxu0
    %v1617 = vadd.f32 0.0, %v1616
    %v1618 = vpop.f32.mrf.mxu0
    %1619 = vmatprep.mubr.bf16.mxu0 0
    %1620 = vmatmul.mubr.bf16.gmra.mxu0 %v1044
    %v1621 = vpop.f32.mrf.mxu0
    %v1622 = vadd.f32 0.0, %v1621
    %v1623 = vpop.f32.mrf.mxu0
    %v1624 = vpop.f32.mrf.mxu0
    %v1625 = vadd.f32 0.0, %v1624
    %v1626 = vpop.f32.mrf.mxu0
    %1627 = vmatprep.mubr.bf16.mxu0 0
    %1628 = vmatmul.mubr.bf16.gmra.mxu0 %v1047
    %v1629 = vpop.f32.mrf.mxu0
    %v1630 = vadd.f32 0.0, %v1629
    %v1631 = vpop.f32.mrf.mxu0
    %v1632 = vpop.f32.mrf.mxu0
    %v1633 = vadd.f32 0.0, %v1632
    %v1634 = vpop.f32.mrf.mxu0
    %1635 = vmatprep.mubr.bf16.mxu0 0
    %1636 = vmatmul.mubr.bf16.gmra.mxu0 %v1050
    %v1637 = vpop.f32.mrf.mxu0
    %v1638 = vadd.f32 0.0, %v1637
    %v1639 = vpop.f32.mrf.mxu0
    %v1640 = vpop.f32.mrf.mxu0
    %v1641 = vadd.f32 0.0, %v1640
    %v1642 = vpop.f32.mrf.mxu0
    %1643 = vmatprep.mubr.bf16.mxu0 0
    %1644 = vmatmul.mubr.bf16.gmra.mxu0 %v1053
    %v1645 = vpop.f32.mrf.mxu0
    %v1646 = vadd.f32 0.0, %v1645
    %v1647 = vpop.f32.mrf.mxu0
    %v1648 = vpop.f32.mrf.mxu0
    %v1649 = vadd.f32 0.0, %v1648
    %v1650 = vpop.f32.mrf.mxu0
    %1651 = vmatprep.mubr.bf16.mxu0 0
    %1652 = vmatmul.mubr.bf16.gmra.mxu0 %v1056
    %v1653 = vpop.f32.mrf.mxu0
    %v1654 = vadd.f32 0.0, %v1653
    %v1655 = vpop.f32.mrf.mxu0
    %v1656 = vpop.f32.mrf.mxu0
    %v1657 = vadd.f32 0.0, %v1656
    %v1658 = vpop.f32.mrf.mxu0
    %1659 = vmatprep.mubr.bf16.mxu0 0
    %1660 = vmatmul.mubr.bf16.gmra.mxu0 %v1059
    %v1661 = vpop.f32.mrf.mxu0
    %v1662 = vadd.f32 0.0, %v1661
    %v1663 = vpop.f32.mrf.mxu0
    %v1664 = vpop.f32.mrf.mxu0
    %v1665 = vadd.f32 0.0, %v1664
    %v1666 = vpop.f32.mrf.mxu0
    %1667 = vmatprep.mubr.bf16.mxu0 0
    %1668 = vmatmul.mubr.bf16.gmra.mxu0 %v1062
    %v1669 = vpop.f32.mrf.mxu0
    %v1670 = vadd.f32 0.0, %v1669
    %v1671 = vpop.f32.mrf.mxu0
    %v1672 = vpop.f32.mrf.mxu0
    %v1673 = vadd.f32 0.0, %v1672
    %v1674 = vpop.f32.mrf.mxu0
    %1675 = vmatprep.mubr.bf16.mxu0 0
    %1676 = vmatmul.mubr.bf16.gmra.mxu0 %v1065
    %v1677 = vpop.f32.mrf.mxu0
    %v1678 = vadd.f32 0.0, %v1677
    %v1679 = vpop.f32.mrf.mxu0
    %v1680 = vpop.f32.mrf.mxu0
    %v1681 = vadd.f32 0.0, %v1680
    %v1682 = vpop.f32.mrf.mxu0
    %1683 = vmatprep.mubr.bf16.mxu0 0
    %1684 = vmatmul.mubr.bf16.gmra.mxu0 %v1068
    %v1685 = vpop.f32.mrf.mxu0
    %v1686 = vadd.f32 0.0, %v1685
    %v1687 = vpop.f32.mrf.mxu0
    %v1688 = vpop.f32.mrf.mxu0
    %v1689 = vadd.f32 0.0, %v1688
    %v1690 = vpop.f32.mrf.mxu0
    %1691 = vmatprep.mubr.bf16.mxu0 0
    %1692 = vmatmul.mubr.bf16.gmra.mxu0 %v1071
    %v1693 = vpop.f32.mrf.mxu0
    %v1694 = vadd.f32 0.0, %v1693
    %v1695 = vpop.f32.mrf.mxu0
    %v1696 = vpop.f32.mrf.mxu0
    %v1697 = vadd.f32 0.0, %v1696
    %v1698 = vpop.f32.mrf.mxu0
    %1699 = vmatprep.mubr.bf16.mxu0 0
    %1700 = vmatmul.mubr.bf16.gmra.mxu0 %v1074
    %v1701 = vpop.f32.mrf.mxu0
    %v1702 = vadd.f32 0.0, %v1701
    %v1703 = vpop.f32.mrf.mxu0
    %v1704 = vpop.f32.mrf.mxu0
    %v1705 = vadd.f32 0.0, %v1704
    %v1706 = vpop.f32.mrf.mxu0
    %1707 = vmatprep.mubr.bf16.mxu0 0
    %1708 = vmatmul.mubr.bf16.gmra.mxu0 %v1077
    %v1709 = vpop.f32.mrf.mxu0
    %v1710 = vadd.f32 0.0, %v1709
    %v1711 = vpop.f32.mrf.mxu0
    %v1712 = vpop.f32.mrf.mxu0
    %v1713 = vadd.f32 0.0, %v1712
    %v1714 = vpop.f32.mrf.mxu0
    %1715 = vmatprep.mubr.bf16.mxu0 0
    %1716 = vmatmul.mubr.bf16.gmra.mxu0 %v1080
    %v1717 = vpop.f32.mrf.mxu0
    %v1718 = vadd.f32 0.0, %v1717
    %v1719 = vpop.f32.mrf.mxu0
    %v1720 = vpop.f32.mrf.mxu0
    %v1721 = vadd.f32 0.0, %v1720
    %v1722 = vpop.f32.mrf.mxu0
    %1723 = vmatprep.mubr.bf16.mxu0 0
    %1724 = vmatmul.mubr.bf16.gmra.mxu0 %v1083
    %v1725 = vpop.f32.mrf.mxu0
    %v1726 = vadd.f32 0.0, %v1725
    %v1727 = vpop.f32.mrf.mxu0
    %v1728 = vpop.f32.mrf.mxu0
    %v1729 = vadd.f32 0.0, %v1728
    %v1730 = vpop.f32.mrf.mxu0
    %1731 = vmatprep.mubr.bf16.mxu0 0
    %1732 = vmatmul.mubr.bf16.gmra.mxu0 %v1086
    %v1733 = vpop.f32.mrf.mxu0
    %v1734 = vadd.f32 0.0, %v1733
    %v1735 = vpop.f32.mrf.mxu0
    %v1736 = vpop.f32.mrf.mxu0
    %v1737 = vadd.f32 0.0, %v1736
    %v1738 = vpop.f32.mrf.mxu0
    %1739 = vmatprep.mubr.bf16.mxu0 0
    %1740 = vmatmul.mubr.bf16.gmra.mxu0 %v1089
    %v1741 = vpop.f32.mrf.mxu0
    %v1742 = vadd.f32 0.0, %v1741
    %v1743 = vpop.f32.mrf.mxu0
    %v1744 = vpop.f32.mrf.mxu0
    %v1745 = vadd.f32 0.0, %v1744
    %v1746 = vpop.f32.mrf.mxu0
    %1747 = vmatprep.mubr.bf16.mxu0 0
    %1748 = vmatmul.mubr.bf16.gmra.mxu0 %v1092
    %v1749 = vpop.f32.mrf.mxu0
    %v1750 = vadd.f32 0.0, %v1749
    %v1751 = vpop.f32.mrf.mxu0
    %v1752 = vpop.f32.mrf.mxu0
    %v1753 = vadd.f32 0.0, %v1752
    %v1754 = vpop.f32.mrf.mxu0
    %1755 = vmatprep.mubr.bf16.mxu0 0
    %1756 = vmatmul.mubr.bf16.gmra.mxu0 %v1095
    %v1757 = vpop.f32.mrf.mxu0
    %v1758 = vadd.f32 0.0, %v1757
    %v1759 = vpop.f32.mrf.mxu0
    %v1760 = vpop.f32.mrf.mxu0
    %v1761 = vadd.f32 0.0, %v1760
    %v1762 = vpop.f32.mrf.mxu0
    %1763 = vmatprep.mubr.bf16.mxu0 0
    %1764 = vmatmul.mubr.bf16.gmra.mxu0 %v1098
    %v1765 = vpop.f32.mrf.mxu0
    %v1766 = vadd.f32 0.0, %v1765
    %v1767 = vpop.f32.mrf.mxu0
    %v1768 = vpop.f32.mrf.mxu0
    %v1769 = vadd.f32 0.0, %v1768
    %v1770 = vpop.f32.mrf.mxu0
    %1771 = vmatprep.mubr.bf16.mxu0 0
    %1772 = vmatmul.mubr.bf16.gmra.mxu0 %v1101
    %v1773 = vpop.f32.mrf.mxu0
    %v1774 = vadd.f32 0.0, %v1773
    %v1775 = vpop.f32.mrf.mxu0
    %v1776 = vpop.f32.mrf.mxu0
    %v1777 = vadd.f32 0.0, %v1776
    %v1778 = vpop.f32.mrf.mxu0
    %1779 = vmatprep.mubr.bf16.mxu0 0
    %1780 = vmatmul.mubr.bf16.gmra.mxu0 %v1104
    %v1781 = vpop.f32.mrf.mxu0
    %v1782 = vadd.f32 0.0, %v1781
    %v1783 = vpop.f32.mrf.mxu0
    %v1784 = vpop.f32.mrf.mxu0
    %v1785 = vadd.f32 0.0, %v1784
    %v1786 = vpop.f32.mrf.mxu0
    %1787 = vmatprep.mubr.bf16.mxu0 0
    %1788 = vmatmul.mubr.bf16.gmra.mxu0 %v1107
    %v1789 = vpop.f32.mrf.mxu0
    %v1790 = vadd.f32 0.0, %v1789
    %v1791 = vpop.f32.mrf.mxu0
    %v1792 = vpop.f32.mrf.mxu0
    %v1793 = vadd.f32 0.0, %v1792
    %v1794 = vpop.f32.mrf.mxu0
    %1795 = vmatprep.mubr.bf16.mxu0 0
    %1796 = vmatmul.mubr.bf16.gmra.mxu0 %v1110
    %v1797 = vpop.f32.mrf.mxu0
    %v1798 = vadd.f32 0.0, %v1797
    %v1799 = vpop.f32.mrf.mxu0
    %v1800 = vpop.f32.mrf.mxu0
    %v1801 = vadd.f32 0.0, %v1800
    %v1802 = vpop.f32.mrf.mxu0
    %1803 = vmatprep.mubr.bf16.mxu0 0
    %1804 = vmatmul.mubr.bf16.gmra.mxu0 %v1113
    %v1805 = vpop.f32.mrf.mxu0
    %v1806 = vadd.f32 0.0, %v1805
    %v1807 = vpop.f32.mrf.mxu0
    %v1808 = vpop.f32.mrf.mxu0
    %v1809 = vadd.f32 0.0, %v1808
    %v1810 = vpop.f32.mrf.mxu0
    %1811 = vmatprep.mubr.bf16.mxu0 0
    %1812 = vmatmul.mubr.bf16.gmra.mxu0 %v1116
    %v1813 = vpop.f32.mrf.mxu0
    %v1814 = vadd.f32 0.0, %v1813
    %v1815 = vpop.f32.mrf.mxu0
    %v1816 = vpop.f32.mrf.mxu0
    %v1817 = vadd.f32 0.0, %v1816
    %v1818 = vpop.f32.mrf.mxu0
    %1819 = vmatprep.mubr.bf16.mxu0 0
    %1820 = vmatmul.mubr.bf16.gmra.mxu0 %v1119
    %v1821 = vpop.f32.mrf.mxu0
    %v1822 = vadd.f32 0.0, %v1821
    %v1823 = vpop.f32.mrf.mxu0
    %v1824 = vpop.f32.mrf.mxu0
    %v1825 = vadd.f32 0.0, %v1824
    %v1826 = vpop.f32.mrf.mxu0
    %1827 = vmatprep.mubr.bf16.mxu0 0
    %1828 = vmatmul.mubr.bf16.gmra.mxu0 %v1122
    %v1829 = vpop.f32.mrf.mxu0
    %v1830 = vadd.f32 0.0, %v1829
    %v1831 = vpop.f32.mrf.mxu0
    %v1832 = vpop.f32.mrf.mxu0
    %v1833 = vadd.f32 0.0, %v1832
    %v1834 = vpop.f32.mrf.mxu0
    %1835 = vmatprep.mubr.bf16.mxu0 0
    %1836 = vmatmul.mubr.bf16.gmra.mxu0 %v1125
    %v1837 = vpop.f32.mrf.mxu0
    %v1838 = vadd.f32 0.0, %v1837
    %v1839 = vpop.f32.mrf.mxu0
    %v1840 = vpop.f32.mrf.mxu0
    %v1841 = vadd.f32 0.0, %v1840
    %v1842 = vpop.f32.mrf.mxu0
    %1843 = vmatprep.mubr.bf16.mxu0 0
    %1844 = vmatmul.mubr.bf16.gmra.mxu0 %v1128
    %v1845 = vpop.f32.mrf.mxu0
    %v1846 = vadd.f32 0.0, %v1845
    %v1847 = vpop.f32.mrf.mxu0
    %v1848 = vpop.f32.mrf.mxu0
    %v1849 = vadd.f32 0.0, %v1848
    %v1850 = vpop.f32.mrf.mxu0
    %1851 = vmatprep.mubr.bf16.mxu0 0
    %1852 = vmatmul.mubr.bf16.gmra.mxu0 %v1131
    %v1853 = vpop.f32.mrf.mxu0
    %v1854 = vadd.f32 0.0, %v1853
    %v1855 = vpop.f32.mrf.mxu0
    %v1856 = vpop.f32.mrf.mxu0
    %v1857 = vadd.f32 0.0, %v1856
    %v1858 = vpop.f32.mrf.mxu0
    %1859 = vmatprep.mubr.bf16.mxu0 0
    %1860 = vmatmul.mubr.bf16.gmra.mxu0 %v1134
    %v1861 = vpop.f32.mrf.mxu0
    %v1862 = vadd.f32 0.0, %v1861
    %v1863 = vpop.f32.mrf.mxu0
    %v1864 = vpop.f32.mrf.mxu0
    %v1865 = vadd.f32 0.0, %v1864
    %v1866 = vpop.f32.mrf.mxu0
    %1867 = vmatprep.mubr.bf16.mxu0 0
    %1868 = vmatmul.mubr.bf16.gmra.mxu0 %v1137
    %v1869 = vpop.f32.mrf.mxu0
    %v1870 = vadd.f32 0.0, %v1869
    %v1871 = vpop.f32.mrf.mxu0
    %v1872 = vpop.f32.mrf.mxu0
    %v1873 = vadd.f32 0.0, %v1872
    %v1874 = vpop.f32.mrf.mxu0
    %1875 = vmatprep.mubr.bf16.mxu0 0
    %1876 = vmatmul.mubr.bf16.gmra.mxu0 %v1140
    %v1877 = vpop.f32.mrf.mxu0
    %v1878 = vadd.f32 0.0, %v1877
    %v1879 = vpop.f32.mrf.mxu0
    %v1880 = vpop.f32.mrf.mxu0
    %v1881 = vadd.f32 0.0, %v1880
    %v1882 = vpop.f32.mrf.mxu0
    %1883 = vmatprep.mubr.bf16.mxu0 0
    %1884 = vmatmul.mubr.bf16.gmra.mxu0 %v1143
    %v1885 = vpop.f32.mrf.mxu0
    %v1886 = vadd.f32 0.0, %v1885
    %v1887 = vpop.f32.mrf.mxu0
    %v1888 = vpop.f32.mrf.mxu0
    %v1889 = vadd.f32 0.0, %v1888
    %v1890 = vpop.f32.mrf.mxu0
    %1891 = vmatprep.mubr.bf16.mxu0 0
    %1892 = vmatmul.mubr.bf16.gmra.mxu0 %v1146
    %v1893 = vpop.f32.mrf.mxu0
    %v1894 = vadd.f32 0.0, %v1893
    %v1895 = vpop.f32.mrf.mxu0
    %v1896 = vpop.f32.mrf.mxu0
    %v1897 = vadd.f32 0.0, %v1896
    %v1898 = vpop.f32.mrf.mxu0
    %1899 = vmatprep.mubr.bf16.mxu0 0
    %1900 = vmatmul.mubr.bf16.gmra.mxu0 %v1149
    %v1901 = vpop.f32.mrf.mxu0
    %v1902 = vadd.f32 0.0, %v1901
    %v1903 = vpop.f32.mrf.mxu0
    %v1904 = vpop.f32.mrf.mxu0
    %v1905 = vadd.f32 0.0, %v1904
    %v1906 = vpop.f32.mrf.mxu0
    %1907 = vmatprep.mubr.bf16.mxu0 0
    %1908 = vmatmul.mubr.bf16.gmra.mxu0 %v1152
    %v1909 = vpop.f32.mrf.mxu0
    %v1910 = vadd.f32 0.0, %v1909
    %v1911 = vpop.f32.mrf.mxu0
    %v1912 = vpop.f32.mrf.mxu0
    %v1913 = vadd.f32 0.0, %v1912
    %v1914 = vpop.f32.mrf.mxu0
    %1915 = vmatprep.mubr.bf16.mxu0 0
    %1916 = vmatmul.mubr.bf16.gmra.mxu0 %v1155
    %v1917 = vpop.f32.mrf.mxu0
    %v1918 = vadd.f32 0.0, %v1917
    %v1919 = vpop.f32.mrf.mxu0
    %v1920 = vpop.f32.mrf.mxu0
    %v1921 = vadd.f32 0.0, %v1920
    %v1922 = vpop.f32.mrf.mxu0
    %1923 = vmatprep.mubr.bf16.mxu0 0
    %1924 = vmatmul.mubr.bf16.gmra.mxu0 %v1158
    %v1925 = vpop.f32.mrf.mxu0
    %v1926 = vadd.f32 0.0, %v1925
    %v1927 = vpop.f32.mrf.mxu0
    %v1928 = vpop.f32.mrf.mxu0
    %v1929 = vadd.f32 0.0, %v1928
    %v1930 = vpop.f32.mrf.mxu0
    %1931 = vmatprep.mubr.bf16.mxu0 0
    %1932 = vmatmul.mubr.bf16.gmra.mxu0 %v1161
    %v1933 = vpop.f32.mrf.mxu0
    %v1934 = vadd.f32 0.0, %v1933
    %v1935 = vpop.f32.mrf.mxu0
    %v1936 = vpop.f32.mrf.mxu0
    %v1937 = vadd.f32 0.0, %v1936
    %v1938 = vpop.f32.mrf.mxu0
    %1939 = vmatprep.mubr.bf16.mxu0 0
    %1940 = vmatmul.mubr.bf16.gmra.mxu0 %v1164
    %v1941 = vpop.f32.mrf.mxu0
    %v1942 = vadd.f32 0.0, %v1941
    %v1943 = vpop.f32.mrf.mxu0
    %v1944 = vpop.f32.mrf.mxu0
    %v1945 = vadd.f32 0.0, %v1944
    %v1946 = vpop.f32.mrf.mxu0
    %1947 = vmatprep.mubr.bf16.mxu0 0
    %1948 = vmatmul.mubr.bf16.gmra.mxu0 %v1167
    %v1949 = vpop.f32.mrf.mxu0
    %v1950 = vadd.f32 0.0, %v1949
    %v1951 = vpop.f32.mrf.mxu0
    %v1952 = vpop.f32.mrf.mxu0
    %v1953 = vadd.f32 0.0, %v1952
    %v1954 = vpop.f32.mrf.mxu0
    %1955 = vmatprep.mubr.bf16.mxu0 0
    %1956 = vmatmul.mubr.bf16.gmra.mxu0 %v1170
    %v1957 = vpop.f32.mrf.mxu0
    %v1958 = vadd.f32 0.0, %v1957
    %v1959 = vpop.f32.mrf.mxu0
    %v1960 = vpop.f32.mrf.mxu0
    %v1961 = vadd.f32 0.0, %v1960
    %v1962 = vpop.f32.mrf.mxu0
    %1963 = vmatprep.mubr.bf16.mxu0 0
    %1964 = vmatmul.mubr.bf16.gmra.mxu0 %v1173
    %v1965 = vpop.f32.mrf.mxu0
    %v1966 = vadd.f32 0.0, %v1965
    %v1967 = vpop.f32.mrf.mxu0
    %v1968 = vpop.f32.mrf.mxu0
    %v1969 = vadd.f32 0.0, %v1968
    %v1970 = vpop.f32.mrf.mxu0
    %1971 = vmatprep.mubr.bf16.mxu0 0
    %1972 = vmatmul.mubr.bf16.gmra.mxu0 %v1176
    %v1973 = vpop.f32.mrf.mxu0
    %v1974 = vadd.f32 0.0, %v1973
    %v1975 = vpop.f32.mrf.mxu0
    %v1976 = vpop.f32.mrf.mxu0
    %v1977 = vadd.f32 0.0, %v1976
    %v1978 = vpop.f32.mrf.mxu0
    %1979 = vmatprep.mubr.bf16.mxu0 0
    %1980 = vmatmul.mubr.bf16.gmra.mxu0 %v1179
    %v1981 = vpop.f32.mrf.mxu0
    %v1982 = vadd.f32 0.0, %v1981
    %v1983 = vpop.f32.mrf.mxu0
    %v1984 = vpop.f32.mrf.mxu0
    %v1985 = vadd.f32 0.0, %v1984
    %v1986 = vpop.f32.mrf.mxu0
    %1987 = vmatprep.mubr.bf16.mxu0 0
    %1988 = vmatmul.mubr.bf16.gmra.mxu0 %v1182
    %v1989 = vpop.f32.mrf.mxu0
    %v1990 = vadd.f32 0.0, %v1989
    %v1991 = vpop.f32.mrf.mxu0
    %v1992 = vpop.f32.mrf.mxu0
    %v1993 = vadd.f32 0.0, %v1992
    %v1994 = vpop.f32.mrf.mxu0
    %1995 = vmatprep.mubr.bf16.mxu0 0
    %1996 = vmatmul.mubr.bf16.gmra.mxu0 %v1185
    %v1997 = vpop.f32.mrf.mxu0
    %v1998 = vadd.f32 0.0, %v1997
    %v1999 = vpop.f32.mrf.mxu0
    %v2000 = vpop.f32.mrf.mxu0
    %v2001 = vadd.f32 0.0, %v2000
    %v2002 = vpop.f32.mrf.mxu0
    %2003 = vmatprep.mubr.bf16.mxu0 0
    %2004 = vmatmul.mubr.bf16.gmra.mxu0 %v1188
    %v2005 = vpop.f32.mrf.mxu0
    %v2006 = vadd.f32 0.0, %v2005
    %v2007 = vpop.f32.mrf.mxu0
    %v2008 = vpop.f32.mrf.mxu0
    %v2009 = vadd.f32 0.0, %v2008
    %v2010 = vpop.f32.mrf.mxu0
    %2011 = vmatprep.mubr.bf16.mxu0 0
    %2012 = vmatmul.mubr.bf16.gmra.mxu0 %v1191
    %v2013 = vpop.f32.mrf.mxu0
    %v2014 = vadd.f32 0.0, %v2013
    %v2015 = vpop.f32.mrf.mxu0
    %v2016 = vpop.f32.mrf.mxu0
    %v2017 = vadd.f32 0.0, %v2016
    %v2018 = vpop.f32.mrf.mxu0
    %2019 = vmatprep.mubr.bf16.mxu0 0
    %2020 = vmatmul.mubr.bf16.gmra.mxu0 %v1194
    %v2021 = vpop.f32.mrf.mxu0
    %v2022 = vadd.f32 0.0, %v2021
    %v2023 = vpop.f32.mrf.mxu0
    %v2024 = vpop.f32.mrf.mxu0
    %v2025 = vadd.f32 0.0, %v2024
    %v2026 = vpop.f32.mrf.mxu0
    %2027 = vmatprep.mubr.bf16.mxu0 0
    %2028 = vmatmul.mubr.bf16.gmra.mxu0 %v1197
    %v2029 = vpop.f32.mrf.mxu0
    %v2030 = vadd.f32 0.0, %v2029
    %v2031 = vpop.f32.mrf.mxu0
    %v2032 = vpop.f32.mrf.mxu0
    %v2033 = vadd.f32 0.0, %v2032
    %v2034 = vpop.f32.mrf.mxu0
    %2035 = vmatprep.mubr.bf16.mxu0 0
    %2036 = vmatmul.mubr.bf16.gmra.mxu0 %v1200
    %v2037 = vpop.f32.mrf.mxu0
    %v2038 = vadd.f32 0.0, %v2037
    %v2039 = vpop.f32.mrf.mxu0
    %v2040 = vpop.f32.mrf.mxu0
    %v2041 = vadd.f32 0.0, %v2040
    %v2042 = vpop.f32.mrf.mxu0
    %2043 = vmatprep.mubr.bf16.mxu0 0
    %2044 = vmatmul.mubr.bf16.gmra.mxu0 %v1203
    %v2045 = vpop.f32.mrf.mxu0
    %v2046 = vadd.f32 0.0, %v2045
    %v2047 = vpop.f32.mrf.mxu0
    %v2048 = vpop.f32.mrf.mxu0
    %v2049 = vadd.f32 0.0, %v2048
    %v2050 = vpop.f32.mrf.mxu0
    %2051 = vmatprep.mubr.bf16.mxu0 0
    %2052 = vmatmul.mubr.bf16.gmra.mxu0 %v1206
    %v2053 = vpop.f32.mrf.mxu0
    %v2054 = vadd.f32 0.0, %v2053
    %v2055 = vpop.f32.mrf.mxu0
    %v2056 = vpop.f32.mrf.mxu0
    %v2057 = vadd.f32 0.0, %v2056
    %v2058 = vpop.f32.mrf.mxu0
    %2059 = vmatprep.mubr.bf16.mxu0 0
    %2060 = vmatmul.mubr.bf16.gmra.mxu0 %v1209
    %v2061 = vpop.f32.mrf.mxu0
    %v2062 = vadd.f32 0.0, %v2061
    %v2063 = vpop.f32.mrf.mxu0
    %v2064 = vpop.f32.mrf.mxu0
    %v2065 = vadd.f32 0.0, %v2064
    %v2066 = vpop.f32.mrf.mxu0
    %2067 = vmatprep.mubr.bf16.mxu0 0
    %2068 = vmatmul.mubr.bf16.gmra.mxu0 %v1212
    %v2069 = vpop.f32.mrf.mxu0
    %v2070 = vadd.f32 0.0, %v2069
    %v2071 = vpop.f32.mrf.mxu0
    %v2072 = vpop.f32.mrf.mxu0
    %v2073 = vadd.f32 0.0, %v2072
    %v2074 = vpop.f32.mrf.mxu0
    %2075 = vmatprep.mubr.bf16.mxu0 0
    %2076 = vmatmul.mubr.bf16.gmra.mxu0 %v1215
    %v2077 = vpop.f32.mrf.mxu0
    %v2078 = vadd.f32 0.0, %v2077
    %v2079 = vpop.f32.mrf.mxu0
    %v2080 = vpop.f32.mrf.mxu0
    %v2081 = vadd.f32 0.0, %v2080
    %v2082 = vpop.f32.mrf.mxu0
    %2083 = vmatprep.mubr.bf16.mxu0 0
    %2084 = vmatmul.mubr.bf16.gmra.mxu0 %v1218
    %v2085 = vpop.f32.mrf.mxu0
    %v2086 = vadd.f32 0.0, %v2085
    %v2087 = vpop.f32.mrf.mxu0
    %v2088 = vpop.f32.mrf.mxu0
    %v2089 = vadd.f32 0.0, %v2088
    %v2090 = vpop.f32.mrf.mxu0
    %2091 = vmatprep.mubr.bf16.mxu0 0
    %2092 = vmatmul.mubr.bf16.gmra.mxu0 %v1221
    %v2093 = vpop.f32.mrf.mxu0
    %v2094 = vadd.f32 0.0, %v2093
    %v2095 = vpop.f32.mrf.mxu0
    %v2096 = vpop.f32.mrf.mxu0
    %v2097 = vadd.f32 0.0, %v2096
    %v2098 = vpop.f32.mrf.mxu0
    %2099 = vmatprep.mubr.bf16.mxu0 0
    %2100 = vmatmul.mubr.bf16.gmra.mxu0 %v1224
    %v2101 = vpop.f32.mrf.mxu0
    %v2102 = vadd.f32 0.0, %v2101
    %v2103 = vpop.f32.mrf.mxu0
    %v2104 = vpop.f32.mrf.mxu0
    %v2105 = vadd.f32 0.0, %v2104
    %v2106 = vpop.f32.mrf.mxu0
    %2107 = vmatprep.mubr.bf16.mxu0 0
    %2108 = vmatmul.mubr.bf16.gmra.mxu0 %v1227
    %v2109 = vpop.f32.mrf.mxu0
    %v2110 = vadd.f32 0.0, %v2109
    %v2111 = vpop.f32.mrf.mxu0
    %v2112 = vpop.f32.mrf.mxu0
    %v2113 = vadd.f32 0.0, %v2112
    %v2114 = vpop.f32.mrf.mxu0
    %2115 = vmatprep.mubr.bf16.mxu0 0
    %2116 = vmatmul.mubr.bf16.gmra.mxu0 %v1230
    %v2117 = vpop.f32.mrf.mxu0
    %v2118 = vadd.f32 0.0, %v2117
    %v2119 = vpop.f32.mrf.mxu0
    %v2120 = vpop.f32.mrf.mxu0
    %v2121 = vadd.f32 0.0, %v2120
    %v2122 = vpop.f32.mrf.mxu0
    %2123 = vmatprep.mubr.bf16.mxu0 0
    %2124 = vmatmul.mubr.bf16.gmra.mxu0 %v1233
    %v2125 = vpop.f32.mrf.mxu0
    %v2126 = vadd.f32 0.0, %v2125
    %v2127 = vpop.f32.mrf.mxu0
    %v2128 = vpop.f32.mrf.mxu0
    %v2129 = vadd.f32 0.0, %v2128
    %v2130 = vpop.f32.mrf.mxu0
    %2131 = vmatprep.mubr.bf16.mxu0 0
    %2132 = vmatmul.mubr.bf16.gmra.mxu0 %v1236
    %v2133 = vpop.f32.mrf.mxu0
    %v2134 = vadd.f32 0.0, %v2133
    %v2135 = vpop.f32.mrf.mxu0
    %v2136 = vpop.f32.mrf.mxu0
    %v2137 = vadd.f32 0.0, %v2136
    %v2138 = vpop.f32.mrf.mxu0
    %2139 = vmatprep.mubr.bf16.mxu0 0
    %2140 = vmatmul.mubr.bf16.gmra.mxu0 %v1239
    %v2141 = vpop.f32.mrf.mxu0
    %v2142 = vadd.f32 0.0, %v2141
    %v2143 = vpop.f32.mrf.mxu0
    %v2144 = vpop.f32.mrf.mxu0
    %v2145 = vadd.f32 0.0, %v2144
    %v2146 = vpop.f32.mrf.mxu0
    %2147 = vmatprep.mubr.bf16.mxu0 0
    %2148 = vmatmul.mubr.bf16.gmra.mxu0 %v1242
    %v2149 = vpop.f32.mrf.mxu0
    %v2150 = vadd.f32 0.0, %v2149
    %v2151 = vpop.f32.mrf.mxu0
    %v2152 = vpop.f32.mrf.mxu0
    %v2153 = vadd.f32 0.0, %v2152
    %v2154 = vpop.f32.mrf.mxu0
    %2155 = vmatprep.mubr.bf16.mxu0 0
    %2156 = vmatmul.mubr.bf16.gmra.mxu0 %v1245
    %v2157 = vpop.f32.mrf.mxu0
    %v2158 = vadd.f32 0.0, %v2157
    %v2159 = vpop.f32.mrf.mxu0
    %v2160 = vpop.f32.mrf.mxu0
    %v2161 = vadd.f32 0.0, %v2160
    %v2162 = vpop.f32.mrf.mxu0
    %2163 = vmatprep.mubr.bf16.mxu0 0
    %2164 = vmatmul.mubr.bf16.gmra.mxu0 %v1248
    %v2165 = vpop.f32.mrf.mxu0
    %v2166 = vadd.f32 0.0, %v2165
    %v2167 = vpop.f32.mrf.mxu0
    %v2168 = vpop.f32.mrf.mxu0
    %v2169 = vadd.f32 0.0, %v2168
    %v2170 = vpop.f32.mrf.mxu0
    %2171 = vmatprep.mubr.bf16.mxu0 0
    %2172 = vmatmul.mubr.bf16.gmra.mxu0 %v1251
    %v2173 = vpop.f32.mrf.mxu0
    %v2174 = vadd.f32 0.0, %v2173
    %v2175 = vpop.f32.mrf.mxu0
    %v2176 = vpop.f32.mrf.mxu0
    %v2177 = vadd.f32 0.0, %v2176
    %v2178 = vpop.f32.mrf.mxu0
    %2179 = vmatprep.mubr.bf16.mxu0 0
    %2180 = vmatmul.mubr.bf16.gmra.mxu0 %v1254
    %v2181 = vpop.f32.mrf.mxu0
    %v2182 = vadd.f32 0.0, %v2181
    %v2183 = vpop.f32.mrf.mxu0
    %v2184 = vpop.f32.mrf.mxu0
    %v2185 = vadd.f32 0.0, %v2184
    %v2186 = vpop.f32.mrf.mxu0
    %2187 = vmatprep.mubr.bf16.mxu0 0
    %2188 = vmatmul.mubr.bf16.gmra.mxu0 %v1257
    %v2189 = vpop.f32.mrf.mxu0
    %v2190 = vadd.f32 0.0, %v2189
    %v2191 = vpop.f32.mrf.mxu0
    %v2192 = vpop.f32.mrf.mxu0
    %v2193 = vadd.f32 0.0, %v2192
    %v2194 = vpop.f32.mrf.mxu0
    %2195 = vmatprep.mubr.bf16.mxu0 0
    %2196 = vmatmul.mubr.bf16.gmra.mxu0 %v1260
    %v2197 = vpop.f32.mrf.mxu0
    %v2198 = vadd.f32 0.0, %v2197
    %v2199 = vpop.f32.mrf.mxu0
    %v2200 = vpop.f32.mrf.mxu0
    %v2201 = vadd.f32 0.0, %v2200
    %v2202 = vpop.f32.mrf.mxu0
    %2203 = vmatprep.mubr.bf16.mxu0 0
    %2204 = vmatmul.mubr.bf16.gmra.mxu0 %v1263
    %v2205 = vpop.f32.mrf.mxu0
    %v2206 = vadd.f32 0.0, %v2205
    %v2207 = vpop.f32.mrf.mxu0
    %v2208 = vpop.f32.mrf.mxu0
    %v2209 = vadd.f32 0.0, %v2208
    %v2210 = vpop.f32.mrf.mxu0
    %2211 = vmatprep.mubr.bf16.mxu0 0
    %2212 = vmatmul.mubr.bf16.gmra.mxu0 %v1266
    %v2213 = vpop.f32.mrf.mxu0
    %v2214 = vadd.f32 0.0, %v2213
    %v2215 = vpop.f32.mrf.mxu0
    %v2216 = vpop.f32.mrf.mxu0
    %v2217 = vadd.f32 0.0, %v2216
    %v2218 = vpop.f32.mrf.mxu0
    %2219 = vmatprep.mubr.bf16.mxu0 0
    %2220 = vmatmul.mubr.bf16.gmra.mxu0 %v1269
    %v2221 = vpop.f32.mrf.mxu0
    %v2222 = vadd.f32 0.0, %v2221
    %v2223 = vpop.f32.mrf.mxu0
    %v2224 = vpop.f32.mrf.mxu0
    %v2225 = vadd.f32 0.0, %v2224
    %v2226 = vpop.f32.mrf.mxu0
    %2227 = vmatprep.mubr.bf16.mxu0 0
    %2228 = vmatmul.mubr.bf16.gmra.mxu0 %v1272
    %v2229 = vpop.f32.mrf.mxu0
    %v2230 = vadd.f32 0.0, %v2229
    %v2231 = vpop.f32.mrf.mxu0
    %v2232 = vpop.f32.mrf.mxu0
    %v2233 = vadd.f32 0.0, %v2232
    %v2234 = vpop.f32.mrf.mxu0
    %2235 = vmatprep.mubr.bf16.mxu0 0
    %2236 = vmatmul.mubr.bf16.gmra.mxu0 %v1275
    %v2237 = vpop.f32.mrf.mxu0
    %v2238 = vadd.f32 0.0, %v2237
    %v2239 = vpop.f32.mrf.mxu0
    %v2240 = vpop.f32.mrf.mxu0
    %v2241 = vadd.f32 0.0, %v2240
    %v2242 = vpop.f32.mrf.mxu0
    %2243 = vmatprep.mubr.bf16.mxu0 0
    %2244 = vmatmul.mubr.bf16.gmra.mxu0 %v1278
    %v2245 = vpop.f32.mrf.mxu0
    %v2246 = vadd.f32 0.0, %v2245
    %v2247 = vpop.f32.mrf.mxu0
    %v2248 = vpop.f32.mrf.mxu0
    %v2249 = vadd.f32 0.0, %v2248
    %v2250 = vpop.f32.mrf.mxu0
    %2251 = vmatprep.mubr.bf16.mxu0 0
    %2252 = vmatmul.mubr.bf16.gmra.mxu0 %v1281
    %v2253 = vpop.f32.mrf.mxu0
    %v2254 = vadd.f32 0.0, %v2253
    %v2255 = vpop.f32.mrf.mxu0
    %v2256 = vpop.f32.mrf.mxu0
    %v2257 = vadd.f32 0.0, %v2256
    %v2258 = vpop.f32.mrf.mxu0
    %2259 = vmatprep.mubr.bf16.mxu0 0
    %2260 = vmatmul.mubr.bf16.gmra.mxu0 %v1284
    %v2261 = vpop.f32.mrf.mxu0
    %v2262 = vadd.f32 0.0, %v2261
    %v2263 = vpop.f32.mrf.mxu0
    %v2264 = vpop.f32.mrf.mxu0
    %v2265 = vadd.f32 0.0, %v2264
    %v2266 = vpop.f32.mrf.mxu0
    %2267 = vmatprep.mubr.bf16.mxu0 0
    %2268 = vmatmul.mubr.bf16.gmra.mxu0 %v1287
    %v2269 = vpop.f32.mrf.mxu0
    %v2270 = vadd.f32 0.0, %v2269
    %v2271 = vpop.f32.mrf.mxu0
    %v2272 = vpop.f32.mrf.mxu0
    %v2273 = vadd.f32 0.0, %v2272
    %v2274 = vpop.f32.mrf.mxu0
    %2275 = vmatprep.mubr.bf16.mxu0 0
    %2276 = vmatmul.mubr.bf16.gmra.mxu0 %v1290
    %v2277 = vpop.f32.mrf.mxu0
    %v2278 = vadd.f32 0.0, %v2277
    %v2279 = vpop.f32.mrf.mxu0
    %v2280 = vpop.f32.mrf.mxu0
    %v2281 = vadd.f32 0.0, %v2280
    %v2282 = vpop.f32.mrf.mxu0
    %2283 = vmatprep.mubr.bf16.mxu0 0
    %2284 = vmatmul.mubr.bf16.gmra.mxu0 %v1293
    %v2285 = vpop.f32.mrf.mxu0
    %v2286 = vadd.f32 0.0, %v2285
    %v2287 = vpop.f32.mrf.mxu0
    %v2288 = vpop.f32.mrf.mxu0
    %v2289 = vadd.f32 0.0, %v2288
    %v2290 = vpop.f32.mrf.mxu0
    %2291 = vmatprep.mubr.bf16.mxu0 0
    %2292 = vmatmul.mubr.bf16.gmra.mxu0 %v1296
    %v2293 = vpop.f32.mrf.mxu0
    %v2294 = vadd.f32 0.0, %v2293
    %v2295 = vpop.f32.mrf.mxu0
    %v2296 = vpop.f32.mrf.mxu0
    %v2297 = vadd.f32 0.0, %v2296
    %v2298 = vpop.f32.mrf.mxu0
    %2299 = vmatprep.mubr.bf16.mxu0 0
    %2300 = vmatmul.mubr.bf16.gmra.mxu0 %v1299
    %v2301 = vpop.f32.mrf.mxu0
    %v2302 = vadd.f32 0.0, %v2301
    %v2303 = vpop.f32.mrf.mxu0
    %v2304 = vpop.f32.mrf.mxu0
    %v2305 = vadd.f32 0.0, %v2304
    %v2306 = vpop.f32.mrf.mxu0
    %2307 = vmatprep.mubr.bf16.mxu0 0
    %2308 = vmatmul.mubr.bf16.gmra.mxu0 %v1302
    %v2309 = vpop.f32.mrf.mxu0
    %v2310 = vadd.f32 0.0, %v2309
    %v2311 = vpop.f32.mrf.mxu0
    %v2312 = vpop.f32.mrf.mxu0
    %v2313 = vadd.f32 0.0, %v2312
    %v2314 = vpop.f32.mrf.mxu0
    %2315 = vmatprep.mubr.bf16.mxu0 0
    %2316 = vmatmul.mubr.bf16.gmra.mxu0 %v1305
    %v2317 = vpop.f32.mrf.mxu0
    %v2318 = vadd.f32 0.0, %v2317
    %v2319 = vpop.f32.mrf.mxu0
    %v2320 = vpop.f32.mrf.mxu0
    %v2321 = vadd.f32 0.0, %v2320
    %v2322 = vpop.f32.mrf.mxu0
    %2323 = vmatprep.mubr.bf16.mxu0 0
    %2324 = vmatmul.mubr.bf16.gmra.mxu0 %v1308
    %v2325 = vpop.f32.mrf.mxu0
    %v2326 = vadd.f32 0.0, %v2325
    %v2327 = vpop.f32.mrf.mxu0
    %v2328 = vpop.f32.mrf.mxu0
    %v2329 = vadd.f32 0.0, %v2328
    %v2330 = vpop.f32.mrf.mxu0
    %2331 = vmatprep.mubr.bf16.mxu0 0
    %2332 = vmatmul.mubr.bf16.gmra.mxu0 %v1311
    %v2333 = vpop.f32.mrf.mxu0
    %v2334 = vadd.f32 0.0, %v2333
    %v2335 = vpop.f32.mrf.mxu0
    %v2336 = vpop.f32.mrf.mxu0
    %v2337 = vadd.f32 0.0, %v2336
    %v2338 = vpop.f32.mrf.mxu0
    %2339 = vmatprep.mubr.bf16.mxu0 0
    %2340 = vmatmul.mubr.bf16.gmra.mxu0 %v1314
    %v2341 = vpop.f32.mrf.mxu0
    %v2342 = vadd.f32 0.0, %v2341
    %v2343 = vpop.f32.mrf.mxu0
    %v2344 = vpop.f32.mrf.mxu0
    %v2345 = vadd.f32 0.0, %v2344
    %v2346 = vpop.f32.mrf.mxu0
    %2347 = vmatprep.mubr.bf16.mxu0 0
    %2348 = vmatmul.mubr.bf16.gmra.mxu0 %v1317
    %v2349 = vpop.f32.mrf.mxu0
    %v2350 = vadd.f32 0.0, %v2349
    %v2351 = vpop.f32.mrf.mxu0
    %v2352 = vpop.f32.mrf.mxu0
    %v2353 = vadd.f32 0.0, %v2352
    %v2354 = vpop.f32.mrf.mxu0
    %2355 = vmatprep.mubr.bf16.mxu0 0
    %2356 = vmatmul.mubr.bf16.gmra.mxu0 %v1320
    %v2357 = vpop.f32.mrf.mxu0
    %v2358 = vadd.f32 0.0, %v2357
    %v2359 = vpop.f32.mrf.mxu0
    %v2360 = vpop.f32.mrf.mxu0
    %v2361 = vadd.f32 0.0, %v2360
    %v2362 = vpop.f32.mrf.mxu0
    %2363 = vmatprep.mubr.bf16.mxu0 0
    %2364 = vmatmul.mubr.bf16.gmra.mxu0 %v1323
    %v2365 = vpop.f32.mrf.mxu0
    %v2366 = vadd.f32 0.0, %v2365
    %v2367 = vpop.f32.mrf.mxu0
    %v2368 = vpop.f32.mrf.mxu0
    %v2369 = vadd.f32 0.0, %v2368
    %v2370 = vpop.f32.mrf.mxu0
    %2371 = vmatprep.mubr.bf16.mxu0 0
    %2372 = vmatmul.mubr.bf16.gmra.mxu0 %v1326
    %v2373 = vpop.f32.mrf.mxu0
    %v2374 = vadd.f32 0.0, %v2373
    %v2375 = vpop.f32.mrf.mxu0
    %v2376 = vpop.f32.mrf.mxu0
    %v2377 = vadd.f32 0.0, %v2376
    %v2378 = vpop.f32.mrf.mxu0
    %2379 = vmatprep.mubr.bf16.mxu0 0
    %2380 = vmatmul.mubr.bf16.gmra.mxu0 %v1329
    %v2381 = vpop.f32.mrf.mxu0
    %v2382 = vadd.f32 0.0, %v2381
    %v2383 = vpop.f32.mrf.mxu0
    %v2384 = vpop.f32.mrf.mxu0
    %v2385 = vadd.f32 0.0, %v2384
    %v2386 = vpop.f32.mrf.mxu0
    %2387 = vdwg.mxu0
    %v2388 = vld [vmem:[#allocation2] sm:$0x1]
    %v2390 = vlaneseq
    %v2391 = vshrl.u32 %v2390, 7
    %v2392 = vsub.s32 0, %v2391
    %v2393 = vrot.slane %v2388, %v2392
    %v2395 = vmul.f32 %v1366, %v2393
    %v2396 = vmul.f32 %v1369, %v2393
    %v2397 = vmul.f32 %v1374, %v2393
    %v2398 = vmul.f32 %v1377, %v2393
    %v2399 = vmul.f32 %v1382, %v2393
    %v2400 = vmul.f32 %v1385, %v2393
    %v2401 = vmul.f32 %v1390, %v2393
    %v2402 = vmul.f32 %v1393, %v2393
    %v2403 = vmul.f32 %v1398, %v2393
    %v2404 = vmul.f32 %v1401, %v2393
    %v2405 = vmul.f32 %v1406, %v2393
    %v2406 = vmul.f32 %v1409, %v2393
    %v2407 = vmul.f32 %v1414, %v2393
    %v2408 = vmul.f32 %v1417, %v2393
    %v2409 = vmul.f32 %v1422, %v2393
    %v2410 = vmul.f32 %v1425, %v2393
    %v2411 = vmul.f32 %v1430, %v2393
    %v2412 = vmul.f32 %v1433, %v2393
    %v2413 = vmul.f32 %v1438, %v2393
    %v2414 = vmul.f32 %v1441, %v2393
    %v2415 = vmul.f32 %v1446, %v2393
    %v2416 = vmul.f32 %v1449, %v2393
    %v2417 = vmul.f32 %v1454, %v2393
    %v2418 = vmul.f32 %v1457, %v2393
    %v2419 = vmul.f32 %v1462, %v2393
    %v2420 = vmul.f32 %v1465, %v2393
    %v2421 = vmul.f32 %v1470, %v2393
    %v2422 = vmul.f32 %v1473, %v2393
    %v2423 = vmul.f32 %v1478, %v2393
    %v2424 = vmul.f32 %v1481, %v2393
    %v2425 = vmul.f32 %v1486, %v2393
    %v2426 = vmul.f32 %v1489, %v2393
    %v2427 = vmul.f32 %v1494, %v2393
    %v2428 = vmul.f32 %v1497, %v2393
    %v2429 = vmul.f32 %v1502, %v2393
    %v2430 = vmul.f32 %v1505, %v2393
    %v2431 = vmul.f32 %v1510, %v2393
    %v2432 = vmul.f32 %v1513, %v2393
    %v2433 = vmul.f32 %v1518, %v2393
    %v2434 = vmul.f32 %v1521, %v2393
    %v2435 = vmul.f32 %v1526, %v2393
    %v2436 = vmul.f32 %v1529, %v2393
    %v2437 = vmul.f32 %v1534, %v2393
    %v2438 = vmul.f32 %v1537, %v2393
    %v2439 = vmul.f32 %v1542, %v2393
    %v2440 = vmul.f32 %v1545, %v2393
    %v2441 = vmul.f32 %v1550, %v2393
    %v2442 = vmul.f32 %v1553, %v2393
    %v2443 = vmul.f32 %v1558, %v2393
    %v2444 = vmul.f32 %v1561, %v2393
    %v2445 = vmul.f32 %v1566, %v2393
    %v2446 = vmul.f32 %v1569, %v2393
    %v2447 = vmul.f32 %v1574, %v2393
    %v2448 = vmul.f32 %v1577, %v2393
    %v2449 = vmul.f32 %v1582, %v2393
    %v2450 = vmul.f32 %v1585, %v2393
    %v2451 = vmul.f32 %v1590, %v2393
    %v2452 = vmul.f32 %v1593, %v2393
    %v2453 = vmul.f32 %v1598, %v2393
    %v2454 = vmul.f32 %v1601, %v2393
    %v2455 = vmul.f32 %v1606, %v2393
    %v2456 = vmul.f32 %v1609, %v2393
    %v2457 = vmul.f32 %v1614, %v2393
    %v2458 = vmul.f32 %v1617, %v2393
    %v2459 = vmul.f32 %v1622, %v2393
    %v2460 = vmul.f32 %v1625, %v2393
    %v2461 = vmul.f32 %v1630, %v2393
    %v2462 = vmul.f32 %v1633, %v2393
    %v2463 = vmul.f32 %v1638, %v2393
    %v2464 = vmul.f32 %v1641, %v2393
    %v2465 = vmul.f32 %v1646, %v2393
    %v2466 = vmul.f32 %v1649, %v2393
    %v2467 = vmul.f32 %v1654, %v2393
    %v2468 = vmul.f32 %v1657, %v2393
    %v2469 = vmul.f32 %v1662, %v2393
    %v2470 = vmul.f32 %v1665, %v2393
    %v2471 = vmul.f32 %v1670, %v2393
    %v2472 = vmul.f32 %v1673, %v2393
    %v2473 = vmul.f32 %v1678, %v2393
    %v2474 = vmul.f32 %v1681, %v2393
    %v2475 = vmul.f32 %v1686, %v2393
    %v2476 = vmul.f32 %v1689, %v2393
    %v2477 = vmul.f32 %v1694, %v2393
    %v2478 = vmul.f32 %v1697, %v2393
    %v2479 = vmul.f32 %v1702, %v2393
    %v2480 = vmul.f32 %v1705, %v2393
    %v2481 = vmul.f32 %v1710, %v2393
    %v2482 = vmul.f32 %v1713, %v2393
    %v2483 = vmul.f32 %v1718, %v2393
    %v2484 = vmul.f32 %v1721, %v2393
    %v2485 = vmul.f32 %v1726, %v2393
    %v2486 = vmul.f32 %v1729, %v2393
    %v2487 = vmul.f32 %v1734, %v2393
    %v2488 = vmul.f32 %v1737, %v2393
    %v2489 = vmul.f32 %v1742, %v2393
    %v2490 = vmul.f32 %v1745, %v2393
    %v2491 = vmul.f32 %v1750, %v2393
    %v2492 = vmul.f32 %v1753, %v2393
    %v2493 = vmul.f32 %v1758, %v2393
    %v2494 = vmul.f32 %v1761, %v2393
    %v2495 = vmul.f32 %v1766, %v2393
    %v2496 = vmul.f32 %v1769, %v2393
    %v2497 = vmul.f32 %v1774, %v2393
    %v2498 = vmul.f32 %v1777, %v2393
    %v2499 = vmul.f32 %v1782, %v2393
    %v2500 = vmul.f32 %v1785, %v2393
    %v2501 = vmul.f32 %v1790, %v2393
    %v2502 = vmul.f32 %v1793, %v2393
    %v2503 = vmul.f32 %v1798, %v2393
    %v2504 = vmul.f32 %v1801, %v2393
    %v2505 = vmul.f32 %v1806, %v2393
    %v2506 = vmul.f32 %v1809, %v2393
    %v2507 = vmul.f32 %v1814, %v2393
    %v2508 = vmul.f32 %v1817, %v2393
    %v2509 = vmul.f32 %v1822, %v2393
    %v2510 = vmul.f32 %v1825, %v2393
    %v2511 = vmul.f32 %v1830, %v2393
    %v2512 = vmul.f32 %v1833, %v2393
    %v2513 = vmul.f32 %v1838, %v2393
    %v2514 = vmul.f32 %v1841, %v2393
    %v2515 = vmul.f32 %v1846, %v2393
    %v2516 = vmul.f32 %v1849, %v2393
    %v2517 = vmul.f32 %v1854, %v2393
    %v2518 = vmul.f32 %v1857, %v2393
    %v2519 = vmul.f32 %v1862, %v2393
    %v2520 = vmul.f32 %v1865, %v2393
    %v2521 = vmul.f32 %v1870, %v2393
    %v2522 = vmul.f32 %v1873, %v2393
    %v2523 = vmul.f32 %v1878, %v2393
    %v2524 = vmul.f32 %v1881, %v2393
    %v2525 = vmul.f32 %v1886, %v2393
    %v2526 = vmul.f32 %v1889, %v2393
    %v2527 = vmul.f32 %v1894, %v2393
    %v2528 = vmul.f32 %v1897, %v2393
    %v2529 = vmul.f32 %v1902, %v2393
    %v2530 = vmul.f32 %v1905, %v2393
    %v2531 = vmul.f32 %v1910, %v2393
    %v2532 = vmul.f32 %v1913, %v2393
    %v2533 = vmul.f32 %v1918, %v2393
    %v2534 = vmul.f32 %v1921, %v2393
    %v2535 = vmul.f32 %v1926, %v2393
    %v2536 = vmul.f32 %v1929, %v2393
    %v2537 = vmul.f32 %v1934, %v2393
    %v2538 = vmul.f32 %v1937, %v2393
    %v2539 = vmul.f32 %v1942, %v2393
    %v2540 = vmul.f32 %v1945, %v2393
    %v2541 = vmul.f32 %v1950, %v2393
    %v2542 = vmul.f32 %v1953, %v2393
    %v2543 = vmul.f32 %v1958, %v2393
    %v2544 = vmul.f32 %v1961, %v2393
    %v2545 = vmul.f32 %v1966, %v2393
    %v2546 = vmul.f32 %v1969, %v2393
    %v2547 = vmul.f32 %v1974, %v2393
    %v2548 = vmul.f32 %v1977, %v2393
    %v2549 = vmul.f32 %v1982, %v2393
    %v2550 = vmul.f32 %v1985, %v2393
    %v2551 = vmul.f32 %v1990, %v2393
    %v2552 = vmul.f32 %v1993, %v2393
    %v2553 = vmul.f32 %v1998, %v2393
    %v2554 = vmul.f32 %v2001, %v2393
    %v2555 = vmul.f32 %v2006, %v2393
    %v2556 = vmul.f32 %v2009, %v2393
    %v2557 = vmul.f32 %v2014, %v2393
    %v2558 = vmul.f32 %v2017, %v2393
    %v2559 = vmul.f32 %v2022, %v2393
    %v2560 = vmul.f32 %v2025, %v2393
    %v2561 = vmul.f32 %v2030, %v2393
    %v2562 = vmul.f32 %v2033, %v2393
    %v2563 = vmul.f32 %v2038, %v2393
    %v2564 = vmul.f32 %v2041, %v2393
    %v2565 = vmul.f32 %v2046, %v2393
    %v2566 = vmul.f32 %v2049, %v2393
    %v2567 = vmul.f32 %v2054, %v2393
    %v2568 = vmul.f32 %v2057, %v2393
    %v2569 = vmul.f32 %v2062, %v2393
    %v2570 = vmul.f32 %v2065, %v2393
    %v2571 = vmul.f32 %v2070, %v2393
    %v2572 = vmul.f32 %v2073, %v2393
    %v2573 = vmul.f32 %v2078, %v2393
    %v2574 = vmul.f32 %v2081, %v2393
    %v2575 = vmul.f32 %v2086, %v2393
    %v2576 = vmul.f32 %v2089, %v2393
    %v2577 = vmul.f32 %v2094, %v2393
    %v2578 = vmul.f32 %v2097, %v2393
    %v2579 = vmul.f32 %v2102, %v2393
    %v2580 = vmul.f32 %v2105, %v2393
    %v2581 = vmul.f32 %v2110, %v2393
    %v2582 = vmul.f32 %v2113, %v2393
    %v2583 = vmul.f32 %v2118, %v2393
    %v2584 = vmul.f32 %v2121, %v2393
    %v2585 = vmul.f32 %v2126, %v2393
    %v2586 = vmul.f32 %v2129, %v2393
    %v2587 = vmul.f32 %v2134, %v2393
    %v2588 = vmul.f32 %v2137, %v2393
    %v2589 = vmul.f32 %v2142, %v2393
    %v2590 = vmul.f32 %v2145, %v2393
    %v2591 = vmul.f32 %v2150, %v2393
    %v2592 = vmul.f32 %v2153, %v2393
    %v2593 = vmul.f32 %v2158, %v2393
    %v2594 = vmul.f32 %v2161, %v2393
    %v2595 = vmul.f32 %v2166, %v2393
    %v2596 = vmul.f32 %v2169, %v2393
    %v2597 = vmul.f32 %v2174, %v2393
    %v2598 = vmul.f32 %v2177, %v2393
    %v2599 = vmul.f32 %v2182, %v2393
    %v2600 = vmul.f32 %v2185, %v2393
    %v2601 = vmul.f32 %v2190, %v2393
    %v2602 = vmul.f32 %v2193, %v2393
    %v2603 = vmul.f32 %v2198, %v2393
    %v2604 = vmul.f32 %v2201, %v2393
    %v2605 = vmul.f32 %v2206, %v2393
    %v2606 = vmul.f32 %v2209, %v2393
    %v2607 = vmul.f32 %v2214, %v2393
    %v2608 = vmul.f32 %v2217, %v2393
    %v2609 = vmul.f32 %v2222, %v2393
    %v2610 = vmul.f32 %v2225, %v2393
    %v2611 = vmul.f32 %v2230, %v2393
    %v2612 = vmul.f32 %v2233, %v2393
    %v2613 = vmul.f32 %v2238, %v2393
    %v2614 = vmul.f32 %v2241, %v2393
    %v2615 = vmul.f32 %v2246, %v2393
    %v2616 = vmul.f32 %v2249, %v2393
    %v2617 = vmul.f32 %v2254, %v2393
    %v2618 = vmul.f32 %v2257, %v2393
    %v2619 = vmul.f32 %v2262, %v2393
    %v2620 = vmul.f32 %v2265, %v2393
    %v2621 = vmul.f32 %v2270, %v2393
    %v2622 = vmul.f32 %v2273, %v2393
    %v2623 = vmul.f32 %v2278, %v2393
    %v2624 = vmul.f32 %v2281, %v2393
    %v2625 = vmul.f32 %v2286, %v2393
    %v2626 = vmul.f32 %v2289, %v2393
    %v2627 = vmul.f32 %v2294, %v2393
    %v2628 = vmul.f32 %v2297, %v2393
    %v2629 = vmul.f32 %v2302, %v2393
    %v2630 = vmul.f32 %v2305, %v2393
    %v2631 = vmul.f32 %v2310, %v2393
    %v2632 = vmul.f32 %v2313, %v2393
    %v2633 = vmul.f32 %v2318, %v2393
    %v2634 = vmul.f32 %v2321, %v2393
    %v2635 = vmul.f32 %v2326, %v2393
    %v2636 = vmul.f32 %v2329, %v2393
    %v2637 = vmul.f32 %v2334, %v2393
    %v2638 = vmul.f32 %v2337, %v2393
    %v2639 = vmul.f32 %v2342, %v2393
    %v2640 = vmul.f32 %v2345, %v2393
    %v2641 = vmul.f32 %v2350, %v2393
    %v2642 = vmul.f32 %v2353, %v2393
    %v2643 = vmul.f32 %v2358, %v2393
    %v2644 = vmul.f32 %v2361, %v2393
    %v2645 = vmul.f32 %v2366, %v2393
    %v2646 = vmul.f32 %v2369, %v2393
    %v2647 = vmul.f32 %v2374, %v2393
    %v2648 = vmul.f32 %v2377, %v2393
    %v2649 = vmul.f32 %v2382, %v2393
    %v2650 = vmul.f32 %v2385, %v2393
    %v2651 = vld [vmem:[#allocation4] sm:$0x1]
    %v2653 = vlaneseq
    %v2654 = vshrl.u32 %v2653, 7
    %v2655 = vsub.s32 0, %v2654
    %v2656 = vrot.slane %v2651, %v2655
    %v2658 = vadd.f32 %v2395, %v2656
    %v2659 = vadd.f32 %v2396, %v2656
    %v2660 = vadd.f32 %v2397, %v2656
    %v2661 = vadd.f32 %v2398, %v2656
    %v2662 = vadd.f32 %v2399, %v2656
    %v2663 = vadd.f32 %v2400, %v2656
    %v2664 = vadd.f32 %v2401, %v2656
    %v2665 = vadd.f32 %v2402, %v2656
    %v2666 = vadd.f32 %v2403, %v2656
    %v2667 = vadd.f32 %v2404, %v2656
    %v2668 = vadd.f32 %v2405, %v2656
    %v2669 = vadd.f32 %v2406, %v2656
    %v2670 = vadd.f32 %v2407, %v2656
    %v2671 = vadd.f32 %v2408, %v2656
    %v2672 = vadd.f32 %v2409, %v2656
    %v2673 = vadd.f32 %v2410, %v2656
    %v2674 = vadd.f32 %v2411, %v2656
    %v2675 = vadd.f32 %v2412, %v2656
    %v2676 = vadd.f32 %v2413, %v2656
    %v2677 = vadd.f32 %v2414, %v2656
    %v2678 = vadd.f32 %v2415, %v2656
    %v2679 = vadd.f32 %v2416, %v2656
    %v2680 = vadd.f32 %v2417, %v2656
    %v2681 = vadd.f32 %v2418, %v2656
    %v2682 = vadd.f32 %v2419, %v2656
    %v2683 = vadd.f32 %v2420, %v2656
    %v2684 = vadd.f32 %v2421, %v2656
    %v2685 = vadd.f32 %v2422, %v2656
    %v2686 = vadd.f32 %v2423, %v2656
    %v2687 = vadd.f32 %v2424, %v2656
    %v2688 = vadd.f32 %v2425, %v2656
    %v2689 = vadd.f32 %v2426, %v2656
    %v2690 = vadd.f32 %v2427, %v2656
    %v2691 = vadd.f32 %v2428, %v2656
    %v2692 = vadd.f32 %v2429, %v2656
    %v2693 = vadd.f32 %v2430, %v2656
    %v2694 = vadd.f32 %v2431, %v2656
    %v2695 = vadd.f32 %v2432, %v2656
    %v2696 = vadd.f32 %v2433, %v2656
    %v2697 = vadd.f32 %v2434, %v2656
    %v2698 = vadd.f32 %v2435, %v2656
    %v2699 = vadd.f32 %v2436, %v2656
    %v2700 = vadd.f32 %v2437, %v2656
    %v2701 = vadd.f32 %v2438, %v2656
    %v2702 = vadd.f32 %v2439, %v2656
    %v2703 = vadd.f32 %v2440, %v2656
    %v2704 = vadd.f32 %v2441, %v2656
    %v2705 = vadd.f32 %v2442, %v2656
    %v2706 = vadd.f32 %v2443, %v2656
    %v2707 = vadd.f32 %v2444, %v2656
    %v2708 = vadd.f32 %v2445, %v2656
    %v2709 = vadd.f32 %v2446, %v2656
    %v2710 = vadd.f32 %v2447, %v2656
    %v2711 = vadd.f32 %v2448, %v2656
    %v2712 = vadd.f32 %v2449, %v2656
    %v2713 = vadd.f32 %v2450, %v2656
    %v2714 = vadd.f32 %v2451, %v2656
    %v2715 = vadd.f32 %v2452, %v2656
    %v2716 = vadd.f32 %v2453, %v2656
    %v2717 = vadd.f32 %v2454, %v2656
    %v2718 = vadd.f32 %v2455, %v2656
    %v2719 = vadd.f32 %v2456, %v2656
    %v2720 = vadd.f32 %v2457, %v2656
    %v2721 = vadd.f32 %v2458, %v2656
    %v2722 = vadd.f32 %v2459, %v2656
    %v2723 = vadd.f32 %v2460, %v2656
    %v2724 = vadd.f32 %v2461, %v2656
    %v2725 = vadd.f32 %v2462, %v2656
    %v2726 = vadd.f32 %v2463, %v2656
    %v2727 = vadd.f32 %v2464, %v2656
    %v2728 = vadd.f32 %v2465, %v2656
    %v2729 = vadd.f32 %v2466, %v2656
    %v2730 = vadd.f32 %v2467, %v2656
    %v2731 = vadd.f32 %v2468, %v2656
    %v2732 = vadd.f32 %v2469, %v2656
    %v2733 = vadd.f32 %v2470, %v2656
    %v2734 = vadd.f32 %v2471, %v2656
    %v2735 = vadd.f32 %v2472, %v2656
    %v2736 = vadd.f32 %v2473, %v2656
    %v2737 = vadd.f32 %v2474, %v2656
    %v2738 = vadd.f32 %v2475, %v2656
    %v2739 = vadd.f32 %v2476, %v2656
    %v2740 = vadd.f32 %v2477, %v2656
    %v2741 = vadd.f32 %v2478, %v2656
    %v2742 = vadd.f32 %v2479, %v2656
    %v2743 = vadd.f32 %v2480, %v2656
    %v2744 = vadd.f32 %v2481, %v2656
    %v2745 = vadd.f32 %v2482, %v2656
    %v2746 = vadd.f32 %v2483, %v2656
    %v2747 = vadd.f32 %v2484, %v2656
    %v2748 = vadd.f32 %v2485, %v2656
    %v2749 = vadd.f32 %v2486, %v2656
    %v2750 = vadd.f32 %v2487, %v2656
    %v2751 = vadd.f32 %v2488, %v2656
    %v2752 = vadd.f32 %v2489, %v2656
    %v2753 = vadd.f32 %v2490, %v2656
    %v2754 = vadd.f32 %v2491, %v2656
    %v2755 = vadd.f32 %v2492, %v2656
    %v2756 = vadd.f32 %v2493, %v2656
    %v2757 = vadd.f32 %v2494, %v2656
    %v2758 = vadd.f32 %v2495, %v2656
    %v2759 = vadd.f32 %v2496, %v2656
    %v2760 = vadd.f32 %v2497, %v2656
    %v2761 = vadd.f32 %v2498, %v2656
    %v2762 = vadd.f32 %v2499, %v2656
    %v2763 = vadd.f32 %v2500, %v2656
    %v2764 = vadd.f32 %v2501, %v2656
    %v2765 = vadd.f32 %v2502, %v2656
    %v2766 = vadd.f32 %v2503, %v2656
    %v2767 = vadd.f32 %v2504, %v2656
    %v2768 = vadd.f32 %v2505, %v2656
    %v2769 = vadd.f32 %v2506, %v2656
    %v2770 = vadd.f32 %v2507, %v2656
    %v2771 = vadd.f32 %v2508, %v2656
    %v2772 = vadd.f32 %v2509, %v2656
    %v2773 = vadd.f32 %v2510, %v2656
    %v2774 = vadd.f32 %v2511, %v2656
    %v2775 = vadd.f32 %v2512, %v2656
    %v2776 = vadd.f32 %v2513, %v2656
    %v2777 = vadd.f32 %v2514, %v2656
    %v2778 = vadd.f32 %v2515, %v2656
    %v2779 = vadd.f32 %v2516, %v2656
    %v2780 = vadd.f32 %v2517, %v2656
    %v2781 = vadd.f32 %v2518, %v2656
    %v2782 = vadd.f32 %v2519, %v2656
    %v2783 = vadd.f32 %v2520, %v2656
    %v2784 = vadd.f32 %v2521, %v2656
    %v2785 = vadd.f32 %v2522, %v2656
    %v2786 = vadd.f32 %v2523, %v2656
    %v2787 = vadd.f32 %v2524, %v2656
    %v2788 = vadd.f32 %v2525, %v2656
    %v2789 = vadd.f32 %v2526, %v2656
    %v2790 = vadd.f32 %v2527, %v2656
    %v2791 = vadd.f32 %v2528, %v2656
    %v2792 = vadd.f32 %v2529, %v2656
    %v2793 = vadd.f32 %v2530, %v2656
    %v2794 = vadd.f32 %v2531, %v2656
    %v2795 = vadd.f32 %v2532, %v2656
    %v2796 = vadd.f32 %v2533, %v2656
    %v2797 = vadd.f32 %v2534, %v2656
    %v2798 = vadd.f32 %v2535, %v2656
    %v2799 = vadd.f32 %v2536, %v2656
    %v2800 = vadd.f32 %v2537, %v2656
    %v2801 = vadd.f32 %v2538, %v2656
    %v2802 = vadd.f32 %v2539, %v2656
    %v2803 = vadd.f32 %v2540, %v2656
    %v2804 = vadd.f32 %v2541, %v2656
    %v2805 = vadd.f32 %v2542, %v2656
    %v2806 = vadd.f32 %v2543, %v2656
    %v2807 = vadd.f32 %v2544, %v2656
    %v2808 = vadd.f32 %v2545, %v2656
    %v2809 = vadd.f32 %v2546, %v2656
    %v2810 = vadd.f32 %v2547, %v2656
    %v2811 = vadd.f32 %v2548, %v2656
    %v2812 = vadd.f32 %v2549, %v2656
    %v2813 = vadd.f32 %v2550, %v2656
    %v2814 = vadd.f32 %v2551, %v2656
    %v2815 = vadd.f32 %v2552, %v2656
    %v2816 = vadd.f32 %v2553, %v2656
    %v2817 = vadd.f32 %v2554, %v2656
    %v2818 = vadd.f32 %v2555, %v2656
    %v2819 = vadd.f32 %v2556, %v2656
    %v2820 = vadd.f32 %v2557, %v2656
    %v2821 = vadd.f32 %v2558, %v2656
    %v2822 = vadd.f32 %v2559, %v2656
    %v2823 = vadd.f32 %v2560, %v2656
    %v2824 = vadd.f32 %v2561, %v2656
    %v2825 = vadd.f32 %v2562, %v2656
    %v2826 = vadd.f32 %v2563, %v2656
    %v2827 = vadd.f32 %v2564, %v2656
    %v2828 = vadd.f32 %v2565, %v2656
    %v2829 = vadd.f32 %v2566, %v2656
    %v2830 = vadd.f32 %v2567, %v2656
    %v2831 = vadd.f32 %v2568, %v2656
    %v2832 = vadd.f32 %v2569, %v2656
    %v2833 = vadd.f32 %v2570, %v2656
    %v2834 = vadd.f32 %v2571, %v2656
    %v2835 = vadd.f32 %v2572, %v2656
    %v2836 = vadd.f32 %v2573, %v2656
    %v2837 = vadd.f32 %v2574, %v2656
    %v2838 = vadd.f32 %v2575, %v2656
    %v2839 = vadd.f32 %v2576, %v2656
    %v2840 = vadd.f32 %v2577, %v2656
    %v2841 = vadd.f32 %v2578, %v2656
    %v2842 = vadd.f32 %v2579, %v2656
    %v2843 = vadd.f32 %v2580, %v2656
    %v2844 = vadd.f32 %v2581, %v2656
    %v2845 = vadd.f32 %v2582, %v2656
    %v2846 = vadd.f32 %v2583, %v2656
    %v2847 = vadd.f32 %v2584, %v2656
    %v2848 = vadd.f32 %v2585, %v2656
    %v2849 = vadd.f32 %v2586, %v2656
    %v2850 = vadd.f32 %v2587, %v2656
    %v2851 = vadd.f32 %v2588, %v2656
    %v2852 = vadd.f32 %v2589, %v2656
    %v2853 = vadd.f32 %v2590, %v2656
    %v2854 = vadd.f32 %v2591, %v2656
    %v2855 = vadd.f32 %v2592, %v2656
    %v2856 = vadd.f32 %v2593, %v2656
    %v2857 = vadd.f32 %v2594, %v2656
    %v2858 = vadd.f32 %v2595, %v2656
    %v2859 = vadd.f32 %v2596, %v2656
    %v2860 = vadd.f32 %v2597, %v2656
    %v2861 = vadd.f32 %v2598, %v2656
    %v2862 = vadd.f32 %v2599, %v2656
    %v2863 = vadd.f32 %v2600, %v2656
    %v2864 = vadd.f32 %v2601, %v2656
    %v2865 = vadd.f32 %v2602, %v2656
    %v2866 = vadd.f32 %v2603, %v2656
    %v2867 = vadd.f32 %v2604, %v2656
    %v2868 = vadd.f32 %v2605, %v2656
    %v2869 = vadd.f32 %v2606, %v2656
    %v2870 = vadd.f32 %v2607, %v2656
    %v2871 = vadd.f32 %v2608, %v2656
    %v2872 = vadd.f32 %v2609, %v2656
    %v2873 = vadd.f32 %v2610, %v2656
    %v2874 = vadd.f32 %v2611, %v2656
    %v2875 = vadd.f32 %v2612, %v2656
    %v2876 = vadd.f32 %v2613, %v2656
    %v2877 = vadd.f32 %v2614, %v2656
    %v2878 = vadd.f32 %v2615, %v2656
    %v2879 = vadd.f32 %v2616, %v2656
    %v2880 = vadd.f32 %v2617, %v2656
    %v2881 = vadd.f32 %v2618, %v2656
    %v2882 = vadd.f32 %v2619, %v2656
    %v2883 = vadd.f32 %v2620, %v2656
    %v2884 = vadd.f32 %v2621, %v2656
    %v2885 = vadd.f32 %v2622, %v2656
    %v2886 = vadd.f32 %v2623, %v2656
    %v2887 = vadd.f32 %v2624, %v2656
    %v2888 = vadd.f32 %v2625, %v2656
    %v2889 = vadd.f32 %v2626, %v2656
    %v2890 = vadd.f32 %v2627, %v2656
    %v2891 = vadd.f32 %v2628, %v2656
    %v2892 = vadd.f32 %v2629, %v2656
    %v2893 = vadd.f32 %v2630, %v2656
    %v2894 = vadd.f32 %v2631, %v2656
    %v2895 = vadd.f32 %v2632, %v2656
    %v2896 = vadd.f32 %v2633, %v2656
    %v2897 = vadd.f32 %v2634, %v2656
    %v2898 = vadd.f32 %v2635, %v2656
    %v2899 = vadd.f32 %v2636, %v2656
    %v2900 = vadd.f32 %v2637, %v2656
    %v2901 = vadd.f32 %v2638, %v2656
    %v2902 = vadd.f32 %v2639, %v2656
    %v2903 = vadd.f32 %v2640, %v2656
    %v2904 = vadd.f32 %v2641, %v2656
    %v2905 = vadd.f32 %v2642, %v2656
    %v2906 = vadd.f32 %v2643, %v2656
    %v2907 = vadd.f32 %v2644, %v2656
    %v2908 = vadd.f32 %v2645, %v2656
    %v2909 = vadd.f32 %v2646, %v2656
    %v2910 = vadd.f32 %v2647, %v2656
    %v2911 = vadd.f32 %v2648, %v2656
    %v2912 = vadd.f32 %v2649, %v2656
    %v2913 = vadd.f32 %v2650, %v2656
    %vm2914 = vcmp.gt.f32.partialorder %v2658, 0.0
    %vm2915 = vcmp.gt.f32.partialorder %v2659, 0.0
    %vm2916 = vcmp.gt.f32.partialorder %v2660, 0.0
    %vm2917 = vcmp.gt.f32.partialorder %v2661, 0.0
    %vm2918 = vcmp.gt.f32.partialorder %v2662, 0.0
    %vm2919 = vcmp.gt.f32.partialorder %v2663, 0.0
    %vm2920 = vcmp.gt.f32.partialorder %v2664, 0.0
    %vm2921 = vcmp.gt.f32.partialorder %v2665, 0.0
    %vm2922 = vcmp.gt.f32.partialorder %v2666, 0.0
    %vm2923 = vcmp.gt.f32.partialorder %v2667, 0.0
    %vm2924 = vcmp.gt.f32.partialorder %v2668, 0.0
    %vm2925 = vcmp.gt.f32.partialorder %v2669, 0.0
    %vm2926 = vcmp.gt.f32.partialorder %v2670, 0.0
    %vm2927 = vcmp.gt.f32.partialorder %v2671, 0.0
    %vm2928 = vcmp.gt.f32.partialorder %v2672, 0.0
    %vm2929 = vcmp.gt.f32.partialorder %v2673, 0.0
    %vm2930 = vcmp.gt.f32.partialorder %v2674, 0.0
    %vm2931 = vcmp.gt.f32.partialorder %v2675, 0.0
    %vm2932 = vcmp.gt.f32.partialorder %v2676, 0.0
    %vm2933 = vcmp.gt.f32.partialorder %v2677, 0.0
    %vm2934 = vcmp.gt.f32.partialorder %v2678, 0.0
    %vm2935 = vcmp.gt.f32.partialorder %v2679, 0.0
    %vm2936 = vcmp.gt.f32.partialorder %v2680, 0.0
    %vm2937 = vcmp.gt.f32.partialorder %v2681, 0.0
    %vm2938 = vcmp.gt.f32.partialorder %v2682, 0.0
    %vm2939 = vcmp.gt.f32.partialorder %v2683, 0.0
    %vm2940 = vcmp.gt.f32.partialorder %v2684, 0.0
    %vm2941 = vcmp.gt.f32.partialorder %v2685, 0.0
    %vm2942 = vcmp.gt.f32.partialorder %v2686, 0.0
    %vm2943 = vcmp.gt.f32.partialorder %v2687, 0.0
    %vm2944 = vcmp.gt.f32.partialorder %v2688, 0.0
    %vm2945 = vcmp.gt.f32.partialorder %v2689, 0.0
    %vm2946 = vcmp.gt.f32.partialorder %v2690, 0.0
    %vm2947 = vcmp.gt.f32.partialorder %v2691, 0.0
    %vm2948 = vcmp.gt.f32.partialorder %v2692, 0.0
    %vm2949 = vcmp.gt.f32.partialorder %v2693, 0.0
    %vm2950 = vcmp.gt.f32.partialorder %v2694, 0.0
    %vm2951 = vcmp.gt.f32.partialorder %v2695, 0.0
    %vm2952 = vcmp.gt.f32.partialorder %v2696, 0.0
    %vm2953 = vcmp.gt.f32.partialorder %v2697, 0.0
    %vm2954 = vcmp.gt.f32.partialorder %v2698, 0.0
    %vm2955 = vcmp.gt.f32.partialorder %v2699, 0.0
    %vm2956 = vcmp.gt.f32.partialorder %v2700, 0.0
    %vm2957 = vcmp.gt.f32.partialorder %v2701, 0.0
    %vm2958 = vcmp.gt.f32.partialorder %v2702, 0.0
    %vm2959 = vcmp.gt.f32.partialorder %v2703, 0.0
    %vm2960 = vcmp.gt.f32.partialorder %v2704, 0.0
    %vm2961 = vcmp.gt.f32.partialorder %v2705, 0.0
    %vm2962 = vcmp.gt.f32.partialorder %v2706, 0.0
    %vm2963 = vcmp.gt.f32.partialorder %v2707, 0.0
    %vm2964 = vcmp.gt.f32.partialorder %v2708, 0.0
    %vm2965 = vcmp.gt.f32.partialorder %v2709, 0.0
    %vm2966 = vcmp.gt.f32.partialorder %v2710, 0.0
    %vm2967 = vcmp.gt.f32.partialorder %v2711, 0.0
    %vm2968 = vcmp.gt.f32.partialorder %v2712, 0.0
    %vm2969 = vcmp.gt.f32.partialorder %v2713, 0.0
    %vm2970 = vcmp.gt.f32.partialorder %v2714, 0.0
    %vm2971 = vcmp.gt.f32.partialorder %v2715, 0.0
    %vm2972 = vcmp.gt.f32.partialorder %v2716, 0.0
    %vm2973 = vcmp.gt.f32.partialorder %v2717, 0.0
    %vm2974 = vcmp.gt.f32.partialorder %v2718, 0.0
    %vm2975 = vcmp.gt.f32.partialorder %v2719, 0.0
    %vm2976 = vcmp.gt.f32.partialorder %v2720, 0.0
    %vm2977 = vcmp.gt.f32.partialorder %v2721, 0.0
    %vm2978 = vcmp.gt.f32.partialorder %v2722, 0.0
    %vm2979 = vcmp.gt.f32.partialorder %v2723, 0.0
    %vm2980 = vcmp.gt.f32.partialorder %v2724, 0.0
    %vm2981 = vcmp.gt.f32.partialorder %v2725, 0.0
    %vm2982 = vcmp.gt.f32.partialorder %v2726, 0.0
    %vm2983 = vcmp.gt.f32.partialorder %v2727, 0.0
    %vm2984 = vcmp.gt.f32.partialorder %v2728, 0.0
    %vm2985 = vcmp.gt.f32.partialorder %v2729, 0.0
    %vm2986 = vcmp.gt.f32.partialorder %v2730, 0.0
    %vm2987 = vcmp.gt.f32.partialorder %v2731, 0.0
    %vm2988 = vcmp.gt.f32.partialorder %v2732, 0.0
    %vm2989 = vcmp.gt.f32.partialorder %v2733, 0.0
    %vm2990 = vcmp.gt.f32.partialorder %v2734, 0.0
    %vm2991 = vcmp.gt.f32.partialorder %v2735, 0.0
    %vm2992 = vcmp.gt.f32.partialorder %v2736, 0.0
    %vm2993 = vcmp.gt.f32.partialorder %v2737, 0.0
    %vm2994 = vcmp.gt.f32.partialorder %v2738, 0.0
    %vm2995 = vcmp.gt.f32.partialorder %v2739, 0.0
    %vm2996 = vcmp.gt.f32.partialorder %v2740, 0.0
    %vm2997 = vcmp.gt.f32.partialorder %v2741, 0.0
    %vm2998 = vcmp.gt.f32.partialorder %v2742, 0.0
    %vm2999 = vcmp.gt.f32.partialorder %v2743, 0.0
    %vm3000 = vcmp.gt.f32.partialorder %v2744, 0.0
    %vm3001 = vcmp.gt.f32.partialorder %v2745, 0.0
    %vm3002 = vcmp.gt.f32.partialorder %v2746, 0.0
    %vm3003 = vcmp.gt.f32.partialorder %v2747, 0.0
    %vm3004 = vcmp.gt.f32.partialorder %v2748, 0.0
    %vm3005 = vcmp.gt.f32.partialorder %v2749, 0.0
    %vm3006 = vcmp.gt.f32.partialorder %v2750, 0.0
    %vm3007 = vcmp.gt.f32.partialorder %v2751, 0.0
    %vm3008 = vcmp.gt.f32.partialorder %v2752, 0.0
    %vm3009 = vcmp.gt.f32.partialorder %v2753, 0.0
    %vm3010 = vcmp.gt.f32.partialorder %v2754, 0.0
    %vm3011 = vcmp.gt.f32.partialorder %v2755, 0.0
    %vm3012 = vcmp.gt.f32.partialorder %v2756, 0.0
    %vm3013 = vcmp.gt.f32.partialorder %v2757, 0.0
    %vm3014 = vcmp.gt.f32.partialorder %v2758, 0.0
    %vm3015 = vcmp.gt.f32.partialorder %v2759, 0.0
    %vm3016 = vcmp.gt.f32.partialorder %v2760, 0.0
    %vm3017 = vcmp.gt.f32.partialorder %v2761, 0.0
    %vm3018 = vcmp.gt.f32.partialorder %v2762, 0.0
    %vm3019 = vcmp.gt.f32.partialorder %v2763, 0.0
    %vm3020 = vcmp.gt.f32.partialorder %v2764, 0.0
    %vm3021 = vcmp.gt.f32.partialorder %v2765, 0.0
    %vm3022 = vcmp.gt.f32.partialorder %v2766, 0.0
    %vm3023 = vcmp.gt.f32.partialorder %v2767, 0.0
    %vm3024 = vcmp.gt.f32.partialorder %v2768, 0.0
    %vm3025 = vcmp.gt.f32.partialorder %v2769, 0.0
    %vm3026 = vcmp.gt.f32.partialorder %v2770, 0.0
    %vm3027 = vcmp.gt.f32.partialorder %v2771, 0.0
    %vm3028 = vcmp.gt.f32.partialorder %v2772, 0.0
    %vm3029 = vcmp.gt.f32.partialorder %v2773, 0.0
    %vm3030 = vcmp.gt.f32.partialorder %v2774, 0.0
    %vm3031 = vcmp.gt.f32.partialorder %v2775, 0.0
    %vm3032 = vcmp.gt.f32.partialorder %v2776, 0.0
    %vm3033 = vcmp.gt.f32.partialorder %v2777, 0.0
    %vm3034 = vcmp.gt.f32.partialorder %v2778, 0.0
    %vm3035 = vcmp.gt.f32.partialorder %v2779, 0.0
    %vm3036 = vcmp.gt.f32.partialorder %v2780, 0.0
    %vm3037 = vcmp.gt.f32.partialorder %v2781, 0.0
    %vm3038 = vcmp.gt.f32.partialorder %v2782, 0.0
    %vm3039 = vcmp.gt.f32.partialorder %v2783, 0.0
    %vm3040 = vcmp.gt.f32.partialorder %v2784, 0.0
    %vm3041 = vcmp.gt.f32.partialorder %v2785, 0.0
    %vm3042 = vcmp.gt.f32.partialorder %v2786, 0.0
    %vm3043 = vcmp.gt.f32.partialorder %v2787, 0.0
    %vm3044 = vcmp.gt.f32.partialorder %v2788, 0.0
    %vm3045 = vcmp.gt.f32.partialorder %v2789, 0.0
    %vm3046 = vcmp.gt.f32.partialorder %v2790, 0.0
    %vm3047 = vcmp.gt.f32.partialorder %v2791, 0.0
    %vm3048 = vcmp.gt.f32.partialorder %v2792, 0.0
    %vm3049 = vcmp.gt.f32.partialorder %v2793, 0.0
    %vm3050 = vcmp.gt.f32.partialorder %v2794, 0.0
    %vm3051 = vcmp.gt.f32.partialorder %v2795, 0.0
    %vm3052 = vcmp.gt.f32.partialorder %v2796, 0.0
    %vm3053 = vcmp.gt.f32.partialorder %v2797, 0.0
    %vm3054 = vcmp.gt.f32.partialorder %v2798, 0.0
    %vm3055 = vcmp.gt.f32.partialorder %v2799, 0.0
    %vm3056 = vcmp.gt.f32.partialorder %v2800, 0.0
    %vm3057 = vcmp.gt.f32.partialorder %v2801, 0.0
    %vm3058 = vcmp.gt.f32.partialorder %v2802, 0.0
    %vm3059 = vcmp.gt.f32.partialorder %v2803, 0.0
    %vm3060 = vcmp.gt.f32.partialorder %v2804, 0.0
    %vm3061 = vcmp.gt.f32.partialorder %v2805, 0.0
    %vm3062 = vcmp.gt.f32.partialorder %v2806, 0.0
    %vm3063 = vcmp.gt.f32.partialorder %v2807, 0.0
    %vm3064 = vcmp.gt.f32.partialorder %v2808, 0.0
    %vm3065 = vcmp.gt.f32.partialorder %v2809, 0.0
    %vm3066 = vcmp.gt.f32.partialorder %v2810, 0.0
    %vm3067 = vcmp.gt.f32.partialorder %v2811, 0.0
    %vm3068 = vcmp.gt.f32.partialorder %v2812, 0.0
    %vm3069 = vcmp.gt.f32.partialorder %v2813, 0.0
    %vm3070 = vcmp.gt.f32.partialorder %v2814, 0.0
    %vm3071 = vcmp.gt.f32.partialorder %v2815, 0.0
    %vm3072 = vcmp.gt.f32.partialorder %v2816, 0.0
    %vm3073 = vcmp.gt.f32.partialorder %v2817, 0.0
    %vm3074 = vcmp.gt.f32.partialorder %v2818, 0.0
    %vm3075 = vcmp.gt.f32.partialorder %v2819, 0.0
    %vm3076 = vcmp.gt.f32.partialorder %v2820, 0.0
    %vm3077 = vcmp.gt.f32.partialorder %v2821, 0.0
    %vm3078 = vcmp.gt.f32.partialorder %v2822, 0.0
    %vm3079 = vcmp.gt.f32.partialorder %v2823, 0.0
    %vm3080 = vcmp.gt.f32.partialorder %v2824, 0.0
    %vm3081 = vcmp.gt.f32.partialorder %v2825, 0.0
    %vm3082 = vcmp.gt.f32.partialorder %v2826, 0.0
    %vm3083 = vcmp.gt.f32.partialorder %v2827, 0.0
    %vm3084 = vcmp.gt.f32.partialorder %v2828, 0.0
    %vm3085 = vcmp.gt.f32.partialorder %v2829, 0.0
    %vm3086 = vcmp.gt.f32.partialorder %v2830, 0.0
    %vm3087 = vcmp.gt.f32.partialorder %v2831, 0.0
    %vm3088 = vcmp.gt.f32.partialorder %v2832, 0.0
    %vm3089 = vcmp.gt.f32.partialorder %v2833, 0.0
    %vm3090 = vcmp.gt.f32.partialorder %v2834, 0.0
    %vm3091 = vcmp.gt.f32.partialorder %v2835, 0.0
    %vm3092 = vcmp.gt.f32.partialorder %v2836, 0.0
    %vm3093 = vcmp.gt.f32.partialorder %v2837, 0.0
    %vm3094 = vcmp.gt.f32.partialorder %v2838, 0.0
    %vm3095 = vcmp.gt.f32.partialorder %v2839, 0.0
    %vm3096 = vcmp.gt.f32.partialorder %v2840, 0.0
    %vm3097 = vcmp.gt.f32.partialorder %v2841, 0.0
    %vm3098 = vcmp.gt.f32.partialorder %v2842, 0.0
    %vm3099 = vcmp.gt.f32.partialorder %v2843, 0.0
    %vm3100 = vcmp.gt.f32.partialorder %v2844, 0.0
    %vm3101 = vcmp.gt.f32.partialorder %v2845, 0.0
    %vm3102 = vcmp.gt.f32.partialorder %v2846, 0.0
    %vm3103 = vcmp.gt.f32.partialorder %v2847, 0.0
    %vm3104 = vcmp.gt.f32.partialorder %v2848, 0.0
    %vm3105 = vcmp.gt.f32.partialorder %v2849, 0.0
    %vm3106 = vcmp.gt.f32.partialorder %v2850, 0.0
    %vm3107 = vcmp.gt.f32.partialorder %v2851, 0.0
    %vm3108 = vcmp.gt.f32.partialorder %v2852, 0.0
    %vm3109 = vcmp.gt.f32.partialorder %v2853, 0.0
    %vm3110 = vcmp.gt.f32.partialorder %v2854, 0.0
    %vm3111 = vcmp.gt.f32.partialorder %v2855, 0.0
    %vm3112 = vcmp.gt.f32.partialorder %v2856, 0.0
    %vm3113 = vcmp.gt.f32.partialorder %v2857, 0.0
    %vm3114 = vcmp.gt.f32.partialorder %v2858, 0.0
    %vm3115 = vcmp.gt.f32.partialorder %v2859, 0.0
    %vm3116 = vcmp.gt.f32.partialorder %v2860, 0.0
    %vm3117 = vcmp.gt.f32.partialorder %v2861, 0.0
    %vm3118 = vcmp.gt.f32.partialorder %v2862, 0.0
    %vm3119 = vcmp.gt.f32.partialorder %v2863, 0.0
    %vm3120 = vcmp.gt.f32.partialorder %v2864, 0.0
    %vm3121 = vcmp.gt.f32.partialorder %v2865, 0.0
    %vm3122 = vcmp.gt.f32.partialorder %v2866, 0.0
    %vm3123 = vcmp.gt.f32.partialorder %v2867, 0.0
    %vm3124 = vcmp.gt.f32.partialorder %v2868, 0.0
    %vm3125 = vcmp.gt.f32.partialorder %v2869, 0.0
    %vm3126 = vcmp.gt.f32.partialorder %v2870, 0.0
    %vm3127 = vcmp.gt.f32.partialorder %v2871, 0.0
    %vm3128 = vcmp.gt.f32.partialorder %v2872, 0.0
    %vm3129 = vcmp.gt.f32.partialorder %v2873, 0.0
    %vm3130 = vcmp.gt.f32.partialorder %v2874, 0.0
    %vm3131 = vcmp.gt.f32.partialorder %v2875, 0.0
    %vm3132 = vcmp.gt.f32.partialorder %v2876, 0.0
    %vm3133 = vcmp.gt.f32.partialorder %v2877, 0.0
    %vm3134 = vcmp.gt.f32.partialorder %v2878, 0.0
    %vm3135 = vcmp.gt.f32.partialorder %v2879, 0.0
    %vm3136 = vcmp.gt.f32.partialorder %v2880, 0.0
    %vm3137 = vcmp.gt.f32.partialorder %v2881, 0.0
    %vm3138 = vcmp.gt.f32.partialorder %v2882, 0.0
    %vm3139 = vcmp.gt.f32.partialorder %v2883, 0.0
    %vm3140 = vcmp.gt.f32.partialorder %v2884, 0.0
    %vm3141 = vcmp.gt.f32.partialorder %v2885, 0.0
    %vm3142 = vcmp.gt.f32.partialorder %v2886, 0.0
    %vm3143 = vcmp.gt.f32.partialorder %v2887, 0.0
    %vm3144 = vcmp.gt.f32.partialorder %v2888, 0.0
    %vm3145 = vcmp.gt.f32.partialorder %v2889, 0.0
    %vm3146 = vcmp.gt.f32.partialorder %v2890, 0.0
    %vm3147 = vcmp.gt.f32.partialorder %v2891, 0.0
    %vm3148 = vcmp.gt.f32.partialorder %v2892, 0.0
    %vm3149 = vcmp.gt.f32.partialorder %v2893, 0.0
    %vm3150 = vcmp.gt.f32.partialorder %v2894, 0.0
    %vm3151 = vcmp.gt.f32.partialorder %v2895, 0.0
    %vm3152 = vcmp.gt.f32.partialorder %v2896, 0.0
    %vm3153 = vcmp.gt.f32.partialorder %v2897, 0.0
    %vm3154 = vcmp.gt.f32.partialorder %v2898, 0.0
    %vm3155 = vcmp.gt.f32.partialorder %v2899, 0.0
    %vm3156 = vcmp.gt.f32.partialorder %v2900, 0.0
    %vm3157 = vcmp.gt.f32.partialorder %v2901, 0.0
    %vm3158 = vcmp.gt.f32.partialorder %v2902, 0.0
    %vm3159 = vcmp.gt.f32.partialorder %v2903, 0.0
    %vm3160 = vcmp.gt.f32.partialorder %v2904, 0.0
    %vm3161 = vcmp.gt.f32.partialorder %v2905, 0.0
    %vm3162 = vcmp.gt.f32.partialorder %v2906, 0.0
    %vm3163 = vcmp.gt.f32.partialorder %v2907, 0.0
    %vm3164 = vcmp.gt.f32.partialorder %v2908, 0.0
    %vm3165 = vcmp.gt.f32.partialorder %v2909, 0.0
    %vm3166 = vcmp.gt.f32.partialorder %v2910, 0.0
    %vm3167 = vcmp.gt.f32.partialorder %v2911, 0.0
    %vm3168 = vcmp.gt.f32.partialorder %v2912, 0.0
    %vm3169 = vcmp.gt.f32.partialorder %v2913, 0.0
    %v3170 = vmul.f32 %v2658, 0.2
    %v3171 = vmul.f32 %v2659, 0.2
    %v3172 = vmul.f32 %v2660, 0.2
    %v3173 = vmul.f32 %v2661, 0.2
    %v3174 = vmul.f32 %v2662, 0.2
    %v3175 = vmul.f32 %v2663, 0.2
    %v3176 = vmul.f32 %v2664, 0.2
    %v3177 = vmul.f32 %v2665, 0.2
    %v3178 = vmul.f32 %v2666, 0.2
    %v3179 = vmul.f32 %v2667, 0.2
    %v3180 = vmul.f32 %v2668, 0.2
    %v3181 = vmul.f32 %v2669, 0.2
    %v3182 = vmul.f32 %v2670, 0.2
    %v3183 = vmul.f32 %v2671, 0.2
    %v3184 = vmul.f32 %v2672, 0.2
    %v3185 = vmul.f32 %v2673, 0.2
    %v3186 = vmul.f32 %v2674, 0.2
    %v3187 = vmul.f32 %v2675, 0.2
    %v3188 = vmul.f32 %v2676, 0.2
    %v3189 = vmul.f32 %v2677, 0.2
    %v3190 = vmul.f32 %v2678, 0.2
    %v3191 = vmul.f32 %v2679, 0.2
    %v3192 = vmul.f32 %v2680, 0.2
    %v3193 = vmul.f32 %v2681, 0.2
    %v3194 = vmul.f32 %v2682, 0.2
    %v3195 = vmul.f32 %v2683, 0.2
    %v3196 = vmul.f32 %v2684, 0.2
    %v3197 = vmul.f32 %v2685, 0.2
    %v3198 = vmul.f32 %v2686, 0.2
    %v3199 = vmul.f32 %v2687, 0.2
    %v3200 = vmul.f32 %v2688, 0.2
    %v3201 = vmul.f32 %v2689, 0.2
    %v3202 = vmul.f32 %v2690, 0.2
    %v3203 = vmul.f32 %v2691, 0.2
    %v3204 = vmul.f32 %v2692, 0.2
    %v3205 = vmul.f32 %v2693, 0.2
    %v3206 = vmul.f32 %v2694, 0.2
    %v3207 = vmul.f32 %v2695, 0.2
    %v3208 = vmul.f32 %v2696, 0.2
    %v3209 = vmul.f32 %v2697, 0.2
    %v3210 = vmul.f32 %v2698, 0.2
    %v3211 = vmul.f32 %v2699, 0.2
    %v3212 = vmul.f32 %v2700, 0.2
    %v3213 = vmul.f32 %v2701, 0.2
    %v3214 = vmul.f32 %v2702, 0.2
    %v3215 = vmul.f32 %v2703, 0.2
    %v3216 = vmul.f32 %v2704, 0.2
    %v3217 = vmul.f32 %v2705, 0.2
    %v3218 = vmul.f32 %v2706, 0.2
    %v3219 = vmul.f32 %v2707, 0.2
    %v3220 = vmul.f32 %v2708, 0.2
    %v3221 = vmul.f32 %v2709, 0.2
    %v3222 = vmul.f32 %v2710, 0.2
    %v3223 = vmul.f32 %v2711, 0.2
    %v3224 = vmul.f32 %v2712, 0.2
    %v3225 = vmul.f32 %v2713, 0.2
    %v3226 = vmul.f32 %v2714, 0.2
    %v3227 = vmul.f32 %v2715, 0.2
    %v3228 = vmul.f32 %v2716, 0.2
    %v3229 = vmul.f32 %v2717, 0.2
    %v3230 = vmul.f32 %v2718, 0.2
    %v3231 = vmul.f32 %v2719, 0.2
    %v3232 = vmul.f32 %v2720, 0.2
    %v3233 = vmul.f32 %v2721, 0.2
    %v3234 = vmul.f32 %v2722, 0.2
    %v3235 = vmul.f32 %v2723, 0.2
    %v3236 = vmul.f32 %v2724, 0.2
    %v3237 = vmul.f32 %v2725, 0.2
    %v3238 = vmul.f32 %v2726, 0.2
    %v3239 = vmul.f32 %v2727, 0.2
    %v3240 = vmul.f32 %v2728, 0.2
    %v3241 = vmul.f32 %v2729, 0.2
    %v3242 = vmul.f32 %v2730, 0.2
    %v3243 = vmul.f32 %v2731, 0.2
    %v3244 = vmul.f32 %v2732, 0.2
    %v3245 = vmul.f32 %v2733, 0.2
    %v3246 = vmul.f32 %v2734, 0.2
    %v3247 = vmul.f32 %v2735, 0.2
    %v3248 = vmul.f32 %v2736, 0.2
    %v3249 = vmul.f32 %v2737, 0.2
    %v3250 = vmul.f32 %v2738, 0.2
    %v3251 = vmul.f32 %v2739, 0.2
    %v3252 = vmul.f32 %v2740, 0.2
    %v3253 = vmul.f32 %v2741, 0.2
    %v3254 = vmul.f32 %v2742, 0.2
    %v3255 = vmul.f32 %v2743, 0.2
    %v3256 = vmul.f32 %v2744, 0.2
    %v3257 = vmul.f32 %v2745, 0.2
    %v3258 = vmul.f32 %v2746, 0.2
    %v3259 = vmul.f32 %v2747, 0.2
    %v3260 = vmul.f32 %v2748, 0.2
    %v3261 = vmul.f32 %v2749, 0.2
    %v3262 = vmul.f32 %v2750, 0.2
    %v3263 = vmul.f32 %v2751, 0.2
    %v3264 = vmul.f32 %v2752, 0.2
    %v3265 = vmul.f32 %v2753, 0.2
    %v3266 = vmul.f32 %v2754, 0.2
    %v3267 = vmul.f32 %v2755, 0.2
    %v3268 = vmul.f32 %v2756, 0.2
    %v3269 = vmul.f32 %v2757, 0.2
    %v3270 = vmul.f32 %v2758, 0.2
    %v3271 = vmul.f32 %v2759, 0.2
    %v3272 = vmul.f32 %v2760, 0.2
    %v3273 = vmul.f32 %v2761, 0.2
    %v3274 = vmul.f32 %v2762, 0.2
    %v3275 = vmul.f32 %v2763, 0.2
    %v3276 = vmul.f32 %v2764, 0.2
    %v3277 = vmul.f32 %v2765, 0.2
    %v3278 = vmul.f32 %v2766, 0.2
    %v3279 = vmul.f32 %v2767, 0.2
    %v3280 = vmul.f32 %v2768, 0.2
    %v3281 = vmul.f32 %v2769, 0.2
    %v3282 = vmul.f32 %v2770, 0.2
    %v3283 = vmul.f32 %v2771, 0.2
    %v3284 = vmul.f32 %v2772, 0.2
    %v3285 = vmul.f32 %v2773, 0.2
    %v3286 = vmul.f32 %v2774, 0.2
    %v3287 = vmul.f32 %v2775, 0.2
    %v3288 = vmul.f32 %v2776, 0.2
    %v3289 = vmul.f32 %v2777, 0.2
    %v3290 = vmul.f32 %v2778, 0.2
    %v3291 = vmul.f32 %v2779, 0.2
    %v3292 = vmul.f32 %v2780, 0.2
    %v3293 = vmul.f32 %v2781, 0.2
    %v3294 = vmul.f32 %v2782, 0.2
    %v3295 = vmul.f32 %v2783, 0.2
    %v3296 = vmul.f32 %v2784, 0.2
    %v3297 = vmul.f32 %v2785, 0.2
    %v3298 = vmul.f32 %v2786, 0.2
    %v3299 = vmul.f32 %v2787, 0.2
    %v3300 = vmul.f32 %v2788, 0.2
    %v3301 = vmul.f32 %v2789, 0.2
    %v3302 = vmul.f32 %v2790, 0.2
    %v3303 = vmul.f32 %v2791, 0.2
    %v3304 = vmul.f32 %v2792, 0.2
    %v3305 = vmul.f32 %v2793, 0.2
    %v3306 = vmul.f32 %v2794, 0.2
    %v3307 = vmul.f32 %v2795, 0.2
    %v3308 = vmul.f32 %v2796, 0.2
    %v3309 = vmul.f32 %v2797, 0.2
    %v3310 = vmul.f32 %v2798, 0.2
    %v3311 = vmul.f32 %v2799, 0.2
    %v3312 = vmul.f32 %v2800, 0.2
    %v3313 = vmul.f32 %v2801, 0.2
    %v3314 = vmul.f32 %v2802, 0.2
    %v3315 = vmul.f32 %v2803, 0.2
    %v3316 = vmul.f32 %v2804, 0.2
    %v3317 = vmul.f32 %v2805, 0.2
    %v3318 = vmul.f32 %v2806, 0.2
    %v3319 = vmul.f32 %v2807, 0.2
    %v3320 = vmul.f32 %v2808, 0.2
    %v3321 = vmul.f32 %v2809, 0.2
    %v3322 = vmul.f32 %v2810, 0.2
    %v3323 = vmul.f32 %v2811, 0.2
    %v3324 = vmul.f32 %v2812, 0.2
    %v3325 = vmul.f32 %v2813, 0.2
    %v3326 = vmul.f32 %v2814, 0.2
    %v3327 = vmul.f32 %v2815, 0.2
    %v3328 = vmul.f32 %v2816, 0.2
    %v3329 = vmul.f32 %v2817, 0.2
    %v3330 = vmul.f32 %v2818, 0.2
    %v3331 = vmul.f32 %v2819, 0.2
    %v3332 = vmul.f32 %v2820, 0.2
    %v3333 = vmul.f32 %v2821, 0.2
    %v3334 = vmul.f32 %v2822, 0.2
    %v3335 = vmul.f32 %v2823, 0.2
    %v3336 = vmul.f32 %v2824, 0.2
    %v3337 = vmul.f32 %v2825, 0.2
    %v3338 = vmul.f32 %v2826, 0.2
    %v3339 = vmul.f32 %v2827, 0.2
    %v3340 = vmul.f32 %v2828, 0.2
    %v3341 = vmul.f32 %v2829, 0.2
    %v3342 = vmul.f32 %v2830, 0.2
    %v3343 = vmul.f32 %v2831, 0.2
    %v3344 = vmul.f32 %v2832, 0.2
    %v3345 = vmul.f32 %v2833, 0.2
    %v3346 = vmul.f32 %v2834, 0.2
    %v3347 = vmul.f32 %v2835, 0.2
    %v3348 = vmul.f32 %v2836, 0.2
    %v3349 = vmul.f32 %v2837, 0.2
    %v3350 = vmul.f32 %v2838, 0.2
    %v3351 = vmul.f32 %v2839, 0.2
    %v3352 = vmul.f32 %v2840, 0.2
    %v3353 = vmul.f32 %v2841, 0.2
    %v3354 = vmul.f32 %v2842, 0.2
    %v3355 = vmul.f32 %v2843, 0.2
    %v3356 = vmul.f32 %v2844, 0.2
    %v3357 = vmul.f32 %v2845, 0.2
    %v3358 = vmul.f32 %v2846, 0.2
    %v3359 = vmul.f32 %v2847, 0.2
    %v3360 = vmul.f32 %v2848, 0.2
    %v3361 = vmul.f32 %v2849, 0.2
    %v3362 = vmul.f32 %v2850, 0.2
    %v3363 = vmul.f32 %v2851, 0.2
    %v3364 = vmul.f32 %v2852, 0.2
    %v3365 = vmul.f32 %v2853, 0.2
    %v3366 = vmul.f32 %v2854, 0.2
    %v3367 = vmul.f32 %v2855, 0.2
    %v3368 = vmul.f32 %v2856, 0.2
    %v3369 = vmul.f32 %v2857, 0.2
    %v3370 = vmul.f32 %v2858, 0.2
    %v3371 = vmul.f32 %v2859, 0.2
    %v3372 = vmul.f32 %v2860, 0.2
    %v3373 = vmul.f32 %v2861, 0.2
    %v3374 = vmul.f32 %v2862, 0.2
    %v3375 = vmul.f32 %v2863, 0.2
    %v3376 = vmul.f32 %v2864, 0.2
    %v3377 = vmul.f32 %v2865, 0.2
    %v3378 = vmul.f32 %v2866, 0.2
    %v3379 = vmul.f32 %v2867, 0.2
    %v3380 = vmul.f32 %v2868, 0.2
    %v3381 = vmul.f32 %v2869, 0.2
    %v3382 = vmul.f32 %v2870, 0.2
    %v3383 = vmul.f32 %v2871, 0.2
    %v3384 = vmul.f32 %v2872, 0.2
    %v3385 = vmul.f32 %v2873, 0.2
    %v3386 = vmul.f32 %v2874, 0.2
    %v3387 = vmul.f32 %v2875, 0.2
    %v3388 = vmul.f32 %v2876, 0.2
    %v3389 = vmul.f32 %v2877, 0.2
    %v3390 = vmul.f32 %v2878, 0.2
    %v3391 = vmul.f32 %v2879, 0.2
    %v3392 = vmul.f32 %v2880, 0.2
    %v3393 = vmul.f32 %v2881, 0.2
    %v3394 = vmul.f32 %v2882, 0.2
    %v3395 = vmul.f32 %v2883, 0.2
    %v3396 = vmul.f32 %v2884, 0.2
    %v3397 = vmul.f32 %v2885, 0.2
    %v3398 = vmul.f32 %v2886, 0.2
    %v3399 = vmul.f32 %v2887, 0.2
    %v3400 = vmul.f32 %v2888, 0.2
    %v3401 = vmul.f32 %v2889, 0.2
    %v3402 = vmul.f32 %v2890, 0.2
    %v3403 = vmul.f32 %v2891, 0.2
    %v3404 = vmul.f32 %v2892, 0.2
    %v3405 = vmul.f32 %v2893, 0.2
    %v3406 = vmul.f32 %v2894, 0.2
    %v3407 = vmul.f32 %v2895, 0.2
    %v3408 = vmul.f32 %v2896, 0.2
    %v3409 = vmul.f32 %v2897, 0.2
    %v3410 = vmul.f32 %v2898, 0.2
    %v3411 = vmul.f32 %v2899, 0.2
    %v3412 = vmul.f32 %v2900, 0.2
    %v3413 = vmul.f32 %v2901, 0.2
    %v3414 = vmul.f32 %v2902, 0.2
    %v3415 = vmul.f32 %v2903, 0.2
    %v3416 = vmul.f32 %v2904, 0.2
    %v3417 = vmul.f32 %v2905, 0.2
    %v3418 = vmul.f32 %v2906, 0.2
    %v3419 = vmul.f32 %v2907, 0.2
    %v3420 = vmul.f32 %v2908, 0.2
    %v3421 = vmul.f32 %v2909, 0.2
    %v3422 = vmul.f32 %v2910, 0.2
    %v3423 = vmul.f32 %v2911, 0.2
    %v3424 = vmul.f32 %v2912, 0.2
    %v3425 = vmul.f32 %v2913, 0.2
    %v3426 = vsel %vm2914, %v2658, %v3170
    %v3427 = vsel %vm2915, %v2659, %v3171
    %v3428 = vsel %vm2916, %v2660, %v3172
    %v3429 = vsel %vm2917, %v2661, %v3173
    %v3430 = vsel %vm2918, %v2662, %v3174
    %v3431 = vsel %vm2919, %v2663, %v3175
    %v3432 = vsel %vm2920, %v2664, %v3176
    %v3433 = vsel %vm2921, %v2665, %v3177
    %v3434 = vsel %vm2922, %v2666, %v3178
    %v3435 = vsel %vm2923, %v2667, %v3179
    %v3436 = vsel %vm2924, %v2668, %v3180
    %v3437 = vsel %vm2925, %v2669, %v3181
    %v3438 = vsel %vm2926, %v2670, %v3182
    %v3439 = vsel %vm2927, %v2671, %v3183
    %v3440 = vsel %vm2928, %v2672, %v3184
    %v3441 = vsel %vm2929, %v2673, %v3185
    %v3442 = vsel %vm2930, %v2674, %v3186
    %v3443 = vsel %vm2931, %v2675, %v3187
    %v3444 = vsel %vm2932, %v2676, %v3188
    %v3445 = vsel %vm2933, %v2677, %v3189
    %v3446 = vsel %vm2934, %v2678, %v3190
    %v3447 = vsel %vm2935, %v2679, %v3191
    %v3448 = vsel %vm2936, %v2680, %v3192
    %v3449 = vsel %vm2937, %v2681, %v3193
    %v3450 = vsel %vm2938, %v2682, %v3194
    %v3451 = vsel %vm2939, %v2683, %v3195
    %v3452 = vsel %vm2940, %v2684, %v3196
    %v3453 = vsel %vm2941, %v2685, %v3197
    %v3454 = vsel %vm2942, %v2686, %v3198
    %v3455 = vsel %vm2943, %v2687, %v3199
    %v3456 = vsel %vm2944, %v2688, %v3200
    %v3457 = vsel %vm2945, %v2689, %v3201
    %v3458 = vsel %vm2946, %v2690, %v3202
    %v3459 = vsel %vm2947, %v2691, %v3203
    %v3460 = vsel %vm2948, %v2692, %v3204
    %v3461 = vsel %vm2949, %v2693, %v3205
    %v3462 = vsel %vm2950, %v2694, %v3206
    %v3463 = vsel %vm2951, %v2695, %v3207
    %v3464 = vsel %vm2952, %v2696, %v3208
    %v3465 = vsel %vm2953, %v2697, %v3209
    %v3466 = vsel %vm2954, %v2698, %v3210
    %v3467 = vsel %vm2955, %v2699, %v3211
    %v3468 = vsel %vm2956, %v2700, %v3212
    %v3469 = vsel %vm2957, %v2701, %v3213
    %v3470 = vsel %vm2958, %v2702, %v3214
    %v3471 = vsel %vm2959, %v2703, %v3215
    %v3472 = vsel %vm2960, %v2704, %v3216
    %v3473 = vsel %vm2961, %v2705, %v3217
    %v3474 = vsel %vm2962, %v2706, %v3218
    %v3475 = vsel %vm2963, %v2707, %v3219
    %v3476 = vsel %vm2964, %v2708, %v3220
    %v3477 = vsel %vm2965, %v2709, %v3221
    %v3478 = vsel %vm2966, %v2710, %v3222
    %v3479 = vsel %vm2967, %v2711, %v3223
    %v3480 = vsel %vm2968, %v2712, %v3224
    %v3481 = vsel %vm2969, %v2713, %v3225
    %v3482 = vsel %vm2970, %v2714, %v3226
    %v3483 = vsel %vm2971, %v2715, %v3227
    %v3484 = vsel %vm2972, %v2716, %v3228
    %v3485 = vsel %vm2973, %v2717, %v3229
    %v3486 = vsel %vm2974, %v2718, %v3230
    %v3487 = vsel %vm2975, %v2719, %v3231
    %v3488 = vsel %vm2976, %v2720, %v3232
    %v3489 = vsel %vm2977, %v2721, %v3233
    %v3490 = vsel %vm2978, %v2722, %v3234
    %v3491 = vsel %vm2979, %v2723, %v3235
    %v3492 = vsel %vm2980, %v2724, %v3236
    %v3493 = vsel %vm2981, %v2725, %v3237
    %v3494 = vsel %vm2982, %v2726, %v3238
    %v3495 = vsel %vm2983, %v2727, %v3239
    %v3496 = vsel %vm2984, %v2728, %v3240
    %v3497 = vsel %vm2985, %v2729, %v3241
    %v3498 = vsel %vm2986, %v2730, %v3242
    %v3499 = vsel %vm2987, %v2731, %v3243
    %v3500 = vsel %vm2988, %v2732, %v3244
    %v3501 = vsel %vm2989, %v2733, %v3245
    %v3502 = vsel %vm2990, %v2734, %v3246
    %v3503 = vsel %vm2991, %v2735, %v3247
    %v3504 = vsel %vm2992, %v2736, %v3248
    %v3505 = vsel %vm2993, %v2737, %v3249
    %v3506 = vsel %vm2994, %v2738, %v3250
    %v3507 = vsel %vm2995, %v2739, %v3251
    %v3508 = vsel %vm2996, %v2740, %v3252
    %v3509 = vsel %vm2997, %v2741, %v3253
    %v3510 = vsel %vm2998, %v2742, %v3254
    %v3511 = vsel %vm2999, %v2743, %v3255
    %v3512 = vsel %vm3000, %v2744, %v3256
    %v3513 = vsel %vm3001, %v2745, %v3257
    %v3514 = vsel %vm3002, %v2746, %v3258
    %v3515 = vsel %vm3003, %v2747, %v3259
    %v3516 = vsel %vm3004, %v2748, %v3260
    %v3517 = vsel %vm3005, %v2749, %v3261
    %v3518 = vsel %vm3006, %v2750, %v3262
    %v3519 = vsel %vm3007, %v2751, %v3263
    %v3520 = vsel %vm3008, %v2752, %v3264
    %v3521 = vsel %vm3009, %v2753, %v3265
    %v3522 = vsel %vm3010, %v2754, %v3266
    %v3523 = vsel %vm3011, %v2755, %v3267
    %v3524 = vsel %vm3012, %v2756, %v3268
    %v3525 = vsel %vm3013, %v2757, %v3269
    %v3526 = vsel %vm3014, %v2758, %v3270
    %v3527 = vsel %vm3015, %v2759, %v3271
    %v3528 = vsel %vm3016, %v2760, %v3272
    %v3529 = vsel %vm3017, %v2761, %v3273
    %v3530 = vsel %vm3018, %v2762, %v3274
    %v3531 = vsel %vm3019, %v2763, %v3275
    %v3532 = vsel %vm3020, %v2764, %v3276
    %v3533 = vsel %vm3021, %v2765, %v3277
    %v3534 = vsel %vm3022, %v2766, %v3278
    %v3535 = vsel %vm3023, %v2767, %v3279
    %v3536 = vsel %vm3024, %v2768, %v3280
    %v3537 = vsel %vm3025, %v2769, %v3281
    %v3538 = vsel %vm3026, %v2770, %v3282
    %v3539 = vsel %vm3027, %v2771, %v3283
    %v3540 = vsel %vm3028, %v2772, %v3284
    %v3541 = vsel %vm3029, %v2773, %v3285
    %v3542 = vsel %vm3030, %v2774, %v3286
    %v3543 = vsel %vm3031, %v2775, %v3287
    %v3544 = vsel %vm3032, %v2776, %v3288
    %v3545 = vsel %vm3033, %v2777, %v3289
    %v3546 = vsel %vm3034, %v2778, %v3290
    %v3547 = vsel %vm3035, %v2779, %v3291
    %v3548 = vsel %vm3036, %v2780, %v3292
    %v3549 = vsel %vm3037, %v2781, %v3293
    %v3550 = vsel %vm3038, %v2782, %v3294
    %v3551 = vsel %vm3039, %v2783, %v3295
    %v3552 = vsel %vm3040, %v2784, %v3296
    %v3553 = vsel %vm3041, %v2785, %v3297
    %v3554 = vsel %vm3042, %v2786, %v3298
    %v3555 = vsel %vm3043, %v2787, %v3299
    %v3556 = vsel %vm3044, %v2788, %v3300
    %v3557 = vsel %vm3045, %v2789, %v3301
    %v3558 = vsel %vm3046, %v2790, %v3302
    %v3559 = vsel %vm3047, %v2791, %v3303
    %v3560 = vsel %vm3048, %v2792, %v3304
    %v3561 = vsel %vm3049, %v2793, %v3305
    %v3562 = vsel %vm3050, %v2794, %v3306
    %v3563 = vsel %vm3051, %v2795, %v3307
    %v3564 = vsel %vm3052, %v2796, %v3308
    %v3565 = vsel %vm3053, %v2797, %v3309
    %v3566 = vsel %vm3054, %v2798, %v3310
    %v3567 = vsel %vm3055, %v2799, %v3311
    %v3568 = vsel %vm3056, %v2800, %v3312
    %v3569 = vsel %vm3057, %v2801, %v3313
    %v3570 = vsel %vm3058, %v2802, %v3314
    %v3571 = vsel %vm3059, %v2803, %v3315
    %v3572 = vsel %vm3060, %v2804, %v3316
    %v3573 = vsel %vm3061, %v2805, %v3317
    %v3574 = vsel %vm3062, %v2806, %v3318
    %v3575 = vsel %vm3063, %v2807, %v3319
    %v3576 = vsel %vm3064, %v2808, %v3320
    %v3577 = vsel %vm3065, %v2809, %v3321
    %v3578 = vsel %vm3066, %v2810, %v3322
    %v3579 = vsel %vm3067, %v2811, %v3323
    %v3580 = vsel %vm3068, %v2812, %v3324
    %v3581 = vsel %vm3069, %v2813, %v3325
    %v3582 = vsel %vm3070, %v2814, %v3326
    %v3583 = vsel %vm3071, %v2815, %v3327
    %v3584 = vsel %vm3072, %v2816, %v3328
    %v3585 = vsel %vm3073, %v2817, %v3329
    %v3586 = vsel %vm3074, %v2818, %v3330
    %v3587 = vsel %vm3075, %v2819, %v3331
    %v3588 = vsel %vm3076, %v2820, %v3332
    %v3589 = vsel %vm3077, %v2821, %v3333
    %v3590 = vsel %vm3078, %v2822, %v3334
    %v3591 = vsel %vm3079, %v2823, %v3335
    %v3592 = vsel %vm3080, %v2824, %v3336
    %v3593 = vsel %vm3081, %v2825, %v3337
    %v3594 = vsel %vm3082, %v2826, %v3338
    %v3595 = vsel %vm3083, %v2827, %v3339
    %v3596 = vsel %vm3084, %v2828, %v3340
    %v3597 = vsel %vm3085, %v2829, %v3341
    %v3598 = vsel %vm3086, %v2830, %v3342
    %v3599 = vsel %vm3087, %v2831, %v3343
    %v3600 = vsel %vm3088, %v2832, %v3344
    %v3601 = vsel %vm3089, %v2833, %v3345
    %v3602 = vsel %vm3090, %v2834, %v3346
    %v3603 = vsel %vm3091, %v2835, %v3347
    %v3604 = vsel %vm3092, %v2836, %v3348
    %v3605 = vsel %vm3093, %v2837, %v3349
    %v3606 = vsel %vm3094, %v2838, %v3350
    %v3607 = vsel %vm3095, %v2839, %v3351
    %v3608 = vsel %vm3096, %v2840, %v3352
    %v3609 = vsel %vm3097, %v2841, %v3353
    %v3610 = vsel %vm3098, %v2842, %v3354
    %v3611 = vsel %vm3099, %v2843, %v3355
    %v3612 = vsel %vm3100, %v2844, %v3356
    %v3613 = vsel %vm3101, %v2845, %v3357
    %v3614 = vsel %vm3102, %v2846, %v3358
    %v3615 = vsel %vm3103, %v2847, %v3359
    %v3616 = vsel %vm3104, %v2848, %v3360
    %v3617 = vsel %vm3105, %v2849, %v3361
    %v3618 = vsel %vm3106, %v2850, %v3362
    %v3619 = vsel %vm3107, %v2851, %v3363
    %v3620 = vsel %vm3108, %v2852, %v3364
    %v3621 = vsel %vm3109, %v2853, %v3365
    %v3622 = vsel %vm3110, %v2854, %v3366
    %v3623 = vsel %vm3111, %v2855, %v3367
    %v3624 = vsel %vm3112, %v2856, %v3368
    %v3625 = vsel %vm3113, %v2857, %v3369
    %v3626 = vsel %vm3114, %v2858, %v3370
    %v3627 = vsel %vm3115, %v2859, %v3371
    %v3628 = vsel %vm3116, %v2860, %v3372
    %v3629 = vsel %vm3117, %v2861, %v3373
    %v3630 = vsel %vm3118, %v2862, %v3374
    %v3631 = vsel %vm3119, %v2863, %v3375
    %v3632 = vsel %vm3120, %v2864, %v3376
    %v3633 = vsel %vm3121, %v2865, %v3377
    %v3634 = vsel %vm3122, %v2866, %v3378
    %v3635 = vsel %vm3123, %v2867, %v3379
    %v3636 = vsel %vm3124, %v2868, %v3380
    %v3637 = vsel %vm3125, %v2869, %v3381
    %v3638 = vsel %vm3126, %v2870, %v3382
    %v3639 = vsel %vm3127, %v2871, %v3383
    %v3640 = vsel %vm3128, %v2872, %v3384
    %v3641 = vsel %vm3129, %v2873, %v3385
    %v3642 = vsel %vm3130, %v2874, %v3386
    %v3643 = vsel %vm3131, %v2875, %v3387
    %v3644 = vsel %vm3132, %v2876, %v3388
    %v3645 = vsel %vm3133, %v2877, %v3389
    %v3646 = vsel %vm3134, %v2878, %v3390
    %v3647 = vsel %vm3135, %v2879, %v3391
    %v3648 = vsel %vm3136, %v2880, %v3392
    %v3649 = vsel %vm3137, %v2881, %v3393
    %v3650 = vsel %vm3138, %v2882, %v3394
    %v3651 = vsel %vm3139, %v2883, %v3395
    %v3652 = vsel %vm3140, %v2884, %v3396
    %v3653 = vsel %vm3141, %v2885, %v3397
    %v3654 = vsel %vm3142, %v2886, %v3398
    %v3655 = vsel %vm3143, %v2887, %v3399
    %v3656 = vsel %vm3144, %v2888, %v3400
    %v3657 = vsel %vm3145, %v2889, %v3401
    %v3658 = vsel %vm3146, %v2890, %v3402
    %v3659 = vsel %vm3147, %v2891, %v3403
    %v3660 = vsel %vm3148, %v2892, %v3404
    %v3661 = vsel %vm3149, %v2893, %v3405
    %v3662 = vsel %vm3150, %v2894, %v3406
    %v3663 = vsel %vm3151, %v2895, %v3407
    %v3664 = vsel %vm3152, %v2896, %v3408
    %v3665 = vsel %vm3153, %v2897, %v3409
    %v3666 = vsel %vm3154, %v2898, %v3410
    %v3667 = vsel %vm3155, %v2899, %v3411
    %v3668 = vsel %vm3156, %v2900, %v3412
    %v3669 = vsel %vm3157, %v2901, %v3413
    %v3670 = vsel %vm3158, %v2902, %v3414
    %v3671 = vsel %vm3159, %v2903, %v3415
    %v3672 = vsel %vm3160, %v2904, %v3416
    %v3673 = vsel %vm3161, %v2905, %v3417
    %v3674 = vsel %vm3162, %v2906, %v3418
    %v3675 = vsel %vm3163, %v2907, %v3419
    %v3676 = vsel %vm3164, %v2908, %v3420
    %v3677 = vsel %vm3165, %v2909, %v3421
    %v3678 = vsel %vm3166, %v2910, %v3422
    %v3679 = vsel %vm3167, %v2911, %v3423
    %v3680 = vsel %vm3168, %v2912, %v3424
    %v3681 = vsel %vm3169, %v2913, %v3425
    %v3682 = vpack.c.bf16 %v3427, %v3426
    %v3683 = vpack.c.bf16 %v3429, %v3428
    %v3684 = vpack.c.bf16 %v3431, %v3430
    %v3685 = vpack.c.bf16 %v3433, %v3432
    %v3686 = vpack.c.bf16 %v3435, %v3434
    %v3687 = vpack.c.bf16 %v3437, %v3436
    %v3688 = vpack.c.bf16 %v3439, %v3438
    %v3689 = vpack.c.bf16 %v3441, %v3440
    %v3690 = vpack.c.bf16 %v3443, %v3442
    %v3691 = vpack.c.bf16 %v3445, %v3444
    %v3692 = vpack.c.bf16 %v3447, %v3446
    %v3693 = vpack.c.bf16 %v3449, %v3448
    %v3694 = vpack.c.bf16 %v3451, %v3450
    %v3695 = vpack.c.bf16 %v3453, %v3452
    %v3696 = vpack.c.bf16 %v3455, %v3454
    %v3697 = vpack.c.bf16 %v3457, %v3456
    %v3698 = vpack.c.bf16 %v3459, %v3458
    %v3699 = vpack.c.bf16 %v3461, %v3460
    %v3700 = vpack.c.bf16 %v3463, %v3462
    %v3701 = vpack.c.bf16 %v3465, %v3464
    %v3702 = vpack.c.bf16 %v3467, %v3466
    %v3703 = vpack.c.bf16 %v3469, %v3468
    %v3704 = vpack.c.bf16 %v3471, %v3470
    %v3705 = vpack.c.bf16 %v3473, %v3472
    %v3706 = vpack.c.bf16 %v3475, %v3474
    %v3707 = vpack.c.bf16 %v3477, %v3476
    %v3708 = vpack.c.bf16 %v3479, %v3478
    %v3709 = vpack.c.bf16 %v3481, %v3480
    %v3710 = vpack.c.bf16 %v3483, %v3482
    %v3711 = vpack.c.bf16 %v3485, %v3484
    %v3712 = vpack.c.bf16 %v3487, %v3486
    %v3713 = vpack.c.bf16 %v3489, %v3488
    %v3714 = vpack.c.bf16 %v3491, %v3490
    %v3715 = vpack.c.bf16 %v3493, %v3492
    %v3716 = vpack.c.bf16 %v3495, %v3494
    %v3717 = vpack.c.bf16 %v3497, %v3496
    %v3718 = vpack.c.bf16 %v3499, %v3498
    %v3719 = vpack.c.bf16 %v3501, %v3500
    %v3720 = vpack.c.bf16 %v3503, %v3502
    %v3721 = vpack.c.bf16 %v3505, %v3504
    %v3722 = vpack.c.bf16 %v3507, %v3506
    %v3723 = vpack.c.bf16 %v3509, %v3508
    %v3724 = vpack.c.bf16 %v3511, %v3510
    %v3725 = vpack.c.bf16 %v3513, %v3512
    %v3726 = vpack.c.bf16 %v3515, %v3514
    %v3727 = vpack.c.bf16 %v3517, %v3516
    %v3728 = vpack.c.bf16 %v3519, %v3518
    %v3729 = vpack.c.bf16 %v3521, %v3520
    %v3730 = vpack.c.bf16 %v3523, %v3522
    %v3731 = vpack.c.bf16 %v3525, %v3524
    %v3732 = vpack.c.bf16 %v3527, %v3526
    %v3733 = vpack.c.bf16 %v3529, %v3528
    %v3734 = vpack.c.bf16 %v3531, %v3530
    %v3735 = vpack.c.bf16 %v3533, %v3532
    %v3736 = vpack.c.bf16 %v3535, %v3534
    %v3737 = vpack.c.bf16 %v3537, %v3536
    %v3738 = vpack.c.bf16 %v3539, %v3538
    %v3739 = vpack.c.bf16 %v3541, %v3540
    %v3740 = vpack.c.bf16 %v3543, %v3542
    %v3741 = vpack.c.bf16 %v3545, %v3544
    %v3742 = vpack.c.bf16 %v3547, %v3546
    %v3743 = vpack.c.bf16 %v3549, %v3548
    %v3744 = vpack.c.bf16 %v3551, %v3550
    %v3745 = vpack.c.bf16 %v3553, %v3552
    %v3746 = vpack.c.bf16 %v3555, %v3554
    %v3747 = vpack.c.bf16 %v3557, %v3556
    %v3748 = vpack.c.bf16 %v3559, %v3558
    %v3749 = vpack.c.bf16 %v3561, %v3560
    %v3750 = vpack.c.bf16 %v3563, %v3562
    %v3751 = vpack.c.bf16 %v3565, %v3564
    %v3752 = vpack.c.bf16 %v3567, %v3566
    %v3753 = vpack.c.bf16 %v3569, %v3568
    %v3754 = vpack.c.bf16 %v3571, %v3570
    %v3755 = vpack.c.bf16 %v3573, %v3572
    %v3756 = vpack.c.bf16 %v3575, %v3574
    %v3757 = vpack.c.bf16 %v3577, %v3576
    %v3758 = vpack.c.bf16 %v3579, %v3578
    %v3759 = vpack.c.bf16 %v3581, %v3580
    %v3760 = vpack.c.bf16 %v3583, %v3582
    %v3761 = vpack.c.bf16 %v3585, %v3584
    %v3762 = vpack.c.bf16 %v3587, %v3586
    %v3763 = vpack.c.bf16 %v3589, %v3588
    %v3764 = vpack.c.bf16 %v3591, %v3590
    %v3765 = vpack.c.bf16 %v3593, %v3592
    %v3766 = vpack.c.bf16 %v3595, %v3594
    %v3767 = vpack.c.bf16 %v3597, %v3596
    %v3768 = vpack.c.bf16 %v3599, %v3598
    %v3769 = vpack.c.bf16 %v3601, %v3600
    %v3770 = vpack.c.bf16 %v3603, %v3602
    %v3771 = vpack.c.bf16 %v3605, %v3604
    %v3772 = vpack.c.bf16 %v3607, %v3606
    %v3773 = vpack.c.bf16 %v3609, %v3608
    %v3774 = vpack.c.bf16 %v3611, %v3610
    %v3775 = vpack.c.bf16 %v3613, %v3612
    %v3776 = vpack.c.bf16 %v3615, %v3614
    %v3777 = vpack.c.bf16 %v3617, %v3616
    %v3778 = vpack.c.bf16 %v3619, %v3618
    %v3779 = vpack.c.bf16 %v3621, %v3620
    %v3780 = vpack.c.bf16 %v3623, %v3622
    %v3781 = vpack.c.bf16 %v3625, %v3624
    %v3782 = vpack.c.bf16 %v3627, %v3626
    %v3783 = vpack.c.bf16 %v3629, %v3628
    %v3784 = vpack.c.bf16 %v3631, %v3630
    %v3785 = vpack.c.bf16 %v3633, %v3632
    %v3786 = vpack.c.bf16 %v3635, %v3634
    %v3787 = vpack.c.bf16 %v3637, %v3636
    %v3788 = vpack.c.bf16 %v3639, %v3638
    %v3789 = vpack.c.bf16 %v3641, %v3640
    %v3790 = vpack.c.bf16 %v3643, %v3642
    %v3791 = vpack.c.bf16 %v3645, %v3644
    %v3792 = vpack.c.bf16 %v3647, %v3646
    %v3793 = vpack.c.bf16 %v3649, %v3648
    %v3794 = vpack.c.bf16 %v3651, %v3650
    %v3795 = vpack.c.bf16 %v3653, %v3652
    %v3796 = vpack.c.bf16 %v3655, %v3654
    %v3797 = vpack.c.bf16 %v3657, %v3656
    %v3798 = vpack.c.bf16 %v3659, %v3658
    %v3799 = vpack.c.bf16 %v3661, %v3660
    %v3800 = vpack.c.bf16 %v3663, %v3662
    %v3801 = vpack.c.bf16 %v3665, %v3664
    %v3802 = vpack.c.bf16 %v3667, %v3666
    %v3803 = vpack.c.bf16 %v3669, %v3668
    %v3804 = vpack.c.bf16 %v3671, %v3670
    %v3805 = vpack.c.bf16 %v3673, %v3672
    %v3806 = vpack.c.bf16 %v3675, %v3674
    %v3807 = vpack.c.bf16 %v3677, %v3676
    %v3808 = vpack.c.bf16 %v3679, %v3678
    %v3809 = vpack.c.bf16 %v3681, %v3680
    %v3938 = vunpack.c.l.b16 %v3682
    %v3939 = vunpack.c.h.b16 %v3682
    %v3940 = vunpack.c.l.b16 %v3683
    %v3941 = vunpack.c.h.b16 %v3683
    %v3942 = vunpack.c.l.b16 %v3684
    %v3943 = vunpack.c.h.b16 %v3684
    %v3944 = vunpack.c.l.b16 %v3685
    %v3945 = vunpack.c.h.b16 %v3685
    %v3946 = vunpack.c.l.b16 %v3686
    %v3947 = vunpack.c.h.b16 %v3686
    %v3948 = vunpack.c.l.b16 %v3687
    %v3949 = vunpack.c.h.b16 %v3687
    %v3950 = vunpack.c.l.b16 %v3688
    %v3951 = vunpack.c.h.b16 %v3688
    %v3952 = vunpack.c.l.b16 %v3689
    %v3953 = vunpack.c.h.b16 %v3689
    %v3954 = vunpack.c.l.b16 %v3690
    %v3955 = vunpack.c.h.b16 %v3690
    %v3956 = vunpack.c.l.b16 %v3691
    %v3957 = vunpack.c.h.b16 %v3691
    %v3958 = vunpack.c.l.b16 %v3692
    %v3959 = vunpack.c.h.b16 %v3692
    %v3960 = vunpack.c.l.b16 %v3693
    %v3961 = vunpack.c.h.b16 %v3693
    %v3962 = vunpack.c.l.b16 %v3694
    %v3963 = vunpack.c.h.b16 %v3694
    %v3964 = vunpack.c.l.b16 %v3695
    %v3965 = vunpack.c.h.b16 %v3695
    %v3966 = vunpack.c.l.b16 %v3696
    %v3967 = vunpack.c.h.b16 %v3696
    %v3968 = vunpack.c.l.b16 %v3697
    %v3969 = vunpack.c.h.b16 %v3697
    %v3970 = vunpack.c.l.b16 %v3698
    %v3971 = vunpack.c.h.b16 %v3698
    %v3972 = vunpack.c.l.b16 %v3699
    %v3973 = vunpack.c.h.b16 %v3699
    %v3974 = vunpack.c.l.b16 %v3700
    %v3975 = vunpack.c.h.b16 %v3700
    %v3976 = vunpack.c.l.b16 %v3701
    %v3977 = vunpack.c.h.b16 %v3701
    %v3978 = vunpack.c.l.b16 %v3702
    %v3979 = vunpack.c.h.b16 %v3702
    %v3980 = vunpack.c.l.b16 %v3703
    %v3981 = vunpack.c.h.b16 %v3703
    %v3982 = vunpack.c.l.b16 %v3704
    %v3983 = vunpack.c.h.b16 %v3704
    %v3984 = vunpack.c.l.b16 %v3705
    %v3985 = vunpack.c.h.b16 %v3705
    %v3986 = vunpack.c.l.b16 %v3706
    %v3987 = vunpack.c.h.b16 %v3706
    %v3988 = vunpack.c.l.b16 %v3707
    %v3989 = vunpack.c.h.b16 %v3707
    %v3990 = vunpack.c.l.b16 %v3708
    %v3991 = vunpack.c.h.b16 %v3708
    %v3992 = vunpack.c.l.b16 %v3709
    %v3993 = vunpack.c.h.b16 %v3709
    %v3994 = vunpack.c.l.b16 %v3710
    %v3995 = vunpack.c.h.b16 %v3710
    %v3996 = vunpack.c.l.b16 %v3711
    %v3997 = vunpack.c.h.b16 %v3711
    %v3998 = vunpack.c.l.b16 %v3712
    %v3999 = vunpack.c.h.b16 %v3712
    %v4000 = vunpack.c.l.b16 %v3713
    %v4001 = vunpack.c.h.b16 %v3713
    %v4002 = vunpack.c.l.b16 %v3714
    %v4003 = vunpack.c.h.b16 %v3714
    %v4004 = vunpack.c.l.b16 %v3715
    %v4005 = vunpack.c.h.b16 %v3715
    %v4006 = vunpack.c.l.b16 %v3716
    %v4007 = vunpack.c.h.b16 %v3716
    %v4008 = vunpack.c.l.b16 %v3717
    %v4009 = vunpack.c.h.b16 %v3717
    %v4010 = vunpack.c.l.b16 %v3718
    %v4011 = vunpack.c.h.b16 %v3718
    %v4012 = vunpack.c.l.b16 %v3719
    %v4013 = vunpack.c.h.b16 %v3719
    %v4014 = vunpack.c.l.b16 %v3720
    %v4015 = vunpack.c.h.b16 %v3720
    %v4016 = vunpack.c.l.b16 %v3721
    %v4017 = vunpack.c.h.b16 %v3721
    %v4018 = vunpack.c.l.b16 %v3722
    %v4019 = vunpack.c.h.b16 %v3722
    %v4020 = vunpack.c.l.b16 %v3723
    %v4021 = vunpack.c.h.b16 %v3723
    %v4022 = vunpack.c.l.b16 %v3724
    %v4023 = vunpack.c.h.b16 %v3724
    %v4024 = vunpack.c.l.b16 %v3725
    %v4025 = vunpack.c.h.b16 %v3725
    %v4026 = vunpack.c.l.b16 %v3726
    %v4027 = vunpack.c.h.b16 %v3726
    %v4028 = vunpack.c.l.b16 %v3727
    %v4029 = vunpack.c.h.b16 %v3727
    %v4030 = vunpack.c.l.b16 %v3728
    %v4031 = vunpack.c.h.b16 %v3728
    %v4032 = vunpack.c.l.b16 %v3729
    %v4033 = vunpack.c.h.b16 %v3729
    %v4034 = vunpack.c.l.b16 %v3730
    %v4035 = vunpack.c.h.b16 %v3730
    %v4036 = vunpack.c.l.b16 %v3731
    %v4037 = vunpack.c.h.b16 %v3731
    %v4038 = vunpack.c.l.b16 %v3732
    %v4039 = vunpack.c.h.b16 %v3732
    %v4040 = vunpack.c.l.b16 %v3733
    %v4041 = vunpack.c.h.b16 %v3733
    %v4042 = vunpack.c.l.b16 %v3734
    %v4043 = vunpack.c.h.b16 %v3734
    %v4044 = vunpack.c.l.b16 %v3735
    %v4045 = vunpack.c.h.b16 %v3735
    %v4046 = vunpack.c.l.b16 %v3736
    %v4047 = vunpack.c.h.b16 %v3736
    %v4048 = vunpack.c.l.b16 %v3737
    %v4049 = vunpack.c.h.b16 %v3737
    %v4050 = vunpack.c.l.b16 %v3738
    %v4051 = vunpack.c.h.b16 %v3738
    %v4052 = vunpack.c.l.b16 %v3739
    %v4053 = vunpack.c.h.b16 %v3739
    %v4054 = vunpack.c.l.b16 %v3740
    %v4055 = vunpack.c.h.b16 %v3740
    %v4056 = vunpack.c.l.b16 %v3741
    %v4057 = vunpack.c.h.b16 %v3741
    %v4058 = vunpack.c.l.b16 %v3742
    %v4059 = vunpack.c.h.b16 %v3742
    %v4060 = vunpack.c.l.b16 %v3743
    %v4061 = vunpack.c.h.b16 %v3743
    %v4062 = vunpack.c.l.b16 %v3744
    %v4063 = vunpack.c.h.b16 %v3744
    %v4064 = vunpack.c.l.b16 %v3745
    %v4065 = vunpack.c.h.b16 %v3745
    %v4066 = vunpack.c.l.b16 %v3746
    %v4067 = vunpack.c.h.b16 %v3746
    %v4068 = vunpack.c.l.b16 %v3747
    %v4069 = vunpack.c.h.b16 %v3747
    %v4070 = vunpack.c.l.b16 %v3748
    %v4071 = vunpack.c.h.b16 %v3748
    %v4072 = vunpack.c.l.b16 %v3749
    %v4073 = vunpack.c.h.b16 %v3749
    %v4074 = vunpack.c.l.b16 %v3750
    %v4075 = vunpack.c.h.b16 %v3750
    %v4076 = vunpack.c.l.b16 %v3751
    %v4077 = vunpack.c.h.b16 %v3751
    %v4078 = vunpack.c.l.b16 %v3752
    %v4079 = vunpack.c.h.b16 %v3752
    %v4080 = vunpack.c.l.b16 %v3753
    %v4081 = vunpack.c.h.b16 %v3753
    %v4082 = vunpack.c.l.b16 %v3754
    %v4083 = vunpack.c.h.b16 %v3754
    %v4084 = vunpack.c.l.b16 %v3755
    %v4085 = vunpack.c.h.b16 %v3755
    %v4086 = vunpack.c.l.b16 %v3756
    %v4087 = vunpack.c.h.b16 %v3756
    %v4088 = vunpack.c.l.b16 %v3757
    %v4089 = vunpack.c.h.b16 %v3757
    %v4090 = vunpack.c.l.b16 %v3758
    %v4091 = vunpack.c.h.b16 %v3758
    %v4092 = vunpack.c.l.b16 %v3759
    %v4093 = vunpack.c.h.b16 %v3759
    %v4094 = vunpack.c.l.b16 %v3760
    %v4095 = vunpack.c.h.b16 %v3760
    %v4096 = vunpack.c.l.b16 %v3761
    %v4097 = vunpack.c.h.b16 %v3761
    %v4098 = vunpack.c.l.b16 %v3762
    %v4099 = vunpack.c.h.b16 %v3762
    %v4100 = vunpack.c.l.b16 %v3763
    %v4101 = vunpack.c.h.b16 %v3763
    %v4102 = vunpack.c.l.b16 %v3764
    %v4103 = vunpack.c.h.b16 %v3764
    %v4104 = vunpack.c.l.b16 %v3765
    %v4105 = vunpack.c.h.b16 %v3765
    %v4106 = vunpack.c.l.b16 %v3766
    %v4107 = vunpack.c.h.b16 %v3766
    %v4108 = vunpack.c.l.b16 %v3767
    %v4109 = vunpack.c.h.b16 %v3767
    %v4110 = vunpack.c.l.b16 %v3768
    %v4111 = vunpack.c.h.b16 %v3768
    %v4112 = vunpack.c.l.b16 %v3769
    %v4113 = vunpack.c.h.b16 %v3769
    %v4114 = vunpack.c.l.b16 %v3770
    %v4115 = vunpack.c.h.b16 %v3770
    %v4116 = vunpack.c.l.b16 %v3771
    %v4117 = vunpack.c.h.b16 %v3771
    %v4118 = vunpack.c.l.b16 %v3772
    %v4119 = vunpack.c.h.b16 %v3772
    %v4120 = vunpack.c.l.b16 %v3773
    %v4121 = vunpack.c.h.b16 %v3773
    %v4122 = vunpack.c.l.b16 %v3774
    %v4123 = vunpack.c.h.b16 %v3774
    %v4124 = vunpack.c.l.b16 %v3775
    %v4125 = vunpack.c.h.b16 %v3775
    %v4126 = vunpack.c.l.b16 %v3776
    %v4127 = vunpack.c.h.b16 %v3776
    %v4128 = vunpack.c.l.b16 %v3777
    %v4129 = vunpack.c.h.b16 %v3777
    %v4130 = vunpack.c.l.b16 %v3778
    %v4131 = vunpack.c.h.b16 %v3778
    %v4132 = vunpack.c.l.b16 %v3779
    %v4133 = vunpack.c.h.b16 %v3779
    %v4134 = vunpack.c.l.b16 %v3780
    %v4135 = vunpack.c.h.b16 %v3780
    %v4136 = vunpack.c.l.b16 %v3781
    %v4137 = vunpack.c.h.b16 %v3781
    %v4138 = vunpack.c.l.b16 %v3782
    %v4139 = vunpack.c.h.b16 %v3782
    %v4140 = vunpack.c.l.b16 %v3783
    %v4141 = vunpack.c.h.b16 %v3783
    %v4142 = vunpack.c.l.b16 %v3784
    %v4143 = vunpack.c.h.b16 %v3784
    %v4144 = vunpack.c.l.b16 %v3785
    %v4145 = vunpack.c.h.b16 %v3785
    %v4146 = vunpack.c.l.b16 %v3786
    %v4147 = vunpack.c.h.b16 %v3786
    %v4148 = vunpack.c.l.b16 %v3787
    %v4149 = vunpack.c.h.b16 %v3787
    %v4150 = vunpack.c.l.b16 %v3788
    %v4151 = vunpack.c.h.b16 %v3788
    %v4152 = vunpack.c.l.b16 %v3789
    %v4153 = vunpack.c.h.b16 %v3789
    %v4154 = vunpack.c.l.b16 %v3790
    %v4155 = vunpack.c.h.b16 %v3790
    %v4156 = vunpack.c.l.b16 %v3791
    %v4157 = vunpack.c.h.b16 %v3791
    %v4158 = vunpack.c.l.b16 %v3792
    %v4159 = vunpack.c.h.b16 %v3792
    %v4160 = vunpack.c.l.b16 %v3793
    %v4161 = vunpack.c.h.b16 %v3793
    %v4162 = vunpack.c.l.b16 %v3794
    %v4163 = vunpack.c.h.b16 %v3794
    %v4164 = vunpack.c.l.b16 %v3795
    %v4165 = vunpack.c.h.b16 %v3795
    %v4166 = vunpack.c.l.b16 %v3796
    %v4167 = vunpack.c.h.b16 %v3796
    %v4168 = vunpack.c.l.b16 %v3797
    %v4169 = vunpack.c.h.b16 %v3797
    %v4170 = vunpack.c.l.b16 %v3798
    %v4171 = vunpack.c.h.b16 %v3798
    %v4172 = vunpack.c.l.b16 %v3799
    %v4173 = vunpack.c.h.b16 %v3799
    %v4174 = vunpack.c.l.b16 %v3800
    %v4175 = vunpack.c.h.b16 %v3800
    %v4176 = vunpack.c.l.b16 %v3801
    %v4177 = vunpack.c.h.b16 %v3801
    %v4178 = vunpack.c.l.b16 %v3802
    %v4179 = vunpack.c.h.b16 %v3802
    %v4180 = vunpack.c.l.b16 %v3803
    %v4181 = vunpack.c.h.b16 %v3803
    %v4182 = vunpack.c.l.b16 %v3804
    %v4183 = vunpack.c.h.b16 %v3804
    %v4184 = vunpack.c.l.b16 %v3805
    %v4185 = vunpack.c.h.b16 %v3805
    %v4186 = vunpack.c.l.b16 %v3806
    %v4187 = vunpack.c.h.b16 %v3806
    %v4188 = vunpack.c.l.b16 %v3807
    %v4189 = vunpack.c.h.b16 %v3807
    %v4190 = vunpack.c.l.b16 %v3808
    %v4191 = vunpack.c.h.b16 %v3808
    %v4192 = vunpack.c.l.b16 %v3809
    %v4193 = vunpack.c.h.b16 %v3809
    %v4194 = vpack.c.b16 %v3938, %v3938
    %v4195 = vpack.c.b16 %v3939, %v3939
    %v4196 = vpack.c.b16 %v3940, %v3940
    %v4197 = vpack.c.b16 %v3941, %v3941
    %v4198 = vpack.c.b16 %v3942, %v3942
    %v4199 = vpack.c.b16 %v3943, %v3943
    %v4200 = vpack.c.b16 %v3944, %v3944
    %v4201 = vpack.c.b16 %v3945, %v3945
    %v4202 = vpack.c.b16 %v3946, %v3946
    %v4203 = vpack.c.b16 %v3947, %v3947
    %v4204 = vpack.c.b16 %v3948, %v3948
    %v4205 = vpack.c.b16 %v3949, %v3949
    %v4206 = vpack.c.b16 %v3950, %v3950
    %v4207 = vpack.c.b16 %v3951, %v3951
    %v4208 = vpack.c.b16 %v3952, %v3952
    %v4209 = vpack.c.b16 %v3953, %v3953
    %v4210 = vpack.c.b16 %v3954, %v3954
    %v4211 = vpack.c.b16 %v3955, %v3955
    %v4212 = vpack.c.b16 %v3956, %v3956
    %v4213 = vpack.c.b16 %v3957, %v3957
    %v4214 = vpack.c.b16 %v3958, %v3958
    %v4215 = vpack.c.b16 %v3959, %v3959
    %v4216 = vpack.c.b16 %v3960, %v3960
    %v4217 = vpack.c.b16 %v3961, %v3961
    %v4218 = vpack.c.b16 %v3962, %v3962
    %v4219 = vpack.c.b16 %v3963, %v3963
    %v4220 = vpack.c.b16 %v3964, %v3964
    %v4221 = vpack.c.b16 %v3965, %v3965
    %v4222 = vpack.c.b16 %v3966, %v3966
    %v4223 = vpack.c.b16 %v3967, %v3967
    %v4224 = vpack.c.b16 %v3968, %v3968
    %v4225 = vpack.c.b16 %v3969, %v3969
    %v4226 = vpack.c.b16 %v3970, %v3970
    %v4227 = vpack.c.b16 %v3971, %v3971
    %v4228 = vpack.c.b16 %v3972, %v3972
    %v4229 = vpack.c.b16 %v3973, %v3973
    %v4230 = vpack.c.b16 %v3974, %v3974
    %v4231 = vpack.c.b16 %v3975, %v3975
    %v4232 = vpack.c.b16 %v3976, %v3976
    %v4233 = vpack.c.b16 %v3977, %v3977
    %v4234 = vpack.c.b16 %v3978, %v3978
    %v4235 = vpack.c.b16 %v3979, %v3979
    %v4236 = vpack.c.b16 %v3980, %v3980
    %v4237 = vpack.c.b16 %v3981, %v3981
    %v4238 = vpack.c.b16 %v3982, %v3982
    %v4239 = vpack.c.b16 %v3983, %v3983
    %v4240 = vpack.c.b16 %v3984, %v3984
    %v4241 = vpack.c.b16 %v3985, %v3985
    %v4242 = vpack.c.b16 %v3986, %v3986
    %v4243 = vpack.c.b16 %v3987, %v3987
    %v4244 = vpack.c.b16 %v3988, %v3988
    %v4245 = vpack.c.b16 %v3989, %v3989
    %v4246 = vpack.c.b16 %v3990, %v3990
    %v4247 = vpack.c.b16 %v3991, %v3991
    %v4248 = vpack.c.b16 %v3992, %v3992
    %v4249 = vpack.c.b16 %v3993, %v3993
    %v4250 = vpack.c.b16 %v3994, %v3994
    %v4251 = vpack.c.b16 %v3995, %v3995
    %v4252 = vpack.c.b16 %v3996, %v3996
    %v4253 = vpack.c.b16 %v3997, %v3997
    %v4254 = vpack.c.b16 %v3998, %v3998
    %v4255 = vpack.c.b16 %v3999, %v3999
    %v4256 = vpack.c.b16 %v4000, %v4000
    %v4257 = vpack.c.b16 %v4001, %v4001
    %v4258 = vpack.c.b16 %v4002, %v4002
    %v4259 = vpack.c.b16 %v4003, %v4003
    %v4260 = vpack.c.b16 %v4004, %v4004
    %v4261 = vpack.c.b16 %v4005, %v4005
    %v4262 = vpack.c.b16 %v4006, %v4006
    %v4263 = vpack.c.b16 %v4007, %v4007
    %v4264 = vpack.c.b16 %v4008, %v4008
    %v4265 = vpack.c.b16 %v4009, %v4009
    %v4266 = vpack.c.b16 %v4010, %v4010
    %v4267 = vpack.c.b16 %v4011, %v4011
    %v4268 = vpack.c.b16 %v4012, %v4012
    %v4269 = vpack.c.b16 %v4013, %v4013
    %v4270 = vpack.c.b16 %v4014, %v4014
    %v4271 = vpack.c.b16 %v4015, %v4015
    %v4272 = vpack.c.b16 %v4016, %v4016
    %v4273 = vpack.c.b16 %v4017, %v4017
    %v4274 = vpack.c.b16 %v4018, %v4018
    %v4275 = vpack.c.b16 %v4019, %v4019
    %v4276 = vpack.c.b16 %v4020, %v4020
    %v4277 = vpack.c.b16 %v4021, %v4021
    %v4278 = vpack.c.b16 %v4022, %v4022
    %v4279 = vpack.c.b16 %v4023, %v4023
    %v4280 = vpack.c.b16 %v4024, %v4024
    %v4281 = vpack.c.b16 %v4025, %v4025
    %v4282 = vpack.c.b16 %v4026, %v4026
    %v4283 = vpack.c.b16 %v4027, %v4027
    %v4284 = vpack.c.b16 %v4028, %v4028
    %v4285 = vpack.c.b16 %v4029, %v4029
    %v4286 = vpack.c.b16 %v4030, %v4030
    %v4287 = vpack.c.b16 %v4031, %v4031
    %v4288 = vpack.c.b16 %v4032, %v4032
    %v4289 = vpack.c.b16 %v4033, %v4033
    %v4290 = vpack.c.b16 %v4034, %v4034
    %v4291 = vpack.c.b16 %v4035, %v4035
    %v4292 = vpack.c.b16 %v4036, %v4036
    %v4293 = vpack.c.b16 %v4037, %v4037
    %v4294 = vpack.c.b16 %v4038, %v4038
    %v4295 = vpack.c.b16 %v4039, %v4039
    %v4296 = vpack.c.b16 %v4040, %v4040
    %v4297 = vpack.c.b16 %v4041, %v4041
    %v4298 = vpack.c.b16 %v4042, %v4042
    %v4299 = vpack.c.b16 %v4043, %v4043
    %v4300 = vpack.c.b16 %v4044, %v4044
    %v4301 = vpack.c.b16 %v4045, %v4045
    %v4302 = vpack.c.b16 %v4046, %v4046
    %v4303 = vpack.c.b16 %v4047, %v4047
    %v4304 = vpack.c.b16 %v4048, %v4048
    %v4305 = vpack.c.b16 %v4049, %v4049
    %v4306 = vpack.c.b16 %v4050, %v4050
    %v4307 = vpack.c.b16 %v4051, %v4051
    %v4308 = vpack.c.b16 %v4052, %v4052
    %v4309 = vpack.c.b16 %v4053, %v4053
    %v4310 = vpack.c.b16 %v4054, %v4054
    %v4311 = vpack.c.b16 %v4055, %v4055
    %v4312 = vpack.c.b16 %v4056, %v4056
    %v4313 = vpack.c.b16 %v4057, %v4057
    %v4314 = vpack.c.b16 %v4058, %v4058
    %v4315 = vpack.c.b16 %v4059, %v4059
    %v4316 = vpack.c.b16 %v4060, %v4060
    %v4317 = vpack.c.b16 %v4061, %v4061
    %v4318 = vpack.c.b16 %v4062, %v4062
    %v4319 = vpack.c.b16 %v4063, %v4063
    %v4320 = vpack.c.b16 %v4064, %v4064
    %v4321 = vpack.c.b16 %v4065, %v4065
    %v4322 = vpack.c.b16 %v4066, %v4066
    %v4323 = vpack.c.b16 %v4067, %v4067
    %v4324 = vpack.c.b16 %v4068, %v4068
    %v4325 = vpack.c.b16 %v4069, %v4069
    %v4326 = vpack.c.b16 %v4070, %v4070
    %v4327 = vpack.c.b16 %v4071, %v4071
    %v4328 = vpack.c.b16 %v4072, %v4072
    %v4329 = vpack.c.b16 %v4073, %v4073
    %v4330 = vpack.c.b16 %v4074, %v4074
    %v4331 = vpack.c.b16 %v4075, %v4075
    %v4332 = vpack.c.b16 %v4076, %v4076
    %v4333 = vpack.c.b16 %v4077, %v4077
    %v4334 = vpack.c.b16 %v4078, %v4078
    %v4335 = vpack.c.b16 %v4079, %v4079
    %v4336 = vpack.c.b16 %v4080, %v4080
    %v4337 = vpack.c.b16 %v4081, %v4081
    %v4338 = vpack.c.b16 %v4082, %v4082
    %v4339 = vpack.c.b16 %v4083, %v4083
    %v4340 = vpack.c.b16 %v4084, %v4084
    %v4341 = vpack.c.b16 %v4085, %v4085
    %v4342 = vpack.c.b16 %v4086, %v4086
    %v4343 = vpack.c.b16 %v4087, %v4087
    %v4344 = vpack.c.b16 %v4088, %v4088
    %v4345 = vpack.c.b16 %v4089, %v4089
    %v4346 = vpack.c.b16 %v4090, %v4090
    %v4347 = vpack.c.b16 %v4091, %v4091
    %v4348 = vpack.c.b16 %v4092, %v4092
    %v4349 = vpack.c.b16 %v4093, %v4093
    %v4350 = vpack.c.b16 %v4094, %v4094
    %v4351 = vpack.c.b16 %v4095, %v4095
    %v4352 = vpack.c.b16 %v4096, %v4096
    %v4353 = vpack.c.b16 %v4097, %v4097
    %v4354 = vpack.c.b16 %v4098, %v4098
    %v4355 = vpack.c.b16 %v4099, %v4099
    %v4356 = vpack.c.b16 %v4100, %v4100
    %v4357 = vpack.c.b16 %v4101, %v4101
    %v4358 = vpack.c.b16 %v4102, %v4102
    %v4359 = vpack.c.b16 %v4103, %v4103
    %v4360 = vpack.c.b16 %v4104, %v4104
    %v4361 = vpack.c.b16 %v4105, %v4105
    %v4362 = vpack.c.b16 %v4106, %v4106
    %v4363 = vpack.c.b16 %v4107, %v4107
    %v4364 = vpack.c.b16 %v4108, %v4108
    %v4365 = vpack.c.b16 %v4109, %v4109
    %v4366 = vpack.c.b16 %v4110, %v4110
    %v4367 = vpack.c.b16 %v4111, %v4111
    %v4368 = vpack.c.b16 %v4112, %v4112
    %v4369 = vpack.c.b16 %v4113, %v4113
    %v4370 = vpack.c.b16 %v4114, %v4114
    %v4371 = vpack.c.b16 %v4115, %v4115
    %v4372 = vpack.c.b16 %v4116, %v4116
    %v4373 = vpack.c.b16 %v4117, %v4117
    %v4374 = vpack.c.b16 %v4118, %v4118
    %v4375 = vpack.c.b16 %v4119, %v4119
    %v4376 = vpack.c.b16 %v4120, %v4120
    %v4377 = vpack.c.b16 %v4121, %v4121
    %v4378 = vpack.c.b16 %v4122, %v4122
    %v4379 = vpack.c.b16 %v4123, %v4123
    %v4380 = vpack.c.b16 %v4124, %v4124
    %v4381 = vpack.c.b16 %v4125, %v4125
    %v4382 = vpack.c.b16 %v4126, %v4126
    %v4383 = vpack.c.b16 %v4127, %v4127
    %v4384 = vpack.c.b16 %v4128, %v4128
    %v4385 = vpack.c.b16 %v4129, %v4129
    %v4386 = vpack.c.b16 %v4130, %v4130
    %v4387 = vpack.c.b16 %v4131, %v4131
    %v4388 = vpack.c.b16 %v4132, %v4132
    %v4389 = vpack.c.b16 %v4133, %v4133
    %v4390 = vpack.c.b16 %v4134, %v4134
    %v4391 = vpack.c.b16 %v4135, %v4135
    %v4392 = vpack.c.b16 %v4136, %v4136
    %v4393 = vpack.c.b16 %v4137, %v4137
    %v4394 = vpack.c.b16 %v4138, %v4138
    %v4395 = vpack.c.b16 %v4139, %v4139
    %v4396 = vpack.c.b16 %v4140, %v4140
    %v4397 = vpack.c.b16 %v4141, %v4141
    %v4398 = vpack.c.b16 %v4142, %v4142
    %v4399 = vpack.c.b16 %v4143, %v4143
    %v4400 = vpack.c.b16 %v4144, %v4144
    %v4401 = vpack.c.b16 %v4145, %v4145
    %v4402 = vpack.c.b16 %v4146, %v4146
    %v4403 = vpack.c.b16 %v4147, %v4147
    %v4404 = vpack.c.b16 %v4148, %v4148
    %v4405 = vpack.c.b16 %v4149, %v4149
    %v4406 = vpack.c.b16 %v4150, %v4150
    %v4407 = vpack.c.b16 %v4151, %v4151
    %v4408 = vpack.c.b16 %v4152, %v4152
    %v4409 = vpack.c.b16 %v4153, %v4153
    %v4410 = vpack.c.b16 %v4154, %v4154
    %v4411 = vpack.c.b16 %v4155, %v4155
    %v4412 = vpack.c.b16 %v4156, %v4156
    %v4413 = vpack.c.b16 %v4157, %v4157
    %v4414 = vpack.c.b16 %v4158, %v4158
    %v4415 = vpack.c.b16 %v4159, %v4159
    %v4416 = vpack.c.b16 %v4160, %v4160
    %v4417 = vpack.c.b16 %v4161, %v4161
    %v4418 = vpack.c.b16 %v4162, %v4162
    %v4419 = vpack.c.b16 %v4163, %v4163
    %v4420 = vpack.c.b16 %v4164, %v4164
    %v4421 = vpack.c.b16 %v4165, %v4165
    %v4422 = vpack.c.b16 %v4166, %v4166
    %v4423 = vpack.c.b16 %v4167, %v4167
    %v4424 = vpack.c.b16 %v4168, %v4168
    %v4425 = vpack.c.b16 %v4169, %v4169
    %v4426 = vpack.c.b16 %v4170, %v4170
    %v4427 = vpack.c.b16 %v4171, %v4171
    %v4428 = vpack.c.b16 %v4172, %v4172
    %v4429 = vpack.c.b16 %v4173, %v4173
    %v4430 = vpack.c.b16 %v4174, %v4174
    %v4431 = vpack.c.b16 %v4175, %v4175
    %v4432 = vpack.c.b16 %v4176, %v4176
    %v4433 = vpack.c.b16 %v4177, %v4177
    %v4434 = vpack.c.b16 %v4178, %v4178
    %v4435 = vpack.c.b16 %v4179, %v4179
    %v4436 = vpack.c.b16 %v4180, %v4180
    %v4437 = vpack.c.b16 %v4181, %v4181
    %v4438 = vpack.c.b16 %v4182, %v4182
    %v4439 = vpack.c.b16 %v4183, %v4183
    %v4440 = vpack.c.b16 %v4184, %v4184
    %v4441 = vpack.c.b16 %v4185, %v4185
    %v4442 = vpack.c.b16 %v4186, %v4186
    %v4443 = vpack.c.b16 %v4187, %v4187
    %v4444 = vpack.c.b16 %v4188, %v4188
    %v4445 = vpack.c.b16 %v4189, %v4189
    %v4446 = vpack.c.b16 %v4190, %v4190
    %v4447 = vpack.c.b16 %v4191, %v4191
    %v4448 = vpack.c.b16 %v4192, %v4192
    %v4449 = vpack.c.b16 %v4193, %v4193
    %vm4706 = vcmask 60416
    %4707 = vst.msk [vmem:[%s4] sm:$0xf] %vm4706, %v4194
    %4708 = vst.msk [vmem:[%s4 + $0x4] sm:$0xf] %vm4706, %v4195
    %4709 = vst.msk [vmem:[%s4 + $0x8] sm:$0xf] %vm4706, %v4196
    %4710 = vst.msk [vmem:[%s4 + $0xc] sm:$0xf] %vm4706, %v4197
    %4711 = vst.msk [vmem:[%s4 + $0x10] sm:$0xf] %vm4706, %v4198
    %4712 = vst.msk [vmem:[%s4 + $0x14] sm:$0xf] %vm4706, %v4199
    %4713 = vst.msk [vmem:[%s4 + $0x18] sm:$0xf] %vm4706, %v4200
    %4714 = vst.msk [vmem:[%s4 + $0x1c] sm:$0xf] %vm4706, %v4201
    %4715 = vst.msk [vmem:[%s4 + $0x20] sm:$0xf] %vm4706, %v4202
    %4716 = vst.msk [vmem:[%s4 + $0x24] sm:$0xf] %vm4706, %v4203
    %4717 = vst.msk [vmem:[%s4 + $0x28] sm:$0xf] %vm4706, %v4204
    %4718 = vst.msk [vmem:[%s4 + $0x2c] sm:$0xf] %vm4706, %v4205
    %4719 = vst.msk [vmem:[%s4 + $0x30] sm:$0xf] %vm4706, %v4206
    %4720 = vst.msk [vmem:[%s4 + $0x34] sm:$0xf] %vm4706, %v4207
    %4721 = vst.msk [vmem:[%s4 + $0x38] sm:$0xf] %vm4706, %v4208
    %4722 = vst.msk [vmem:[%s4 + $0x3c] sm:$0xf] %vm4706, %v4209
    %4723 = vst.msk [vmem:[%s4 + $0x40] sm:$0xf] %vm4706, %v4210
    %4724 = vst.msk [vmem:[%s4 + $0x44] sm:$0xf] %vm4706, %v4211
    %4725 = vst.msk [vmem:[%s4 + $0x48] sm:$0xf] %vm4706, %v4212
    %4726 = vst.msk [vmem:[%s4 + $0x4c] sm:$0xf] %vm4706, %v4213
    %4727 = vst.msk [vmem:[%s4 + $0x50] sm:$0xf] %vm4706, %v4214
    %4728 = vst.msk [vmem:[%s4 + $0x54] sm:$0xf] %vm4706, %v4215
    %4729 = vst.msk [vmem:[%s4 + $0x58] sm:$0xf] %vm4706, %v4216
    %4730 = vst.msk [vmem:[%s4 + $0x5c] sm:$0xf] %vm4706, %v4217
    %4731 = vst.msk [vmem:[%s4 + $0x60] sm:$0xf] %vm4706, %v4218
    %4732 = vst.msk [vmem:[%s4 + $0x64] sm:$0xf] %vm4706, %v4219
    %4733 = vst.msk [vmem:[%s4 + $0x68] sm:$0xf] %vm4706, %v4220
    %4734 = vst.msk [vmem:[%s4 + $0x6c] sm:$0xf] %vm4706, %v4221
    %4735 = vst.msk [vmem:[%s4 + $0x70] sm:$0xf] %vm4706, %v4222
    %4736 = vst.msk [vmem:[%s4 + $0x74] sm:$0xf] %vm4706, %v4223
    %4737 = vst.msk [vmem:[%s4 + $0x78] sm:$0xf] %vm4706, %v4224
    %4738 = vst.msk [vmem:[%s4 + $0x7c] sm:$0xf] %vm4706, %v4225
    %4739 = vst.msk [vmem:[%s4 + $0x80] sm:$0xf] %vm4706, %v4226
    %4740 = vst.msk [vmem:[%s4 + $0x84] sm:$0xf] %vm4706, %v4227
    %4741 = vst.msk [vmem:[%s4 + $0x88] sm:$0xf] %vm4706, %v4228
    %4742 = vst.msk [vmem:[%s4 + $0x8c] sm:$0xf] %vm4706, %v4229
    %4743 = vst.msk [vmem:[%s4 + $0x90] sm:$0xf] %vm4706, %v4230
    %4744 = vst.msk [vmem:[%s4 + $0x94] sm:$0xf] %vm4706, %v4231
    %4745 = vst.msk [vmem:[%s4 + $0x98] sm:$0xf] %vm4706, %v4232
    %4746 = vst.msk [vmem:[%s4 + $0x9c] sm:$0xf] %vm4706, %v4233
    %4747 = vst.msk [vmem:[%s4 + $0xa0] sm:$0xf] %vm4706, %v4234
    %4748 = vst.msk [vmem:[%s4 + $0xa4] sm:$0xf] %vm4706, %v4235
    %4749 = vst.msk [vmem:[%s4 + $0xa8] sm:$0xf] %vm4706, %v4236
    %4750 = vst.msk [vmem:[%s4 + $0xac] sm:$0xf] %vm4706, %v4237
    %4751 = vst.msk [vmem:[%s4 + $0xb0] sm:$0xf] %vm4706, %v4238
    %4752 = vst.msk [vmem:[%s4 + $0xb4] sm:$0xf] %vm4706, %v4239
    %4753 = vst.msk [vmem:[%s4 + $0xb8] sm:$0xf] %vm4706, %v4240
    %4754 = vst.msk [vmem:[%s4 + $0xbc] sm:$0xf] %vm4706, %v4241
    %4755 = vst.msk [vmem:[%s4 + $0xc0] sm:$0xf] %vm4706, %v4242
    %4756 = vst.msk [vmem:[%s4 + $0xc4] sm:$0xf] %vm4706, %v4243
    %4757 = vst.msk [vmem:[%s4 + $0xc8] sm:$0xf] %vm4706, %v4244
    %4758 = vst.msk [vmem:[%s4 + $0xcc] sm:$0xf] %vm4706, %v4245
    %4759 = vst.msk [vmem:[%s4 + $0xd0] sm:$0xf] %vm4706, %v4246
    %4760 = vst.msk [vmem:[%s4 + $0xd4] sm:$0xf] %vm4706, %v4247
    %4761 = vst.msk [vmem:[%s4 + $0xd8] sm:$0xf] %vm4706, %v4248
    %4762 = vst.msk [vmem:[%s4 + $0xdc] sm:$0xf] %vm4706, %v4249
    %4763 = vst.msk [vmem:[%s4 + $0xe0] sm:$0xf] %vm4706, %v4250
    %4764 = vst.msk [vmem:[%s4 + $0xe4] sm:$0xf] %vm4706, %v4251
    %4765 = vst.msk [vmem:[%s4 + $0xe8] sm:$0xf] %vm4706, %v4252
    %4766 = vst.msk [vmem:[%s4 + $0xec] sm:$0xf] %vm4706, %v4253
    %4767 = vst.msk [vmem:[%s4 + $0xf0] sm:$0xf] %vm4706, %v4254
    %4768 = vst.msk [vmem:[%s4 + $0xf4] sm:$0xf] %vm4706, %v4255
    %4769 = vst.msk [vmem:[%s4 + $0xf8] sm:$0xf] %vm4706, %v4256
    %4770 = vst.msk [vmem:[%s4 + $0xfc] sm:$0xf] %vm4706, %v4257
    %4771 = vst.msk [vmem:[%s4 + $0x100] sm:$0xf] %vm4706, %v4258
    %4772 = vst.msk [vmem:[%s4 + $0x104] sm:$0xf] %vm4706, %v4259
    %4773 = vst.msk [vmem:[%s4 + $0x108] sm:$0xf] %vm4706, %v4260
    %4774 = vst.msk [vmem:[%s4 + $0x10c] sm:$0xf] %vm4706, %v4261
    %4775 = vst.msk [vmem:[%s4 + $0x110] sm:$0xf] %vm4706, %v4262
    %4776 = vst.msk [vmem:[%s4 + $0x114] sm:$0xf] %vm4706, %v4263
    %4777 = vst.msk [vmem:[%s4 + $0x118] sm:$0xf] %vm4706, %v4264
    %4778 = vst.msk [vmem:[%s4 + $0x11c] sm:$0xf] %vm4706, %v4265
    %4779 = vst.msk [vmem:[%s4 + $0x120] sm:$0xf] %vm4706, %v4266
    %4780 = vst.msk [vmem:[%s4 + $0x124] sm:$0xf] %vm4706, %v4267
    %4781 = vst.msk [vmem:[%s4 + $0x128] sm:$0xf] %vm4706, %v4268
    %4782 = vst.msk [vmem:[%s4 + $0x12c] sm:$0xf] %vm4706, %v4269
    %4783 = vst.msk [vmem:[%s4 + $0x130] sm:$0xf] %vm4706, %v4270
    %4784 = vst.msk [vmem:[%s4 + $0x134] sm:$0xf] %vm4706, %v4271
    %4785 = vst.msk [vmem:[%s4 + $0x138] sm:$0xf] %vm4706, %v4272
    %4786 = vst.msk [vmem:[%s4 + $0x13c] sm:$0xf] %vm4706, %v4273
    %4787 = vst.msk [vmem:[%s4 + $0x140] sm:$0xf] %vm4706, %v4274
    %4788 = vst.msk [vmem:[%s4 + $0x144] sm:$0xf] %vm4706, %v4275
    %4789 = vst.msk [vmem:[%s4 + $0x148] sm:$0xf] %vm4706, %v4276
    %4790 = vst.msk [vmem:[%s4 + $0x14c] sm:$0xf] %vm4706, %v4277
    %4791 = vst.msk [vmem:[%s4 + $0x150] sm:$0xf] %vm4706, %v4278
    %4792 = vst.msk [vmem:[%s4 + $0x154] sm:$0xf] %vm4706, %v4279
    %4793 = vst.msk [vmem:[%s4 + $0x158] sm:$0xf] %vm4706, %v4280
    %4794 = vst.msk [vmem:[%s4 + $0x15c] sm:$0xf] %vm4706, %v4281
    %4795 = vst.msk [vmem:[%s4 + $0x160] sm:$0xf] %vm4706, %v4282
    %4796 = vst.msk [vmem:[%s4 + $0x164] sm:$0xf] %vm4706, %v4283
    %4797 = vst.msk [vmem:[%s4 + $0x168] sm:$0xf] %vm4706, %v4284
    %4798 = vst.msk [vmem:[%s4 + $0x16c] sm:$0xf] %vm4706, %v4285
    %4799 = vst.msk [vmem:[%s4 + $0x170] sm:$0xf] %vm4706, %v4286
    %4800 = vst.msk [vmem:[%s4 + $0x174] sm:$0xf] %vm4706, %v4287
    %4801 = vst.msk [vmem:[%s4 + $0x178] sm:$0xf] %vm4706, %v4288
    %4802 = vst.msk [vmem:[%s4 + $0x17c] sm:$0xf] %vm4706, %v4289
    %4803 = vst.msk [vmem:[%s4 + $0x180] sm:$0xf] %vm4706, %v4290
    %4804 = vst.msk [vmem:[%s4 + $0x184] sm:$0xf] %vm4706, %v4291
    %4805 = vst.msk [vmem:[%s4 + $0x188] sm:$0xf] %vm4706, %v4292
    %4806 = vst.msk [vmem:[%s4 + $0x18c] sm:$0xf] %vm4706, %v4293
    %4807 = vst.msk [vmem:[%s4 + $0x190] sm:$0xf] %vm4706, %v4294
    %4808 = vst.msk [vmem:[%s4 + $0x194] sm:$0xf] %vm4706, %v4295
    %4809 = vst.msk [vmem:[%s4 + $0x198] sm:$0xf] %vm4706, %v4296
    %4810 = vst.msk [vmem:[%s4 + $0x19c] sm:$0xf] %vm4706, %v4297
    %4811 = vst.msk [vmem:[%s4 + $0x1a0] sm:$0xf] %vm4706, %v4298
    %4812 = vst.msk [vmem:[%s4 + $0x1a4] sm:$0xf] %vm4706, %v4299
    %4813 = vst.msk [vmem:[%s4 + $0x1a8] sm:$0xf] %vm4706, %v4300
    %4814 = vst.msk [vmem:[%s4 + $0x1ac] sm:$0xf] %vm4706, %v4301
    %4815 = vst.msk [vmem:[%s4 + $0x1b0] sm:$0xf] %vm4706, %v4302
    %4816 = vst.msk [vmem:[%s4 + $0x1b4] sm:$0xf] %vm4706, %v4303
    %4817 = vst.msk [vmem:[%s4 + $0x1b8] sm:$0xf] %vm4706, %v4304
    %4818 = vst.msk [vmem:[%s4 + $0x1bc] sm:$0xf] %vm4706, %v4305
    %4819 = vst.msk [vmem:[%s4 + $0x1c0] sm:$0xf] %vm4706, %v4306
    %4820 = vst.msk [vmem:[%s4 + $0x1c4] sm:$0xf] %vm4706, %v4307
    %4821 = vst.msk [vmem:[%s4 + $0x1c8] sm:$0xf] %vm4706, %v4308
    %4822 = vst.msk [vmem:[%s4 + $0x1cc] sm:$0xf] %vm4706, %v4309
    %4823 = vst.msk [vmem:[%s4 + $0x1d0] sm:$0xf] %vm4706, %v4310
    %4824 = vst.msk [vmem:[%s4 + $0x1d4] sm:$0xf] %vm4706, %v4311
    %4825 = vst.msk [vmem:[%s4 + $0x1d8] sm:$0xf] %vm4706, %v4312
    %4826 = vst.msk [vmem:[%s4 + $0x1dc] sm:$0xf] %vm4706, %v4313
    %4827 = vst.msk [vmem:[%s4 + $0x1e0] sm:$0xf] %vm4706, %v4314
    %4828 = vst.msk [vmem:[%s4 + $0x1e4] sm:$0xf] %vm4706, %v4315
    %4829 = vst.msk [vmem:[%s4 + $0x1e8] sm:$0xf] %vm4706, %v4316
    %4830 = vst.msk [vmem:[%s4 + $0x1ec] sm:$0xf] %vm4706, %v4317
    %4831 = vst.msk [vmem:[%s4 + $0x1f0] sm:$0xf] %vm4706, %v4318
    %4832 = vst.msk [vmem:[%s4 + $0x1f4] sm:$0xf] %vm4706, %v4319
    %4833 = vst.msk [vmem:[%s4 + $0x1f8] sm:$0xf] %vm4706, %v4320
    %4834 = vst.msk [vmem:[%s4 + $0x1fc] sm:$0xf] %vm4706, %v4321
    %4835 = vst.msk [vmem:[%s4 + $0x200] sm:$0xf] %vm4706, %v4322
    %4836 = vst.msk [vmem:[%s4 + $0x204] sm:$0xf] %vm4706, %v4323
    %4837 = vst.msk [vmem:[%s4 + $0x208] sm:$0xf] %vm4706, %v4324
    %4838 = vst.msk [vmem:[%s4 + $0x20c] sm:$0xf] %vm4706, %v4325
    %4839 = vst.msk [vmem:[%s4 + $0x210] sm:$0xf] %vm4706, %v4326
    %4840 = vst.msk [vmem:[%s4 + $0x214] sm:$0xf] %vm4706, %v4327
    %4841 = vst.msk [vmem:[%s4 + $0x218] sm:$0xf] %vm4706, %v4328
    %4842 = vst.msk [vmem:[%s4 + $0x21c] sm:$0xf] %vm4706, %v4329
    %4843 = vst.msk [vmem:[%s4 + $0x220] sm:$0xf] %vm4706, %v4330
    %4844 = vst.msk [vmem:[%s4 + $0x224] sm:$0xf] %vm4706, %v4331
    %4845 = vst.msk [vmem:[%s4 + $0x228] sm:$0xf] %vm4706, %v4332
    %4846 = vst.msk [vmem:[%s4 + $0x22c] sm:$0xf] %vm4706, %v4333
    %4847 = vst.msk [vmem:[%s4 + $0x230] sm:$0xf] %vm4706, %v4334
    %4848 = vst.msk [vmem:[%s4 + $0x234] sm:$0xf] %vm4706, %v4335
    %4849 = vst.msk [vmem:[%s4 + $0x238] sm:$0xf] %vm4706, %v4336
    %4850 = vst.msk [vmem:[%s4 + $0x23c] sm:$0xf] %vm4706, %v4337
    %4851 = vst.msk [vmem:[%s4 + $0x240] sm:$0xf] %vm4706, %v4338
    %4852 = vst.msk [vmem:[%s4 + $0x244] sm:$0xf] %vm4706, %v4339
    %4853 = vst.msk [vmem:[%s4 + $0x248] sm:$0xf] %vm4706, %v4340
    %4854 = vst.msk [vmem:[%s4 + $0x24c] sm:$0xf] %vm4706, %v4341
    %4855 = vst.msk [vmem:[%s4 + $0x250] sm:$0xf] %vm4706, %v4342
    %4856 = vst.msk [vmem:[%s4 + $0x254] sm:$0xf] %vm4706, %v4343
    %4857 = vst.msk [vmem:[%s4 + $0x258] sm:$0xf] %vm4706, %v4344
    %4858 = vst.msk [vmem:[%s4 + $0x25c] sm:$0xf] %vm4706, %v4345
    %4859 = vst.msk [vmem:[%s4 + $0x260] sm:$0xf] %vm4706, %v4346
    %4860 = vst.msk [vmem:[%s4 + $0x264] sm:$0xf] %vm4706, %v4347
    %4861 = vst.msk [vmem:[%s4 + $0x268] sm:$0xf] %vm4706, %v4348
    %4862 = vst.msk [vmem:[%s4 + $0x26c] sm:$0xf] %vm4706, %v4349
    %4863 = vst.msk [vmem:[%s4 + $0x270] sm:$0xf] %vm4706, %v4350
    %4864 = vst.msk [vmem:[%s4 + $0x274] sm:$0xf] %vm4706, %v4351
    %4865 = vst.msk [vmem:[%s4 + $0x278] sm:$0xf] %vm4706, %v4352
    %4866 = vst.msk [vmem:[%s4 + $0x27c] sm:$0xf] %vm4706, %v4353
    %4867 = vst.msk [vmem:[%s4 + $0x280] sm:$0xf] %vm4706, %v4354
    %4868 = vst.msk [vmem:[%s4 + $0x284] sm:$0xf] %vm4706, %v4355
    %4869 = vst.msk [vmem:[%s4 + $0x288] sm:$0xf] %vm4706, %v4356
    %4870 = vst.msk [vmem:[%s4 + $0x28c] sm:$0xf] %vm4706, %v4357
    %4871 = vst.msk [vmem:[%s4 + $0x290] sm:$0xf] %vm4706, %v4358
    %4872 = vst.msk [vmem:[%s4 + $0x294] sm:$0xf] %vm4706, %v4359
    %4873 = vst.msk [vmem:[%s4 + $0x298] sm:$0xf] %vm4706, %v4360
    %4874 = vst.msk [vmem:[%s4 + $0x29c] sm:$0xf] %vm4706, %v4361
    %4875 = vst.msk [vmem:[%s4 + $0x2a0] sm:$0xf] %vm4706, %v4362
    %4876 = vst.msk [vmem:[%s4 + $0x2a4] sm:$0xf] %vm4706, %v4363
    %4877 = vst.msk [vmem:[%s4 + $0x2a8] sm:$0xf] %vm4706, %v4364
    %4878 = vst.msk [vmem:[%s4 + $0x2ac] sm:$0xf] %vm4706, %v4365
    %4879 = vst.msk [vmem:[%s4 + $0x2b0] sm:$0xf] %vm4706, %v4366
    %4880 = vst.msk [vmem:[%s4 + $0x2b4] sm:$0xf] %vm4706, %v4367
    %4881 = vst.msk [vmem:[%s4 + $0x2b8] sm:$0xf] %vm4706, %v4368
    %4882 = vst.msk [vmem:[%s4 + $0x2bc] sm:$0xf] %vm4706, %v4369
    %4883 = vst.msk [vmem:[%s4 + $0x2c0] sm:$0xf] %vm4706, %v4370
    %4884 = vst.msk [vmem:[%s4 + $0x2c4] sm:$0xf] %vm4706, %v4371
    %4885 = vst.msk [vmem:[%s4 + $0x2c8] sm:$0xf] %vm4706, %v4372
    %4886 = vst.msk [vmem:[%s4 + $0x2cc] sm:$0xf] %vm4706, %v4373
    %4887 = vst.msk [vmem:[%s4 + $0x2d0] sm:$0xf] %vm4706, %v4374
    %4888 = vst.msk [vmem:[%s4 + $0x2d4] sm:$0xf] %vm4706, %v4375
    %4889 = vst.msk [vmem:[%s4 + $0x2d8] sm:$0xf] %vm4706, %v4376
    %4890 = vst.msk [vmem:[%s4 + $0x2dc] sm:$0xf] %vm4706, %v4377
    %4891 = vst.msk [vmem:[%s4 + $0x2e0] sm:$0xf] %vm4706, %v4378
    %4892 = vst.msk [vmem:[%s4 + $0x2e4] sm:$0xf] %vm4706, %v4379
    %4893 = vst.msk [vmem:[%s4 + $0x2e8] sm:$0xf] %vm4706, %v4380
    %4894 = vst.msk [vmem:[%s4 + $0x2ec] sm:$0xf] %vm4706, %v4381
    %4895 = vst.msk [vmem:[%s4 + $0x2f0] sm:$0xf] %vm4706, %v4382
    %4896 = vst.msk [vmem:[%s4 + $0x2f4] sm:$0xf] %vm4706, %v4383
    %4897 = vst.msk [vmem:[%s4 + $0x2f8] sm:$0xf] %vm4706, %v4384
    %4898 = vst.msk [vmem:[%s4 + $0x2fc] sm:$0xf] %vm4706, %v4385
    %4899 = vst.msk [vmem:[%s4 + $0x300] sm:$0xf] %vm4706, %v4386
    %4900 = vst.msk [vmem:[%s4 + $0x304] sm:$0xf] %vm4706, %v4387
    %4901 = vst.msk [vmem:[%s4 + $0x308] sm:$0xf] %vm4706, %v4388
    %4902 = vst.msk [vmem:[%s4 + $0x30c] sm:$0xf] %vm4706, %v4389
    %4903 = vst.msk [vmem:[%s4 + $0x310] sm:$0xf] %vm4706, %v4390
    %4904 = vst.msk [vmem:[%s4 + $0x314] sm:$0xf] %vm4706, %v4391
    %4905 = vst.msk [vmem:[%s4 + $0x318] sm:$0xf] %vm4706, %v4392
    %4906 = vst.msk [vmem:[%s4 + $0x31c] sm:$0xf] %vm4706, %v4393
    %4907 = vst.msk [vmem:[%s4 + $0x320] sm:$0xf] %vm4706, %v4394
    %4908 = vst.msk [vmem:[%s4 + $0x324] sm:$0xf] %vm4706, %v4395
    %4909 = vst.msk [vmem:[%s4 + $0x328] sm:$0xf] %vm4706, %v4396
    %4910 = vst.msk [vmem:[%s4 + $0x32c] sm:$0xf] %vm4706, %v4397
    %4911 = vst.msk [vmem:[%s4 + $0x330] sm:$0xf] %vm4706, %v4398
    %4912 = vst.msk [vmem:[%s4 + $0x334] sm:$0xf] %vm4706, %v4399
    %4913 = vst.msk [vmem:[%s4 + $0x338] sm:$0xf] %vm4706, %v4400
    %4914 = vst.msk [vmem:[%s4 + $0x33c] sm:$0xf] %vm4706, %v4401
    %4915 = vst.msk [vmem:[%s4 + $0x340] sm:$0xf] %vm4706, %v4402
    %4916 = vst.msk [vmem:[%s4 + $0x344] sm:$0xf] %vm4706, %v4403
    %4917 = vst.msk [vmem:[%s4 + $0x348] sm:$0xf] %vm4706, %v4404
    %4918 = vst.msk [vmem:[%s4 + $0x34c] sm:$0xf] %vm4706, %v4405
    %4919 = vst.msk [vmem:[%s4 + $0x350] sm:$0xf] %vm4706, %v4406
    %4920 = vst.msk [vmem:[%s4 + $0x354] sm:$0xf] %vm4706, %v4407
    %4921 = vst.msk [vmem:[%s4 + $0x358] sm:$0xf] %vm4706, %v4408
    %4922 = vst.msk [vmem:[%s4 + $0x35c] sm:$0xf] %vm4706, %v4409
    %4923 = vst.msk [vmem:[%s4 + $0x360] sm:$0xf] %vm4706, %v4410
    %4924 = vst.msk [vmem:[%s4 + $0x364] sm:$0xf] %vm4706, %v4411
    %4925 = vst.msk [vmem:[%s4 + $0x368] sm:$0xf] %vm4706, %v4412
    %4926 = vst.msk [vmem:[%s4 + $0x36c] sm:$0xf] %vm4706, %v4413
    %4927 = vst.msk [vmem:[%s4 + $0x370] sm:$0xf] %vm4706, %v4414
    %4928 = vst.msk [vmem:[%s4 + $0x374] sm:$0xf] %vm4706, %v4415
    %4929 = vst.msk [vmem:[%s4 + $0x378] sm:$0xf] %vm4706, %v4416
    %4930 = vst.msk [vmem:[%s4 + $0x37c] sm:$0xf] %vm4706, %v4417
    %4931 = vst.msk [vmem:[%s4 + $0x380] sm:$0xf] %vm4706, %v4418
    %4932 = vst.msk [vmem:[%s4 + $0x384] sm:$0xf] %vm4706, %v4419
    %4933 = vst.msk [vmem:[%s4 + $0x388] sm:$0xf] %vm4706, %v4420
    %4934 = vst.msk [vmem:[%s4 + $0x38c] sm:$0xf] %vm4706, %v4421
    %4935 = vst.msk [vmem:[%s4 + $0x390] sm:$0xf] %vm4706, %v4422
    %4936 = vst.msk [vmem:[%s4 + $0x394] sm:$0xf] %vm4706, %v4423
    %4937 = vst.msk [vmem:[%s4 + $0x398] sm:$0xf] %vm4706, %v4424
    %4938 = vst.msk [vmem:[%s4 + $0x39c] sm:$0xf] %vm4706, %v4425
    %4939 = vst.msk [vmem:[%s4 + $0x3a0] sm:$0xf] %vm4706, %v4426
    %4940 = vst.msk [vmem:[%s4 + $0x3a4] sm:$0xf] %vm4706, %v4427
    %4941 = vst.msk [vmem:[%s4 + $0x3a8] sm:$0xf] %vm4706, %v4428
    %4942 = vst.msk [vmem:[%s4 + $0x3ac] sm:$0xf] %vm4706, %v4429
    %4943 = vst.msk [vmem:[%s4 + $0x3b0] sm:$0xf] %vm4706, %v4430
    %4944 = vst.msk [vmem:[%s4 + $0x3b4] sm:$0xf] %vm4706, %v4431
    %4945 = vst.msk [vmem:[%s4 + $0x3b8] sm:$0xf] %vm4706, %v4432
    %4946 = vst.msk [vmem:[%s4 + $0x3bc] sm:$0xf] %vm4706, %v4433
    %4947 = vst.msk [vmem:[%s4 + $0x3c0] sm:$0xf] %vm4706, %v4434
    %4948 = vst.msk [vmem:[%s4 + $0x3c4] sm:$0xf] %vm4706, %v4435
    %4949 = vst.msk [vmem:[%s4 + $0x3c8] sm:$0xf] %vm4706, %v4436
    %4950 = vst.msk [vmem:[%s4 + $0x3cc] sm:$0xf] %vm4706, %v4437
    %4951 = vst.msk [vmem:[%s4 + $0x3d0] sm:$0xf] %vm4706, %v4438
    %4952 = vst.msk [vmem:[%s4 + $0x3d4] sm:$0xf] %vm4706, %v4439
    %4953 = vst.msk [vmem:[%s4 + $0x3d8] sm:$0xf] %vm4706, %v4440
    %4954 = vst.msk [vmem:[%s4 + $0x3dc] sm:$0xf] %vm4706, %v4441
    %4955 = vst.msk [vmem:[%s4 + $0x3e0] sm:$0xf] %vm4706, %v4442
    %4956 = vst.msk [vmem:[%s4 + $0x3e4] sm:$0xf] %vm4706, %v4443
    %4957 = vst.msk [vmem:[%s4 + $0x3e8] sm:$0xf] %vm4706, %v4444
    %4958 = vst.msk [vmem:[%s4 + $0x3ec] sm:$0xf] %vm4706, %v4445
    %4959 = vst.msk [vmem:[%s4 + $0x3f0] sm:$0xf] %vm4706, %v4446
    %4960 = vst.msk [vmem:[%s4 + $0x3f4] sm:$0xf] %vm4706, %v4447
    %4961 = vst.msk [vmem:[%s4 + $0x3f8] sm:$0xf] %vm4706, %v4448
    %4962 = vst.msk [vmem:[%s4 + $0x3fc] sm:$0xf] %vm4706, %v4449
    // Predicated region
    $region26: #{discriminator_forward.5} parent=1 // pred_check
      _
    $region27: #{discriminator_forward.5} parent=1 // pred_check_branch
      %4964 = sbr.rel (0) target = $region29
    $region28: #{discriminator_forward.5} parent=1 // pred_region
      _
    $region29: #{discriminator_forward.5} parent=1 // pred_fallthru
      _
    // Predicated region
    $region30: #{discriminator_forward.5} parent=1 // pred_check
      _
    $region31: #{discriminator_forward.5} parent=1 // pred_check_branch
      %4966 = sbr.rel (0) target = $region33
    $region32: #{discriminator_forward.5} parent=1 // pred_region
      _
    $region33: #{discriminator_forward.5} parent=1 // pred_fallthru
      _
    %4967 = vsyncpa [#allocation3], 1
    %4968 = vsyncpa [#allocation5], 1

// kernel: discriminator_forward.6
$region0: #{discriminator_forward.6}
  #allocation0 [shape = 'u32[]', space=smem, size = 0x4, offset = 0x4, fixed_abs, tag = 'smem constant byte address 0x4 - core index']
  #allocation1 [shape = 'u32[144,128]{1,0:T(1,128)}', space=vmem, size = 0x12000, scoped, tag = 'internal scratch']
  %s0 = inlined_call_operand.vmem [shape: bf16[512,128], index: 0, kind: input, shape index: {}]
  %s1 = inlined_call_operand.vmem [shape: bf16[128,16], index: 1, kind: input, shape index: {}]
  %s2 = inlined_call_operand.vmem [shape: f32[1,16], index: 2, kind: input, shape index: {}]
  %s3 = inlined_call_operand.vmem [shape: f32[1,16], index: 3, kind: input, shape index: {}]
  %s4 = inlined_call_operand.vmem [shape: bf16[512,16], index: 4, kind: output, shape index: {}]
  %s5 = sld [smem:[#allocation0]]
  $region26: #{discriminator_forward.6} parent=0
    _
  %s7 = ssub.s32 1, %s5
  %s8 = scalar_select 0, %s7, %s5
  // Predicated region
  $region2: #{discriminator_forward.6} parent=0 // pred_check
    _
  $region3: #{discriminator_forward.6} parent=0 // pred_check_branch
    %10 = sbr.rel (0) target = $region5
  $region4: #{discriminator_forward.6} parent=0 // pred_region
    _
  $region5: #{discriminator_forward.6} parent=0 // pred_fallthru
    _
  // Predicated region
  $region6: #{discriminator_forward.6} parent=0 // pred_check
    _
  $region7: #{discriminator_forward.6} parent=0 // pred_check_branch
    %12 = sbr.rel (0) target = $region9
  $region8: #{discriminator_forward.6} parent=0 // pred_region
    _
  $region9: #{discriminator_forward.6} parent=0 // pred_fallthru
    _
  // Predicated region
  $region10: #{discriminator_forward.6} parent=0 // pred_check
    _
  $region11: #{discriminator_forward.6} parent=0 // pred_check_branch
    %14 = sbr.rel (0) target = $region13
  $region12: #{discriminator_forward.6} parent=0 // pred_region
    _
  $region13: #{discriminator_forward.6} parent=0 // pred_fallthru
    _
  // Predicated region
  $region14: #{discriminator_forward.6} parent=0 // pred_check
    _
  $region15: #{discriminator_forward.6} parent=0 // pred_check_branch
    %16 = sbr.rel (0) target = $region17
  $region16: #{discriminator_forward.6} parent=0 // pred_region
    _
  $region17: #{discriminator_forward.6} parent=0 // pred_fallthru
    _
  %v18 = vld [vmem:[%s0] sm:$0xf]
  %v19 = vld [vmem:[%s0 + $0x4] sm:$0xf]
  %v20 = vld [vmem:[%s0 + $0x8] sm:$0xf]
  %v21 = vld [vmem:[%s0 + $0xc] sm:$0xf]
  %v22 = vld [vmem:[%s0 + $0x10] sm:$0xf]
  %v23 = vld [vmem:[%s0 + $0x14] sm:$0xf]
  %v24 = vld [vmem:[%s0 + $0x18] sm:$0xf]
  %v25 = vld [vmem:[%s0 + $0x1c] sm:$0xf]
  %v26 = vld [vmem:[%s0 + $0x20] sm:$0xf]
  %v27 = vld [vmem:[%s0 + $0x24] sm:$0xf]
  %v28 = vld [vmem:[%s0 + $0x28] sm:$0xf]
  %v29 = vld [vmem:[%s0 + $0x2c] sm:$0xf]
  %v30 = vld [vmem:[%s0 + $0x30] sm:$0xf]
  %v31 = vld [vmem:[%s0 + $0x34] sm:$0xf]
  %v32 = vld [vmem:[%s0 + $0x38] sm:$0xf]
  %v33 = vld [vmem:[%s0 + $0x3c] sm:$0xf]
  %v34 = vld [vmem:[%s0 + $0x40] sm:$0xf]
  %v35 = vld [vmem:[%s0 + $0x44] sm:$0xf]
  %v36 = vld [vmem:[%s0 + $0x48] sm:$0xf]
  %v37 = vld [vmem:[%s0 + $0x4c] sm:$0xf]
  %v38 = vld [vmem:[%s0 + $0x50] sm:$0xf]
  %v39 = vld [vmem:[%s0 + $0x54] sm:$0xf]
  %v40 = vld [vmem:[%s0 + $0x58] sm:$0xf]
  %v41 = vld [vmem:[%s0 + $0x5c] sm:$0xf]
  %v42 = vld [vmem:[%s0 + $0x60] sm:$0xf]
  %v43 = vld [vmem:[%s0 + $0x64] sm:$0xf]
  %v44 = vld [vmem:[%s0 + $0x68] sm:$0xf]
  %v45 = vld [vmem:[%s0 + $0x6c] sm:$0xf]
  %v46 = vld [vmem:[%s0 + $0x70] sm:$0xf]
  %v47 = vld [vmem:[%s0 + $0x74] sm:$0xf]
  %v48 = vld [vmem:[%s0 + $0x78] sm:$0xf]
  %v49 = vld [vmem:[%s0 + $0x7c] sm:$0xf]
  %v50 = vld [vmem:[%s0 + $0x80] sm:$0xf]
  %v51 = vld [vmem:[%s0 + $0x84] sm:$0xf]
  %v52 = vld [vmem:[%s0 + $0x88] sm:$0xf]
  %v53 = vld [vmem:[%s0 + $0x8c] sm:$0xf]
  %v54 = vld [vmem:[%s0 + $0x90] sm:$0xf]
  %v55 = vld [vmem:[%s0 + $0x94] sm:$0xf]
  %v56 = vld [vmem:[%s0 + $0x98] sm:$0xf]
  %v57 = vld [vmem:[%s0 + $0x9c] sm:$0xf]
  %v58 = vld [vmem:[%s0 + $0xa0] sm:$0xf]
  %v59 = vld [vmem:[%s0 + $0xa4] sm:$0xf]
  %v60 = vld [vmem:[%s0 + $0xa8] sm:$0xf]
  %v61 = vld [vmem:[%s0 + $0xac] sm:$0xf]
  %v62 = vld [vmem:[%s0 + $0xb0] sm:$0xf]
  %v63 = vld [vmem:[%s0 + $0xb4] sm:$0xf]
  %v64 = vld [vmem:[%s0 + $0xb8] sm:$0xf]
  %v65 = vld [vmem:[%s0 + $0xbc] sm:$0xf]
  %v66 = vld [vmem:[%s0 + $0xc0] sm:$0xf]
  %v67 = vld [vmem:[%s0 + $0xc4] sm:$0xf]
  %v68 = vld [vmem:[%s0 + $0xc8] sm:$0xf]
  %v69 = vld [vmem:[%s0 + $0xcc] sm:$0xf]
  %v70 = vld [vmem:[%s0 + $0xd0] sm:$0xf]
  %v71 = vld [vmem:[%s0 + $0xd4] sm:$0xf]
  %v72 = vld [vmem:[%s0 + $0xd8] sm:$0xf]
  %v73 = vld [vmem:[%s0 + $0xdc] sm:$0xf]
  %v74 = vld [vmem:[%s0 + $0xe0] sm:$0xf]
  %v75 = vld [vmem:[%s0 + $0xe4] sm:$0xf]
  %v76 = vld [vmem:[%s0 + $0xe8] sm:$0xf]
  %v77 = vld [vmem:[%s0 + $0xec] sm:$0xf]
  %v78 = vld [vmem:[%s0 + $0xf0] sm:$0xf]
  %v79 = vld [vmem:[%s0 + $0xf4] sm:$0xf]
  %v80 = vld [vmem:[%s0 + $0xf8] sm:$0xf]
  %v81 = vld [vmem:[%s0 + $0xfc] sm:$0xf]
  %v82 = vld [vmem:[%s1] sm:$0xf]
  %v83 = vld [vmem:[%s1 + $0x4] sm:$0xf]
  %v84 = vld [vmem:[%s1 + $0x8] sm:$0xf]
  %v85 = vld [vmem:[%s1 + $0xc] sm:$0xf]
  %v86 = vld [vmem:[%s1 + $0x10] sm:$0xf]
  %v87 = vld [vmem:[%s1 + $0x14] sm:$0xf]
  %v88 = vld [vmem:[%s1 + $0x18] sm:$0xf]
  %v89 = vld [vmem:[%s1 + $0x1c] sm:$0xf]
  %v90 = vld [vmem:[%s1 + $0x20] sm:$0xf]
  %v91 = vld [vmem:[%s1 + $0x24] sm:$0xf]
  %v92 = vld [vmem:[%s1 + $0x28] sm:$0xf]
  %v93 = vld [vmem:[%s1 + $0x2c] sm:$0xf]
  %v94 = vld [vmem:[%s1 + $0x30] sm:$0xf]
  %v95 = vld [vmem:[%s1 + $0x34] sm:$0xf]
  %v96 = vld [vmem:[%s1 + $0x38] sm:$0xf]
  %v97 = vld [vmem:[%s1 + $0x3c] sm:$0xf]
  %v162 = vunpack.c.l.b16 %v18
  %v163 = vunpack.c.l.b16 %v19
  %v164 = vunpack.c.l.b16 %v20
  %v165 = vunpack.c.l.b16 %v21
  %v166 = vunpack.c.l.b16 %v22
  %v167 = vunpack.c.l.b16 %v23
  %v168 = vunpack.c.l.b16 %v24
  %v169 = vunpack.c.l.b16 %v25
  %v170 = vunpack.c.l.b16 %v26
  %v171 = vunpack.c.l.b16 %v27
  %v172 = vunpack.c.l.b16 %v28
  %v173 = vunpack.c.l.b16 %v29
  %v174 = vunpack.c.l.b16 %v30
  %v175 = vunpack.c.l.b16 %v31
  %v176 = vunpack.c.l.b16 %v32
  %v177 = vunpack.c.l.b16 %v33
  %v178 = vunpack.c.l.b16 %v34
  %v179 = vunpack.c.l.b16 %v35
  %v180 = vunpack.c.l.b16 %v36
  %v181 = vunpack.c.l.b16 %v37
  %v182 = vunpack.c.l.b16 %v38
  %v183 = vunpack.c.l.b16 %v39
  %v184 = vunpack.c.l.b16 %v40
  %v185 = vunpack.c.l.b16 %v41
  %v186 = vunpack.c.l.b16 %v42
  %v187 = vunpack.c.l.b16 %v43
  %v188 = vunpack.c.l.b16 %v44
  %v189 = vunpack.c.l.b16 %v45
  %v190 = vunpack.c.l.b16 %v46
  %v191 = vunpack.c.l.b16 %v47
  %v192 = vunpack.c.l.b16 %v48
  %v193 = vunpack.c.l.b16 %v49
  %v194 = vunpack.c.l.b16 %v50
  %v195 = vunpack.c.l.b16 %v51
  %v196 = vunpack.c.l.b16 %v52
  %v197 = vunpack.c.l.b16 %v53
  %v198 = vunpack.c.l.b16 %v54
  %v199 = vunpack.c.l.b16 %v55
  %v200 = vunpack.c.l.b16 %v56
  %v201 = vunpack.c.l.b16 %v57
  %v202 = vunpack.c.l.b16 %v58
  %v203 = vunpack.c.l.b16 %v59
  %v204 = vunpack.c.l.b16 %v60
  %v205 = vunpack.c.l.b16 %v61
  %v206 = vunpack.c.l.b16 %v62
  %v207 = vunpack.c.l.b16 %v63
  %v208 = vunpack.c.l.b16 %v64
  %v209 = vunpack.c.l.b16 %v65
  %v210 = vunpack.c.l.b16 %v66
  %v211 = vunpack.c.l.b16 %v67
  %v212 = vunpack.c.l.b16 %v68
  %v213 = vunpack.c.l.b16 %v69
  %v214 = vunpack.c.l.b16 %v70
  %v215 = vunpack.c.l.b16 %v71
  %v216 = vunpack.c.l.b16 %v72
  %v217 = vunpack.c.l.b16 %v73
  %v218 = vunpack.c.l.b16 %v74
  %v219 = vunpack.c.l.b16 %v75
  %v220 = vunpack.c.l.b16 %v76
  %v221 = vunpack.c.l.b16 %v77
  %v222 = vunpack.c.l.b16 %v78
  %v223 = vunpack.c.l.b16 %v79
  %v224 = vunpack.c.l.b16 %v80
  %v225 = vunpack.c.l.b16 %v81
  %v226 = vpack.c.b16 %v163, %v162
  %v227 = vpack.c.b16 %v165, %v164
  %v228 = vpack.c.b16 %v167, %v166
  %v229 = vpack.c.b16 %v169, %v168
  %v230 = vpack.c.b16 %v171, %v170
  %v231 = vpack.c.b16 %v173, %v172
  %v232 = vpack.c.b16 %v175, %v174
  %v233 = vpack.c.b16 %v177, %v176
  %v234 = vpack.c.b16 %v179, %v178
  %v235 = vpack.c.b16 %v181, %v180
  %v236 = vpack.c.b16 %v183, %v182
  %v237 = vpack.c.b16 %v185, %v184
  %v238 = vpack.c.b16 %v187, %v186
  %v239 = vpack.c.b16 %v189, %v188
  %v240 = vpack.c.b16 %v191, %v190
  %v241 = vpack.c.b16 %v193, %v192
  %v242 = vpack.c.b16 %v195, %v194
  %v243 = vpack.c.b16 %v197, %v196
  %v244 = vpack.c.b16 %v199, %v198
  %v245 = vpack.c.b16 %v201, %v200
  %v246 = vpack.c.b16 %v203, %v202
  %v247 = vpack.c.b16 %v205, %v204
  %v248 = vpack.c.b16 %v207, %v206
  %v249 = vpack.c.b16 %v209, %v208
  %v250 = vpack.c.b16 %v211, %v210
  %v251 = vpack.c.b16 %v213, %v212
  %v252 = vpack.c.b16 %v215, %v214
  %v253 = vpack.c.b16 %v217, %v216
  %v254 = vpack.c.b16 %v219, %v218
  %v255 = vpack.c.b16 %v221, %v220
  %v256 = vpack.c.b16 %v223, %v222
  %v257 = vpack.c.b16 %v225, %v224
  %v306 = vunpack.c.l.b16 %v82
  %v307 = vunpack.c.l.b16 %v83
  %v308 = vunpack.c.l.b16 %v84
  %v309 = vunpack.c.l.b16 %v85
  %v310 = vunpack.c.l.b16 %v86
  %v311 = vunpack.c.l.b16 %v87
  %v312 = vunpack.c.l.b16 %v88
  %v313 = vunpack.c.l.b16 %v89
  %v314 = vunpack.c.l.b16 %v90
  %v315 = vunpack.c.l.b16 %v91
  %v316 = vunpack.c.l.b16 %v92
  %v317 = vunpack.c.l.b16 %v93
  %v318 = vunpack.c.l.b16 %v94
  %v319 = vunpack.c.l.b16 %v95
  %v320 = vunpack.c.l.b16 %v96
  %v321 = vunpack.c.l.b16 %v97
  %v322 = vpack.c.b16 %v307, %v306
  %v323 = vpack.c.b16 %v309, %v308
  %v324 = vpack.c.b16 %v311, %v310
  %v325 = vpack.c.b16 %v313, %v312
  %v326 = vpack.c.b16 %v315, %v314
  %v327 = vpack.c.b16 %v317, %v316
  %v328 = vpack.c.b16 %v319, %v318
  %v329 = vpack.c.b16 %v321, %v320
  %338 = vmatprep.subr.bf16.mxu0 0
  %339 = vmatpush1.bf16.msra.mxu0 %v329
  %340 = vmatprep.subr.bf16.mxu0 0
  %341 = vmatpush1.bf16.msra.mxu0 %v328
  %342 = vmatprep.subr.bf16.mxu0 0
  %343 = vmatpush1.bf16.msra.mxu0 %v327
  %344 = vmatprep.subr.bf16.mxu0 0
  %345 = vmatpush1.bf16.msra.mxu0 %v326
  %346 = vmatprep.subr.bf16.mxu0 0
  %347 = vmatpush1.bf16.msra.mxu0 %v325
  %348 = vmatprep.subr.bf16.mxu0 0
  %349 = vmatpush1.bf16.msra.mxu0 %v324
  %350 = vmatprep.subr.bf16.mxu0 0
  %351 = vmatpush1.bf16.msra.mxu0 %v323
  %352 = vmatprep.subr.bf16.mxu0 0
  %353 = vmatpush1.bf16.msra.mxu0 %v322
  %354 = vmatprep.subr.bf16.mxu0 0
  %355 = vmatpush2.bf16.msra.mxu0 0
  %356 = vmatprep.subr.bf16.mxu0 0
  %357 = vmatpush2.bf16.msra.mxu0 0
  %358 = vmatprep.subr.bf16.mxu0 0
  %359 = vmatpush2.bf16.msra.mxu0 0
  %360 = vmatprep.subr.bf16.mxu0 0
  %361 = vmatpush2.bf16.msra.mxu0 0
  %362 = vmatprep.subr.bf16.mxu0 0
  %363 = vmatpush2.bf16.msra.mxu0 0
  %364 = vmatprep.subr.bf16.mxu0 0
  %365 = vmatpush2.bf16.msra.mxu0 0
  %366 = vmatprep.subr.bf16.mxu0 0
  %367 = vmatpush2.bf16.msra.mxu0 0
  %368 = vmatprep.subr.bf16.mxu0 0
  %369 = vmatpush2.bf16.msra.mxu0 0
  %370 = vmatprep.mubr.bf16.mxu0 0
  %371 = vmatmul.mubr.bf16.gmra.mxu0 %v226
  %v372 = vpop.f32.mrf.mxu0
  %v373 = vadd.f32 0.0, %v372
  %v374 = vpop.f32.mrf.mxu0
  %v375 = vpop.f32.mrf.mxu0
  %v376 = vadd.f32 0.0, %v375
  %v377 = vpop.f32.mrf.mxu0
  %378 = vmatprep.mubr.bf16.mxu0 0
  %379 = vmatmul.mubr.bf16.gmra.mxu0 %v227
  %v380 = vpop.f32.mrf.mxu0
  %v381 = vadd.f32 0.0, %v380
  %v382 = vpop.f32.mrf.mxu0
  %v383 = vpop.f32.mrf.mxu0
  %v384 = vadd.f32 0.0, %v383
  %v385 = vpop.f32.mrf.mxu0
  %386 = vmatprep.mubr.bf16.mxu0 0
  %387 = vmatmul.mubr.bf16.gmra.mxu0 %v228
  %v388 = vpop.f32.mrf.mxu0
  %v389 = vadd.f32 0.0, %v388
  %v390 = vpop.f32.mrf.mxu0
  %v391 = vpop.f32.mrf.mxu0
  %v392 = vadd.f32 0.0, %v391
  %v393 = vpop.f32.mrf.mxu0
  %394 = vmatprep.mubr.bf16.mxu0 0
  %395 = vmatmul.mubr.bf16.gmra.mxu0 %v229
  %v396 = vpop.f32.mrf.mxu0
  %v397 = vadd.f32 0.0, %v396
  %v398 = vpop.f32.mrf.mxu0
  %v399 = vpop.f32.mrf.mxu0
  %v400 = vadd.f32 0.0, %v399
  %v401 = vpop.f32.mrf.mxu0
  %402 = vmatprep.mubr.bf16.mxu0 0
  %403 = vmatmul.mubr.bf16.gmra.mxu0 %v230
  %v404 = vpop.f32.mrf.mxu0
  %v405 = vadd.f32 0.0, %v404
  %v406 = vpop.f32.mrf.mxu0
  %v407 = vpop.f32.mrf.mxu0
  %v408 = vadd.f32 0.0, %v407
  %v409 = vpop.f32.mrf.mxu0
  %410 = vmatprep.mubr.bf16.mxu0 0
  %411 = vmatmul.mubr.bf16.gmra.mxu0 %v231
  %v412 = vpop.f32.mrf.mxu0
  %v413 = vadd.f32 0.0, %v412
  %v414 = vpop.f32.mrf.mxu0
  %v415 = vpop.f32.mrf.mxu0
  %v416 = vadd.f32 0.0, %v415
  %v417 = vpop.f32.mrf.mxu0
  %418 = vmatprep.mubr.bf16.mxu0 0
  %419 = vmatmul.mubr.bf16.gmra.mxu0 %v232
  %v420 = vpop.f32.mrf.mxu0
  %v421 = vadd.f32 0.0, %v420
  %v422 = vpop.f32.mrf.mxu0
  %v423 = vpop.f32.mrf.mxu0
  %v424 = vadd.f32 0.0, %v423
  %v425 = vpop.f32.mrf.mxu0
  %426 = vmatprep.mubr.bf16.mxu0 0
  %427 = vmatmul.mubr.bf16.gmra.mxu0 %v233
  %v428 = vpop.f32.mrf.mxu0
  %v429 = vadd.f32 0.0, %v428
  %v430 = vpop.f32.mrf.mxu0
  %v431 = vpop.f32.mrf.mxu0
  %v432 = vadd.f32 0.0, %v431
  %v433 = vpop.f32.mrf.mxu0
  %434 = vmatprep.mubr.bf16.mxu0 0
  %435 = vmatmul.mubr.bf16.gmra.mxu0 %v234
  %v436 = vpop.f32.mrf.mxu0
  %v437 = vadd.f32 0.0, %v436
  %v438 = vpop.f32.mrf.mxu0
  %v439 = vpop.f32.mrf.mxu0
  %v440 = vadd.f32 0.0, %v439
  %v441 = vpop.f32.mrf.mxu0
  %442 = vmatprep.mubr.bf16.mxu0 0
  %443 = vmatmul.mubr.bf16.gmra.mxu0 %v235
  %v444 = vpop.f32.mrf.mxu0
  %v445 = vadd.f32 0.0, %v444
  %v446 = vpop.f32.mrf.mxu0
  %v447 = vpop.f32.mrf.mxu0
  %v448 = vadd.f32 0.0, %v447
  %v449 = vpop.f32.mrf.mxu0
  %450 = vmatprep.mubr.bf16.mxu0 0
  %451 = vmatmul.mubr.bf16.gmra.mxu0 %v236
  %v452 = vpop.f32.mrf.mxu0
  %v453 = vadd.f32 0.0, %v452
  %v454 = vpop.f32.mrf.mxu0
  %v455 = vpop.f32.mrf.mxu0
  %v456 = vadd.f32 0.0, %v455
  %v457 = vpop.f32.mrf.mxu0
  %458 = vmatprep.mubr.bf16.mxu0 0
  %459 = vmatmul.mubr.bf16.gmra.mxu0 %v237
  %v460 = vpop.f32.mrf.mxu0
  %v461 = vadd.f32 0.0, %v460
  %v462 = vpop.f32.mrf.mxu0
  %v463 = vpop.f32.mrf.mxu0
  %v464 = vadd.f32 0.0, %v463
  %v465 = vpop.f32.mrf.mxu0
  %466 = vmatprep.mubr.bf16.mxu0 0
  %467 = vmatmul.mubr.bf16.gmra.mxu0 %v238
  %v468 = vpop.f32.mrf.mxu0
  %v469 = vadd.f32 0.0, %v468
  %v470 = vpop.f32.mrf.mxu0
  %v471 = vpop.f32.mrf.mxu0
  %v472 = vadd.f32 0.0, %v471
  %v473 = vpop.f32.mrf.mxu0
  %474 = vmatprep.mubr.bf16.mxu0 0
  %475 = vmatmul.mubr.bf16.gmra.mxu0 %v239
  %v476 = vpop.f32.mrf.mxu0
  %v477 = vadd.f32 0.0, %v476
  %v478 = vpop.f32.mrf.mxu0
  %v479 = vpop.f32.mrf.mxu0
  %v480 = vadd.f32 0.0, %v479
  %v481 = vpop.f32.mrf.mxu0
  %482 = vmatprep.mubr.bf16.mxu0 0
  %483 = vmatmul.mubr.bf16.gmra.mxu0 %v240
  %v484 = vpop.f32.mrf.mxu0
  %v485 = vadd.f32 0.0, %v484
  %v486 = vpop.f32.mrf.mxu0
  %v487 = vpop.f32.mrf.mxu0
  %v488 = vadd.f32 0.0, %v487
  %v489 = vpop.f32.mrf.mxu0
  %490 = vmatprep.mubr.bf16.mxu0 0
  %491 = vmatmul.mubr.bf16.gmra.mxu0 %v241
  %v492 = vpop.f32.mrf.mxu0
  %v493 = vadd.f32 0.0, %v492
  %v494 = vpop.f32.mrf.mxu0
  %v495 = vpop.f32.mrf.mxu0
  %v496 = vadd.f32 0.0, %v495
  %v497 = vpop.f32.mrf.mxu0
  %498 = vmatprep.mubr.bf16.mxu0 0
  %499 = vmatmul.mubr.bf16.gmra.mxu0 %v242
  %v500 = vpop.f32.mrf.mxu0
  %v501 = vadd.f32 0.0, %v500
  %v502 = vpop.f32.mrf.mxu0
  %v503 = vpop.f32.mrf.mxu0
  %v504 = vadd.f32 0.0, %v503
  %v505 = vpop.f32.mrf.mxu0
  %506 = vmatprep.mubr.bf16.mxu0 0
  %507 = vmatmul.mubr.bf16.gmra.mxu0 %v243
  %v508 = vpop.f32.mrf.mxu0
  %v509 = vadd.f32 0.0, %v508
  %v510 = vpop.f32.mrf.mxu0
  %v511 = vpop.f32.mrf.mxu0
  %v512 = vadd.f32 0.0, %v511
  %v513 = vpop.f32.mrf.mxu0
  %514 = vmatprep.mubr.bf16.mxu0 0
  %515 = vmatmul.mubr.bf16.gmra.mxu0 %v244
  %v516 = vpop.f32.mrf.mxu0
  %v517 = vadd.f32 0.0, %v516
  %v518 = vpop.f32.mrf.mxu0
  %v519 = vpop.f32.mrf.mxu0
  %v520 = vadd.f32 0.0, %v519
  %v521 = vpop.f32.mrf.mxu0
  %522 = vmatprep.mubr.bf16.mxu0 0
  %523 = vmatmul.mubr.bf16.gmra.mxu0 %v245
  %v524 = vpop.f32.mrf.mxu0
  %v525 = vadd.f32 0.0, %v524
  %v526 = vpop.f32.mrf.mxu0
  %v527 = vpop.f32.mrf.mxu0
  %v528 = vadd.f32 0.0, %v527
  %v529 = vpop.f32.mrf.mxu0
  %530 = vmatprep.mubr.bf16.mxu0 0
  %531 = vmatmul.mubr.bf16.gmra.mxu0 %v246
  %v532 = vpop.f32.mrf.mxu0
  %v533 = vadd.f32 0.0, %v532
  %v534 = vpop.f32.mrf.mxu0
  %v535 = vpop.f32.mrf.mxu0
  %v536 = vadd.f32 0.0, %v535
  %v537 = vpop.f32.mrf.mxu0
  %538 = vmatprep.mubr.bf16.mxu0 0
  %539 = vmatmul.mubr.bf16.gmra.mxu0 %v247
  %v540 = vpop.f32.mrf.mxu0
  %v541 = vadd.f32 0.0, %v540
  %v542 = vpop.f32.mrf.mxu0
  %v543 = vpop.f32.mrf.mxu0
  %v544 = vadd.f32 0.0, %v543
  %v545 = vpop.f32.mrf.mxu0
  %546 = vmatprep.mubr.bf16.mxu0 0
  %547 = vmatmul.mubr.bf16.gmra.mxu0 %v248
  %v548 = vpop.f32.mrf.mxu0
  %v549 = vadd.f32 0.0, %v548
  %v550 = vpop.f32.mrf.mxu0
  %v551 = vpop.f32.mrf.mxu0
  %v552 = vadd.f32 0.0, %v551
  %v553 = vpop.f32.mrf.mxu0
  %554 = vmatprep.mubr.bf16.mxu0 0
  %555 = vmatmul.mubr.bf16.gmra.mxu0 %v249
  %v556 = vpop.f32.mrf.mxu0
  %v557 = vadd.f32 0.0, %v556
  %v558 = vpop.f32.mrf.mxu0
  %v559 = vpop.f32.mrf.mxu0
  %v560 = vadd.f32 0.0, %v559
  %v561 = vpop.f32.mrf.mxu0
  %562 = vmatprep.mubr.bf16.mxu0 0
  %563 = vmatmul.mubr.bf16.gmra.mxu0 %v250
  %v564 = vpop.f32.mrf.mxu0
  %v565 = vadd.f32 0.0, %v564
  %v566 = vpop.f32.mrf.mxu0
  %v567 = vpop.f32.mrf.mxu0
  %v568 = vadd.f32 0.0, %v567
  %v569 = vpop.f32.mrf.mxu0
  %570 = vmatprep.mubr.bf16.mxu0 0
  %571 = vmatmul.mubr.bf16.gmra.mxu0 %v251
  %v572 = vpop.f32.mrf.mxu0
  %v573 = vadd.f32 0.0, %v572
  %v574 = vpop.f32.mrf.mxu0
  %v575 = vpop.f32.mrf.mxu0
  %v576 = vadd.f32 0.0, %v575
  %v577 = vpop.f32.mrf.mxu0
  %578 = vmatprep.mubr.bf16.mxu0 0
  %579 = vmatmul.mubr.bf16.gmra.mxu0 %v252
  %v580 = vpop.f32.mrf.mxu0
  %v581 = vadd.f32 0.0, %v580
  %v582 = vpop.f32.mrf.mxu0
  %v583 = vpop.f32.mrf.mxu0
  %v584 = vadd.f32 0.0, %v583
  %v585 = vpop.f32.mrf.mxu0
  %586 = vmatprep.mubr.bf16.mxu0 0
  %587 = vmatmul.mubr.bf16.gmra.mxu0 %v253
  %v588 = vpop.f32.mrf.mxu0
  %v589 = vadd.f32 0.0, %v588
  %v590 = vpop.f32.mrf.mxu0
  %v591 = vpop.f32.mrf.mxu0
  %v592 = vadd.f32 0.0, %v591
  %v593 = vpop.f32.mrf.mxu0
  %594 = vmatprep.mubr.bf16.mxu0 0
  %595 = vmatmul.mubr.bf16.gmra.mxu0 %v254
  %v596 = vpop.f32.mrf.mxu0
  %v597 = vadd.f32 0.0, %v596
  %v598 = vpop.f32.mrf.mxu0
  %v599 = vpop.f32.mrf.mxu0
  %v600 = vadd.f32 0.0, %v599
  %v601 = vpop.f32.mrf.mxu0
  %602 = vmatprep.mubr.bf16.mxu0 0
  %603 = vmatmul.mubr.bf16.gmra.mxu0 %v255
  %v604 = vpop.f32.mrf.mxu0
  %v605 = vadd.f32 0.0, %v604
  %v606 = vpop.f32.mrf.mxu0
  %v607 = vpop.f32.mrf.mxu0
  %v608 = vadd.f32 0.0, %v607
  %v609 = vpop.f32.mrf.mxu0
  %610 = vmatprep.mubr.bf16.mxu0 0
  %611 = vmatmul.mubr.bf16.gmra.mxu0 %v256
  %v612 = vpop.f32.mrf.mxu0
  %v613 = vadd.f32 0.0, %v612
  %v614 = vpop.f32.mrf.mxu0
  %v615 = vpop.f32.mrf.mxu0
  %v616 = vadd.f32 0.0, %v615
  %v617 = vpop.f32.mrf.mxu0
  %618 = vmatprep.mubr.bf16.mxu0 0
  %619 = vmatmul.mubr.bf16.gmra.mxu0 %v257
  %v620 = vpop.f32.mrf.mxu0
  %v621 = vadd.f32 0.0, %v620
  %v622 = vpop.f32.mrf.mxu0
  %v623 = vpop.f32.mrf.mxu0
  %v624 = vadd.f32 0.0, %v623
  %v625 = vpop.f32.mrf.mxu0
  %626 = vdwg.mxu0
  %v627 = vld [vmem:[%s2] sm:$0x1]
  %v629 = vlaneseq
  %v630 = vshrl.u32 %v629, 7
  %v631 = vsub.s32 0, %v630
  %v632 = vrot.slane %v627, %v631
  %v634 = vmul.f32 %v373, %v632
  %v635 = vmul.f32 %v376, %v632
  %v636 = vmul.f32 %v381, %v632
  %v637 = vmul.f32 %v384, %v632
  %v638 = vmul.f32 %v389, %v632
  %v639 = vmul.f32 %v392, %v632
  %v640 = vmul.f32 %v397, %v632
  %v641 = vmul.f32 %v400, %v632
  %v642 = vmul.f32 %v405, %v632
  %v643 = vmul.f32 %v408, %v632
  %v644 = vmul.f32 %v413, %v632
  %v645 = vmul.f32 %v416, %v632
  %v646 = vmul.f32 %v421, %v632
  %v647 = vmul.f32 %v424, %v632
  %v648 = vmul.f32 %v429, %v632
  %v649 = vmul.f32 %v432, %v632
  %v650 = vmul.f32 %v437, %v632
  %v651 = vmul.f32 %v440, %v632
  %v652 = vmul.f32 %v445, %v632
  %v653 = vmul.f32 %v448, %v632
  %v654 = vmul.f32 %v453, %v632
  %v655 = vmul.f32 %v456, %v632
  %v656 = vmul.f32 %v461, %v632
  %v657 = vmul.f32 %v464, %v632
  %v658 = vmul.f32 %v469, %v632
  %v659 = vmul.f32 %v472, %v632
  %v660 = vmul.f32 %v477, %v632
  %v661 = vmul.f32 %v480, %v632
  %v662 = vmul.f32 %v485, %v632
  %v663 = vmul.f32 %v488, %v632
  %v664 = vmul.f32 %v493, %v632
  %v665 = vmul.f32 %v496, %v632
  %v666 = vmul.f32 %v501, %v632
  %v667 = vmul.f32 %v504, %v632
  %v668 = vmul.f32 %v509, %v632
  %v669 = vmul.f32 %v512, %v632
  %v670 = vmul.f32 %v517, %v632
  %v671 = vmul.f32 %v520, %v632
  %v672 = vmul.f32 %v525, %v632
  %v673 = vmul.f32 %v528, %v632
  %v674 = vmul.f32 %v533, %v632
  %v675 = vmul.f32 %v536, %v632
  %v676 = vmul.f32 %v541, %v632
  %v677 = vmul.f32 %v544, %v632
  %v678 = vmul.f32 %v549, %v632
  %v679 = vmul.f32 %v552, %v632
  %v680 = vmul.f32 %v557, %v632
  %v681 = vmul.f32 %v560, %v632
  %v682 = vmul.f32 %v565, %v632
  %v683 = vmul.f32 %v568, %v632
  %v684 = vmul.f32 %v573, %v632
  %v685 = vmul.f32 %v576, %v632
  %v686 = vmul.f32 %v581, %v632
  %v687 = vmul.f32 %v584, %v632
  %v688 = vmul.f32 %v589, %v632
  %v689 = vmul.f32 %v592, %v632
  %v690 = vmul.f32 %v597, %v632
  %v691 = vmul.f32 %v600, %v632
  %v692 = vmul.f32 %v605, %v632
  %v693 = vmul.f32 %v608, %v632
  %v694 = vmul.f32 %v613, %v632
  %v695 = vmul.f32 %v616, %v632
  %v696 = vmul.f32 %v621, %v632
  %v697 = vmul.f32 %v624, %v632
  %v698 = vld [vmem:[%s3] sm:$0x1]
  %v700 = vlaneseq
  %v701 = vshrl.u32 %v700, 7
  %v702 = vsub.s32 0, %v701
  %v703 = vrot.slane %v698, %v702
  %v705 = vadd.f32 %v634, %v703
  %v706 = vadd.f32 %v635, %v703
  %v707 = vadd.f32 %v636, %v703
  %v708 = vadd.f32 %v637, %v703
  %v709 = vadd.f32 %v638, %v703
  %v710 = vadd.f32 %v639, %v703
  %v711 = vadd.f32 %v640, %v703
  %v712 = vadd.f32 %v641, %v703
  %v713 = vadd.f32 %v642, %v703
  %v714 = vadd.f32 %v643, %v703
  %v715 = vadd.f32 %v644, %v703
  %v716 = vadd.f32 %v645, %v703
  %v717 = vadd.f32 %v646, %v703
  %v718 = vadd.f32 %v647, %v703
  %v719 = vadd.f32 %v648, %v703
  %v720 = vadd.f32 %v649, %v703
  %v721 = vadd.f32 %v650, %v703
  %v722 = vadd.f32 %v651, %v703
  %v723 = vadd.f32 %v652, %v703
  %v724 = vadd.f32 %v653, %v703
  %v725 = vadd.f32 %v654, %v703
  %v726 = vadd.f32 %v655, %v703
  %v727 = vadd.f32 %v656, %v703
  %v728 = vadd.f32 %v657, %v703
  %v729 = vadd.f32 %v658, %v703
  %v730 = vadd.f32 %v659, %v703
  %v731 = vadd.f32 %v660, %v703
  %v732 = vadd.f32 %v661, %v703
  %v733 = vadd.f32 %v662, %v703
  %v734 = vadd.f32 %v663, %v703
  %v735 = vadd.f32 %v664, %v703
  %v736 = vadd.f32 %v665, %v703
  %v737 = vadd.f32 %v666, %v703
  %v738 = vadd.f32 %v667, %v703
  %v739 = vadd.f32 %v668, %v703
  %v740 = vadd.f32 %v669, %v703
  %v741 = vadd.f32 %v670, %v703
  %v742 = vadd.f32 %v671, %v703
  %v743 = vadd.f32 %v672, %v703
  %v744 = vadd.f32 %v673, %v703
  %v745 = vadd.f32 %v674, %v703
  %v746 = vadd.f32 %v675, %v703
  %v747 = vadd.f32 %v676, %v703
  %v748 = vadd.f32 %v677, %v703
  %v749 = vadd.f32 %v678, %v703
  %v750 = vadd.f32 %v679, %v703
  %v751 = vadd.f32 %v680, %v703
  %v752 = vadd.f32 %v681, %v703
  %v753 = vadd.f32 %v682, %v703
  %v754 = vadd.f32 %v683, %v703
  %v755 = vadd.f32 %v684, %v703
  %v756 = vadd.f32 %v685, %v703
  %v757 = vadd.f32 %v686, %v703
  %v758 = vadd.f32 %v687, %v703
  %v759 = vadd.f32 %v688, %v703
  %v760 = vadd.f32 %v689, %v703
  %v761 = vadd.f32 %v690, %v703
  %v762 = vadd.f32 %v691, %v703
  %v763 = vadd.f32 %v692, %v703
  %v764 = vadd.f32 %v693, %v703
  %v765 = vadd.f32 %v694, %v703
  %v766 = vadd.f32 %v695, %v703
  %v767 = vadd.f32 %v696, %v703
  %v768 = vadd.f32 %v697, %v703
  %vm769 = vcmp.gt.f32.partialorder %v705, 0.0
  %vm770 = vcmp.gt.f32.partialorder %v706, 0.0
  %vm771 = vcmp.gt.f32.partialorder %v707, 0.0
  %vm772 = vcmp.gt.f32.partialorder %v708, 0.0
  %vm773 = vcmp.gt.f32.partialorder %v709, 0.0
  %vm774 = vcmp.gt.f32.partialorder %v710, 0.0
  %vm775 = vcmp.gt.f32.partialorder %v711, 0.0
  %vm776 = vcmp.gt.f32.partialorder %v712, 0.0
  %vm777 = vcmp.gt.f32.partialorder %v713, 0.0
  %vm778 = vcmp.gt.f32.partialorder %v714, 0.0
  %vm779 = vcmp.gt.f32.partialorder %v715, 0.0
  %vm780 = vcmp.gt.f32.partialorder %v716, 0.0
  %vm781 = vcmp.gt.f32.partialorder %v717, 0.0
  %vm782 = vcmp.gt.f32.partialorder %v718, 0.0
  %vm783 = vcmp.gt.f32.partialorder %v719, 0.0
  %vm784 = vcmp.gt.f32.partialorder %v720, 0.0
  %vm785 = vcmp.gt.f32.partialorder %v721, 0.0
  %vm786 = vcmp.gt.f32.partialorder %v722, 0.0
  %vm787 = vcmp.gt.f32.partialorder %v723, 0.0
  %vm788 = vcmp.gt.f32.partialorder %v724, 0.0
  %vm789 = vcmp.gt.f32.partialorder %v725, 0.0
  %vm790 = vcmp.gt.f32.partialorder %v726, 0.0
  %vm791 = vcmp.gt.f32.partialorder %v727, 0.0
  %vm792 = vcmp.gt.f32.partialorder %v728, 0.0
  %vm793 = vcmp.gt.f32.partialorder %v729, 0.0
  %vm794 = vcmp.gt.f32.partialorder %v730, 0.0
  %vm795 = vcmp.gt.f32.partialorder %v731, 0.0
  %vm796 = vcmp.gt.f32.partialorder %v732, 0.0
  %vm797 = vcmp.gt.f32.partialorder %v733, 0.0
  %vm798 = vcmp.gt.f32.partialorder %v734, 0.0
  %vm799 = vcmp.gt.f32.partialorder %v735, 0.0
  %vm800 = vcmp.gt.f32.partialorder %v736, 0.0
  %vm801 = vcmp.gt.f32.partialorder %v737, 0.0
  %vm802 = vcmp.gt.f32.partialorder %v738, 0.0
  %vm803 = vcmp.gt.f32.partialorder %v739, 0.0
  %vm804 = vcmp.gt.f32.partialorder %v740, 0.0
  %vm805 = vcmp.gt.f32.partialorder %v741, 0.0
  %vm806 = vcmp.gt.f32.partialorder %v742, 0.0
  %vm807 = vcmp.gt.f32.partialorder %v743, 0.0
  %vm808 = vcmp.gt.f32.partialorder %v744, 0.0
  %vm809 = vcmp.gt.f32.partialorder %v745, 0.0
  %vm810 = vcmp.gt.f32.partialorder %v746, 0.0
  %vm811 = vcmp.gt.f32.partialorder %v747, 0.0
  %vm812 = vcmp.gt.f32.partialorder %v748, 0.0
  %vm813 = vcmp.gt.f32.partialorder %v749, 0.0
  %vm814 = vcmp.gt.f32.partialorder %v750, 0.0
  %vm815 = vcmp.gt.f32.partialorder %v751, 0.0
  %vm816 = vcmp.gt.f32.partialorder %v752, 0.0
  %vm817 = vcmp.gt.f32.partialorder %v753, 0.0
  %vm818 = vcmp.gt.f32.partialorder %v754, 0.0
  %vm819 = vcmp.gt.f32.partialorder %v755, 0.0
  %vm820 = vcmp.gt.f32.partialorder %v756, 0.0
  %vm821 = vcmp.gt.f32.partialorder %v757, 0.0
  %vm822 = vcmp.gt.f32.partialorder %v758, 0.0
  %vm823 = vcmp.gt.f32.partialorder %v759, 0.0
  %vm824 = vcmp.gt.f32.partialorder %v760, 0.0
  %vm825 = vcmp.gt.f32.partialorder %v761, 0.0
  %vm826 = vcmp.gt.f32.partialorder %v762, 0.0
  %vm827 = vcmp.gt.f32.partialorder %v763, 0.0
  %vm828 = vcmp.gt.f32.partialorder %v764, 0.0
  %vm829 = vcmp.gt.f32.partialorder %v765, 0.0
  %vm830 = vcmp.gt.f32.partialorder %v766, 0.0
  %vm831 = vcmp.gt.f32.partialorder %v767, 0.0
  %vm832 = vcmp.gt.f32.partialorder %v768, 0.0
  %v833 = vmul.f32 %v705, 0.2
  %v834 = vmul.f32 %v706, 0.2
  %v835 = vmul.f32 %v707, 0.2
  %v836 = vmul.f32 %v708, 0.2
  %v837 = vmul.f32 %v709, 0.2
  %v838 = vmul.f32 %v710, 0.2
  %v839 = vmul.f32 %v711, 0.2
  %v840 = vmul.f32 %v712, 0.2
  %v841 = vmul.f32 %v713, 0.2
  %v842 = vmul.f32 %v714, 0.2
  %v843 = vmul.f32 %v715, 0.2
  %v844 = vmul.f32 %v716, 0.2
  %v845 = vmul.f32 %v717, 0.2
  %v846 = vmul.f32 %v718, 0.2
  %v847 = vmul.f32 %v719, 0.2
  %v848 = vmul.f32 %v720, 0.2
  %v849 = vmul.f32 %v721, 0.2
  %v850 = vmul.f32 %v722, 0.2
  %v851 = vmul.f32 %v723, 0.2
  %v852 = vmul.f32 %v724, 0.2
  %v853 = vmul.f32 %v725, 0.2
  %v854 = vmul.f32 %v726, 0.2
  %v855 = vmul.f32 %v727, 0.2
  %v856 = vmul.f32 %v728, 0.2
  %v857 = vmul.f32 %v729, 0.2
  %v858 = vmul.f32 %v730, 0.2
  %v859 = vmul.f32 %v731, 0.2
  %v860 = vmul.f32 %v732, 0.2
  %v861 = vmul.f32 %v733, 0.2
  %v862 = vmul.f32 %v734, 0.2
  %v863 = vmul.f32 %v735, 0.2
  %v864 = vmul.f32 %v736, 0.2
  %v865 = vmul.f32 %v737, 0.2
  %v866 = vmul.f32 %v738, 0.2
  %v867 = vmul.f32 %v739, 0.2
  %v868 = vmul.f32 %v740, 0.2
  %v869 = vmul.f32 %v741, 0.2
  %v870 = vmul.f32 %v742, 0.2
  %v871 = vmul.f32 %v743, 0.2
  %v872 = vmul.f32 %v744, 0.2
  %v873 = vmul.f32 %v745, 0.2
  %v874 = vmul.f32 %v746, 0.2
  %v875 = vmul.f32 %v747, 0.2
  %v876 = vmul.f32 %v748, 0.2
  %v877 = vmul.f32 %v749, 0.2
  %v878 = vmul.f32 %v750, 0.2
  %v879 = vmul.f32 %v751, 0.2
  %v880 = vmul.f32 %v752, 0.2
  %v881 = vmul.f32 %v753, 0.2
  %v882 = vmul.f32 %v754, 0.2
  %v883 = vmul.f32 %v755, 0.2
  %v884 = vmul.f32 %v756, 0.2
  %v885 = vmul.f32 %v757, 0.2
  %v886 = vmul.f32 %v758, 0.2
  %v887 = vmul.f32 %v759, 0.2
  %v888 = vmul.f32 %v760, 0.2
  %v889 = vmul.f32 %v761, 0.2
  %v890 = vmul.f32 %v762, 0.2
  %v891 = vmul.f32 %v763, 0.2
  %v892 = vmul.f32 %v764, 0.2
  %v893 = vmul.f32 %v765, 0.2
  %v894 = vmul.f32 %v766, 0.2
  %v895 = vmul.f32 %v767, 0.2
  %v896 = vmul.f32 %v768, 0.2
  %v897 = vsel %vm769, %v705, %v833
  %v898 = vsel %vm770, %v706, %v834
  %v899 = vsel %vm771, %v707, %v835
  %v900 = vsel %vm772, %v708, %v836
  %v901 = vsel %vm773, %v709, %v837
  %v902 = vsel %vm774, %v710, %v838
  %v903 = vsel %vm775, %v711, %v839
  %v904 = vsel %vm776, %v712, %v840
  %v905 = vsel %vm777, %v713, %v841
  %v906 = vsel %vm778, %v714, %v842
  %v907 = vsel %vm779, %v715, %v843
  %v908 = vsel %vm780, %v716, %v844
  %v909 = vsel %vm781, %v717, %v845
  %v910 = vsel %vm782, %v718, %v846
  %v911 = vsel %vm783, %v719, %v847
  %v912 = vsel %vm784, %v720, %v848
  %v913 = vsel %vm785, %v721, %v849
  %v914 = vsel %vm786, %v722, %v850
  %v915 = vsel %vm787, %v723, %v851
  %v916 = vsel %vm788, %v724, %v852
  %v917 = vsel %vm789, %v725, %v853
  %v918 = vsel %vm790, %v726, %v854
  %v919 = vsel %vm791, %v727, %v855
  %v920 = vsel %vm792, %v728, %v856
  %v921 = vsel %vm793, %v729, %v857
  %v922 = vsel %vm794, %v730, %v858
  %v923 = vsel %vm795, %v731, %v859
  %v924 = vsel %vm796, %v732, %v860
  %v925 = vsel %vm797, %v733, %v861
  %v926 = vsel %vm798, %v734, %v862
  %v927 = vsel %vm799, %v735, %v863
  %v928 = vsel %vm800, %v736, %v864
  %v929 = vsel %vm801, %v737, %v865
  %v930 = vsel %vm802, %v738, %v866
  %v931 = vsel %vm803, %v739, %v867
  %v932 = vsel %vm804, %v740, %v868
  %v933 = vsel %vm805, %v741, %v869
  %v934 = vsel %vm806, %v742, %v870
  %v935 = vsel %vm807, %v743, %v871
  %v936 = vsel %vm808, %v744, %v872
  %v937 = vsel %vm809, %v745, %v873
  %v938 = vsel %vm810, %v746, %v874
  %v939 = vsel %vm811, %v747, %v875
  %v940 = vsel %vm812, %v748, %v876
  %v941 = vsel %vm813, %v749, %v877
  %v942 = vsel %vm814, %v750, %v878
  %v943 = vsel %vm815, %v751, %v879
  %v944 = vsel %vm816, %v752, %v880
  %v945 = vsel %vm817, %v753, %v881
  %v946 = vsel %vm818, %v754, %v882
  %v947 = vsel %vm819, %v755, %v883
  %v948 = vsel %vm820, %v756, %v884
  %v949 = vsel %vm821, %v757, %v885
  %v950 = vsel %vm822, %v758, %v886
  %v951 = vsel %vm823, %v759, %v887
  %v952 = vsel %vm824, %v760, %v888
  %v953 = vsel %vm825, %v761, %v889
  %v954 = vsel %vm826, %v762, %v890
  %v955 = vsel %vm827, %v763, %v891
  %v956 = vsel %vm828, %v764, %v892
  %v957 = vsel %vm829, %v765, %v893
  %v958 = vsel %vm830, %v766, %v894
  %v959 = vsel %vm831, %v767, %v895
  %v960 = vsel %vm832, %v768, %v896
  %v961 = vpack.c.bf16 %v898, %v897
  %v962 = vpack.c.bf16 %v900, %v899
  %v963 = vpack.c.bf16 %v902, %v901
  %v964 = vpack.c.bf16 %v904, %v903
  %v965 = vpack.c.bf16 %v906, %v905
  %v966 = vpack.c.bf16 %v908, %v907
  %v967 = vpack.c.bf16 %v910, %v909
  %v968 = vpack.c.bf16 %v912, %v911
  %v969 = vpack.c.bf16 %v914, %v913
  %v970 = vpack.c.bf16 %v916, %v915
  %v971 = vpack.c.bf16 %v918, %v917
  %v972 = vpack.c.bf16 %v920, %v919
  %v973 = vpack.c.bf16 %v922, %v921
  %v974 = vpack.c.bf16 %v924, %v923
  %v975 = vpack.c.bf16 %v926, %v925
  %v976 = vpack.c.bf16 %v928, %v927
  %v977 = vpack.c.bf16 %v930, %v929
  %v978 = vpack.c.bf16 %v932, %v931
  %v979 = vpack.c.bf16 %v934, %v933
  %v980 = vpack.c.bf16 %v936, %v935
  %v981 = vpack.c.bf16 %v938, %v937
  %v982 = vpack.c.bf16 %v940, %v939
  %v983 = vpack.c.bf16 %v942, %v941
  %v984 = vpack.c.bf16 %v944, %v943
  %v985 = vpack.c.bf16 %v946, %v945
  %v986 = vpack.c.bf16 %v948, %v947
  %v987 = vpack.c.bf16 %v950, %v949
  %v988 = vpack.c.bf16 %v952, %v951
  %v989 = vpack.c.bf16 %v954, %v953
  %v990 = vpack.c.bf16 %v956, %v955
  %v991 = vpack.c.bf16 %v958, %v957
  %v992 = vpack.c.bf16 %v960, %v959
  %v1025 = vunpack.c.l.b16 %v961
  %v1026 = vunpack.c.h.b16 %v961
  %v1027 = vunpack.c.l.b16 %v962
  %v1028 = vunpack.c.h.b16 %v962
  %v1029 = vunpack.c.l.b16 %v963
  %v1030 = vunpack.c.h.b16 %v963
  %v1031 = vunpack.c.l.b16 %v964
  %v1032 = vunpack.c.h.b16 %v964
  %v1033 = vunpack.c.l.b16 %v965
  %v1034 = vunpack.c.h.b16 %v965
  %v1035 = vunpack.c.l.b16 %v966
  %v1036 = vunpack.c.h.b16 %v966
  %v1037 = vunpack.c.l.b16 %v967
  %v1038 = vunpack.c.h.b16 %v967
  %v1039 = vunpack.c.l.b16 %v968
  %v1040 = vunpack.c.h.b16 %v968
  %v1041 = vunpack.c.l.b16 %v969
  %v1042 = vunpack.c.h.b16 %v969
  %v1043 = vunpack.c.l.b16 %v970
  %v1044 = vunpack.c.h.b16 %v970
  %v1045 = vunpack.c.l.b16 %v971
  %v1046 = vunpack.c.h.b16 %v971
  %v1047 = vunpack.c.l.b16 %v972
  %v1048 = vunpack.c.h.b16 %v972
  %v1049 = vunpack.c.l.b16 %v973
  %v1050 = vunpack.c.h.b16 %v973
  %v1051 = vunpack.c.l.b16 %v974
  %v1052 = vunpack.c.h.b16 %v974
  %v1053 = vunpack.c.l.b16 %v975
  %v1054 = vunpack.c.h.b16 %v975
  %v1055 = vunpack.c.l.b16 %v976
  %v1056 = vunpack.c.h.b16 %v976
  %v1057 = vunpack.c.l.b16 %v977
  %v1058 = vunpack.c.h.b16 %v977
  %v1059 = vunpack.c.l.b16 %v978
  %v1060 = vunpack.c.h.b16 %v978
  %v1061 = vunpack.c.l.b16 %v979
  %v1062 = vunpack.c.h.b16 %v979
  %v1063 = vunpack.c.l.b16 %v980
  %v1064 = vunpack.c.h.b16 %v980
  %v1065 = vunpack.c.l.b16 %v981
  %v1066 = vunpack.c.h.b16 %v981
  %v1067 = vunpack.c.l.b16 %v982
  %v1068 = vunpack.c.h.b16 %v982
  %v1069 = vunpack.c.l.b16 %v983
  %v1070 = vunpack.c.h.b16 %v983
  %v1071 = vunpack.c.l.b16 %v984
  %v1072 = vunpack.c.h.b16 %v984
  %v1073 = vunpack.c.l.b16 %v985
  %v1074 = vunpack.c.h.b16 %v985
  %v1075 = vunpack.c.l.b16 %v986
  %v1076 = vunpack.c.h.b16 %v986
  %v1077 = vunpack.c.l.b16 %v987
  %v1078 = vunpack.c.h.b16 %v987
  %v1079 = vunpack.c.l.b16 %v988
  %v1080 = vunpack.c.h.b16 %v988
  %v1081 = vunpack.c.l.b16 %v989
  %v1082 = vunpack.c.h.b16 %v989
  %v1083 = vunpack.c.l.b16 %v990
  %v1084 = vunpack.c.h.b16 %v990
  %v1085 = vunpack.c.l.b16 %v991
  %v1086 = vunpack.c.h.b16 %v991
  %v1087 = vunpack.c.l.b16 %v992
  %v1088 = vunpack.c.h.b16 %v992
  %v1089 = vpack.c.b16 %v1025, %v1025
  %v1090 = vpack.c.b16 %v1026, %v1026
  %v1091 = vpack.c.b16 %v1027, %v1027
  %v1092 = vpack.c.b16 %v1028, %v1028
  %v1093 = vpack.c.b16 %v1029, %v1029
  %v1094 = vpack.c.b16 %v1030, %v1030
  %v1095 = vpack.c.b16 %v1031, %v1031
  %v1096 = vpack.c.b16 %v1032, %v1032
  %v1097 = vpack.c.b16 %v1033, %v1033
  %v1098 = vpack.c.b16 %v1034, %v1034
  %v1099 = vpack.c.b16 %v1035, %v1035
  %v1100 = vpack.c.b16 %v1036, %v1036
  %v1101 = vpack.c.b16 %v1037, %v1037
  %v1102 = vpack.c.b16 %v1038, %v1038
  %v1103 = vpack.c.b16 %v1039, %v1039
  %v1104 = vpack.c.b16 %v1040, %v1040
  %v1105 = vpack.c.b16 %v1041, %v1041
  %v1106 = vpack.c.b16 %v1042, %v1042
  %v1107 = vpack.c.b16 %v1043, %v1043
  %v1108 = vpack.c.b16 %v1044, %v1044
  %v1109 = vpack.c.b16 %v1045, %v1045
  %v1110 = vpack.c.b16 %v1046, %v1046
  %v1111 = vpack.c.b16 %v1047, %v1047
  %v1112 = vpack.c.b16 %v1048, %v1048
  %v1113 = vpack.c.b16 %v1049, %v1049
  %v1114 = vpack.c.b16 %v1050, %v1050
  %v1115 = vpack.c.b16 %v1051, %v1051
  %v1116 = vpack.c.b16 %v1052, %v1052
  %v1117 = vpack.c.b16 %v1053, %v1053
  %v1118 = vpack.c.b16 %v1054, %v1054
  %v1119 = vpack.c.b16 %v1055, %v1055
  %v1120 = vpack.c.b16 %v1056, %v1056
  %v1121 = vpack.c.b16 %v1057, %v1057
  %v1122 = vpack.c.b16 %v1058, %v1058
  %v1123 = vpack.c.b16 %v1059, %v1059
  %v1124 = vpack.c.b16 %v1060, %v1060
  %v1125 = vpack.c.b16 %v1061, %v1061
  %v1126 = vpack.c.b16 %v1062, %v1062
  %v1127 = vpack.c.b16 %v1063, %v1063
  %v1128 = vpack.c.b16 %v1064, %v1064
  %v1129 = vpack.c.b16 %v1065, %v1065
  %v1130 = vpack.c.b16 %v1066, %v1066
  %v1131 = vpack.c.b16 %v1067, %v1067
  %v1132 = vpack.c.b16 %v1068, %v1068
  %v1133 = vpack.c.b16 %v1069, %v1069
  %v1134 = vpack.c.b16 %v1070, %v1070
  %v1135 = vpack.c.b16 %v1071, %v1071
  %v1136 = vpack.c.b16 %v1072, %v1072
  %v1137 = vpack.c.b16 %v1073, %v1073
  %v1138 = vpack.c.b16 %v1074, %v1074
  %v1139 = vpack.c.b16 %v1075, %v1075
  %v1140 = vpack.c.b16 %v1076, %v1076
  %v1141 = vpack.c.b16 %v1077, %v1077
  %v1142 = vpack.c.b16 %v1078, %v1078
  %v1143 = vpack.c.b16 %v1079, %v1079
  %v1144 = vpack.c.b16 %v1080, %v1080
  %v1145 = vpack.c.b16 %v1081, %v1081
  %v1146 = vpack.c.b16 %v1082, %v1082
  %v1147 = vpack.c.b16 %v1083, %v1083
  %v1148 = vpack.c.b16 %v1084, %v1084
  %v1149 = vpack.c.b16 %v1085, %v1085
  %v1150 = vpack.c.b16 %v1086, %v1086
  %v1151 = vpack.c.b16 %v1087, %v1087
  %v1152 = vpack.c.b16 %v1088, %v1088
  %vm1217 = vcmask 125952
  %1218 = vst.msk [vmem:[%s4] sm:$0xf] %vm1217, %v1089
  %1219 = vst.msk [vmem:[%s4 + $0x4] sm:$0xf] %vm1217, %v1090
  %1220 = vst.msk [vmem:[%s4 + $0x8] sm:$0xf] %vm1217, %v1091
  %1221 = vst.msk [vmem:[%s4 + $0xc] sm:$0xf] %vm1217, %v1092
  %1222 = vst.msk [vmem:[%s4 + $0x10] sm:$0xf] %vm1217, %v1093
  %1223 = vst.msk [vmem:[%s4 + $0x14] sm:$0xf] %vm1217, %v1094
  %1224 = vst.msk [vmem:[%s4 + $0x18] sm:$0xf] %vm1217, %v1095
  %1225 = vst.msk [vmem:[%s4 + $0x1c] sm:$0xf] %vm1217, %v1096
  %1226 = vst.msk [vmem:[%s4 + $0x20] sm:$0xf] %vm1217, %v1097
  %1227 = vst.msk [vmem:[%s4 + $0x24] sm:$0xf] %vm1217, %v1098
  %1228 = vst.msk [vmem:[%s4 + $0x28] sm:$0xf] %vm1217, %v1099
  %1229 = vst.msk [vmem:[%s4 + $0x2c] sm:$0xf] %vm1217, %v1100
  %1230 = vst.msk [vmem:[%s4 + $0x30] sm:$0xf] %vm1217, %v1101
  %1231 = vst.msk [vmem:[%s4 + $0x34] sm:$0xf] %vm1217, %v1102
  %1232 = vst.msk [vmem:[%s4 + $0x38] sm:$0xf] %vm1217, %v1103
  %1233 = vst.msk [vmem:[%s4 + $0x3c] sm:$0xf] %vm1217, %v1104
  %1234 = vst.msk [vmem:[%s4 + $0x40] sm:$0xf] %vm1217, %v1105
  %1235 = vst.msk [vmem:[%s4 + $0x44] sm:$0xf] %vm1217, %v1106
  %1236 = vst.msk [vmem:[%s4 + $0x48] sm:$0xf] %vm1217, %v1107
  %1237 = vst.msk [vmem:[%s4 + $0x4c] sm:$0xf] %vm1217, %v1108
  %1238 = vst.msk [vmem:[%s4 + $0x50] sm:$0xf] %vm1217, %v1109
  %1239 = vst.msk [vmem:[%s4 + $0x54] sm:$0xf] %vm1217, %v1110
  %1240 = vst.msk [vmem:[%s4 + $0x58] sm:$0xf] %vm1217, %v1111
  %1241 = vst.msk [vmem:[%s4 + $0x5c] sm:$0xf] %vm1217, %v1112
  %1242 = vst.msk [vmem:[%s4 + $0x60] sm:$0xf] %vm1217, %v1113
  %1243 = vst.msk [vmem:[%s4 + $0x64] sm:$0xf] %vm1217, %v1114
  %1244 = vst.msk [vmem:[%s4 + $0x68] sm:$0xf] %vm1217, %v1115
  %1245 = vst.msk [vmem:[%s4 + $0x6c] sm:$0xf] %vm1217, %v1116
  %1246 = vst.msk [vmem:[%s4 + $0x70] sm:$0xf] %vm1217, %v1117
  %1247 = vst.msk [vmem:[%s4 + $0x74] sm:$0xf] %vm1217, %v1118
  %1248 = vst.msk [vmem:[%s4 + $0x78] sm:$0xf] %vm1217, %v1119
  %1249 = vst.msk [vmem:[%s4 + $0x7c] sm:$0xf] %vm1217, %v1120
  %1250 = vst.msk [vmem:[%s4 + $0x80] sm:$0xf] %vm1217, %v1121
  %1251 = vst.msk [vmem:[%s4 + $0x84] sm:$0xf] %vm1217, %v1122
  %1252 = vst.msk [vmem:[%s4 + $0x88] sm:$0xf] %vm1217, %v1123
  %1253 = vst.msk [vmem:[%s4 + $0x8c] sm:$0xf] %vm1217, %v1124
  %1254 = vst.msk [vmem:[%s4 + $0x90] sm:$0xf] %vm1217, %v1125
  %1255 = vst.msk [vmem:[%s4 + $0x94] sm:$0xf] %vm1217, %v1126
  %1256 = vst.msk [vmem:[%s4 + $0x98] sm:$0xf] %vm1217, %v1127
  %1257 = vst.msk [vmem:[%s4 + $0x9c] sm:$0xf] %vm1217, %v1128
  %1258 = vst.msk [vmem:[%s4 + $0xa0] sm:$0xf] %vm1217, %v1129
  %1259 = vst.msk [vmem:[%s4 + $0xa4] sm:$0xf] %vm1217, %v1130
  %1260 = vst.msk [vmem:[%s4 + $0xa8] sm:$0xf] %vm1217, %v1131
  %1261 = vst.msk [vmem:[%s4 + $0xac] sm:$0xf] %vm1217, %v1132
  %1262 = vst.msk [vmem:[%s4 + $0xb0] sm:$0xf] %vm1217, %v1133
  %1263 = vst.msk [vmem:[%s4 + $0xb4] sm:$0xf] %vm1217, %v1134
  %1264 = vst.msk [vmem:[%s4 + $0xb8] sm:$0xf] %vm1217, %v1135
  %1265 = vst.msk [vmem:[%s4 + $0xbc] sm:$0xf] %vm1217, %v1136
  %1266 = vst.msk [vmem:[%s4 + $0xc0] sm:$0xf] %vm1217, %v1137
  %1267 = vst.msk [vmem:[%s4 + $0xc4] sm:$0xf] %vm1217, %v1138
  %1268 = vst.msk [vmem:[%s4 + $0xc8] sm:$0xf] %vm1217, %v1139
  %1269 = vst.msk [vmem:[%s4 + $0xcc] sm:$0xf] %vm1217, %v1140
  %1270 = vst.msk [vmem:[%s4 + $0xd0] sm:$0xf] %vm1217, %v1141
  %1271 = vst.msk [vmem:[%s4 + $0xd4] sm:$0xf] %vm1217, %v1142
  %1272 = vst.msk [vmem:[%s4 + $0xd8] sm:$0xf] %vm1217, %v1143
  %1273 = vst.msk [vmem:[%s4 + $0xdc] sm:$0xf] %vm1217, %v1144
  %1274 = vst.msk [vmem:[%s4 + $0xe0] sm:$0xf] %vm1217, %v1145
  %1275 = vst.msk [vmem:[%s4 + $0xe4] sm:$0xf] %vm1217, %v1146
  %1276 = vst.msk [vmem:[%s4 + $0xe8] sm:$0xf] %vm1217, %v1147
  %1277 = vst.msk [vmem:[%s4 + $0xec] sm:$0xf] %vm1217, %v1148
  %1278 = vst.msk [vmem:[%s4 + $0xf0] sm:$0xf] %vm1217, %v1149
  %1279 = vst.msk [vmem:[%s4 + $0xf4] sm:$0xf] %vm1217, %v1150
  %1280 = vst.msk [vmem:[%s4 + $0xf8] sm:$0xf] %vm1217, %v1151
  %1281 = vst.msk [vmem:[%s4 + $0xfc] sm:$0xf] %vm1217, %v1152
  // Predicated region
  $region18: #{discriminator_forward.6} parent=0 // pred_check
    _
  $region19: #{discriminator_forward.6} parent=0 // pred_check_branch
    %1283 = sbr.rel (0) target = $region21
  $region20: #{discriminator_forward.6} parent=0 // pred_region
    _
  $region21: #{discriminator_forward.6} parent=0 // pred_fallthru
    _
  // Predicated region
  $region22: #{discriminator_forward.6} parent=0 // pred_check
    _
  $region23: #{discriminator_forward.6} parent=0 // pred_check_branch
    %1285 = sbr.rel (0) target = $region25
  $region24: #{discriminator_forward.6} parent=0 // pred_region
    _
  $region25: #{discriminator_forward.6} parent=0 // pred_fallthru
    _

// kernel: discriminator_forward.7
$region0: #{discriminator_forward.7}
  #allocation0 [shape = 'u32[]', space=smem, size = 0x4, offset = 0x4, fixed_abs, tag = 'smem constant byte address 0x4 - core index']
  #allocation1 [shape = 'u32[144,128]{1,0:T(1,128)}', space=vmem, size = 0x12000, scoped, tag = 'internal scratch']
  %s0 = inlined_call_operand.vmem [shape: bf16[128,256], index: 0, kind: input, shape index: {}]
  %s1 = inlined_call_operand.vmem [shape: bf16[256,32], index: 1, kind: input, shape index: {}]
  %s2 = inlined_call_operand.vmem [shape: f32[1,32], index: 2, kind: input, shape index: {}]
  %s3 = inlined_call_operand.vmem [shape: f32[1,32], index: 3, kind: input, shape index: {}]
  %s4 = inlined_call_operand.vmem [shape: bf16[128,32], index: 4, kind: output, shape index: {}]
  %s5 = sld [smem:[#allocation0]]
  $region26: #{discriminator_forward.7} parent=0
    _
  %s7 = ssub.s32 1, %s5
  %s8 = scalar_select 0, %s7, %s5
  // Predicated region
  $region2: #{discriminator_forward.7} parent=0 // pred_check
    _
  $region3: #{discriminator_forward.7} parent=0 // pred_check_branch
    %10 = sbr.rel (0) target = $region5
  $region4: #{discriminator_forward.7} parent=0 // pred_region
    _
  $region5: #{discriminator_forward.7} parent=0 // pred_fallthru
    _
  // Predicated region
  $region6: #{discriminator_forward.7} parent=0 // pred_check
    _
  $region7: #{discriminator_forward.7} parent=0 // pred_check_branch
    %12 = sbr.rel (0) target = $region9
  $region8: #{discriminator_forward.7} parent=0 // pred_region
    _
  $region9: #{discriminator_forward.7} parent=0 // pred_fallthru
    _
  // Predicated region
  $region10: #{discriminator_forward.7} parent=0 // pred_check
    _
  $region11: #{discriminator_forward.7} parent=0 // pred_check_branch
    %14 = sbr.rel (0) target = $region13
  $region12: #{discriminator_forward.7} parent=0 // pred_region
    _
  $region13: #{discriminator_forward.7} parent=0 // pred_fallthru
    _
  // Predicated region
  $region14: #{discriminator_forward.7} parent=0 // pred_check
    _
  $region15: #{discriminator_forward.7} parent=0 // pred_check_branch
    %16 = sbr.rel (0) target = $region17
  $region16: #{discriminator_forward.7} parent=0 // pred_region
    _
  $region17: #{discriminator_forward.7} parent=0 // pred_fallthru
    _
  %v18 = vld [vmem:[%s0] sm:$0xff]
  %v19 = vld [vmem:[%s0 + $0x8] sm:$0xff]
  %v20 = vld [vmem:[%s0 + $0x10] sm:$0xff]
  %v21 = vld [vmem:[%s0 + $0x18] sm:$0xff]
  %v22 = vld [vmem:[%s0 + $0x20] sm:$0xff]
  %v23 = vld [vmem:[%s0 + $0x28] sm:$0xff]
  %v24 = vld [vmem:[%s0 + $0x30] sm:$0xff]
  %v25 = vld [vmem:[%s0 + $0x38] sm:$0xff]
  %v26 = vld [vmem:[%s0 + $0x40] sm:$0xff]
  %v27 = vld [vmem:[%s0 + $0x48] sm:$0xff]
  %v28 = vld [vmem:[%s0 + $0x50] sm:$0xff]
  %v29 = vld [vmem:[%s0 + $0x58] sm:$0xff]
  %v30 = vld [vmem:[%s0 + $0x60] sm:$0xff]
  %v31 = vld [vmem:[%s0 + $0x68] sm:$0xff]
  %v32 = vld [vmem:[%s0 + $0x70] sm:$0xff]
  %v33 = vld [vmem:[%s0 + $0x78] sm:$0xff]
  %v34 = vld [vmem:[%s1] sm:$0xf]
  %v35 = vld [vmem:[%s1 + $0x4] sm:$0xf]
  %v36 = vld [vmem:[%s1 + $0x8] sm:$0xf]
  %v37 = vld [vmem:[%s1 + $0xc] sm:$0xf]
  %v38 = vld [vmem:[%s1 + $0x10] sm:$0xf]
  %v39 = vld [vmem:[%s1 + $0x14] sm:$0xf]
  %v40 = vld [vmem:[%s1 + $0x18] sm:$0xf]
  %v41 = vld [vmem:[%s1 + $0x1c] sm:$0xf]
  %v42 = vld [vmem:[%s1 + $0x20] sm:$0xf]
  %v43 = vld [vmem:[%s1 + $0x24] sm:$0xf]
  %v44 = vld [vmem:[%s1 + $0x28] sm:$0xf]
  %v45 = vld [vmem:[%s1 + $0x2c] sm:$0xf]
  %v46 = vld [vmem:[%s1 + $0x30] sm:$0xf]
  %v47 = vld [vmem:[%s1 + $0x34] sm:$0xf]
  %v48 = vld [vmem:[%s1 + $0x38] sm:$0xf]
  %v49 = vld [vmem:[%s1 + $0x3c] sm:$0xf]
  %v50 = vld [vmem:[%s1 + $0x40] sm:$0xf]
  %v51 = vld [vmem:[%s1 + $0x44] sm:$0xf]
  %v52 = vld [vmem:[%s1 + $0x48] sm:$0xf]
  %v53 = vld [vmem:[%s1 + $0x4c] sm:$0xf]
  %v54 = vld [vmem:[%s1 + $0x50] sm:$0xf]
  %v55 = vld [vmem:[%s1 + $0x54] sm:$0xf]
  %v56 = vld [vmem:[%s1 + $0x58] sm:$0xf]
  %v57 = vld [vmem:[%s1 + $0x5c] sm:$0xf]
  %v58 = vld [vmem:[%s1 + $0x60] sm:$0xf]
  %v59 = vld [vmem:[%s1 + $0x64] sm:$0xf]
  %v60 = vld [vmem:[%s1 + $0x68] sm:$0xf]
  %v61 = vld [vmem:[%s1 + $0x6c] sm:$0xf]
  %v62 = vld [vmem:[%s1 + $0x70] sm:$0xf]
  %v63 = vld [vmem:[%s1 + $0x74] sm:$0xf]
  %v64 = vld [vmem:[%s1 + $0x78] sm:$0xf]
  %v65 = vld [vmem:[%s1 + $0x7c] sm:$0xf]
  %v82 = vunpack.c.l.b16 %v18
  %v83 = vunpack.c.h.b16 %v18
  %v84 = vunpack.c.l.b16 %v19
  %v85 = vunpack.c.h.b16 %v19
  %v86 = vunpack.c.l.b16 %v20
  %v87 = vunpack.c.h.b16 %v20
  %v88 = vunpack.c.l.b16 %v21
  %v89 = vunpack.c.h.b16 %v21
  %v90 = vunpack.c.l.b16 %v22
  %v91 = vunpack.c.h.b16 %v22
  %v92 = vunpack.c.l.b16 %v23
  %v93 = vunpack.c.h.b16 %v23
  %v94 = vunpack.c.l.b16 %v24
  %v95 = vunpack.c.h.b16 %v24
  %v96 = vunpack.c.l.b16 %v25
  %v97 = vunpack.c.h.b16 %v25
  %v98 = vunpack.c.l.b16 %v26
  %v99 = vunpack.c.h.b16 %v26
  %v100 = vunpack.c.l.b16 %v27
  %v101 = vunpack.c.h.b16 %v27
  %v102 = vunpack.c.l.b16 %v28
  %v103 = vunpack.c.h.b16 %v28
  %v104 = vunpack.c.l.b16 %v29
  %v105 = vunpack.c.h.b16 %v29
  %v106 = vunpack.c.l.b16 %v30
  %v107 = vunpack.c.h.b16 %v30
  %v108 = vunpack.c.l.b16 %v31
  %v109 = vunpack.c.h.b16 %v31
  %v110 = vunpack.c.l.b16 %v32
  %v111 = vunpack.c.h.b16 %v32
  %v112 = vunpack.c.l.b16 %v33
  %v113 = vunpack.c.h.b16 %v33
  %v114 = vpack.c.b16 %v84, %v82
  %v115 = vpack.c.b16 %v85, %v83
  %v116 = vpack.c.b16 %v88, %v86
  %v117 = vpack.c.b16 %v89, %v87
  %v118 = vpack.c.b16 %v92, %v90
  %v119 = vpack.c.b16 %v93, %v91
  %v120 = vpack.c.b16 %v96, %v94
  %v121 = vpack.c.b16 %v97, %v95
  %v122 = vpack.c.b16 %v100, %v98
  %v123 = vpack.c.b16 %v101, %v99
  %v124 = vpack.c.b16 %v104, %v102
  %v125 = vpack.c.b16 %v105, %v103
  %v126 = vpack.c.b16 %v108, %v106
  %v127 = vpack.c.b16 %v109, %v107
  %v128 = vpack.c.b16 %v112, %v110
  %v129 = vpack.c.b16 %v113, %v111
  %v178 = vunpack.c.l.b16 %v34
  %v179 = vunpack.c.l.b16 %v35
  %v180 = vunpack.c.l.b16 %v36
  %v181 = vunpack.c.l.b16 %v37
  %v182 = vunpack.c.l.b16 %v38
  %v183 = vunpack.c.l.b16 %v39
  %v184 = vunpack.c.l.b16 %v40
  %v185 = vunpack.c.l.b16 %v41
  %v186 = vunpack.c.l.b16 %v42
  %v187 = vunpack.c.l.b16 %v43
  %v188 = vunpack.c.l.b16 %v44
  %v189 = vunpack.c.l.b16 %v45
  %v190 = vunpack.c.l.b16 %v46
  %v191 = vunpack.c.l.b16 %v47
  %v192 = vunpack.c.l.b16 %v48
  %v193 = vunpack.c.l.b16 %v49
  %v194 = vunpack.c.l.b16 %v50
  %v195 = vunpack.c.l.b16 %v51
  %v196 = vunpack.c.l.b16 %v52
  %v197 = vunpack.c.l.b16 %v53
  %v198 = vunpack.c.l.b16 %v54
  %v199 = vunpack.c.l.b16 %v55
  %v200 = vunpack.c.l.b16 %v56
  %v201 = vunpack.c.l.b16 %v57
  %v202 = vunpack.c.l.b16 %v58
  %v203 = vunpack.c.l.b16 %v59
  %v204 = vunpack.c.l.b16 %v60
  %v205 = vunpack.c.l.b16 %v61
  %v206 = vunpack.c.l.b16 %v62
  %v207 = vunpack.c.l.b16 %v63
  %v208 = vunpack.c.l.b16 %v64
  %v209 = vunpack.c.l.b16 %v65
  %v210 = vpack.c.b16 %v179, %v178
  %v211 = vpack.c.b16 %v181, %v180
  %v212 = vpack.c.b16 %v183, %v182
  %v213 = vpack.c.b16 %v185, %v184
  %v214 = vpack.c.b16 %v187, %v186
  %v215 = vpack.c.b16 %v189, %v188
  %v216 = vpack.c.b16 %v191, %v190
  %v217 = vpack.c.b16 %v193, %v192
  %v218 = vpack.c.b16 %v195, %v194
  %v219 = vpack.c.b16 %v197, %v196
  %v220 = vpack.c.b16 %v199, %v198
  %v221 = vpack.c.b16 %v201, %v200
  %v222 = vpack.c.b16 %v203, %v202
  %v223 = vpack.c.b16 %v205, %v204
  %v224 = vpack.c.b16 %v207, %v206
  %v225 = vpack.c.b16 %v209, %v208
  %242 = vmatprep.subr.bf16.mxu0 0
  %243 = vmatpush1.bf16.msra.mxu0 %v217
  %244 = vmatprep.subr.bf16.mxu0 0
  %245 = vmatpush1.bf16.msra.mxu0 %v216
  %246 = vmatprep.subr.bf16.mxu0 0
  %247 = vmatpush1.bf16.msra.mxu0 %v215
  %248 = vmatprep.subr.bf16.mxu0 0
  %249 = vmatpush1.bf16.msra.mxu0 %v214
  %250 = vmatprep.subr.bf16.mxu0 0
  %251 = vmatpush1.bf16.msra.mxu0 %v213
  %252 = vmatprep.subr.bf16.mxu0 0
  %253 = vmatpush1.bf16.msra.mxu0 %v212
  %254 = vmatprep.subr.bf16.mxu0 0
  %255 = vmatpush1.bf16.msra.mxu0 %v211
  %256 = vmatprep.subr.bf16.mxu0 0
  %257 = vmatpush1.bf16.msra.mxu0 %v210
  %258 = vmatprep.subr.bf16.mxu0 0
  %259 = vmatpush2.bf16.msra.mxu0 %v225
  %260 = vmatprep.subr.bf16.mxu0 0
  %261 = vmatpush2.bf16.msra.mxu0 %v224
  %262 = vmatprep.subr.bf16.mxu0 0
  %263 = vmatpush2.bf16.msra.mxu0 %v223
  %264 = vmatprep.subr.bf16.mxu0 0
  %265 = vmatpush2.bf16.msra.mxu0 %v222
  %266 = vmatprep.subr.bf16.mxu0 0
  %267 = vmatpush2.bf16.msra.mxu0 %v221
  %268 = vmatprep.subr.bf16.mxu0 0
  %269 = vmatpush2.bf16.msra.mxu0 %v220
  %270 = vmatprep.subr.bf16.mxu0 0
  %271 = vmatpush2.bf16.msra.mxu0 %v219
  %272 = vmatprep.subr.bf16.mxu0 0
  %273 = vmatpush2.bf16.msra.mxu0 %v218
  %274 = vmatprep.mubr.bf16.mxu0 %v115
  %275 = vmatmul.mubr.bf16.gmra.mxu0 %v114
  %v276 = vpop.f32.mrf.mxu0
  %v277 = vadd.f32 0.0, %v276
  %v278 = vpop.f32.mrf.mxu0
  %v279 = vpop.f32.mrf.mxu0
  %v280 = vadd.f32 0.0, %v279
  %v281 = vpop.f32.mrf.mxu0
  %282 = vmatprep.mubr.bf16.mxu0 %v117
  %283 = vmatmul.mubr.bf16.gmra.mxu0 %v116
  %v284 = vpop.f32.mrf.mxu0
  %v285 = vadd.f32 0.0, %v284
  %v286 = vpop.f32.mrf.mxu0
  %v287 = vpop.f32.mrf.mxu0
  %v288 = vadd.f32 0.0, %v287
  %v289 = vpop.f32.mrf.mxu0
  %290 = vmatprep.mubr.bf16.mxu0 %v119
  %291 = vmatmul.mubr.bf16.gmra.mxu0 %v118
  %v292 = vpop.f32.mrf.mxu0
  %v293 = vadd.f32 0.0, %v292
  %v294 = vpop.f32.mrf.mxu0
  %v295 = vpop.f32.mrf.mxu0
  %v296 = vadd.f32 0.0, %v295
  %v297 = vpop.f32.mrf.mxu0
  %298 = vmatprep.mubr.bf16.mxu0 %v121
  %299 = vmatmul.mubr.bf16.gmra.mxu0 %v120
  %v300 = vpop.f32.mrf.mxu0
  %v301 = vadd.f32 0.0, %v300
  %v302 = vpop.f32.mrf.mxu0
  %v303 = vpop.f32.mrf.mxu0
  %v304 = vadd.f32 0.0, %v303
  %v305 = vpop.f32.mrf.mxu0
  %306 = vmatprep.mubr.bf16.mxu0 %v123
  %307 = vmatmul.mubr.bf16.gmra.mxu0 %v122
  %v308 = vpop.f32.mrf.mxu0
  %v309 = vadd.f32 0.0, %v308
  %v310 = vpop.f32.mrf.mxu0
  %v311 = vpop.f32.mrf.mxu0
  %v312 = vadd.f32 0.0, %v311
  %v313 = vpop.f32.mrf.mxu0
  %314 = vmatprep.mubr.bf16.mxu0 %v125
  %315 = vmatmul.mubr.bf16.gmra.mxu0 %v124
  %v316 = vpop.f32.mrf.mxu0
  %v317 = vadd.f32 0.0, %v316
  %v318 = vpop.f32.mrf.mxu0
  %v319 = vpop.f32.mrf.mxu0
  %v320 = vadd.f32 0.0, %v319
  %v321 = vpop.f32.mrf.mxu0
  %322 = vmatprep.mubr.bf16.mxu0 %v127
  %323 = vmatmul.mubr.bf16.gmra.mxu0 %v126
  %v324 = vpop.f32.mrf.mxu0
  %v325 = vadd.f32 0.0, %v324
  %v326 = vpop.f32.mrf.mxu0
  %v327 = vpop.f32.mrf.mxu0
  %v328 = vadd.f32 0.0, %v327
  %v329 = vpop.f32.mrf.mxu0
  %330 = vmatprep.mubr.bf16.mxu0 %v129
  %331 = vmatmul.mubr.bf16.gmra.mxu0 %v128
  %v332 = vpop.f32.mrf.mxu0
  %v333 = vadd.f32 0.0, %v332
  %v334 = vpop.f32.mrf.mxu0
  %v335 = vpop.f32.mrf.mxu0
  %v336 = vadd.f32 0.0, %v335
  %v337 = vpop.f32.mrf.mxu0
  %338 = vdwg.mxu0
  %v339 = vld [vmem:[%s2] sm:$0x1]
  %v341 = vlaneseq
  %v342 = vshrl.u32 %v341, 7
  %v343 = vsub.s32 0, %v342
  %v344 = vrot.slane %v339, %v343
  %v346 = vmul.f32 %v277, %v344
  %v347 = vmul.f32 %v280, %v344
  %v348 = vmul.f32 %v285, %v344
  %v349 = vmul.f32 %v288, %v344
  %v350 = vmul.f32 %v293, %v344
  %v351 = vmul.f32 %v296, %v344
  %v352 = vmul.f32 %v301, %v344
  %v353 = vmul.f32 %v304, %v344
  %v354 = vmul.f32 %v309, %v344
  %v355 = vmul.f32 %v312, %v344
  %v356 = vmul.f32 %v317, %v344
  %v357 = vmul.f32 %v320, %v344
  %v358 = vmul.f32 %v325, %v344
  %v359 = vmul.f32 %v328, %v344
  %v360 = vmul.f32 %v333, %v344
  %v361 = vmul.f32 %v336, %v344
  %v362 = vld [vmem:[%s3] sm:$0x1]
  %v364 = vlaneseq
  %v365 = vshrl.u32 %v364, 7
  %v366 = vsub.s32 0, %v365
  %v367 = vrot.slane %v362, %v366
  %v369 = vadd.f32 %v346, %v367
  %v370 = vadd.f32 %v347, %v367
  %v371 = vadd.f32 %v348, %v367
  %v372 = vadd.f32 %v349, %v367
  %v373 = vadd.f32 %v350, %v367
  %v374 = vadd.f32 %v351, %v367
  %v375 = vadd.f32 %v352, %v367
  %v376 = vadd.f32 %v353, %v367
  %v377 = vadd.f32 %v354, %v367
  %v378 = vadd.f32 %v355, %v367
  %v379 = vadd.f32 %v356, %v367
  %v380 = vadd.f32 %v357, %v367
  %v381 = vadd.f32 %v358, %v367
  %v382 = vadd.f32 %v359, %v367
  %v383 = vadd.f32 %v360, %v367
  %v384 = vadd.f32 %v361, %v367
  %vm385 = vcmp.gt.f32.partialorder %v369, 0.0
  %vm386 = vcmp.gt.f32.partialorder %v370, 0.0
  %vm387 = vcmp.gt.f32.partialorder %v371, 0.0
  %vm388 = vcmp.gt.f32.partialorder %v372, 0.0
  %vm389 = vcmp.gt.f32.partialorder %v373, 0.0
  %vm390 = vcmp.gt.f32.partialorder %v374, 0.0
  %vm391 = vcmp.gt.f32.partialorder %v375, 0.0
  %vm392 = vcmp.gt.f32.partialorder %v376, 0.0
  %vm393 = vcmp.gt.f32.partialorder %v377, 0.0
  %vm394 = vcmp.gt.f32.partialorder %v378, 0.0
  %vm395 = vcmp.gt.f32.partialorder %v379, 0.0
  %vm396 = vcmp.gt.f32.partialorder %v380, 0.0
  %vm397 = vcmp.gt.f32.partialorder %v381, 0.0
  %vm398 = vcmp.gt.f32.partialorder %v382, 0.0
  %vm399 = vcmp.gt.f32.partialorder %v383, 0.0
  %vm400 = vcmp.gt.f32.partialorder %v384, 0.0
  %v401 = vmul.f32 %v369, 0.2
  %v402 = vmul.f32 %v370, 0.2
  %v403 = vmul.f32 %v371, 0.2
  %v404 = vmul.f32 %v372, 0.2
  %v405 = vmul.f32 %v373, 0.2
  %v406 = vmul.f32 %v374, 0.2
  %v407 = vmul.f32 %v375, 0.2
  %v408 = vmul.f32 %v376, 0.2
  %v409 = vmul.f32 %v377, 0.2
  %v410 = vmul.f32 %v378, 0.2
  %v411 = vmul.f32 %v379, 0.2
  %v412 = vmul.f32 %v380, 0.2
  %v413 = vmul.f32 %v381, 0.2
  %v414 = vmul.f32 %v382, 0.2
  %v415 = vmul.f32 %v383, 0.2
  %v416 = vmul.f32 %v384, 0.2
  %v417 = vsel %vm385, %v369, %v401
  %v418 = vsel %vm386, %v370, %v402
  %v419 = vsel %vm387, %v371, %v403
  %v420 = vsel %vm388, %v372, %v404
  %v421 = vsel %vm389, %v373, %v405
  %v422 = vsel %vm390, %v374, %v406
  %v423 = vsel %vm391, %v375, %v407
  %v424 = vsel %vm392, %v376, %v408
  %v425 = vsel %vm393, %v377, %v409
  %v426 = vsel %vm394, %v378, %v410
  %v427 = vsel %vm395, %v379, %v411
  %v428 = vsel %vm396, %v380, %v412
  %v429 = vsel %vm397, %v381, %v413
  %v430 = vsel %vm398, %v382, %v414
  %v431 = vsel %vm399, %v383, %v415
  %v432 = vsel %vm400, %v384, %v416
  %v433 = vpack.c.bf16 %v418, %v417
  %v434 = vpack.c.bf16 %v420, %v419
  %v435 = vpack.c.bf16 %v422, %v421
  %v436 = vpack.c.bf16 %v424, %v423
  %v437 = vpack.c.bf16 %v426, %v425
  %v438 = vpack.c.bf16 %v428, %v427
  %v439 = vpack.c.bf16 %v430, %v429
  %v440 = vpack.c.bf16 %v432, %v431
  %v449 = vunpack.c.l.b16 %v433
  %v450 = vunpack.c.h.b16 %v433
  %v451 = vunpack.c.l.b16 %v434
  %v452 = vunpack.c.h.b16 %v434
  %v453 = vunpack.c.l.b16 %v435
  %v454 = vunpack.c.h.b16 %v435
  %v455 = vunpack.c.l.b16 %v436
  %v456 = vunpack.c.h.b16 %v436
  %v457 = vunpack.c.l.b16 %v437
  %v458 = vunpack.c.h.b16 %v437
  %v459 = vunpack.c.l.b16 %v438
  %v460 = vunpack.c.h.b16 %v438
  %v461 = vunpack.c.l.b16 %v439
  %v462 = vunpack.c.h.b16 %v439
  %v463 = vunpack.c.l.b16 %v440
  %v464 = vunpack.c.h.b16 %v440
  %v465 = vpack.c.b16 %v449, %v449
  %v466 = vpack.c.b16 %v450, %v450
  %v467 = vpack.c.b16 %v451, %v451
  %v468 = vpack.c.b16 %v452, %v452
  %v469 = vpack.c.b16 %v453, %v453
  %v470 = vpack.c.b16 %v454, %v454
  %v471 = vpack.c.b16 %v455, %v455
  %v472 = vpack.c.b16 %v456, %v456
  %v473 = vpack.c.b16 %v457, %v457
  %v474 = vpack.c.b16 %v458, %v458
  %v475 = vpack.c.b16 %v459, %v459
  %v476 = vpack.c.b16 %v460, %v460
  %v477 = vpack.c.b16 %v461, %v461
  %v478 = vpack.c.b16 %v462, %v462
  %v479 = vpack.c.b16 %v463, %v463
  %v480 = vpack.c.b16 %v464, %v464
  %vm497 = vcmask 257024
  %498 = vst.msk [vmem:[%s4] sm:$0xf] %vm497, %v465
  %499 = vst.msk [vmem:[%s4 + $0x4] sm:$0xf] %vm497, %v466
  %500 = vst.msk [vmem:[%s4 + $0x8] sm:$0xf] %vm497, %v467
  %501 = vst.msk [vmem:[%s4 + $0xc] sm:$0xf] %vm497, %v468
  %502 = vst.msk [vmem:[%s4 + $0x10] sm:$0xf] %vm497, %v469
  %503 = vst.msk [vmem:[%s4 + $0x14] sm:$0xf] %vm497, %v470
  %504 = vst.msk [vmem:[%s4 + $0x18] sm:$0xf] %vm497, %v471
  %505 = vst.msk [vmem:[%s4 + $0x1c] sm:$0xf] %vm497, %v472
  %506 = vst.msk [vmem:[%s4 + $0x20] sm:$0xf] %vm497, %v473
  %507 = vst.msk [vmem:[%s4 + $0x24] sm:$0xf] %vm497, %v474
  %508 = vst.msk [vmem:[%s4 + $0x28] sm:$0xf] %vm497, %v475
  %509 = vst.msk [vmem:[%s4 + $0x2c] sm:$0xf] %vm497, %v476
  %510 = vst.msk [vmem:[%s4 + $0x30] sm:$0xf] %vm497, %v477
  %511 = vst.msk [vmem:[%s4 + $0x34] sm:$0xf] %vm497, %v478
  %512 = vst.msk [vmem:[%s4 + $0x38] sm:$0xf] %vm497, %v479
  %513 = vst.msk [vmem:[%s4 + $0x3c] sm:$0xf] %vm497, %v480
  // Predicated region
  $region18: #{discriminator_forward.7} parent=0 // pred_check
    _
  $region19: #{discriminator_forward.7} parent=0 // pred_check_branch
    %515 = sbr.rel (0) target = $region21
  $region20: #{discriminator_forward.7} parent=0 // pred_region
    _
  $region21: #{discriminator_forward.7} parent=0 // pred_fallthru
    _
  // Predicated region
  $region22: #{discriminator_forward.7} parent=0 // pred_check
    _
  $region23: #{discriminator_forward.7} parent=0 // pred_check_branch
    %517 = sbr.rel (0) target = $region25
  $region24: #{discriminator_forward.7} parent=0 // pred_region
    _
  $region25: #{discriminator_forward.7} parent=0 // pred_fallthru
    _

// kernel: discriminator_forward.8
$region0: #{discriminator_forward.8}
  #allocation0 [shape = 'u32[]', space=smem, size = 0x4, offset = 0x4, fixed_abs, tag = 'smem constant byte address 0x4 - core index']
  #allocation1 [shape = 'u32[144,128]{1,0:T(1,128)}', space=vmem, size = 0x12000, scoped, tag = 'internal scratch']
  %s0 = inlined_call_operand.vmem [shape: bf16[32,512], index: 0, kind: input, shape index: {}]
  %s1 = inlined_call_operand.vmem [shape: bf16[512,64], index: 1, kind: input, shape index: {}]
  %s2 = inlined_call_operand.vmem [shape: f32[1,64], index: 2, kind: input, shape index: {}]
  %s3 = inlined_call_operand.vmem [shape: f32[1,64], index: 3, kind: input, shape index: {}]
  %s4 = inlined_call_operand.vmem [shape: bf16[32,64], index: 4, kind: output, shape index: {}]
  %s5 = sld [smem:[#allocation0]]
  $region26: #{discriminator_forward.8} parent=0
    _
  %s7 = ssub.s32 1, %s5
  %s8 = scalar_select 0, %s7, %s5
  // Predicated region
  $region2: #{discriminator_forward.8} parent=0 // pred_check
    _
  $region3: #{discriminator_forward.8} parent=0 // pred_check_branch
    %10 = sbr.rel (0) target = $region5
  $region4: #{discriminator_forward.8} parent=0 // pred_region
    _
  $region5: #{discriminator_forward.8} parent=0 // pred_fallthru
    _
  // Predicated region
  $region6: #{discriminator_forward.8} parent=0 // pred_check
    _
  $region7: #{discriminator_forward.8} parent=0 // pred_check_branch
    %12 = sbr.rel (0) target = $region9
  $region8: #{discriminator_forward.8} parent=0 // pred_region
    _
  $region9: #{discriminator_forward.8} parent=0 // pred_fallthru
    _
  // Predicated region
  $region10: #{discriminator_forward.8} parent=0 // pred_check
    _
  $region11: #{discriminator_forward.8} parent=0 // pred_check_branch
    %14 = sbr.rel (0) target = $region13
  $region12: #{discriminator_forward.8} parent=0 // pred_region
    _
  $region13: #{discriminator_forward.8} parent=0 // pred_fallthru
    _
  // Predicated region
  $region14: #{discriminator_forward.8} parent=0 // pred_check
    _
  $region15: #{discriminator_forward.8} parent=0 // pred_check_branch
    %16 = sbr.rel (0) target = $region17
  $region16: #{discriminator_forward.8} parent=0 // pred_region
    _
  $region17: #{discriminator_forward.8} parent=0 // pred_fallthru
    _
  %v18 = vld [vmem:[%s0] sm:$0xff]
  %v19 = vld [vmem:[%s0 + $0x8] sm:$0xff]
  %v20 = vld [vmem:[%s0 + $0x10] sm:$0xff]
  %v21 = vld [vmem:[%s0 + $0x18] sm:$0xff]
  %v22 = vld [vmem:[%s0 + $0x20] sm:$0xff]
  %v23 = vld [vmem:[%s0 + $0x28] sm:$0xff]
  %v24 = vld [vmem:[%s0 + $0x30] sm:$0xff]
  %v25 = vld [vmem:[%s0 + $0x38] sm:$0xff]
  %v26 = vld [vmem:[%s1] sm:$0xf]
  %v27 = vld [vmem:[%s1 + $0x4] sm:$0xf]
  %v28 = vld [vmem:[%s1 + $0x8] sm:$0xf]
  %v29 = vld [vmem:[%s1 + $0xc] sm:$0xf]
  %v30 = vld [vmem:[%s1 + $0x10] sm:$0xf]
  %v31 = vld [vmem:[%s1 + $0x14] sm:$0xf]
  %v32 = vld [vmem:[%s1 + $0x18] sm:$0xf]
  %v33 = vld [vmem:[%s1 + $0x1c] sm:$0xf]
  %v34 = vld [vmem:[%s1 + $0x20] sm:$0xf]
  %v35 = vld [vmem:[%s1 + $0x24] sm:$0xf]
  %v36 = vld [vmem:[%s1 + $0x28] sm:$0xf]
  %v37 = vld [vmem:[%s1 + $0x2c] sm:$0xf]
  %v38 = vld [vmem:[%s1 + $0x30] sm:$0xf]
  %v39 = vld [vmem:[%s1 + $0x34] sm:$0xf]
  %v40 = vld [vmem:[%s1 + $0x38] sm:$0xf]
  %v41 = vld [vmem:[%s1 + $0x3c] sm:$0xf]
  %v42 = vld [vmem:[%s1 + $0x40] sm:$0xf]
  %v43 = vld [vmem:[%s1 + $0x44] sm:$0xf]
  %v44 = vld [vmem:[%s1 + $0x48] sm:$0xf]
  %v45 = vld [vmem:[%s1 + $0x4c] sm:$0xf]
  %v46 = vld [vmem:[%s1 + $0x50] sm:$0xf]
  %v47 = vld [vmem:[%s1 + $0x54] sm:$0xf]
  %v48 = vld [vmem:[%s1 + $0x58] sm:$0xf]
  %v49 = vld [vmem:[%s1 + $0x5c] sm:$0xf]
  %v50 = vld [vmem:[%s1 + $0x60] sm:$0xf]
  %v51 = vld [vmem:[%s1 + $0x64] sm:$0xf]
  %v52 = vld [vmem:[%s1 + $0x68] sm:$0xf]
  %v53 = vld [vmem:[%s1 + $0x6c] sm:$0xf]
  %v54 = vld [vmem:[%s1 + $0x70] sm:$0xf]
  %v55 = vld [vmem:[%s1 + $0x74] sm:$0xf]
  %v56 = vld [vmem:[%s1 + $0x78] sm:$0xf]
  %v57 = vld [vmem:[%s1 + $0x7c] sm:$0xf]
  %v58 = vld [vmem:[%s1 + $0x80] sm:$0xf]
  %v59 = vld [vmem:[%s1 + $0x84] sm:$0xf]
  %v60 = vld [vmem:[%s1 + $0x88] sm:$0xf]
  %v61 = vld [vmem:[%s1 + $0x8c] sm:$0xf]
  %v62 = vld [vmem:[%s1 + $0x90] sm:$0xf]
  %v63 = vld [vmem:[%s1 + $0x94] sm:$0xf]
  %v64 = vld [vmem:[%s1 + $0x98] sm:$0xf]
  %v65 = vld [vmem:[%s1 + $0x9c] sm:$0xf]
  %v66 = vld [vmem:[%s1 + $0xa0] sm:$0xf]
  %v67 = vld [vmem:[%s1 + $0xa4] sm:$0xf]
  %v68 = vld [vmem:[%s1 + $0xa8] sm:$0xf]
  %v69 = vld [vmem:[%s1 + $0xac] sm:$0xf]
  %v70 = vld [vmem:[%s1 + $0xb0] sm:$0xf]
  %v71 = vld [vmem:[%s1 + $0xb4] sm:$0xf]
  %v72 = vld [vmem:[%s1 + $0xb8] sm:$0xf]
  %v73 = vld [vmem:[%s1 + $0xbc] sm:$0xf]
  %v74 = vld [vmem:[%s1 + $0xc0] sm:$0xf]
  %v75 = vld [vmem:[%s1 + $0xc4] sm:$0xf]
  %v76 = vld [vmem:[%s1 + $0xc8] sm:$0xf]
  %v77 = vld [vmem:[%s1 + $0xcc] sm:$0xf]
  %v78 = vld [vmem:[%s1 + $0xd0] sm:$0xf]
  %v79 = vld [vmem:[%s1 + $0xd4] sm:$0xf]
  %v80 = vld [vmem:[%s1 + $0xd8] sm:$0xf]
  %v81 = vld [vmem:[%s1 + $0xdc] sm:$0xf]
  %v82 = vld [vmem:[%s1 + $0xe0] sm:$0xf]
  %v83 = vld [vmem:[%s1 + $0xe4] sm:$0xf]
  %v84 = vld [vmem:[%s1 + $0xe8] sm:$0xf]
  %v85 = vld [vmem:[%s1 + $0xec] sm:$0xf]
  %v86 = vld [vmem:[%s1 + $0xf0] sm:$0xf]
  %v87 = vld [vmem:[%s1 + $0xf4] sm:$0xf]
  %v88 = vld [vmem:[%s1 + $0xf8] sm:$0xf]
  %v89 = vld [vmem:[%s1 + $0xfc] sm:$0xf]
  %v98 = vunpack.c.l.b16 %v18
  %v99 = vunpack.c.h.b16 %v18
  %v100 = vunpack.c.l.b16 %v19
  %v101 = vunpack.c.h.b16 %v19
  %v102 = vunpack.c.l.b16 %v20
  %v103 = vunpack.c.h.b16 %v20
  %v104 = vunpack.c.l.b16 %v21
  %v105 = vunpack.c.h.b16 %v21
  %v106 = vunpack.c.l.b16 %v22
  %v107 = vunpack.c.h.b16 %v22
  %v108 = vunpack.c.l.b16 %v23
  %v109 = vunpack.c.h.b16 %v23
  %v110 = vunpack.c.l.b16 %v24
  %v111 = vunpack.c.h.b16 %v24
  %v112 = vunpack.c.l.b16 %v25
  %v113 = vunpack.c.h.b16 %v25
  %v114 = vpack.c.b16 %v102, %v98
  %v115 = vpack.c.b16 %v103, %v99
  %v116 = vpack.c.b16 %v104, %v100
  %v117 = vpack.c.b16 %v105, %v101
  %v118 = vpack.c.b16 %v110, %v106
  %v119 = vpack.c.b16 %v111, %v107
  %v120 = vpack.c.b16 %v112, %v108
  %v121 = vpack.c.b16 %v113, %v109
  %v194 = vunpack.c.l.b16 %v26
  %v195 = vunpack.c.l.b16 %v27
  %v196 = vunpack.c.l.b16 %v28
  %v197 = vunpack.c.l.b16 %v29
  %v198 = vunpack.c.l.b16 %v30
  %v199 = vunpack.c.l.b16 %v31
  %v200 = vunpack.c.l.b16 %v32
  %v201 = vunpack.c.l.b16 %v33
  %v202 = vunpack.c.l.b16 %v34
  %v203 = vunpack.c.l.b16 %v35
  %v204 = vunpack.c.l.b16 %v36
  %v205 = vunpack.c.l.b16 %v37
  %v206 = vunpack.c.l.b16 %v38
  %v207 = vunpack.c.l.b16 %v39
  %v208 = vunpack.c.l.b16 %v40
  %v209 = vunpack.c.l.b16 %v41
  %v210 = vunpack.c.l.b16 %v42
  %v211 = vunpack.c.l.b16 %v43
  %v212 = vunpack.c.l.b16 %v44
  %v213 = vunpack.c.l.b16 %v45
  %v214 = vunpack.c.l.b16 %v46
  %v215 = vunpack.c.l.b16 %v47
  %v216 = vunpack.c.l.b16 %v48
  %v217 = vunpack.c.l.b16 %v49
  %v218 = vunpack.c.l.b16 %v50
  %v219 = vunpack.c.l.b16 %v51
  %v220 = vunpack.c.l.b16 %v52
  %v221 = vunpack.c.l.b16 %v53
  %v222 = vunpack.c.l.b16 %v54
  %v223 = vunpack.c.l.b16 %v55
  %v224 = vunpack.c.l.b16 %v56
  %v225 = vunpack.c.l.b16 %v57
  %v226 = vunpack.c.l.b16 %v58
  %v227 = vunpack.c.l.b16 %v59
  %v228 = vunpack.c.l.b16 %v60
  %v229 = vunpack.c.l.b16 %v61
  %v230 = vunpack.c.l.b16 %v62
  %v231 = vunpack.c.l.b16 %v63
  %v232 = vunpack.c.l.b16 %v64
  %v233 = vunpack.c.l.b16 %v65
  %v234 = vunpack.c.l.b16 %v66
  %v235 = vunpack.c.l.b16 %v67
  %v236 = vunpack.c.l.b16 %v68
  %v237 = vunpack.c.l.b16 %v69
  %v238 = vunpack.c.l.b16 %v70
  %v239 = vunpack.c.l.b16 %v71
  %v240 = vunpack.c.l.b16 %v72
  %v241 = vunpack.c.l.b16 %v73
  %v242 = vunpack.c.l.b16 %v74
  %v243 = vunpack.c.l.b16 %v75
  %v244 = vunpack.c.l.b16 %v76
  %v245 = vunpack.c.l.b16 %v77
  %v246 = vunpack.c.l.b16 %v78
  %v247 = vunpack.c.l.b16 %v79
  %v248 = vunpack.c.l.b16 %v80
  %v249 = vunpack.c.l.b16 %v81
  %v250 = vunpack.c.l.b16 %v82
  %v251 = vunpack.c.l.b16 %v83
  %v252 = vunpack.c.l.b16 %v84
  %v253 = vunpack.c.l.b16 %v85
  %v254 = vunpack.c.l.b16 %v86
  %v255 = vunpack.c.l.b16 %v87
  %v256 = vunpack.c.l.b16 %v88
  %v257 = vunpack.c.l.b16 %v89
  %v258 = vpack.c.b16 %v195, %v194
  %v259 = vpack.c.b16 %v197, %v196
  %v260 = vpack.c.b16 %v199, %v198
  %v261 = vpack.c.b16 %v201, %v200
  %v262 = vpack.c.b16 %v203, %v202
  %v263 = vpack.c.b16 %v205, %v204
  %v264 = vpack.c.b16 %v207, %v206
  %v265 = vpack.c.b16 %v209, %v208
  %v266 = vpack.c.b16 %v211, %v210
  %v267 = vpack.c.b16 %v213, %v212
  %v268 = vpack.c.b16 %v215, %v214
  %v269 = vpack.c.b16 %v217, %v216
  %v270 = vpack.c.b16 %v219, %v218
  %v271 = vpack.c.b16 %v221, %v220
  %v272 = vpack.c.b16 %v223, %v222
  %v273 = vpack.c.b16 %v225, %v224
  %v274 = vpack.c.b16 %v227, %v226
  %v275 = vpack.c.b16 %v229, %v228
  %v276 = vpack.c.b16 %v231, %v230
  %v277 = vpack.c.b16 %v233, %v232
  %v278 = vpack.c.b16 %v235, %v234
  %v279 = vpack.c.b16 %v237, %v236
  %v280 = vpack.c.b16 %v239, %v238
  %v281 = vpack.c.b16 %v241, %v240
  %v282 = vpack.c.b16 %v243, %v242
  %v283 = vpack.c.b16 %v245, %v244
  %v284 = vpack.c.b16 %v247, %v246
  %v285 = vpack.c.b16 %v249, %v248
  %v286 = vpack.c.b16 %v251, %v250
  %v287 = vpack.c.b16 %v253, %v252
  %v288 = vpack.c.b16 %v255, %v254
  %v289 = vpack.c.b16 %v257, %v256
  %322 = vmatprep.subr.bf16.mxu0 0
  %323 = vmatpush1.bf16.msra.mxu0 %v265
  %324 = vmatprep.subr.bf16.mxu0 0
  %325 = vmatpush1.bf16.msra.mxu0 %v264
  %326 = vmatprep.subr.bf16.mxu0 0
  %327 = vmatpush1.bf16.msra.mxu0 %v263
  %328 = vmatprep.subr.bf16.mxu0 0
  %329 = vmatpush1.bf16.msra.mxu0 %v262
  %330 = vmatprep.subr.bf16.mxu0 0
  %331 = vmatpush1.bf16.msra.mxu0 %v261
  %332 = vmatprep.subr.bf16.mxu0 0
  %333 = vmatpush1.bf16.msra.mxu0 %v260
  %334 = vmatprep.subr.bf16.mxu0 0
  %335 = vmatpush1.bf16.msra.mxu0 %v259
  %336 = vmatprep.subr.bf16.mxu0 0
  %337 = vmatpush1.bf16.msra.mxu0 %v258
  %338 = vmatprep.subr.bf16.mxu0 0
  %339 = vmatpush2.bf16.msra.mxu0 %v273
  %340 = vmatprep.subr.bf16.mxu0 0
  %341 = vmatpush2.bf16.msra.mxu0 %v272
  %342 = vmatprep.subr.bf16.mxu0 0
  %343 = vmatpush2.bf16.msra.mxu0 %v271
  %344 = vmatprep.subr.bf16.mxu0 0
  %345 = vmatpush2.bf16.msra.mxu0 %v270
  %346 = vmatprep.subr.bf16.mxu0 0
  %347 = vmatpush2.bf16.msra.mxu0 %v269
  %348 = vmatprep.subr.bf16.mxu0 0
  %349 = vmatpush2.bf16.msra.mxu0 %v268
  %350 = vmatprep.subr.bf16.mxu0 0
  %351 = vmatpush2.bf16.msra.mxu0 %v267
  %352 = vmatprep.subr.bf16.mxu0 0
  %353 = vmatpush2.bf16.msra.mxu0 %v266
  %354 = vmatprep.mubr.bf16.mxu0 %v115
  %355 = vmatmul.mubr.bf16.gmra.mxu0 %v114
  %v356 = vpop.f32.mrf.mxu0
  %v357 = vadd.f32 0.0, %v356
  %v358 = vpop.f32.mrf.mxu0
  %v359 = vpop.f32.mrf.mxu0
  %v360 = vadd.f32 0.0, %v359
  %v361 = vpop.f32.mrf.mxu0
  %362 = vmatprep.mubr.bf16.mxu0 %v119
  %363 = vmatmul.mubr.bf16.gmra.mxu0 %v118
  %v364 = vpop.f32.mrf.mxu0
  %v365 = vadd.f32 0.0, %v364
  %v366 = vpop.f32.mrf.mxu0
  %v367 = vpop.f32.mrf.mxu0
  %v368 = vadd.f32 0.0, %v367
  %v369 = vpop.f32.mrf.mxu0
  %370 = vdwg.mxu0
  %371 = vmatprep.subr.bf16.mxu0 0
  %372 = vmatpush1.bf16.msra.mxu0 %v281
  %373 = vmatprep.subr.bf16.mxu0 0
  %374 = vmatpush1.bf16.msra.mxu0 %v280
  %375 = vmatprep.subr.bf16.mxu0 0
  %376 = vmatpush1.bf16.msra.mxu0 %v279
  %377 = vmatprep.subr.bf16.mxu0 0
  %378 = vmatpush1.bf16.msra.mxu0 %v278
  %379 = vmatprep.subr.bf16.mxu0 0
  %380 = vmatpush1.bf16.msra.mxu0 %v277
  %381 = vmatprep.subr.bf16.mxu0 0
  %382 = vmatpush1.bf16.msra.mxu0 %v276
  %383 = vmatprep.subr.bf16.mxu0 0
  %384 = vmatpush1.bf16.msra.mxu0 %v275
  %385 = vmatprep.subr.bf16.mxu0 0
  %386 = vmatpush1.bf16.msra.mxu0 %v274
  %387 = vmatprep.subr.bf16.mxu0 0
  %388 = vmatpush2.bf16.msra.mxu0 %v289
  %389 = vmatprep.subr.bf16.mxu0 0
  %390 = vmatpush2.bf16.msra.mxu0 %v288
  %391 = vmatprep.subr.bf16.mxu0 0
  %392 = vmatpush2.bf16.msra.mxu0 %v287
  %393 = vmatprep.subr.bf16.mxu0 0
  %394 = vmatpush2.bf16.msra.mxu0 %v286
  %395 = vmatprep.subr.bf16.mxu0 0
  %396 = vmatpush2.bf16.msra.mxu0 %v285
  %397 = vmatprep.subr.bf16.mxu0 0
  %398 = vmatpush2.bf16.msra.mxu0 %v284
  %399 = vmatprep.subr.bf16.mxu0 0
  %400 = vmatpush2.bf16.msra.mxu0 %v283
  %401 = vmatprep.subr.bf16.mxu0 0
  %402 = vmatpush2.bf16.msra.mxu0 %v282
  %403 = vmatprep.mubr.bf16.mxu0 %v117
  %404 = vmatmul.mubr.bf16.gmra.mxu0 %v116
  %v405 = vpop.f32.mrf.mxu0
  %v406 = vadd.f32 %v357, %v405
  %v407 = vpop.f32.mrf.mxu0
  %v408 = vpop.f32.mrf.mxu0
  %v409 = vadd.f32 %v360, %v408
  %v410 = vpop.f32.mrf.mxu0
  %411 = vmatprep.mubr.bf16.mxu0 %v121
  %412 = vmatmul.mubr.bf16.gmra.mxu0 %v120
  %v413 = vpop.f32.mrf.mxu0
  %v414 = vadd.f32 %v365, %v413
  %v415 = vpop.f32.mrf.mxu0
  %v416 = vpop.f32.mrf.mxu0
  %v417 = vadd.f32 %v368, %v416
  %v418 = vpop.f32.mrf.mxu0
  %419 = vdwg.mxu0
  %v420 = vld [vmem:[%s2] sm:$0x1]
  %v422 = vlaneseq
  %v423 = vshrl.u32 %v422, 7
  %v424 = vsub.s32 0, %v423
  %v425 = vrot.slane %v420, %v424
  %v427 = vmul.f32 %v406, %v425
  %v428 = vmul.f32 %v409, %v425
  %v429 = vmul.f32 %v414, %v425
  %v430 = vmul.f32 %v417, %v425
  %v431 = vld [vmem:[%s3] sm:$0x1]
  %v433 = vlaneseq
  %v434 = vshrl.u32 %v433, 7
  %v435 = vsub.s32 0, %v434
  %v436 = vrot.slane %v431, %v435
  %v438 = vadd.f32 %v427, %v436
  %v439 = vadd.f32 %v428, %v436
  %v440 = vadd.f32 %v429, %v436
  %v441 = vadd.f32 %v430, %v436
  %vm442 = vcmp.gt.f32.partialorder %v438, 0.0
  %vm443 = vcmp.gt.f32.partialorder %v439, 0.0
  %vm444 = vcmp.gt.f32.partialorder %v440, 0.0
  %vm445 = vcmp.gt.f32.partialorder %v441, 0.0
  %v446 = vmul.f32 %v438, 0.2
  %v447 = vmul.f32 %v439, 0.2
  %v448 = vmul.f32 %v440, 0.2
  %v449 = vmul.f32 %v441, 0.2
  %v450 = vsel %vm442, %v438, %v446
  %v451 = vsel %vm443, %v439, %v447
  %v452 = vsel %vm444, %v440, %v448
  %v453 = vsel %vm445, %v441, %v449
  %v454 = vpack.c.bf16 %v451, %v450
  %v455 = vpack.c.bf16 %v453, %v452
  %v458 = vunpack.c.l.b16 %v454
  %v459 = vunpack.c.h.b16 %v454
  %v460 = vunpack.c.l.b16 %v455
  %v461 = vunpack.c.h.b16 %v455
  %v462 = vpack.c.b16 %v458, %v458
  %v463 = vpack.c.b16 %v459, %v459
  %v464 = vpack.c.b16 %v460, %v460
  %v465 = vpack.c.b16 %v461, %v461
  %vm470 = vcmask 519168
  %471 = vst.msk [vmem:[%s4] sm:$0xf] %vm470, %v462
  %472 = vst.msk [vmem:[%s4 + $0x4] sm:$0xf] %vm470, %v463
  %473 = vst.msk [vmem:[%s4 + $0x8] sm:$0xf] %vm470, %v464
  %474 = vst.msk [vmem:[%s4 + $0xc] sm:$0xf] %vm470, %v465
  // Predicated region
  $region18: #{discriminator_forward.8} parent=0 // pred_check
    _
  $region19: #{discriminator_forward.8} parent=0 // pred_check_branch
    %476 = sbr.rel (0) target = $region21
  $region20: #{discriminator_forward.8} parent=0 // pred_region
    _
  $region21: #{discriminator_forward.8} parent=0 // pred_fallthru
    _
  // Predicated region
  $region22: #{discriminator_forward.8} parent=0 // pred_check
    _
  $region23: #{discriminator_forward.8} parent=0 // pred_check_branch
    %478 = sbr.rel (0) target = $region25
  $region24: #{discriminator_forward.8} parent=0 // pred_region
    _
  $region25: #{discriminator_forward.8} parent=0 // pred_fallthru
    _

// kernel: discriminator_forward.9
$region0: #{discriminator_forward.9}
  #allocation0 [shape = 'u32[]', space=smem, size = 0x4, offset = 0x4, fixed_abs, tag = 'smem constant byte address 0x4 - core index']
  #allocation1 [shape = 'u32[144,128]{1,0:T(1,128)}', space=vmem, size = 0x12000, scoped, tag = 'internal scratch']
  #allocation2 [shape = 'f32[1,1]{1,0:T(1,128)S(1)}', space=vmem, size = 0x200, scoped, tag = 'scoped memory for discriminator_forward.9']
  %s0 = inlined_call_operand.vmem [shape: bf16[2,1024], index: 0, kind: input, shape index: {}]
  %s1 = inlined_call_operand.vmem [shape: f32[1,1024], index: 1, kind: input, shape index: {}]
  %s2 = inlined_call_operand.<no memory space> [shape: f32[1,1], index: 2, kind: input, shape index: {}]
  %s3 = inlined_call_operand.vmem [shape: bf16[1024,1024], index: 3, kind: input, shape index: {}]
  %s4 = inlined_call_operand.vmem [shape: f32[1,1024], index: 4, kind: input, shape index: {}]
  %s5 = inlined_call_operand.vmem [shape: bf16[1024,512], index: 5, kind: input, shape index: {}]
  %s6 = inlined_call_operand.vmem [shape: f32[1,512], index: 6, kind: input, shape index: {}]
  %s7 = inlined_call_operand.vmem [shape: bf16[512,27], index: 7, kind: input, shape index: {}]
  %s8 = inlined_call_operand.vmem [shape: f32[1,27], index: 8, kind: input, shape index: {}]
  %s9 = inlined_call_operand.vmem [shape: f32[2,1], index: 9, kind: output, shape index: {0}]
  %s10 = inlined_call_operand.hbm [shape: f32[2,27], index: 10, kind: output, shape index: {1}]
  %11 = xla_tuple %s9, %s10
  %s12 = sld [smem:[#allocation0]]
  $region54: #{discriminator_forward.9} parent=0
    _
  %s14 = ssub.s32 1, %s12
  %s15 = scalar_select 0, %s14, %s12
  %v16 = vstv %s2
  %17 = vst [vmem:[#allocation2] sm:$0x1] %v16
  $region1: #{discriminator_forward.9} parent=0
    #allocation3 [shape = 'u8[1024]{0}', space=vmem, size = 0x400, scoped, tag = 'output window, operand 1, single buffered']
    #allocation4 [shape = 's32[1]{0}', space=sflag, size = 0x4, scoped, tag = 'scoped memory for discriminator_forward.9']
    %18 = vsyncpa [#allocation4], 0
    // Predicated region
    $region2: #{discriminator_forward.9} parent=1 // pred_check
      _
    $region3: #{discriminator_forward.9} parent=1 // pred_check_branch
      %20 = sbr.rel (0) target = $region5
    $region4: #{discriminator_forward.9} parent=1 // pred_region
      _
    $region5: #{discriminator_forward.9} parent=1 // pred_fallthru
      _
    // Predicated region
    $region6: #{discriminator_forward.9} parent=1 // pred_check
      _
    $region7: #{discriminator_forward.9} parent=1 // pred_check_branch
      %22 = sbr.rel (0) target = $region9
    $region8: #{discriminator_forward.9} parent=1 // pred_region
      _
    $region9: #{discriminator_forward.9} parent=1 // pred_fallthru
      _
    // Predicated region
    $region10: #{discriminator_forward.9} parent=1 // pred_check
      _
    $region11: #{discriminator_forward.9} parent=1 // pred_check_branch
      %24 = sbr.rel (0) target = $region13
    $region12: #{discriminator_forward.9} parent=1 // pred_region
      _
    $region13: #{discriminator_forward.9} parent=1 // pred_fallthru
      _
    // Predicated region
    $region14: #{discriminator_forward.9} parent=1 // pred_check
      _
    $region15: #{discriminator_forward.9} parent=1 // pred_check_branch
      %26 = sbr.rel (0) target = $region17
    $region16: #{discriminator_forward.9} parent=1 // pred_region
      _
    $region17: #{discriminator_forward.9} parent=1 // pred_fallthru
      _
    // Predicated region
    $region18: #{discriminator_forward.9} parent=1 // pred_check
      _
    $region19: #{discriminator_forward.9} parent=1 // pred_check_branch
      %28 = sbr.rel (0) target = $region21
    $region20: #{discriminator_forward.9} parent=1 // pred_region
      _
    $region21: #{discriminator_forward.9} parent=1 // pred_fallthru
      _
    // Predicated region
    $region22: #{discriminator_forward.9} parent=1 // pred_check
      _
    $region23: #{discriminator_forward.9} parent=1 // pred_check_branch
      %30 = sbr.rel (0) target = $region25
    $region24: #{discriminator_forward.9} parent=1 // pred_region
      _
    $region25: #{discriminator_forward.9} parent=1 // pred_fallthru
      _
    // Predicated region
    $region26: #{discriminator_forward.9} parent=1 // pred_check
      _
    $region27: #{discriminator_forward.9} parent=1 // pred_check_branch
      %32 = sbr.rel (0) target = $region29
    $region28: #{discriminator_forward.9} parent=1 // pred_region
      _
    $region29: #{discriminator_forward.9} parent=1 // pred_fallthru
      _
    // Predicated region
    $region30: #{discriminator_forward.9} parent=1 // pred_check
      _
    $region31: #{discriminator_forward.9} parent=1 // pred_check_branch
      %34 = sbr.rel (0) target = $region33
    $region32: #{discriminator_forward.9} parent=1 // pred_region
      _
    $region33: #{discriminator_forward.9} parent=1 // pred_fallthru
      _
    // Predicated region
    $region34: #{discriminator_forward.9} parent=1 // pred_check
      _
    $region35: #{discriminator_forward.9} parent=1 // pred_check_branch
      %36 = sbr.rel (0) target = $region37
    $region36: #{discriminator_forward.9} parent=1 // pred_region
      _
    $region37: #{discriminator_forward.9} parent=1 // pred_fallthru
      _
    %v38 = vld [vmem:[%s0] sm:$0xff]
    %v39 = vunpack.c.l.bf16 %v38
    %v40 = vunpack.c.h.bf16 %v38
    %v41 = vld [vmem:[%s1] sm:$0xff]
    %v43 = vlaneseq
    %v44 = vshrl.u32 %v43, 7
    %v45 = vsub.s32 0, %v44
    %v46 = vrot.slane %v41, %v45
    %v47 = vlaneseq
    %v48 = vshrl.u32 %v47, 7
    %v49 = vsub.s32 1, %v48
    %v50 = vrot.slane %v41, %v49
    %v51 = vlaneseq
    %v52 = vshrl.u32 %v51, 7
    %v53 = vsub.s32 2, %v52
    %v54 = vrot.slane %v41, %v53
    %v55 = vlaneseq
    %v56 = vshrl.u32 %v55, 7
    %v57 = vsub.s32 3, %v56
    %v58 = vrot.slane %v41, %v57
    %v59 = vlaneseq
    %v60 = vshrl.u32 %v59, 7
    %v61 = vsub.s32 4, %v60
    %v62 = vrot.slane %v41, %v61
    %v63 = vlaneseq
    %v64 = vshrl.u32 %v63, 7
    %v65 = vsub.s32 5, %v64
    %v66 = vrot.slane %v41, %v65
    %v67 = vlaneseq
    %v68 = vshrl.u32 %v67, 7
    %v69 = vsub.s32 6, %v68
    %v70 = vrot.slane %v41, %v69
    %v71 = vlaneseq
    %v72 = vshrl.u32 %v71, 7
    %v73 = vsub.s32 7, %v72
    %v74 = vrot.slane %v41, %v73
    %v75 = vcombine.low %v46, %v50
    %v76 = vcombine.low %v54, %v58
    %v78 = vunpack.c.l.s4 1983009808
    %v79 = vunpack.c.0.s8 %v78
    %v80 = vlaneseq
    %v81 = vshrl.u32 %v80, 7
    %v82 = vsub.s32 %v79, %v81
    %v83 = vrot.slane %v75, %v82
    %v85 = vunpack.c.l.s4 1983009808
    %v86 = vunpack.c.0.s8 %v85
    %v87 = vlaneseq
    %v88 = vshrl.u32 %v87, 7
    %v89 = vsub.s32 %v86, %v88
    %v90 = vrot.slane %v76, %v89
    %v91 = vcombine.low %v83, %v90
    %v92 = vcombine.low %v62, %v66
    %v93 = vcombine.low %v70, %v74
    %v95 = vunpack.c.l.s4 1983009808
    %v96 = vunpack.c.0.s8 %v95
    %v97 = vlaneseq
    %v98 = vshrl.u32 %v97, 7
    %v99 = vsub.s32 %v96, %v98
    %v100 = vrot.slane %v92, %v99
    %v102 = vunpack.c.l.s4 1983009808
    %v103 = vunpack.c.0.s8 %v102
    %v104 = vlaneseq
    %v105 = vshrl.u32 %v104, 7
    %v106 = vsub.s32 %v103, %v105
    %v107 = vrot.slane %v93, %v106
    %v108 = vcombine.low %v100, %v107
    %v111 = vmul.f32 %v39, %v91
    %v112 = vmul.f32 %v40, %v108
    %v115 = vcombine.high %v111, %v111
    %v117 = vunpack.c.l.s4 1983009808
    %v118 = vunpack.c.0.s8 %v117
    %v119 = vlaneseq
    %v120 = vshrl.u32 %v119, 7
    %v121 = vsub.s32 %v118, %v120
    %v122 = vrot.slane %v111, %v121
    %v124 = vunpack.c.l.s4 1983009808
    %v125 = vunpack.c.0.s8 %v124
    %v126 = vlaneseq
    %v127 = vshrl.u32 %v126, 7
    %v128 = vsub.s32 %v125, %v127
    %v129 = vrot.slane %v115, %v128
    %v130 = vcombine.high %v122, %v122
    %v131 = vcombine.high %v129, %v129
    %v132 = vcombine.high %v112, %v112
    %v134 = vunpack.c.l.s4 1983009808
    %v135 = vunpack.c.0.s8 %v134
    %v136 = vlaneseq
    %v137 = vshrl.u32 %v136, 7
    %v138 = vsub.s32 %v135, %v137
    %v139 = vrot.slane %v112, %v138
    %v141 = vunpack.c.l.s4 1983009808
    %v142 = vunpack.c.0.s8 %v141
    %v143 = vlaneseq
    %v144 = vshrl.u32 %v143, 7
    %v145 = vsub.s32 %v142, %v144
    %v146 = vrot.slane %v132, %v145
    %v147 = vcombine.high %v139, %v139
    %v148 = vcombine.high %v146, %v146
    %vm157 = vcmask 1041408
    %v158 = vsel %vm157, %v122, 0.0
    %v159 = vsel %vm157, %v130, 0.0
    %v160 = vadd.f32 %v158, %v159
    %v161 = vsel %vm157, %v129, 0.0
    %v162 = vadd.f32 %v160, %v161
    %v163 = vsel %vm157, %v131, 0.0
    %v164 = vadd.f32 %v162, %v163
    %v165 = vsel %vm157, %v139, 0.0
    %v166 = vadd.f32 %v164, %v165
    %v167 = vsel %vm157, %v147, 0.0
    %v168 = vadd.f32 %v166, %v167
    %v169 = vsel %vm157, %v146, 0.0
    %v170 = vadd.f32 %v168, %v169
    %v171 = vsel %vm157, %v148, 0.0
    %v172 = vadd.f32 %v170, %v171
    %173 = vadd.xlane.f32.xlu0 %v172
    %v174 = vpop.xlane.xlu0 %173
    %v175 = vld [vmem:[#allocation2] sm:$0x1]
    %v177 = vlaneseq
    %v178 = vshrl.u32 %v177, 7
    %v179 = vsub.s32 0, %v178
    %v180 = vrot.slane %v175, %v179
    %v182 = vadd.f32 %v174, %v180
    %v183 = vsub.f32 0.0, %v182
    %v184 = vmul.f32 %v183, 1.442695
    %v185 = vpow.pop %v184
    %v186 = vadd.f32 %v185, 1.0
    %v187 = vrcp.pop %v186
    %v188 = vmax.f32 %v187, 0.0
    %v189 = vmin.f32 %v188, 1.0
    %vm190 = vcmask 1024
    %191 = vst.msk [vmem:[%s9] sm:$0x3] %vm190, %v189
    %v192 = vld [vmem:[%s3] sm:$0xff]
    %v193 = vld [vmem:[%s3 + $0x8] sm:$0xff]
    %v194 = vld [vmem:[%s3 + $0x10] sm:$0xff]
    %v195 = vld [vmem:[%s3 + $0x18] sm:$0xff]
    %v196 = vld [vmem:[%s3 + $0x20] sm:$0xff]
    %v197 = vld [vmem:[%s3 + $0x28] sm:$0xff]
    %v198 = vld [vmem:[%s3 + $0x30] sm:$0xff]
    %v199 = vld [vmem:[%s3 + $0x38] sm:$0xff]
    %v200 = vld [vmem:[%s3 + $0x40] sm:$0xff]
    %v201 = vld [vmem:[%s3 + $0x48] sm:$0xff]
    %v202 = vld [vmem:[%s3 + $0x50] sm:$0xff]
    %v203 = vld [vmem:[%s3 + $0x58] sm:$0xff]
    %v204 = vld [vmem:[%s3 + $0x60] sm:$0xff]
    %v205 = vld [vmem:[%s3 + $0x68] sm:$0xff]
    %v206 = vld [vmem:[%s3 + $0x70] sm:$0xff]
    %v207 = vld [vmem:[%s3 + $0x78] sm:$0xff]
    %v208 = vld [vmem:[%s3 + $0x80] sm:$0xff]
    %v209 = vld [vmem:[%s3 + $0x88] sm:$0xff]
    %v210 = vld [vmem:[%s3 + $0x90] sm:$0xff]
    %v211 = vld [vmem:[%s3 + $0x98] sm:$0xff]
    %v212 = vld [vmem:[%s3 + $0xa0] sm:$0xff]
    %v213 = vld [vmem:[%s3 + $0xa8] sm:$0xff]
    %v214 = vld [vmem:[%s3 + $0xb0] sm:$0xff]
    %v215 = vld [vmem:[%s3 + $0xb8] sm:$0xff]
    %v216 = vld [vmem:[%s3 + $0xc0] sm:$0xff]
    %v217 = vld [vmem:[%s3 + $0xc8] sm:$0xff]
    %v218 = vld [vmem:[%s3 + $0xd0] sm:$0xff]
    %v219 = vld [vmem:[%s3 + $0xd8] sm:$0xff]
    %v220 = vld [vmem:[%s3 + $0xe0] sm:$0xff]
    %v221 = vld [vmem:[%s3 + $0xe8] sm:$0xff]
    %v222 = vld [vmem:[%s3 + $0xf0] sm:$0xff]
    %v223 = vld [vmem:[%s3 + $0xf8] sm:$0xff]
    %v224 = vld [vmem:[%s3 + $0x100] sm:$0xff]
    %v225 = vld [vmem:[%s3 + $0x108] sm:$0xff]
    %v226 = vld [vmem:[%s3 + $0x110] sm:$0xff]
    %v227 = vld [vmem:[%s3 + $0x118] sm:$0xff]
    %v228 = vld [vmem:[%s3 + $0x120] sm:$0xff]
    %v229 = vld [vmem:[%s3 + $0x128] sm:$0xff]
    %v230 = vld [vmem:[%s3 + $0x130] sm:$0xff]
    %v231 = vld [vmem:[%s3 + $0x138] sm:$0xff]
    %v232 = vld [vmem:[%s3 + $0x140] sm:$0xff]
    %v233 = vld [vmem:[%s3 + $0x148] sm:$0xff]
    %v234 = vld [vmem:[%s3 + $0x150] sm:$0xff]
    %v235 = vld [vmem:[%s3 + $0x158] sm:$0xff]
    %v236 = vld [vmem:[%s3 + $0x160] sm:$0xff]
    %v237 = vld [vmem:[%s3 + $0x168] sm:$0xff]
    %v238 = vld [vmem:[%s3 + $0x170] sm:$0xff]
    %v239 = vld [vmem:[%s3 + $0x178] sm:$0xff]
    %v240 = vld [vmem:[%s3 + $0x180] sm:$0xff]
    %v241 = vld [vmem:[%s3 + $0x188] sm:$0xff]
    %v242 = vld [vmem:[%s3 + $0x190] sm:$0xff]
    %v243 = vld [vmem:[%s3 + $0x198] sm:$0xff]
    %v244 = vld [vmem:[%s3 + $0x1a0] sm:$0xff]
    %v245 = vld [vmem:[%s3 + $0x1a8] sm:$0xff]
    %v246 = vld [vmem:[%s3 + $0x1b0] sm:$0xff]
    %v247 = vld [vmem:[%s3 + $0x1b8] sm:$0xff]
    %v248 = vld [vmem:[%s3 + $0x1c0] sm:$0xff]
    %v249 = vld [vmem:[%s3 + $0x1c8] sm:$0xff]
    %v250 = vld [vmem:[%s3 + $0x1d0] sm:$0xff]
    %v251 = vld [vmem:[%s3 + $0x1d8] sm:$0xff]
    %v252 = vld [vmem:[%s3 + $0x1e0] sm:$0xff]
    %v253 = vld [vmem:[%s3 + $0x1e8] sm:$0xff]
    %v254 = vld [vmem:[%s3 + $0x1f0] sm:$0xff]
    %v255 = vld [vmem:[%s3 + $0x1f8] sm:$0xff]
    %v256 = vld [vmem:[%s3 + $0x200] sm:$0xff]
    %v257 = vld [vmem:[%s3 + $0x208] sm:$0xff]
    %v258 = vld [vmem:[%s3 + $0x210] sm:$0xff]
    %v259 = vld [vmem:[%s3 + $0x218] sm:$0xff]
    %v260 = vld [vmem:[%s3 + $0x220] sm:$0xff]
    %v261 = vld [vmem:[%s3 + $0x228] sm:$0xff]
    %v262 = vld [vmem:[%s3 + $0x230] sm:$0xff]
    %v263 = vld [vmem:[%s3 + $0x238] sm:$0xff]
    %v264 = vld [vmem:[%s3 + $0x240] sm:$0xff]
    %v265 = vld [vmem:[%s3 + $0x248] sm:$0xff]
    %v266 = vld [vmem:[%s3 + $0x250] sm:$0xff]
    %v267 = vld [vmem:[%s3 + $0x258] sm:$0xff]
    %v268 = vld [vmem:[%s3 + $0x260] sm:$0xff]
    %v269 = vld [vmem:[%s3 + $0x268] sm:$0xff]
    %v270 = vld [vmem:[%s3 + $0x270] sm:$0xff]
    %v271 = vld [vmem:[%s3 + $0x278] sm:$0xff]
    %v272 = vld [vmem:[%s3 + $0x280] sm:$0xff]
    %v273 = vld [vmem:[%s3 + $0x288] sm:$0xff]
    %v274 = vld [vmem:[%s3 + $0x290] sm:$0xff]
    %v275 = vld [vmem:[%s3 + $0x298] sm:$0xff]
    %v276 = vld [vmem:[%s3 + $0x2a0] sm:$0xff]
    %v277 = vld [vmem:[%s3 + $0x2a8] sm:$0xff]
    %v278 = vld [vmem:[%s3 + $0x2b0] sm:$0xff]
    %v279 = vld [vmem:[%s3 + $0x2b8] sm:$0xff]
    %v280 = vld [vmem:[%s3 + $0x2c0] sm:$0xff]
    %v281 = vld [vmem:[%s3 + $0x2c8] sm:$0xff]
    %v282 = vld [vmem:[%s3 + $0x2d0] sm:$0xff]
    %v283 = vld [vmem:[%s3 + $0x2d8] sm:$0xff]
    %v284 = vld [vmem:[%s3 + $0x2e0] sm:$0xff]
    %v285 = vld [vmem:[%s3 + $0x2e8] sm:$0xff]
    %v286 = vld [vmem:[%s3 + $0x2f0] sm:$0xff]
    %v287 = vld [vmem:[%s3 + $0x2f8] sm:$0xff]
    %v288 = vld [vmem:[%s3 + $0x300] sm:$0xff]
    %v289 = vld [vmem:[%s3 + $0x308] sm:$0xff]
    %v290 = vld [vmem:[%s3 + $0x310] sm:$0xff]
    %v291 = vld [vmem:[%s3 + $0x318] sm:$0xff]
    %v292 = vld [vmem:[%s3 + $0x320] sm:$0xff]
    %v293 = vld [vmem:[%s3 + $0x328] sm:$0xff]
    %v294 = vld [vmem:[%s3 + $0x330] sm:$0xff]
    %v295 = vld [vmem:[%s3 + $0x338] sm:$0xff]
    %v296 = vld [vmem:[%s3 + $0x340] sm:$0xff]
    %v297 = vld [vmem:[%s3 + $0x348] sm:$0xff]
    %v298 = vld [vmem:[%s3 + $0x350] sm:$0xff]
    %v299 = vld [vmem:[%s3 + $0x358] sm:$0xff]
    %v300 = vld [vmem:[%s3 + $0x360] sm:$0xff]
    %v301 = vld [vmem:[%s3 + $0x368] sm:$0xff]
    %v302 = vld [vmem:[%s3 + $0x370] sm:$0xff]
    %v303 = vld [vmem:[%s3 + $0x378] sm:$0xff]
    %v304 = vld [vmem:[%s3 + $0x380] sm:$0xff]
    %v305 = vld [vmem:[%s3 + $0x388] sm:$0xff]
    %v306 = vld [vmem:[%s3 + $0x390] sm:$0xff]
    %v307 = vld [vmem:[%s3 + $0x398] sm:$0xff]
    %v308 = vld [vmem:[%s3 + $0x3a0] sm:$0xff]
    %v309 = vld [vmem:[%s3 + $0x3a8] sm:$0xff]
    %v310 = vld [vmem:[%s3 + $0x3b0] sm:$0xff]
    %v311 = vld [vmem:[%s3 + $0x3b8] sm:$0xff]
    %v312 = vld [vmem:[%s3 + $0x3c0] sm:$0xff]
    %v313 = vld [vmem:[%s3 + $0x3c8] sm:$0xff]
    %v314 = vld [vmem:[%s3 + $0x3d0] sm:$0xff]
    %v315 = vld [vmem:[%s3 + $0x3d8] sm:$0xff]
    %v316 = vld [vmem:[%s3 + $0x3e0] sm:$0xff]
    %v317 = vld [vmem:[%s3 + $0x3e8] sm:$0xff]
    %v318 = vld [vmem:[%s3 + $0x3f0] sm:$0xff]
    %v319 = vld [vmem:[%s3 + $0x3f8] sm:$0xff]
    %v320 = vld [vmem:[%s3 + $0x400] sm:$0xff]
    %v321 = vld [vmem:[%s3 + $0x408] sm:$0xff]
    %v322 = vld [vmem:[%s3 + $0x410] sm:$0xff]
    %v323 = vld [vmem:[%s3 + $0x418] sm:$0xff]
    %v324 = vld [vmem:[%s3 + $0x420] sm:$0xff]
    %v325 = vld [vmem:[%s3 + $0x428] sm:$0xff]
    %v326 = vld [vmem:[%s3 + $0x430] sm:$0xff]
    %v327 = vld [vmem:[%s3 + $0x438] sm:$0xff]
    %v328 = vld [vmem:[%s3 + $0x440] sm:$0xff]
    %v329 = vld [vmem:[%s3 + $0x448] sm:$0xff]
    %v330 = vld [vmem:[%s3 + $0x450] sm:$0xff]
    %v331 = vld [vmem:[%s3 + $0x458] sm:$0xff]
    %v332 = vld [vmem:[%s3 + $0x460] sm:$0xff]
    %v333 = vld [vmem:[%s3 + $0x468] sm:$0xff]
    %v334 = vld [vmem:[%s3 + $0x470] sm:$0xff]
    %v335 = vld [vmem:[%s3 + $0x478] sm:$0xff]
    %v336 = vld [vmem:[%s3 + $0x480] sm:$0xff]
    %v337 = vld [vmem:[%s3 + $0x488] sm:$0xff]
    %v338 = vld [vmem:[%s3 + $0x490] sm:$0xff]
    %v339 = vld [vmem:[%s3 + $0x498] sm:$0xff]
    %v340 = vld [vmem:[%s3 + $0x4a0] sm:$0xff]
    %v341 = vld [vmem:[%s3 + $0x4a8] sm:$0xff]
    %v342 = vld [vmem:[%s3 + $0x4b0] sm:$0xff]
    %v343 = vld [vmem:[%s3 + $0x4b8] sm:$0xff]
    %v344 = vld [vmem:[%s3 + $0x4c0] sm:$0xff]
    %v345 = vld [vmem:[%s3 + $0x4c8] sm:$0xff]
    %v346 = vld [vmem:[%s3 + $0x4d0] sm:$0xff]
    %v347 = vld [vmem:[%s3 + $0x4d8] sm:$0xff]
    %v348 = vld [vmem:[%s3 + $0x4e0] sm:$0xff]
    %v349 = vld [vmem:[%s3 + $0x4e8] sm:$0xff]
    %v350 = vld [vmem:[%s3 + $0x4f0] sm:$0xff]
    %v351 = vld [vmem:[%s3 + $0x4f8] sm:$0xff]
    %v352 = vld [vmem:[%s3 + $0x500] sm:$0xff]
    %v353 = vld [vmem:[%s3 + $0x508] sm:$0xff]
    %v354 = vld [vmem:[%s3 + $0x510] sm:$0xff]
    %v355 = vld [vmem:[%s3 + $0x518] sm:$0xff]
    %v356 = vld [vmem:[%s3 + $0x520] sm:$0xff]
    %v357 = vld [vmem:[%s3 + $0x528] sm:$0xff]
    %v358 = vld [vmem:[%s3 + $0x530] sm:$0xff]
    %v359 = vld [vmem:[%s3 + $0x538] sm:$0xff]
    %v360 = vld [vmem:[%s3 + $0x540] sm:$0xff]
    %v361 = vld [vmem:[%s3 + $0x548] sm:$0xff]
    %v362 = vld [vmem:[%s3 + $0x550] sm:$0xff]
    %v363 = vld [vmem:[%s3 + $0x558] sm:$0xff]
    %v364 = vld [vmem:[%s3 + $0x560] sm:$0xff]
    %v365 = vld [vmem:[%s3 + $0x568] sm:$0xff]
    %v366 = vld [vmem:[%s3 + $0x570] sm:$0xff]
    %v367 = vld [vmem:[%s3 + $0x578] sm:$0xff]
    %v368 = vld [vmem:[%s3 + $0x580] sm:$0xff]
    %v369 = vld [vmem:[%s3 + $0x588] sm:$0xff]
    %v370 = vld [vmem:[%s3 + $0x590] sm:$0xff]
    %v371 = vld [vmem:[%s3 + $0x598] sm:$0xff]
    %v372 = vld [vmem:[%s3 + $0x5a0] sm:$0xff]
    %v373 = vld [vmem:[%s3 + $0x5a8] sm:$0xff]
    %v374 = vld [vmem:[%s3 + $0x5b0] sm:$0xff]
    %v375 = vld [vmem:[%s3 + $0x5b8] sm:$0xff]
    %v376 = vld [vmem:[%s3 + $0x5c0] sm:$0xff]
    %v377 = vld [vmem:[%s3 + $0x5c8] sm:$0xff]
    %v378 = vld [vmem:[%s3 + $0x5d0] sm:$0xff]
    %v379 = vld [vmem:[%s3 + $0x5d8] sm:$0xff]
    %v380 = vld [vmem:[%s3 + $0x5e0] sm:$0xff]
    %v381 = vld [vmem:[%s3 + $0x5e8] sm:$0xff]
    %v382 = vld [vmem:[%s3 + $0x5f0] sm:$0xff]
    %v383 = vld [vmem:[%s3 + $0x5f8] sm:$0xff]
    %v384 = vld [vmem:[%s3 + $0x600] sm:$0xff]
    %v385 = vld [vmem:[%s3 + $0x608] sm:$0xff]
    %v386 = vld [vmem:[%s3 + $0x610] sm:$0xff]
    %v387 = vld [vmem:[%s3 + $0x618] sm:$0xff]
    %v388 = vld [vmem:[%s3 + $0x620] sm:$0xff]
    %v389 = vld [vmem:[%s3 + $0x628] sm:$0xff]
    %v390 = vld [vmem:[%s3 + $0x630] sm:$0xff]
    %v391 = vld [vmem:[%s3 + $0x638] sm:$0xff]
    %v392 = vld [vmem:[%s3 + $0x640] sm:$0xff]
    %v393 = vld [vmem:[%s3 + $0x648] sm:$0xff]
    %v394 = vld [vmem:[%s3 + $0x650] sm:$0xff]
    %v395 = vld [vmem:[%s3 + $0x658] sm:$0xff]
    %v396 = vld [vmem:[%s3 + $0x660] sm:$0xff]
    %v397 = vld [vmem:[%s3 + $0x668] sm:$0xff]
    %v398 = vld [vmem:[%s3 + $0x670] sm:$0xff]
    %v399 = vld [vmem:[%s3 + $0x678] sm:$0xff]
    %v400 = vld [vmem:[%s3 + $0x680] sm:$0xff]
    %v401 = vld [vmem:[%s3 + $0x688] sm:$0xff]
    %v402 = vld [vmem:[%s3 + $0x690] sm:$0xff]
    %v403 = vld [vmem:[%s3 + $0x698] sm:$0xff]
    %v404 = vld [vmem:[%s3 + $0x6a0] sm:$0xff]
    %v405 = vld [vmem:[%s3 + $0x6a8] sm:$0xff]
    %v406 = vld [vmem:[%s3 + $0x6b0] sm:$0xff]
    %v407 = vld [vmem:[%s3 + $0x6b8] sm:$0xff]
    %v408 = vld [vmem:[%s3 + $0x6c0] sm:$0xff]
    %v409 = vld [vmem:[%s3 + $0x6c8] sm:$0xff]
    %v410 = vld [vmem:[%s3 + $0x6d0] sm:$0xff]
    %v411 = vld [vmem:[%s3 + $0x6d8] sm:$0xff]
    %v412 = vld [vmem:[%s3 + $0x6e0] sm:$0xff]
    %v413 = vld [vmem:[%s3 + $0x6e8] sm:$0xff]
    %v414 = vld [vmem:[%s3 + $0x6f0] sm:$0xff]
    %v415 = vld [vmem:[%s3 + $0x6f8] sm:$0xff]
    %v416 = vld [vmem:[%s3 + $0x700] sm:$0xff]
    %v417 = vld [vmem:[%s3 + $0x708] sm:$0xff]
    %v418 = vld [vmem:[%s3 + $0x710] sm:$0xff]
    %v419 = vld [vmem:[%s3 + $0x718] sm:$0xff]
    %v420 = vld [vmem:[%s3 + $0x720] sm:$0xff]
    %v421 = vld [vmem:[%s3 + $0x728] sm:$0xff]
    %v422 = vld [vmem:[%s3 + $0x730] sm:$0xff]
    %v423 = vld [vmem:[%s3 + $0x738] sm:$0xff]
    %v424 = vld [vmem:[%s3 + $0x740] sm:$0xff]
    %v425 = vld [vmem:[%s3 + $0x748] sm:$0xff]
    %v426 = vld [vmem:[%s3 + $0x750] sm:$0xff]
    %v427 = vld [vmem:[%s3 + $0x758] sm:$0xff]
    %v428 = vld [vmem:[%s3 + $0x760] sm:$0xff]
    %v429 = vld [vmem:[%s3 + $0x768] sm:$0xff]
    %v430 = vld [vmem:[%s3 + $0x770] sm:$0xff]
    %v431 = vld [vmem:[%s3 + $0x778] sm:$0xff]
    %v432 = vld [vmem:[%s3 + $0x780] sm:$0xff]
    %v433 = vld [vmem:[%s3 + $0x788] sm:$0xff]
    %v434 = vld [vmem:[%s3 + $0x790] sm:$0xff]
    %v435 = vld [vmem:[%s3 + $0x798] sm:$0xff]
    %v436 = vld [vmem:[%s3 + $0x7a0] sm:$0xff]
    %v437 = vld [vmem:[%s3 + $0x7a8] sm:$0xff]
    %v438 = vld [vmem:[%s3 + $0x7b0] sm:$0xff]
    %v439 = vld [vmem:[%s3 + $0x7b8] sm:$0xff]
    %v440 = vld [vmem:[%s3 + $0x7c0] sm:$0xff]
    %v441 = vld [vmem:[%s3 + $0x7c8] sm:$0xff]
    %v442 = vld [vmem:[%s3 + $0x7d0] sm:$0xff]
    %v443 = vld [vmem:[%s3 + $0x7d8] sm:$0xff]
    %v444 = vld [vmem:[%s3 + $0x7e0] sm:$0xff]
    %v445 = vld [vmem:[%s3 + $0x7e8] sm:$0xff]
    %v446 = vld [vmem:[%s3 + $0x7f0] sm:$0xff]
    %v447 = vld [vmem:[%s3 + $0x7f8] sm:$0xff]
    %v448 = vld [vmem:[%s3 + $0x800] sm:$0xff]
    %v449 = vld [vmem:[%s3 + $0x808] sm:$0xff]
    %v450 = vld [vmem:[%s3 + $0x810] sm:$0xff]
    %v451 = vld [vmem:[%s3 + $0x818] sm:$0xff]
    %v452 = vld [vmem:[%s3 + $0x820] sm:$0xff]
    %v453 = vld [vmem:[%s3 + $0x828] sm:$0xff]
    %v454 = vld [vmem:[%s3 + $0x830] sm:$0xff]
    %v455 = vld [vmem:[%s3 + $0x838] sm:$0xff]
    %v456 = vld [vmem:[%s3 + $0x840] sm:$0xff]
    %v457 = vld [vmem:[%s3 + $0x848] sm:$0xff]
    %v458 = vld [vmem:[%s3 + $0x850] sm:$0xff]
    %v459 = vld [vmem:[%s3 + $0x858] sm:$0xff]
    %v460 = vld [vmem:[%s3 + $0x860] sm:$0xff]
    %v461 = vld [vmem:[%s3 + $0x868] sm:$0xff]
    %v462 = vld [vmem:[%s3 + $0x870] sm:$0xff]
    %v463 = vld [vmem:[%s3 + $0x878] sm:$0xff]
    %v464 = vld [vmem:[%s3 + $0x880] sm:$0xff]
    %v465 = vld [vmem:[%s3 + $0x888] sm:$0xff]
    %v466 = vld [vmem:[%s3 + $0x890] sm:$0xff]
    %v467 = vld [vmem:[%s3 + $0x898] sm:$0xff]
    %v468 = vld [vmem:[%s3 + $0x8a0] sm:$0xff]
    %v469 = vld [vmem:[%s3 + $0x8a8] sm:$0xff]
    %v470 = vld [vmem:[%s3 + $0x8b0] sm:$0xff]
    %v471 = vld [vmem:[%s3 + $0x8b8] sm:$0xff]
    %v472 = vld [vmem:[%s3 + $0x8c0] sm:$0xff]
    %v473 = vld [vmem:[%s3 + $0x8c8] sm:$0xff]
    %v474 = vld [vmem:[%s3 + $0x8d0] sm:$0xff]
    %v475 = vld [vmem:[%s3 + $0x8d8] sm:$0xff]
    %v476 = vld [vmem:[%s3 + $0x8e0] sm:$0xff]
    %v477 = vld [vmem:[%s3 + $0x8e8] sm:$0xff]
    %v478 = vld [vmem:[%s3 + $0x8f0] sm:$0xff]
    %v479 = vld [vmem:[%s3 + $0x8f8] sm:$0xff]
    %v480 = vld [vmem:[%s3 + $0x900] sm:$0xff]
    %v481 = vld [vmem:[%s3 + $0x908] sm:$0xff]
    %v482 = vld [vmem:[%s3 + $0x910] sm:$0xff]
    %v483 = vld [vmem:[%s3 + $0x918] sm:$0xff]
    %v484 = vld [vmem:[%s3 + $0x920] sm:$0xff]
    %v485 = vld [vmem:[%s3 + $0x928] sm:$0xff]
    %v486 = vld [vmem:[%s3 + $0x930] sm:$0xff]
    %v487 = vld [vmem:[%s3 + $0x938] sm:$0xff]
    %v488 = vld [vmem:[%s3 + $0x940] sm:$0xff]
    %v489 = vld [vmem:[%s3 + $0x948] sm:$0xff]
    %v490 = vld [vmem:[%s3 + $0x950] sm:$0xff]
    %v491 = vld [vmem:[%s3 + $0x958] sm:$0xff]
    %v492 = vld [vmem:[%s3 + $0x960] sm:$0xff]
    %v493 = vld [vmem:[%s3 + $0x968] sm:$0xff]
    %v494 = vld [vmem:[%s3 + $0x970] sm:$0xff]
    %v495 = vld [vmem:[%s3 + $0x978] sm:$0xff]
    %v496 = vld [vmem:[%s3 + $0x980] sm:$0xff]
    %v497 = vld [vmem:[%s3 + $0x988] sm:$0xff]
    %v498 = vld [vmem:[%s3 + $0x990] sm:$0xff]
    %v499 = vld [vmem:[%s3 + $0x998] sm:$0xff]
    %v500 = vld [vmem:[%s3 + $0x9a0] sm:$0xff]
    %v501 = vld [vmem:[%s3 + $0x9a8] sm:$0xff]
    %v502 = vld [vmem:[%s3 + $0x9b0] sm:$0xff]
    %v503 = vld [vmem:[%s3 + $0x9b8] sm:$0xff]
    %v504 = vld [vmem:[%s3 + $0x9c0] sm:$0xff]
    %v505 = vld [vmem:[%s3 + $0x9c8] sm:$0xff]
    %v506 = vld [vmem:[%s3 + $0x9d0] sm:$0xff]
    %v507 = vld [vmem:[%s3 + $0x9d8] sm:$0xff]
    %v508 = vld [vmem:[%s3 + $0x9e0] sm:$0xff]
    %v509 = vld [vmem:[%s3 + $0x9e8] sm:$0xff]
    %v510 = vld [vmem:[%s3 + $0x9f0] sm:$0xff]
    %v511 = vld [vmem:[%s3 + $0x9f8] sm:$0xff]
    %v512 = vld [vmem:[%s3 + $0xa00] sm:$0xff]
    %v513 = vld [vmem:[%s3 + $0xa08] sm:$0xff]
    %v514 = vld [vmem:[%s3 + $0xa10] sm:$0xff]
    %v515 = vld [vmem:[%s3 + $0xa18] sm:$0xff]
    %v516 = vld [vmem:[%s3 + $0xa20] sm:$0xff]
    %v517 = vld [vmem:[%s3 + $0xa28] sm:$0xff]
    %v518 = vld [vmem:[%s3 + $0xa30] sm:$0xff]
    %v519 = vld [vmem:[%s3 + $0xa38] sm:$0xff]
    %v520 = vld [vmem:[%s3 + $0xa40] sm:$0xff]
    %v521 = vld [vmem:[%s3 + $0xa48] sm:$0xff]
    %v522 = vld [vmem:[%s3 + $0xa50] sm:$0xff]
    %v523 = vld [vmem:[%s3 + $0xa58] sm:$0xff]
    %v524 = vld [vmem:[%s3 + $0xa60] sm:$0xff]
    %v525 = vld [vmem:[%s3 + $0xa68] sm:$0xff]
    %v526 = vld [vmem:[%s3 + $0xa70] sm:$0xff]
    %v527 = vld [vmem:[%s3 + $0xa78] sm:$0xff]
    %v528 = vld [vmem:[%s3 + $0xa80] sm:$0xff]
    %v529 = vld [vmem:[%s3 + $0xa88] sm:$0xff]
    %v530 = vld [vmem:[%s3 + $0xa90] sm:$0xff]
    %v531 = vld [vmem:[%s3 + $0xa98] sm:$0xff]
    %v532 = vld [vmem:[%s3 + $0xaa0] sm:$0xff]
    %v533 = vld [vmem:[%s3 + $0xaa8] sm:$0xff]
    %v534 = vld [vmem:[%s3 + $0xab0] sm:$0xff]
    %v535 = vld [vmem:[%s3 + $0xab8] sm:$0xff]
    %v536 = vld [vmem:[%s3 + $0xac0] sm:$0xff]
    %v537 = vld [vmem:[%s3 + $0xac8] sm:$0xff]
    %v538 = vld [vmem:[%s3 + $0xad0] sm:$0xff]
    %v539 = vld [vmem:[%s3 + $0xad8] sm:$0xff]
    %v540 = vld [vmem:[%s3 + $0xae0] sm:$0xff]
    %v541 = vld [vmem:[%s3 + $0xae8] sm:$0xff]
    %v542 = vld [vmem:[%s3 + $0xaf0] sm:$0xff]
    %v543 = vld [vmem:[%s3 + $0xaf8] sm:$0xff]
    %v544 = vld [vmem:[%s3 + $0xb00] sm:$0xff]
    %v545 = vld [vmem:[%s3 + $0xb08] sm:$0xff]
    %v546 = vld [vmem:[%s3 + $0xb10] sm:$0xff]
    %v547 = vld [vmem:[%s3 + $0xb18] sm:$0xff]
    %v548 = vld [vmem:[%s3 + $0xb20] sm:$0xff]
    %v549 = vld [vmem:[%s3 + $0xb28] sm:$0xff]
    %v550 = vld [vmem:[%s3 + $0xb30] sm:$0xff]
    %v551 = vld [vmem:[%s3 + $0xb38] sm:$0xff]
    %v552 = vld [vmem:[%s3 + $0xb40] sm:$0xff]
    %v553 = vld [vmem:[%s3 + $0xb48] sm:$0xff]
    %v554 = vld [vmem:[%s3 + $0xb50] sm:$0xff]
    %v555 = vld [vmem:[%s3 + $0xb58] sm:$0xff]
    %v556 = vld [vmem:[%s3 + $0xb60] sm:$0xff]
    %v557 = vld [vmem:[%s3 + $0xb68] sm:$0xff]
    %v558 = vld [vmem:[%s3 + $0xb70] sm:$0xff]
    %v559 = vld [vmem:[%s3 + $0xb78] sm:$0xff]
    %v560 = vld [vmem:[%s3 + $0xb80] sm:$0xff]
    %v561 = vld [vmem:[%s3 + $0xb88] sm:$0xff]
    %v562 = vld [vmem:[%s3 + $0xb90] sm:$0xff]
    %v563 = vld [vmem:[%s3 + $0xb98] sm:$0xff]
    %v564 = vld [vmem:[%s3 + $0xba0] sm:$0xff]
    %v565 = vld [vmem:[%s3 + $0xba8] sm:$0xff]
    %v566 = vld [vmem:[%s3 + $0xbb0] sm:$0xff]
    %v567 = vld [vmem:[%s3 + $0xbb8] sm:$0xff]
    %v568 = vld [vmem:[%s3 + $0xbc0] sm:$0xff]
    %v569 = vld [vmem:[%s3 + $0xbc8] sm:$0xff]
    %v570 = vld [vmem:[%s3 + $0xbd0] sm:$0xff]
    %v571 = vld [vmem:[%s3 + $0xbd8] sm:$0xff]
    %v572 = vld [vmem:[%s3 + $0xbe0] sm:$0xff]
    %v573 = vld [vmem:[%s3 + $0xbe8] sm:$0xff]
    %v574 = vld [vmem:[%s3 + $0xbf0] sm:$0xff]
    %v575 = vld [vmem:[%s3 + $0xbf8] sm:$0xff]
    %v576 = vld [vmem:[%s3 + $0xc00] sm:$0xff]
    %v577 = vld [vmem:[%s3 + $0xc08] sm:$0xff]
    %v578 = vld [vmem:[%s3 + $0xc10] sm:$0xff]
    %v579 = vld [vmem:[%s3 + $0xc18] sm:$0xff]
    %v580 = vld [vmem:[%s3 + $0xc20] sm:$0xff]
    %v581 = vld [vmem:[%s3 + $0xc28] sm:$0xff]
    %v582 = vld [vmem:[%s3 + $0xc30] sm:$0xff]
    %v583 = vld [vmem:[%s3 + $0xc38] sm:$0xff]
    %v584 = vld [vmem:[%s3 + $0xc40] sm:$0xff]
    %v585 = vld [vmem:[%s3 + $0xc48] sm:$0xff]
    %v586 = vld [vmem:[%s3 + $0xc50] sm:$0xff]
    %v587 = vld [vmem:[%s3 + $0xc58] sm:$0xff]
    %v588 = vld [vmem:[%s3 + $0xc60] sm:$0xff]
    %v589 = vld [vmem:[%s3 + $0xc68] sm:$0xff]
    %v590 = vld [vmem:[%s3 + $0xc70] sm:$0xff]
    %v591 = vld [vmem:[%s3 + $0xc78] sm:$0xff]
    %v592 = vld [vmem:[%s3 + $0xc80] sm:$0xff]
    %v593 = vld [vmem:[%s3 + $0xc88] sm:$0xff]
    %v594 = vld [vmem:[%s3 + $0xc90] sm:$0xff]
    %v595 = vld [vmem:[%s3 + $0xc98] sm:$0xff]
    %v596 = vld [vmem:[%s3 + $0xca0] sm:$0xff]
    %v597 = vld [vmem:[%s3 + $0xca8] sm:$0xff]
    %v598 = vld [vmem:[%s3 + $0xcb0] sm:$0xff]
    %v599 = vld [vmem:[%s3 + $0xcb8] sm:$0xff]
    %v600 = vld [vmem:[%s3 + $0xcc0] sm:$0xff]
    %v601 = vld [vmem:[%s3 + $0xcc8] sm:$0xff]
    %v602 = vld [vmem:[%s3 + $0xcd0] sm:$0xff]
    %v603 = vld [vmem:[%s3 + $0xcd8] sm:$0xff]
    %v604 = vld [vmem:[%s3 + $0xce0] sm:$0xff]
    %v605 = vld [vmem:[%s3 + $0xce8] sm:$0xff]
    %v606 = vld [vmem:[%s3 + $0xcf0] sm:$0xff]
    %v607 = vld [vmem:[%s3 + $0xcf8] sm:$0xff]
    %v608 = vld [vmem:[%s3 + $0xd00] sm:$0xff]
    %v609 = vld [vmem:[%s3 + $0xd08] sm:$0xff]
    %v610 = vld [vmem:[%s3 + $0xd10] sm:$0xff]
    %v611 = vld [vmem:[%s3 + $0xd18] sm:$0xff]
    %v612 = vld [vmem:[%s3 + $0xd20] sm:$0xff]
    %v613 = vld [vmem:[%s3 + $0xd28] sm:$0xff]
    %v614 = vld [vmem:[%s3 + $0xd30] sm:$0xff]
    %v615 = vld [vmem:[%s3 + $0xd38] sm:$0xff]
    %v616 = vld [vmem:[%s3 + $0xd40] sm:$0xff]
    %v617 = vld [vmem:[%s3 + $0xd48] sm:$0xff]
    %v618 = vld [vmem:[%s3 + $0xd50] sm:$0xff]
    %v619 = vld [vmem:[%s3 + $0xd58] sm:$0xff]
    %v620 = vld [vmem:[%s3 + $0xd60] sm:$0xff]
    %v621 = vld [vmem:[%s3 + $0xd68] sm:$0xff]
    %v622 = vld [vmem:[%s3 + $0xd70] sm:$0xff]
    %v623 = vld [vmem:[%s3 + $0xd78] sm:$0xff]
    %v624 = vld [vmem:[%s3 + $0xd80] sm:$0xff]
    %v625 = vld [vmem:[%s3 + $0xd88] sm:$0xff]
    %v626 = vld [vmem:[%s3 + $0xd90] sm:$0xff]
    %v627 = vld [vmem:[%s3 + $0xd98] sm:$0xff]
    %v628 = vld [vmem:[%s3 + $0xda0] sm:$0xff]
    %v629 = vld [vmem:[%s3 + $0xda8] sm:$0xff]
    %v630 = vld [vmem:[%s3 + $0xdb0] sm:$0xff]
    %v631 = vld [vmem:[%s3 + $0xdb8] sm:$0xff]
    %v632 = vld [vmem:[%s3 + $0xdc0] sm:$0xff]
    %v633 = vld [vmem:[%s3 + $0xdc8] sm:$0xff]
    %v634 = vld [vmem:[%s3 + $0xdd0] sm:$0xff]
    %v635 = vld [vmem:[%s3 + $0xdd8] sm:$0xff]
    %v636 = vld [vmem:[%s3 + $0xde0] sm:$0xff]
    %v637 = vld [vmem:[%s3 + $0xde8] sm:$0xff]
    %v638 = vld [vmem:[%s3 + $0xdf0] sm:$0xff]
    %v639 = vld [vmem:[%s3 + $0xdf8] sm:$0xff]
    %v640 = vld [vmem:[%s3 + $0xe00] sm:$0xff]
    %v641 = vld [vmem:[%s3 + $0xe08] sm:$0xff]
    %v642 = vld [vmem:[%s3 + $0xe10] sm:$0xff]
    %v643 = vld [vmem:[%s3 + $0xe18] sm:$0xff]
    %v644 = vld [vmem:[%s3 + $0xe20] sm:$0xff]
    %v645 = vld [vmem:[%s3 + $0xe28] sm:$0xff]
    %v646 = vld [vmem:[%s3 + $0xe30] sm:$0xff]
    %v647 = vld [vmem:[%s3 + $0xe38] sm:$0xff]
    %v648 = vld [vmem:[%s3 + $0xe40] sm:$0xff]
    %v649 = vld [vmem:[%s3 + $0xe48] sm:$0xff]
    %v650 = vld [vmem:[%s3 + $0xe50] sm:$0xff]
    %v651 = vld [vmem:[%s3 + $0xe58] sm:$0xff]
    %v652 = vld [vmem:[%s3 + $0xe60] sm:$0xff]
    %v653 = vld [vmem:[%s3 + $0xe68] sm:$0xff]
    %v654 = vld [vmem:[%s3 + $0xe70] sm:$0xff]
    %v655 = vld [vmem:[%s3 + $0xe78] sm:$0xff]
    %v656 = vld [vmem:[%s3 + $0xe80] sm:$0xff]
    %v657 = vld [vmem:[%s3 + $0xe88] sm:$0xff]
    %v658 = vld [vmem:[%s3 + $0xe90] sm:$0xff]
    %v659 = vld [vmem:[%s3 + $0xe98] sm:$0xff]
    %v660 = vld [vmem:[%s3 + $0xea0] sm:$0xff]
    %v661 = vld [vmem:[%s3 + $0xea8] sm:$0xff]
    %v662 = vld [vmem:[%s3 + $0xeb0] sm:$0xff]
    %v663 = vld [vmem:[%s3 + $0xeb8] sm:$0xff]
    %v664 = vld [vmem:[%s3 + $0xec0] sm:$0xff]
    %v665 = vld [vmem:[%s3 + $0xec8] sm:$0xff]
    %v666 = vld [vmem:[%s3 + $0xed0] sm:$0xff]
    %v667 = vld [vmem:[%s3 + $0xed8] sm:$0xff]
    %v668 = vld [vmem:[%s3 + $0xee0] sm:$0xff]
    %v669 = vld [vmem:[%s3 + $0xee8] sm:$0xff]
    %v670 = vld [vmem:[%s3 + $0xef0] sm:$0xff]
    %v671 = vld [vmem:[%s3 + $0xef8] sm:$0xff]
    %v672 = vld [vmem:[%s3 + $0xf00] sm:$0xff]
    %v673 = vld [vmem:[%s3 + $0xf08] sm:$0xff]
    %v674 = vld [vmem:[%s3 + $0xf10] sm:$0xff]
    %v675 = vld [vmem:[%s3 + $0xf18] sm:$0xff]
    %v676 = vld [vmem:[%s3 + $0xf20] sm:$0xff]
    %v677 = vld [vmem:[%s3 + $0xf28] sm:$0xff]
    %v678 = vld [vmem:[%s3 + $0xf30] sm:$0xff]
    %v679 = vld [vmem:[%s3 + $0xf38] sm:$0xff]
    %v680 = vld [vmem:[%s3 + $0xf40] sm:$0xff]
    %v681 = vld [vmem:[%s3 + $0xf48] sm:$0xff]
    %v682 = vld [vmem:[%s3 + $0xf50] sm:$0xff]
    %v683 = vld [vmem:[%s3 + $0xf58] sm:$0xff]
    %v684 = vld [vmem:[%s3 + $0xf60] sm:$0xff]
    %v685 = vld [vmem:[%s3 + $0xf68] sm:$0xff]
    %v686 = vld [vmem:[%s3 + $0xf70] sm:$0xff]
    %v687 = vld [vmem:[%s3 + $0xf78] sm:$0xff]
    %v688 = vld [vmem:[%s3 + $0xf80] sm:$0xff]
    %v689 = vld [vmem:[%s3 + $0xf88] sm:$0xff]
    %v690 = vld [vmem:[%s3 + $0xf90] sm:$0xff]
    %v691 = vld [vmem:[%s3 + $0xf98] sm:$0xff]
    %v692 = vld [vmem:[%s3 + $0xfa0] sm:$0xff]
    %v693 = vld [vmem:[%s3 + $0xfa8] sm:$0xff]
    %v694 = vld [vmem:[%s3 + $0xfb0] sm:$0xff]
    %v695 = vld [vmem:[%s3 + $0xfb8] sm:$0xff]
    %v696 = vld [vmem:[%s3 + $0xfc0] sm:$0xff]
    %v697 = vld [vmem:[%s3 + $0xfc8] sm:$0xff]
    %v698 = vld [vmem:[%s3 + $0xfd0] sm:$0xff]
    %v699 = vld [vmem:[%s3 + $0xfd8] sm:$0xff]
    %v700 = vld [vmem:[%s3 + $0xfe0] sm:$0xff]
    %v701 = vld [vmem:[%s3 + $0xfe8] sm:$0xff]
    %v702 = vld [vmem:[%s3 + $0xff0] sm:$0xff]
    %v703 = vld [vmem:[%s3 + $0xff8] sm:$0xff]
    %v704 = vld [vmem:[%s4] sm:$0xff]
    %v706 = vlaneseq
    %v707 = vshrl.u32 %v706, 7
    %v708 = vsub.s32 0, %v707
    %v709 = vrot.slane %v704, %v708
    %v710 = vlaneseq
    %v711 = vshrl.u32 %v710, 7
    %v712 = vsub.s32 1, %v711
    %v713 = vrot.slane %v704, %v712
    %v714 = vlaneseq
    %v715 = vshrl.u32 %v714, 7
    %v716 = vsub.s32 2, %v715
    %v717 = vrot.slane %v704, %v716
    %v718 = vlaneseq
    %v719 = vshrl.u32 %v718, 7
    %v720 = vsub.s32 3, %v719
    %v721 = vrot.slane %v704, %v720
    %v722 = vlaneseq
    %v723 = vshrl.u32 %v722, 7
    %v724 = vsub.s32 4, %v723
    %v725 = vrot.slane %v704, %v724
    %v726 = vlaneseq
    %v727 = vshrl.u32 %v726, 7
    %v728 = vsub.s32 5, %v727
    %v729 = vrot.slane %v704, %v728
    %v730 = vlaneseq
    %v731 = vshrl.u32 %v730, 7
    %v732 = vsub.s32 6, %v731
    %v733 = vrot.slane %v704, %v732
    %v734 = vlaneseq
    %v735 = vshrl.u32 %v734, 7
    %v736 = vsub.s32 7, %v735
    %v737 = vrot.slane %v704, %v736
    %v747 = vcombine.high %v38, %v38
    %v749 = vunpack.c.l.s4 1966171168
    %v750 = vunpack.c.0.s8 %v749
    %v751 = vlaneseq
    %v752 = vshrl.u32 %v751, 7
    %v753 = vsub.s32 %v750, %v752
    %v754 = vrot.slane %v38, %v753
    %v756 = vunpack.c.l.s4 1966171168
    %v757 = vunpack.c.0.s8 %v756
    %v758 = vlaneseq
    %v759 = vshrl.u32 %v758, 7
    %v760 = vsub.s32 %v757, %v759
    %v761 = vrot.slane %v747, %v760
    %v762 = vcombine.high %v754, %v754
    %v763 = vcombine.high %v761, %v761
    %v765 = vunpack.c.l.s4 1966171168
    %v766 = vunpack.c.0.s8 %v765
    %v767 = vlaneseq
    %v768 = vshrl.u32 %v767, 7
    %v769 = vsub.s32 %v766, %v768
    %v770 = vrot.slane %v754, %v769
    %v772 = vunpack.c.l.s4 1966171168
    %v773 = vunpack.c.0.s8 %v772
    %v774 = vlaneseq
    %v775 = vshrl.u32 %v774, 7
    %v776 = vsub.s32 %v773, %v775
    %v777 = vrot.slane %v761, %v776
    %v779 = vunpack.c.l.s4 1966171168
    %v780 = vunpack.c.0.s8 %v779
    %v781 = vlaneseq
    %v782 = vshrl.u32 %v781, 7
    %v783 = vsub.s32 %v780, %v782
    %v784 = vrot.slane %v762, %v783
    %v786 = vunpack.c.l.s4 1966171168
    %v787 = vunpack.c.0.s8 %v786
    %v788 = vlaneseq
    %v789 = vshrl.u32 %v788, 7
    %v790 = vsub.s32 %v787, %v789
    %v791 = vrot.slane %v763, %v790
    %v792 = vcombine.high %v770, %v770
    %v793 = vcombine.high %v777, %v777
    %v794 = vcombine.high %v784, %v784
    %v795 = vcombine.high %v791, %v791
    %v1316 = vunpack.c.l.b16 %v192
    %v1317 = vunpack.c.h.b16 %v192
    %v1318 = vunpack.c.l.b16 %v193
    %v1319 = vunpack.c.h.b16 %v193
    %v1320 = vunpack.c.l.b16 %v194
    %v1321 = vunpack.c.h.b16 %v194
    %v1322 = vunpack.c.l.b16 %v195
    %v1323 = vunpack.c.h.b16 %v195
    %v1324 = vunpack.c.l.b16 %v196
    %v1325 = vunpack.c.h.b16 %v196
    %v1326 = vunpack.c.l.b16 %v197
    %v1327 = vunpack.c.h.b16 %v197
    %v1328 = vunpack.c.l.b16 %v198
    %v1329 = vunpack.c.h.b16 %v198
    %v1330 = vunpack.c.l.b16 %v199
    %v1331 = vunpack.c.h.b16 %v199
    %v1332 = vunpack.c.l.b16 %v200
    %v1333 = vunpack.c.h.b16 %v200
    %v1334 = vunpack.c.l.b16 %v201
    %v1335 = vunpack.c.h.b16 %v201
    %v1336 = vunpack.c.l.b16 %v202
    %v1337 = vunpack.c.h.b16 %v202
    %v1338 = vunpack.c.l.b16 %v203
    %v1339 = vunpack.c.h.b16 %v203
    %v1340 = vunpack.c.l.b16 %v204
    %v1341 = vunpack.c.h.b16 %v204
    %v1342 = vunpack.c.l.b16 %v205
    %v1343 = vunpack.c.h.b16 %v205
    %v1344 = vunpack.c.l.b16 %v206
    %v1345 = vunpack.c.h.b16 %v206
    %v1346 = vunpack.c.l.b16 %v207
    %v1347 = vunpack.c.h.b16 %v207
    %v1348 = vunpack.c.l.b16 %v208
    %v1349 = vunpack.c.h.b16 %v208
    %v1350 = vunpack.c.l.b16 %v209
    %v1351 = vunpack.c.h.b16 %v209
    %v1352 = vunpack.c.l.b16 %v210
    %v1353 = vunpack.c.h.b16 %v210
    %v1354 = vunpack.c.l.b16 %v211
    %v1355 = vunpack.c.h.b16 %v211
    %v1356 = vunpack.c.l.b16 %v212
    %v1357 = vunpack.c.h.b16 %v212
    %v1358 = vunpack.c.l.b16 %v213
    %v1359 = vunpack.c.h.b16 %v213
    %v1360 = vunpack.c.l.b16 %v214
    %v1361 = vunpack.c.h.b16 %v214
    %v1362 = vunpack.c.l.b16 %v215
    %v1363 = vunpack.c.h.b16 %v215
    %v1364 = vunpack.c.l.b16 %v216
    %v1365 = vunpack.c.h.b16 %v216
    %v1366 = vunpack.c.l.b16 %v217
    %v1367 = vunpack.c.h.b16 %v217
    %v1368 = vunpack.c.l.b16 %v218
    %v1369 = vunpack.c.h.b16 %v218
    %v1370 = vunpack.c.l.b16 %v219
    %v1371 = vunpack.c.h.b16 %v219
    %v1372 = vunpack.c.l.b16 %v220
    %v1373 = vunpack.c.h.b16 %v220
    %v1374 = vunpack.c.l.b16 %v221
    %v1375 = vunpack.c.h.b16 %v221
    %v1376 = vunpack.c.l.b16 %v222
    %v1377 = vunpack.c.h.b16 %v222
    %v1378 = vunpack.c.l.b16 %v223
    %v1379 = vunpack.c.h.b16 %v223
    %v1380 = vunpack.c.l.b16 %v224
    %v1381 = vunpack.c.h.b16 %v224
    %v1382 = vunpack.c.l.b16 %v225
    %v1383 = vunpack.c.h.b16 %v225
    %v1384 = vunpack.c.l.b16 %v226
    %v1385 = vunpack.c.h.b16 %v226
    %v1386 = vunpack.c.l.b16 %v227
    %v1387 = vunpack.c.h.b16 %v227
    %v1388 = vunpack.c.l.b16 %v228
    %v1389 = vunpack.c.h.b16 %v228
    %v1390 = vunpack.c.l.b16 %v229
    %v1391 = vunpack.c.h.b16 %v229
    %v1392 = vunpack.c.l.b16 %v230
    %v1393 = vunpack.c.h.b16 %v230
    %v1394 = vunpack.c.l.b16 %v231
    %v1395 = vunpack.c.h.b16 %v231
    %v1396 = vunpack.c.l.b16 %v232
    %v1397 = vunpack.c.h.b16 %v232
    %v1398 = vunpack.c.l.b16 %v233
    %v1399 = vunpack.c.h.b16 %v233
    %v1400 = vunpack.c.l.b16 %v234
    %v1401 = vunpack.c.h.b16 %v234
    %v1402 = vunpack.c.l.b16 %v235
    %v1403 = vunpack.c.h.b16 %v235
    %v1404 = vunpack.c.l.b16 %v236
    %v1405 = vunpack.c.h.b16 %v236
    %v1406 = vunpack.c.l.b16 %v237
    %v1407 = vunpack.c.h.b16 %v237
    %v1408 = vunpack.c.l.b16 %v238
    %v1409 = vunpack.c.h.b16 %v238
    %v1410 = vunpack.c.l.b16 %v239
    %v1411 = vunpack.c.h.b16 %v239
    %v1412 = vunpack.c.l.b16 %v240
    %v1413 = vunpack.c.h.b16 %v240
    %v1414 = vunpack.c.l.b16 %v241
    %v1415 = vunpack.c.h.b16 %v241
    %v1416 = vunpack.c.l.b16 %v242
    %v1417 = vunpack.c.h.b16 %v242
    %v1418 = vunpack.c.l.b16 %v243
    %v1419 = vunpack.c.h.b16 %v243
    %v1420 = vunpack.c.l.b16 %v244
    %v1421 = vunpack.c.h.b16 %v244
    %v1422 = vunpack.c.l.b16 %v245
    %v1423 = vunpack.c.h.b16 %v245
    %v1424 = vunpack.c.l.b16 %v246
    %v1425 = vunpack.c.h.b16 %v246
    %v1426 = vunpack.c.l.b16 %v247
    %v1427 = vunpack.c.h.b16 %v247
    %v1428 = vunpack.c.l.b16 %v248
    %v1429 = vunpack.c.h.b16 %v248
    %v1430 = vunpack.c.l.b16 %v249
    %v1431 = vunpack.c.h.b16 %v249
    %v1432 = vunpack.c.l.b16 %v250
    %v1433 = vunpack.c.h.b16 %v250
    %v1434 = vunpack.c.l.b16 %v251
    %v1435 = vunpack.c.h.b16 %v251
    %v1436 = vunpack.c.l.b16 %v252
    %v1437 = vunpack.c.h.b16 %v252
    %v1438 = vunpack.c.l.b16 %v253
    %v1439 = vunpack.c.h.b16 %v253
    %v1440 = vunpack.c.l.b16 %v254
    %v1441 = vunpack.c.h.b16 %v254
    %v1442 = vunpack.c.l.b16 %v255
    %v1443 = vunpack.c.h.b16 %v255
    %v1444 = vunpack.c.l.b16 %v256
    %v1445 = vunpack.c.h.b16 %v256
    %v1446 = vunpack.c.l.b16 %v257
    %v1447 = vunpack.c.h.b16 %v257
    %v1448 = vunpack.c.l.b16 %v258
    %v1449 = vunpack.c.h.b16 %v258
    %v1450 = vunpack.c.l.b16 %v259
    %v1451 = vunpack.c.h.b16 %v259
    %v1452 = vunpack.c.l.b16 %v260
    %v1453 = vunpack.c.h.b16 %v260
    %v1454 = vunpack.c.l.b16 %v261
    %v1455 = vunpack.c.h.b16 %v261
    %v1456 = vunpack.c.l.b16 %v262
    %v1457 = vunpack.c.h.b16 %v262
    %v1458 = vunpack.c.l.b16 %v263
    %v1459 = vunpack.c.h.b16 %v263
    %v1460 = vunpack.c.l.b16 %v264
    %v1461 = vunpack.c.h.b16 %v264
    %v1462 = vunpack.c.l.b16 %v265
    %v1463 = vunpack.c.h.b16 %v265
    %v1464 = vunpack.c.l.b16 %v266
    %v1465 = vunpack.c.h.b16 %v266
    %v1466 = vunpack.c.l.b16 %v267
    %v1467 = vunpack.c.h.b16 %v267
    %v1468 = vunpack.c.l.b16 %v268
    %v1469 = vunpack.c.h.b16 %v268
    %v1470 = vunpack.c.l.b16 %v269
    %v1471 = vunpack.c.h.b16 %v269
    %v1472 = vunpack.c.l.b16 %v270
    %v1473 = vunpack.c.h.b16 %v270
    %v1474 = vunpack.c.l.b16 %v271
    %v1475 = vunpack.c.h.b16 %v271
    %v1476 = vunpack.c.l.b16 %v272
    %v1477 = vunpack.c.h.b16 %v272
    %v1478 = vunpack.c.l.b16 %v273
    %v1479 = vunpack.c.h.b16 %v273
    %v1480 = vunpack.c.l.b16 %v274
    %v1481 = vunpack.c.h.b16 %v274
    %v1482 = vunpack.c.l.b16 %v275
    %v1483 = vunpack.c.h.b16 %v275
    %v1484 = vunpack.c.l.b16 %v276
    %v1485 = vunpack.c.h.b16 %v276
    %v1486 = vunpack.c.l.b16 %v277
    %v1487 = vunpack.c.h.b16 %v277
    %v1488 = vunpack.c.l.b16 %v278
    %v1489 = vunpack.c.h.b16 %v278
    %v1490 = vunpack.c.l.b16 %v279
    %v1491 = vunpack.c.h.b16 %v279
    %v1492 = vunpack.c.l.b16 %v280
    %v1493 = vunpack.c.h.b16 %v280
    %v1494 = vunpack.c.l.b16 %v281
    %v1495 = vunpack.c.h.b16 %v281
    %v1496 = vunpack.c.l.b16 %v282
    %v1497 = vunpack.c.h.b16 %v282
    %v1498 = vunpack.c.l.b16 %v283
    %v1499 = vunpack.c.h.b16 %v283
    %v1500 = vunpack.c.l.b16 %v284
    %v1501 = vunpack.c.h.b16 %v284
    %v1502 = vunpack.c.l.b16 %v285
    %v1503 = vunpack.c.h.b16 %v285
    %v1504 = vunpack.c.l.b16 %v286
    %v1505 = vunpack.c.h.b16 %v286
    %v1506 = vunpack.c.l.b16 %v287
    %v1507 = vunpack.c.h.b16 %v287
    %v1508 = vunpack.c.l.b16 %v288
    %v1509 = vunpack.c.h.b16 %v288
    %v1510 = vunpack.c.l.b16 %v289
    %v1511 = vunpack.c.h.b16 %v289
    %v1512 = vunpack.c.l.b16 %v290
    %v1513 = vunpack.c.h.b16 %v290
    %v1514 = vunpack.c.l.b16 %v291
    %v1515 = vunpack.c.h.b16 %v291
    %v1516 = vunpack.c.l.b16 %v292
    %v1517 = vunpack.c.h.b16 %v292
    %v1518 = vunpack.c.l.b16 %v293
    %v1519 = vunpack.c.h.b16 %v293
    %v1520 = vunpack.c.l.b16 %v294
    %v1521 = vunpack.c.h.b16 %v294
    %v1522 = vunpack.c.l.b16 %v295
    %v1523 = vunpack.c.h.b16 %v295
    %v1524 = vunpack.c.l.b16 %v296
    %v1525 = vunpack.c.h.b16 %v296
    %v1526 = vunpack.c.l.b16 %v297
    %v1527 = vunpack.c.h.b16 %v297
    %v1528 = vunpack.c.l.b16 %v298
    %v1529 = vunpack.c.h.b16 %v298
    %v1530 = vunpack.c.l.b16 %v299
    %v1531 = vunpack.c.h.b16 %v299
    %v1532 = vunpack.c.l.b16 %v300
    %v1533 = vunpack.c.h.b16 %v300
    %v1534 = vunpack.c.l.b16 %v301
    %v1535 = vunpack.c.h.b16 %v301
    %v1536 = vunpack.c.l.b16 %v302
    %v1537 = vunpack.c.h.b16 %v302
    %v1538 = vunpack.c.l.b16 %v303
    %v1539 = vunpack.c.h.b16 %v303
    %v1540 = vunpack.c.l.b16 %v304
    %v1541 = vunpack.c.h.b16 %v304
    %v1542 = vunpack.c.l.b16 %v305
    %v1543 = vunpack.c.h.b16 %v305
    %v1544 = vunpack.c.l.b16 %v306
    %v1545 = vunpack.c.h.b16 %v306
    %v1546 = vunpack.c.l.b16 %v307
    %v1547 = vunpack.c.h.b16 %v307
    %v1548 = vunpack.c.l.b16 %v308
    %v1549 = vunpack.c.h.b16 %v308
    %v1550 = vunpack.c.l.b16 %v309
    %v1551 = vunpack.c.h.b16 %v309
    %v1552 = vunpack.c.l.b16 %v310
    %v1553 = vunpack.c.h.b16 %v310
    %v1554 = vunpack.c.l.b16 %v311
    %v1555 = vunpack.c.h.b16 %v311
    %v1556 = vunpack.c.l.b16 %v312
    %v1557 = vunpack.c.h.b16 %v312
    %v1558 = vunpack.c.l.b16 %v313
    %v1559 = vunpack.c.h.b16 %v313
    %v1560 = vunpack.c.l.b16 %v314
    %v1561 = vunpack.c.h.b16 %v314
    %v1562 = vunpack.c.l.b16 %v315
    %v1563 = vunpack.c.h.b16 %v315
    %v1564 = vunpack.c.l.b16 %v316
    %v1565 = vunpack.c.h.b16 %v316
    %v1566 = vunpack.c.l.b16 %v317
    %v1567 = vunpack.c.h.b16 %v317
    %v1568 = vunpack.c.l.b16 %v318
    %v1569 = vunpack.c.h.b16 %v318
    %v1570 = vunpack.c.l.b16 %v319
    %v1571 = vunpack.c.h.b16 %v319
    %v1572 = vunpack.c.l.b16 %v320
    %v1573 = vunpack.c.h.b16 %v320
    %v1574 = vunpack.c.l.b16 %v321
    %v1575 = vunpack.c.h.b16 %v321
    %v1576 = vunpack.c.l.b16 %v322
    %v1577 = vunpack.c.h.b16 %v322
    %v1578 = vunpack.c.l.b16 %v323
    %v1579 = vunpack.c.h.b16 %v323
    %v1580 = vunpack.c.l.b16 %v324
    %v1581 = vunpack.c.h.b16 %v324
    %v1582 = vunpack.c.l.b16 %v325
    %v1583 = vunpack.c.h.b16 %v325
    %v1584 = vunpack.c.l.b16 %v326
    %v1585 = vunpack.c.h.b16 %v326
    %v1586 = vunpack.c.l.b16 %v327
    %v1587 = vunpack.c.h.b16 %v327
    %v1588 = vunpack.c.l.b16 %v328
    %v1589 = vunpack.c.h.b16 %v328
    %v1590 = vunpack.c.l.b16 %v329
    %v1591 = vunpack.c.h.b16 %v329
    %v1592 = vunpack.c.l.b16 %v330
    %v1593 = vunpack.c.h.b16 %v330
    %v1594 = vunpack.c.l.b16 %v331
    %v1595 = vunpack.c.h.b16 %v331
    %v1596 = vunpack.c.l.b16 %v332
    %v1597 = vunpack.c.h.b16 %v332
    %v1598 = vunpack.c.l.b16 %v333
    %v1599 = vunpack.c.h.b16 %v333
    %v1600 = vunpack.c.l.b16 %v334
    %v1601 = vunpack.c.h.b16 %v334
    %v1602 = vunpack.c.l.b16 %v335
    %v1603 = vunpack.c.h.b16 %v335
    %v1604 = vunpack.c.l.b16 %v336
    %v1605 = vunpack.c.h.b16 %v336
    %v1606 = vunpack.c.l.b16 %v337
    %v1607 = vunpack.c.h.b16 %v337
    %v1608 = vunpack.c.l.b16 %v338
    %v1609 = vunpack.c.h.b16 %v338
    %v1610 = vunpack.c.l.b16 %v339
    %v1611 = vunpack.c.h.b16 %v339
    %v1612 = vunpack.c.l.b16 %v340
    %v1613 = vunpack.c.h.b16 %v340
    %v1614 = vunpack.c.l.b16 %v341
    %v1615 = vunpack.c.h.b16 %v341
    %v1616 = vunpack.c.l.b16 %v342
    %v1617 = vunpack.c.h.b16 %v342
    %v1618 = vunpack.c.l.b16 %v343
    %v1619 = vunpack.c.h.b16 %v343
    %v1620 = vunpack.c.l.b16 %v344
    %v1621 = vunpack.c.h.b16 %v344
    %v1622 = vunpack.c.l.b16 %v345
    %v1623 = vunpack.c.h.b16 %v345
    %v1624 = vunpack.c.l.b16 %v346
    %v1625 = vunpack.c.h.b16 %v346
    %v1626 = vunpack.c.l.b16 %v347
    %v1627 = vunpack.c.h.b16 %v347
    %v1628 = vunpack.c.l.b16 %v348
    %v1629 = vunpack.c.h.b16 %v348
    %v1630 = vunpack.c.l.b16 %v349
    %v1631 = vunpack.c.h.b16 %v349
    %v1632 = vunpack.c.l.b16 %v350
    %v1633 = vunpack.c.h.b16 %v350
    %v1634 = vunpack.c.l.b16 %v351
    %v1635 = vunpack.c.h.b16 %v351
    %v1636 = vunpack.c.l.b16 %v352
    %v1637 = vunpack.c.h.b16 %v352
    %v1638 = vunpack.c.l.b16 %v353
    %v1639 = vunpack.c.h.b16 %v353
    %v1640 = vunpack.c.l.b16 %v354
    %v1641 = vunpack.c.h.b16 %v354
    %v1642 = vunpack.c.l.b16 %v355
    %v1643 = vunpack.c.h.b16 %v355
    %v1644 = vunpack.c.l.b16 %v356
    %v1645 = vunpack.c.h.b16 %v356
    %v1646 = vunpack.c.l.b16 %v357
    %v1647 = vunpack.c.h.b16 %v357
    %v1648 = vunpack.c.l.b16 %v358
    %v1649 = vunpack.c.h.b16 %v358
    %v1650 = vunpack.c.l.b16 %v359
    %v1651 = vunpack.c.h.b16 %v359
    %v1652 = vunpack.c.l.b16 %v360
    %v1653 = vunpack.c.h.b16 %v360
    %v1654 = vunpack.c.l.b16 %v361
    %v1655 = vunpack.c.h.b16 %v361
    %v1656 = vunpack.c.l.b16 %v362
    %v1657 = vunpack.c.h.b16 %v362
    %v1658 = vunpack.c.l.b16 %v363
    %v1659 = vunpack.c.h.b16 %v363
    %v1660 = vunpack.c.l.b16 %v364
    %v1661 = vunpack.c.h.b16 %v364
    %v1662 = vunpack.c.l.b16 %v365
    %v1663 = vunpack.c.h.b16 %v365
    %v1664 = vunpack.c.l.b16 %v366
    %v1665 = vunpack.c.h.b16 %v366
    %v1666 = vunpack.c.l.b16 %v367
    %v1667 = vunpack.c.h.b16 %v367
    %v1668 = vunpack.c.l.b16 %v368
    %v1669 = vunpack.c.h.b16 %v368
    %v1670 = vunpack.c.l.b16 %v369
    %v1671 = vunpack.c.h.b16 %v369
    %v1672 = vunpack.c.l.b16 %v370
    %v1673 = vunpack.c.h.b16 %v370
    %v1674 = vunpack.c.l.b16 %v371
    %v1675 = vunpack.c.h.b16 %v371
    %v1676 = vunpack.c.l.b16 %v372
    %v1677 = vunpack.c.h.b16 %v372
    %v1678 = vunpack.c.l.b16 %v373
    %v1679 = vunpack.c.h.b16 %v373
    %v1680 = vunpack.c.l.b16 %v374
    %v1681 = vunpack.c.h.b16 %v374
    %v1682 = vunpack.c.l.b16 %v375
    %v1683 = vunpack.c.h.b16 %v375
    %v1684 = vunpack.c.l.b16 %v376
    %v1685 = vunpack.c.h.b16 %v376
    %v1686 = vunpack.c.l.b16 %v377
    %v1687 = vunpack.c.h.b16 %v377
    %v1688 = vunpack.c.l.b16 %v378
    %v1689 = vunpack.c.h.b16 %v378
    %v1690 = vunpack.c.l.b16 %v379
    %v1691 = vunpack.c.h.b16 %v379
    %v1692 = vunpack.c.l.b16 %v380
    %v1693 = vunpack.c.h.b16 %v380
    %v1694 = vunpack.c.l.b16 %v381
    %v1695 = vunpack.c.h.b16 %v381
    %v1696 = vunpack.c.l.b16 %v382
    %v1697 = vunpack.c.h.b16 %v382
    %v1698 = vunpack.c.l.b16 %v383
    %v1699 = vunpack.c.h.b16 %v383
    %v1700 = vunpack.c.l.b16 %v384
    %v1701 = vunpack.c.h.b16 %v384
    %v1702 = vunpack.c.l.b16 %v385
    %v1703 = vunpack.c.h.b16 %v385
    %v1704 = vunpack.c.l.b16 %v386
    %v1705 = vunpack.c.h.b16 %v386
    %v1706 = vunpack.c.l.b16 %v387
    %v1707 = vunpack.c.h.b16 %v387
    %v1708 = vunpack.c.l.b16 %v388
    %v1709 = vunpack.c.h.b16 %v388
    %v1710 = vunpack.c.l.b16 %v389
    %v1711 = vunpack.c.h.b16 %v389
    %v1712 = vunpack.c.l.b16 %v390
    %v1713 = vunpack.c.h.b16 %v390
    %v1714 = vunpack.c.l.b16 %v391
    %v1715 = vunpack.c.h.b16 %v391
    %v1716 = vunpack.c.l.b16 %v392
    %v1717 = vunpack.c.h.b16 %v392
    %v1718 = vunpack.c.l.b16 %v393
    %v1719 = vunpack.c.h.b16 %v393
    %v1720 = vunpack.c.l.b16 %v394
    %v1721 = vunpack.c.h.b16 %v394
    %v1722 = vunpack.c.l.b16 %v395
    %v1723 = vunpack.c.h.b16 %v395
    %v1724 = vunpack.c.l.b16 %v396
    %v1725 = vunpack.c.h.b16 %v396
    %v1726 = vunpack.c.l.b16 %v397
    %v1727 = vunpack.c.h.b16 %v397
    %v1728 = vunpack.c.l.b16 %v398
    %v1729 = vunpack.c.h.b16 %v398
    %v1730 = vunpack.c.l.b16 %v399
    %v1731 = vunpack.c.h.b16 %v399
    %v1732 = vunpack.c.l.b16 %v400
    %v1733 = vunpack.c.h.b16 %v400
    %v1734 = vunpack.c.l.b16 %v401
    %v1735 = vunpack.c.h.b16 %v401
    %v1736 = vunpack.c.l.b16 %v402
    %v1737 = vunpack.c.h.b16 %v402
    %v1738 = vunpack.c.l.b16 %v403
    %v1739 = vunpack.c.h.b16 %v403
    %v1740 = vunpack.c.l.b16 %v404
    %v1741 = vunpack.c.h.b16 %v404
    %v1742 = vunpack.c.l.b16 %v405
    %v1743 = vunpack.c.h.b16 %v405
    %v1744 = vunpack.c.l.b16 %v406
    %v1745 = vunpack.c.h.b16 %v406
    %v1746 = vunpack.c.l.b16 %v407
    %v1747 = vunpack.c.h.b16 %v407
    %v1748 = vunpack.c.l.b16 %v408
    %v1749 = vunpack.c.h.b16 %v408
    %v1750 = vunpack.c.l.b16 %v409
    %v1751 = vunpack.c.h.b16 %v409
    %v1752 = vunpack.c.l.b16 %v410
    %v1753 = vunpack.c.h.b16 %v410
    %v1754 = vunpack.c.l.b16 %v411
    %v1755 = vunpack.c.h.b16 %v411
    %v1756 = vunpack.c.l.b16 %v412
    %v1757 = vunpack.c.h.b16 %v412
    %v1758 = vunpack.c.l.b16 %v413
    %v1759 = vunpack.c.h.b16 %v413
    %v1760 = vunpack.c.l.b16 %v414
    %v1761 = vunpack.c.h.b16 %v414
    %v1762 = vunpack.c.l.b16 %v415
    %v1763 = vunpack.c.h.b16 %v415
    %v1764 = vunpack.c.l.b16 %v416
    %v1765 = vunpack.c.h.b16 %v416
    %v1766 = vunpack.c.l.b16 %v417
    %v1767 = vunpack.c.h.b16 %v417
    %v1768 = vunpack.c.l.b16 %v418
    %v1769 = vunpack.c.h.b16 %v418
    %v1770 = vunpack.c.l.b16 %v419
    %v1771 = vunpack.c.h.b16 %v419
    %v1772 = vunpack.c.l.b16 %v420
    %v1773 = vunpack.c.h.b16 %v420
    %v1774 = vunpack.c.l.b16 %v421
    %v1775 = vunpack.c.h.b16 %v421
    %v1776 = vunpack.c.l.b16 %v422
    %v1777 = vunpack.c.h.b16 %v422
    %v1778 = vunpack.c.l.b16 %v423
    %v1779 = vunpack.c.h.b16 %v423
    %v1780 = vunpack.c.l.b16 %v424
    %v1781 = vunpack.c.h.b16 %v424
    %v1782 = vunpack.c.l.b16 %v425
    %v1783 = vunpack.c.h.b16 %v425
    %v1784 = vunpack.c.l.b16 %v426
    %v1785 = vunpack.c.h.b16 %v426
    %v1786 = vunpack.c.l.b16 %v427
    %v1787 = vunpack.c.h.b16 %v427
    %v1788 = vunpack.c.l.b16 %v428
    %v1789 = vunpack.c.h.b16 %v428
    %v1790 = vunpack.c.l.b16 %v429
    %v1791 = vunpack.c.h.b16 %v429
    %v1792 = vunpack.c.l.b16 %v430
    %v1793 = vunpack.c.h.b16 %v430
    %v1794 = vunpack.c.l.b16 %v431
    %v1795 = vunpack.c.h.b16 %v431
    %v1796 = vunpack.c.l.b16 %v432
    %v1797 = vunpack.c.h.b16 %v432
    %v1798 = vunpack.c.l.b16 %v433
    %v1799 = vunpack.c.h.b16 %v433
    %v1800 = vunpack.c.l.b16 %v434
    %v1801 = vunpack.c.h.b16 %v434
    %v1802 = vunpack.c.l.b16 %v435
    %v1803 = vunpack.c.h.b16 %v435
    %v1804 = vunpack.c.l.b16 %v436
    %v1805 = vunpack.c.h.b16 %v436
    %v1806 = vunpack.c.l.b16 %v437
    %v1807 = vunpack.c.h.b16 %v437
    %v1808 = vunpack.c.l.b16 %v438
    %v1809 = vunpack.c.h.b16 %v438
    %v1810 = vunpack.c.l.b16 %v439
    %v1811 = vunpack.c.h.b16 %v439
    %v1812 = vunpack.c.l.b16 %v440
    %v1813 = vunpack.c.h.b16 %v440
    %v1814 = vunpack.c.l.b16 %v441
    %v1815 = vunpack.c.h.b16 %v441
    %v1816 = vunpack.c.l.b16 %v442
    %v1817 = vunpack.c.h.b16 %v442
    %v1818 = vunpack.c.l.b16 %v443
    %v1819 = vunpack.c.h.b16 %v443
    %v1820 = vunpack.c.l.b16 %v444
    %v1821 = vunpack.c.h.b16 %v444
    %v1822 = vunpack.c.l.b16 %v445
    %v1823 = vunpack.c.h.b16 %v445
    %v1824 = vunpack.c.l.b16 %v446
    %v1825 = vunpack.c.h.b16 %v446
    %v1826 = vunpack.c.l.b16 %v447
    %v1827 = vunpack.c.h.b16 %v447
    %v1828 = vunpack.c.l.b16 %v448
    %v1829 = vunpack.c.h.b16 %v448
    %v1830 = vunpack.c.l.b16 %v449
    %v1831 = vunpack.c.h.b16 %v449
    %v1832 = vunpack.c.l.b16 %v450
    %v1833 = vunpack.c.h.b16 %v450
    %v1834 = vunpack.c.l.b16 %v451
    %v1835 = vunpack.c.h.b16 %v451
    %v1836 = vunpack.c.l.b16 %v452
    %v1837 = vunpack.c.h.b16 %v452
    %v1838 = vunpack.c.l.b16 %v453
    %v1839 = vunpack.c.h.b16 %v453
    %v1840 = vunpack.c.l.b16 %v454
    %v1841 = vunpack.c.h.b16 %v454
    %v1842 = vunpack.c.l.b16 %v455
    %v1843 = vunpack.c.h.b16 %v455
    %v1844 = vunpack.c.l.b16 %v456
    %v1845 = vunpack.c.h.b16 %v456
    %v1846 = vunpack.c.l.b16 %v457
    %v1847 = vunpack.c.h.b16 %v457
    %v1848 = vunpack.c.l.b16 %v458
    %v1849 = vunpack.c.h.b16 %v458
    %v1850 = vunpack.c.l.b16 %v459
    %v1851 = vunpack.c.h.b16 %v459
    %v1852 = vunpack.c.l.b16 %v460
    %v1853 = vunpack.c.h.b16 %v460
    %v1854 = vunpack.c.l.b16 %v461
    %v1855 = vunpack.c.h.b16 %v461
    %v1856 = vunpack.c.l.b16 %v462
    %v1857 = vunpack.c.h.b16 %v462
    %v1858 = vunpack.c.l.b16 %v463
    %v1859 = vunpack.c.h.b16 %v463
    %v1860 = vunpack.c.l.b16 %v464
    %v1861 = vunpack.c.h.b16 %v464
    %v1862 = vunpack.c.l.b16 %v465
    %v1863 = vunpack.c.h.b16 %v465
    %v1864 = vunpack.c.l.b16 %v466
    %v1865 = vunpack.c.h.b16 %v466
    %v1866 = vunpack.c.l.b16 %v467
    %v1867 = vunpack.c.h.b16 %v467
    %v1868 = vunpack.c.l.b16 %v468
    %v1869 = vunpack.c.h.b16 %v468
    %v1870 = vunpack.c.l.b16 %v469
    %v1871 = vunpack.c.h.b16 %v469
    %v1872 = vunpack.c.l.b16 %v470
    %v1873 = vunpack.c.h.b16 %v470
    %v1874 = vunpack.c.l.b16 %v471
    %v1875 = vunpack.c.h.b16 %v471
    %v1876 = vunpack.c.l.b16 %v472
    %v1877 = vunpack.c.h.b16 %v472
    %v1878 = vunpack.c.l.b16 %v473
    %v1879 = vunpack.c.h.b16 %v473
    %v1880 = vunpack.c.l.b16 %v474
    %v1881 = vunpack.c.h.b16 %v474
    %v1882 = vunpack.c.l.b16 %v475
    %v1883 = vunpack.c.h.b16 %v475
    %v1884 = vunpack.c.l.b16 %v476
    %v1885 = vunpack.c.h.b16 %v476
    %v1886 = vunpack.c.l.b16 %v477
    %v1887 = vunpack.c.h.b16 %v477
    %v1888 = vunpack.c.l.b16 %v478
    %v1889 = vunpack.c.h.b16 %v478
    %v1890 = vunpack.c.l.b16 %v479
    %v1891 = vunpack.c.h.b16 %v479
    %v1892 = vunpack.c.l.b16 %v480
    %v1893 = vunpack.c.h.b16 %v480
    %v1894 = vunpack.c.l.b16 %v481
    %v1895 = vunpack.c.h.b16 %v481
    %v1896 = vunpack.c.l.b16 %v482
    %v1897 = vunpack.c.h.b16 %v482
    %v1898 = vunpack.c.l.b16 %v483
    %v1899 = vunpack.c.h.b16 %v483
    %v1900 = vunpack.c.l.b16 %v484
    %v1901 = vunpack.c.h.b16 %v484
    %v1902 = vunpack.c.l.b16 %v485
    %v1903 = vunpack.c.h.b16 %v485
    %v1904 = vunpack.c.l.b16 %v486
    %v1905 = vunpack.c.h.b16 %v486
    %v1906 = vunpack.c.l.b16 %v487
    %v1907 = vunpack.c.h.b16 %v487
    %v1908 = vunpack.c.l.b16 %v488
    %v1909 = vunpack.c.h.b16 %v488
    %v1910 = vunpack.c.l.b16 %v489
    %v1911 = vunpack.c.h.b16 %v489
    %v1912 = vunpack.c.l.b16 %v490
    %v1913 = vunpack.c.h.b16 %v490
    %v1914 = vunpack.c.l.b16 %v491
    %v1915 = vunpack.c.h.b16 %v491
    %v1916 = vunpack.c.l.b16 %v492
    %v1917 = vunpack.c.h.b16 %v492
    %v1918 = vunpack.c.l.b16 %v493
    %v1919 = vunpack.c.h.b16 %v493
    %v1920 = vunpack.c.l.b16 %v494
    %v1921 = vunpack.c.h.b16 %v494
    %v1922 = vunpack.c.l.b16 %v495
    %v1923 = vunpack.c.h.b16 %v495
    %v1924 = vunpack.c.l.b16 %v496
    %v1925 = vunpack.c.h.b16 %v496
    %v1926 = vunpack.c.l.b16 %v497
    %v1927 = vunpack.c.h.b16 %v497
    %v1928 = vunpack.c.l.b16 %v498
    %v1929 = vunpack.c.h.b16 %v498
    %v1930 = vunpack.c.l.b16 %v499
    %v1931 = vunpack.c.h.b16 %v499
    %v1932 = vunpack.c.l.b16 %v500
    %v1933 = vunpack.c.h.b16 %v500
    %v1934 = vunpack.c.l.b16 %v501
    %v1935 = vunpack.c.h.b16 %v501
    %v1936 = vunpack.c.l.b16 %v502
    %v1937 = vunpack.c.h.b16 %v502
    %v1938 = vunpack.c.l.b16 %v503
    %v1939 = vunpack.c.h.b16 %v503
    %v1940 = vunpack.c.l.b16 %v504
    %v1941 = vunpack.c.h.b16 %v504
    %v1942 = vunpack.c.l.b16 %v505
    %v1943 = vunpack.c.h.b16 %v505
    %v1944 = vunpack.c.l.b16 %v506
    %v1945 = vunpack.c.h.b16 %v506
    %v1946 = vunpack.c.l.b16 %v507
    %v1947 = vunpack.c.h.b16 %v507
    %v1948 = vunpack.c.l.b16 %v508
    %v1949 = vunpack.c.h.b16 %v508
    %v1950 = vunpack.c.l.b16 %v509
    %v1951 = vunpack.c.h.b16 %v509
    %v1952 = vunpack.c.l.b16 %v510
    %v1953 = vunpack.c.h.b16 %v510
    %v1954 = vunpack.c.l.b16 %v511
    %v1955 = vunpack.c.h.b16 %v511
    %v1956 = vunpack.c.l.b16 %v512
    %v1957 = vunpack.c.h.b16 %v512
    %v1958 = vunpack.c.l.b16 %v513
    %v1959 = vunpack.c.h.b16 %v513
    %v1960 = vunpack.c.l.b16 %v514
    %v1961 = vunpack.c.h.b16 %v514
    %v1962 = vunpack.c.l.b16 %v515
    %v1963 = vunpack.c.h.b16 %v515
    %v1964 = vunpack.c.l.b16 %v516
    %v1965 = vunpack.c.h.b16 %v516
    %v1966 = vunpack.c.l.b16 %v517
    %v1967 = vunpack.c.h.b16 %v517
    %v1968 = vunpack.c.l.b16 %v518
    %v1969 = vunpack.c.h.b16 %v518
    %v1970 = vunpack.c.l.b16 %v519
    %v1971 = vunpack.c.h.b16 %v519
    %v1972 = vunpack.c.l.b16 %v520
    %v1973 = vunpack.c.h.b16 %v520
    %v1974 = vunpack.c.l.b16 %v521
    %v1975 = vunpack.c.h.b16 %v521
    %v1976 = vunpack.c.l.b16 %v522
    %v1977 = vunpack.c.h.b16 %v522
    %v1978 = vunpack.c.l.b16 %v523
    %v1979 = vunpack.c.h.b16 %v523
    %v1980 = vunpack.c.l.b16 %v524
    %v1981 = vunpack.c.h.b16 %v524
    %v1982 = vunpack.c.l.b16 %v525
    %v1983 = vunpack.c.h.b16 %v525
    %v1984 = vunpack.c.l.b16 %v526
    %v1985 = vunpack.c.h.b16 %v526
    %v1986 = vunpack.c.l.b16 %v527
    %v1987 = vunpack.c.h.b16 %v527
    %v1988 = vunpack.c.l.b16 %v528
    %v1989 = vunpack.c.h.b16 %v528
    %v1990 = vunpack.c.l.b16 %v529
    %v1991 = vunpack.c.h.b16 %v529
    %v1992 = vunpack.c.l.b16 %v530
    %v1993 = vunpack.c.h.b16 %v530
    %v1994 = vunpack.c.l.b16 %v531
    %v1995 = vunpack.c.h.b16 %v531
    %v1996 = vunpack.c.l.b16 %v532
    %v1997 = vunpack.c.h.b16 %v532
    %v1998 = vunpack.c.l.b16 %v533
    %v1999 = vunpack.c.h.b16 %v533
    %v2000 = vunpack.c.l.b16 %v534
    %v2001 = vunpack.c.h.b16 %v534
    %v2002 = vunpack.c.l.b16 %v535
    %v2003 = vunpack.c.h.b16 %v535
    %v2004 = vunpack.c.l.b16 %v536
    %v2005 = vunpack.c.h.b16 %v536
    %v2006 = vunpack.c.l.b16 %v537
    %v2007 = vunpack.c.h.b16 %v537
    %v2008 = vunpack.c.l.b16 %v538
    %v2009 = vunpack.c.h.b16 %v538
    %v2010 = vunpack.c.l.b16 %v539
    %v2011 = vunpack.c.h.b16 %v539
    %v2012 = vunpack.c.l.b16 %v540
    %v2013 = vunpack.c.h.b16 %v540
    %v2014 = vunpack.c.l.b16 %v541
    %v2015 = vunpack.c.h.b16 %v541
    %v2016 = vunpack.c.l.b16 %v542
    %v2017 = vunpack.c.h.b16 %v542
    %v2018 = vunpack.c.l.b16 %v543
    %v2019 = vunpack.c.h.b16 %v543
    %v2020 = vunpack.c.l.b16 %v544
    %v2021 = vunpack.c.h.b16 %v544
    %v2022 = vunpack.c.l.b16 %v545
    %v2023 = vunpack.c.h.b16 %v545
    %v2024 = vunpack.c.l.b16 %v546
    %v2025 = vunpack.c.h.b16 %v546
    %v2026 = vunpack.c.l.b16 %v547
    %v2027 = vunpack.c.h.b16 %v547
    %v2028 = vunpack.c.l.b16 %v548
    %v2029 = vunpack.c.h.b16 %v548
    %v2030 = vunpack.c.l.b16 %v549
    %v2031 = vunpack.c.h.b16 %v549
    %v2032 = vunpack.c.l.b16 %v550
    %v2033 = vunpack.c.h.b16 %v550
    %v2034 = vunpack.c.l.b16 %v551
    %v2035 = vunpack.c.h.b16 %v551
    %v2036 = vunpack.c.l.b16 %v552
    %v2037 = vunpack.c.h.b16 %v552
    %v2038 = vunpack.c.l.b16 %v553
    %v2039 = vunpack.c.h.b16 %v553
    %v2040 = vunpack.c.l.b16 %v554
    %v2041 = vunpack.c.h.b16 %v554
    %v2042 = vunpack.c.l.b16 %v555
    %v2043 = vunpack.c.h.b16 %v555
    %v2044 = vunpack.c.l.b16 %v556
    %v2045 = vunpack.c.h.b16 %v556
    %v2046 = vunpack.c.l.b16 %v557
    %v2047 = vunpack.c.h.b16 %v557
    %v2048 = vunpack.c.l.b16 %v558
    %v2049 = vunpack.c.h.b16 %v558
    %v2050 = vunpack.c.l.b16 %v559
    %v2051 = vunpack.c.h.b16 %v559
    %v2052 = vunpack.c.l.b16 %v560
    %v2053 = vunpack.c.h.b16 %v560
    %v2054 = vunpack.c.l.b16 %v561
    %v2055 = vunpack.c.h.b16 %v561
    %v2056 = vunpack.c.l.b16 %v562
    %v2057 = vunpack.c.h.b16 %v562
    %v2058 = vunpack.c.l.b16 %v563
    %v2059 = vunpack.c.h.b16 %v563
    %v2060 = vunpack.c.l.b16 %v564
    %v2061 = vunpack.c.h.b16 %v564
    %v2062 = vunpack.c.l.b16 %v565
    %v2063 = vunpack.c.h.b16 %v565
    %v2064 = vunpack.c.l.b16 %v566
    %v2065 = vunpack.c.h.b16 %v566
    %v2066 = vunpack.c.l.b16 %v567
    %v2067 = vunpack.c.h.b16 %v567
    %v2068 = vunpack.c.l.b16 %v568
    %v2069 = vunpack.c.h.b16 %v568
    %v2070 = vunpack.c.l.b16 %v569
    %v2071 = vunpack.c.h.b16 %v569
    %v2072 = vunpack.c.l.b16 %v570
    %v2073 = vunpack.c.h.b16 %v570
    %v2074 = vunpack.c.l.b16 %v571
    %v2075 = vunpack.c.h.b16 %v571
    %v2076 = vunpack.c.l.b16 %v572
    %v2077 = vunpack.c.h.b16 %v572
    %v2078 = vunpack.c.l.b16 %v573
    %v2079 = vunpack.c.h.b16 %v573
    %v2080 = vunpack.c.l.b16 %v574
    %v2081 = vunpack.c.h.b16 %v574
    %v2082 = vunpack.c.l.b16 %v575
    %v2083 = vunpack.c.h.b16 %v575
    %v2084 = vunpack.c.l.b16 %v576
    %v2085 = vunpack.c.h.b16 %v576
    %v2086 = vunpack.c.l.b16 %v577
    %v2087 = vunpack.c.h.b16 %v577
    %v2088 = vunpack.c.l.b16 %v578
    %v2089 = vunpack.c.h.b16 %v578
    %v2090 = vunpack.c.l.b16 %v579
    %v2091 = vunpack.c.h.b16 %v579
    %v2092 = vunpack.c.l.b16 %v580
    %v2093 = vunpack.c.h.b16 %v580
    %v2094 = vunpack.c.l.b16 %v581
    %v2095 = vunpack.c.h.b16 %v581
    %v2096 = vunpack.c.l.b16 %v582
    %v2097 = vunpack.c.h.b16 %v582
    %v2098 = vunpack.c.l.b16 %v583
    %v2099 = vunpack.c.h.b16 %v583
    %v2100 = vunpack.c.l.b16 %v584
    %v2101 = vunpack.c.h.b16 %v584
    %v2102 = vunpack.c.l.b16 %v585
    %v2103 = vunpack.c.h.b16 %v585
    %v2104 = vunpack.c.l.b16 %v586
    %v2105 = vunpack.c.h.b16 %v586
    %v2106 = vunpack.c.l.b16 %v587
    %v2107 = vunpack.c.h.b16 %v587
    %v2108 = vunpack.c.l.b16 %v588
    %v2109 = vunpack.c.h.b16 %v588
    %v2110 = vunpack.c.l.b16 %v589
    %v2111 = vunpack.c.h.b16 %v589
    %v2112 = vunpack.c.l.b16 %v590
    %v2113 = vunpack.c.h.b16 %v590
    %v2114 = vunpack.c.l.b16 %v591
    %v2115 = vunpack.c.h.b16 %v591
    %v2116 = vunpack.c.l.b16 %v592
    %v2117 = vunpack.c.h.b16 %v592
    %v2118 = vunpack.c.l.b16 %v593
    %v2119 = vunpack.c.h.b16 %v593
    %v2120 = vunpack.c.l.b16 %v594
    %v2121 = vunpack.c.h.b16 %v594
    %v2122 = vunpack.c.l.b16 %v595
    %v2123 = vunpack.c.h.b16 %v595
    %v2124 = vunpack.c.l.b16 %v596
    %v2125 = vunpack.c.h.b16 %v596
    %v2126 = vunpack.c.l.b16 %v597
    %v2127 = vunpack.c.h.b16 %v597
    %v2128 = vunpack.c.l.b16 %v598
    %v2129 = vunpack.c.h.b16 %v598
    %v2130 = vunpack.c.l.b16 %v599
    %v2131 = vunpack.c.h.b16 %v599
    %v2132 = vunpack.c.l.b16 %v600
    %v2133 = vunpack.c.h.b16 %v600
    %v2134 = vunpack.c.l.b16 %v601
    %v2135 = vunpack.c.h.b16 %v601
    %v2136 = vunpack.c.l.b16 %v602
    %v2137 = vunpack.c.h.b16 %v602
    %v2138 = vunpack.c.l.b16 %v603
    %v2139 = vunpack.c.h.b16 %v603
    %v2140 = vunpack.c.l.b16 %v604
    %v2141 = vunpack.c.h.b16 %v604
    %v2142 = vunpack.c.l.b16 %v605
    %v2143 = vunpack.c.h.b16 %v605
    %v2144 = vunpack.c.l.b16 %v606
    %v2145 = vunpack.c.h.b16 %v606
    %v2146 = vunpack.c.l.b16 %v607
    %v2147 = vunpack.c.h.b16 %v607
    %v2148 = vunpack.c.l.b16 %v608
    %v2149 = vunpack.c.h.b16 %v608
    %v2150 = vunpack.c.l.b16 %v609
    %v2151 = vunpack.c.h.b16 %v609
    %v2152 = vunpack.c.l.b16 %v610
    %v2153 = vunpack.c.h.b16 %v610
    %v2154 = vunpack.c.l.b16 %v611
    %v2155 = vunpack.c.h.b16 %v611
    %v2156 = vunpack.c.l.b16 %v612
    %v2157 = vunpack.c.h.b16 %v612
    %v2158 = vunpack.c.l.b16 %v613
    %v2159 = vunpack.c.h.b16 %v613
    %v2160 = vunpack.c.l.b16 %v614
    %v2161 = vunpack.c.h.b16 %v614
    %v2162 = vunpack.c.l.b16 %v615
    %v2163 = vunpack.c.h.b16 %v615
    %v2164 = vunpack.c.l.b16 %v616
    %v2165 = vunpack.c.h.b16 %v616
    %v2166 = vunpack.c.l.b16 %v617
    %v2167 = vunpack.c.h.b16 %v617
    %v2168 = vunpack.c.l.b16 %v618
    %v2169 = vunpack.c.h.b16 %v618
    %v2170 = vunpack.c.l.b16 %v619
    %v2171 = vunpack.c.h.b16 %v619
    %v2172 = vunpack.c.l.b16 %v620
    %v2173 = vunpack.c.h.b16 %v620
    %v2174 = vunpack.c.l.b16 %v621
    %v2175 = vunpack.c.h.b16 %v621
    %v2176 = vunpack.c.l.b16 %v622
    %v2177 = vunpack.c.h.b16 %v622
    %v2178 = vunpack.c.l.b16 %v623
    %v2179 = vunpack.c.h.b16 %v623
    %v2180 = vunpack.c.l.b16 %v624
    %v2181 = vunpack.c.h.b16 %v624
    %v2182 = vunpack.c.l.b16 %v625
    %v2183 = vunpack.c.h.b16 %v625
    %v2184 = vunpack.c.l.b16 %v626
    %v2185 = vunpack.c.h.b16 %v626
    %v2186 = vunpack.c.l.b16 %v627
    %v2187 = vunpack.c.h.b16 %v627
    %v2188 = vunpack.c.l.b16 %v628
    %v2189 = vunpack.c.h.b16 %v628
    %v2190 = vunpack.c.l.b16 %v629
    %v2191 = vunpack.c.h.b16 %v629
    %v2192 = vunpack.c.l.b16 %v630
    %v2193 = vunpack.c.h.b16 %v630
    %v2194 = vunpack.c.l.b16 %v631
    %v2195 = vunpack.c.h.b16 %v631
    %v2196 = vunpack.c.l.b16 %v632
    %v2197 = vunpack.c.h.b16 %v632
    %v2198 = vunpack.c.l.b16 %v633
    %v2199 = vunpack.c.h.b16 %v633
    %v2200 = vunpack.c.l.b16 %v634
    %v2201 = vunpack.c.h.b16 %v634
    %v2202 = vunpack.c.l.b16 %v635
    %v2203 = vunpack.c.h.b16 %v635
    %v2204 = vunpack.c.l.b16 %v636
    %v2205 = vunpack.c.h.b16 %v636
    %v2206 = vunpack.c.l.b16 %v637
    %v2207 = vunpack.c.h.b16 %v637
    %v2208 = vunpack.c.l.b16 %v638
    %v2209 = vunpack.c.h.b16 %v638
    %v2210 = vunpack.c.l.b16 %v639
    %v2211 = vunpack.c.h.b16 %v639
    %v2212 = vunpack.c.l.b16 %v640
    %v2213 = vunpack.c.h.b16 %v640
    %v2214 = vunpack.c.l.b16 %v641
    %v2215 = vunpack.c.h.b16 %v641
    %v2216 = vunpack.c.l.b16 %v642
    %v2217 = vunpack.c.h.b16 %v642
    %v2218 = vunpack.c.l.b16 %v643
    %v2219 = vunpack.c.h.b16 %v643
    %v2220 = vunpack.c.l.b16 %v644
    %v2221 = vunpack.c.h.b16 %v644
    %v2222 = vunpack.c.l.b16 %v645
    %v2223 = vunpack.c.h.b16 %v645
    %v2224 = vunpack.c.l.b16 %v646
    %v2225 = vunpack.c.h.b16 %v646
    %v2226 = vunpack.c.l.b16 %v647
    %v2227 = vunpack.c.h.b16 %v647
    %v2228 = vunpack.c.l.b16 %v648
    %v2229 = vunpack.c.h.b16 %v648
    %v2230 = vunpack.c.l.b16 %v649
    %v2231 = vunpack.c.h.b16 %v649
    %v2232 = vunpack.c.l.b16 %v650
    %v2233 = vunpack.c.h.b16 %v650
    %v2234 = vunpack.c.l.b16 %v651
    %v2235 = vunpack.c.h.b16 %v651
    %v2236 = vunpack.c.l.b16 %v652
    %v2237 = vunpack.c.h.b16 %v652
    %v2238 = vunpack.c.l.b16 %v653
    %v2239 = vunpack.c.h.b16 %v653
    %v2240 = vunpack.c.l.b16 %v654
    %v2241 = vunpack.c.h.b16 %v654
    %v2242 = vunpack.c.l.b16 %v655
    %v2243 = vunpack.c.h.b16 %v655
    %v2244 = vunpack.c.l.b16 %v656
    %v2245 = vunpack.c.h.b16 %v656
    %v2246 = vunpack.c.l.b16 %v657
    %v2247 = vunpack.c.h.b16 %v657
    %v2248 = vunpack.c.l.b16 %v658
    %v2249 = vunpack.c.h.b16 %v658
    %v2250 = vunpack.c.l.b16 %v659
    %v2251 = vunpack.c.h.b16 %v659
    %v2252 = vunpack.c.l.b16 %v660
    %v2253 = vunpack.c.h.b16 %v660
    %v2254 = vunpack.c.l.b16 %v661
    %v2255 = vunpack.c.h.b16 %v661
    %v2256 = vunpack.c.l.b16 %v662
    %v2257 = vunpack.c.h.b16 %v662
    %v2258 = vunpack.c.l.b16 %v663
    %v2259 = vunpack.c.h.b16 %v663
    %v2260 = vunpack.c.l.b16 %v664
    %v2261 = vunpack.c.h.b16 %v664
    %v2262 = vunpack.c.l.b16 %v665
    %v2263 = vunpack.c.h.b16 %v665
    %v2264 = vunpack.c.l.b16 %v666
    %v2265 = vunpack.c.h.b16 %v666
    %v2266 = vunpack.c.l.b16 %v667
    %v2267 = vunpack.c.h.b16 %v667
    %v2268 = vunpack.c.l.b16 %v668
    %v2269 = vunpack.c.h.b16 %v668
    %v2270 = vunpack.c.l.b16 %v669
    %v2271 = vunpack.c.h.b16 %v669
    %v2272 = vunpack.c.l.b16 %v670
    %v2273 = vunpack.c.h.b16 %v670
    %v2274 = vunpack.c.l.b16 %v671
    %v2275 = vunpack.c.h.b16 %v671
    %v2276 = vunpack.c.l.b16 %v672
    %v2277 = vunpack.c.h.b16 %v672
    %v2278 = vunpack.c.l.b16 %v673
    %v2279 = vunpack.c.h.b16 %v673
    %v2280 = vunpack.c.l.b16 %v674
    %v2281 = vunpack.c.h.b16 %v674
    %v2282 = vunpack.c.l.b16 %v675
    %v2283 = vunpack.c.h.b16 %v675
    %v2284 = vunpack.c.l.b16 %v676
    %v2285 = vunpack.c.h.b16 %v676
    %v2286 = vunpack.c.l.b16 %v677
    %v2287 = vunpack.c.h.b16 %v677
    %v2288 = vunpack.c.l.b16 %v678
    %v2289 = vunpack.c.h.b16 %v678
    %v2290 = vunpack.c.l.b16 %v679
    %v2291 = vunpack.c.h.b16 %v679
    %v2292 = vunpack.c.l.b16 %v680
    %v2293 = vunpack.c.h.b16 %v680
    %v2294 = vunpack.c.l.b16 %v681
    %v2295 = vunpack.c.h.b16 %v681
    %v2296 = vunpack.c.l.b16 %v682
    %v2297 = vunpack.c.h.b16 %v682
    %v2298 = vunpack.c.l.b16 %v683
    %v2299 = vunpack.c.h.b16 %v683
    %v2300 = vunpack.c.l.b16 %v684
    %v2301 = vunpack.c.h.b16 %v684
    %v2302 = vunpack.c.l.b16 %v685
    %v2303 = vunpack.c.h.b16 %v685
    %v2304 = vunpack.c.l.b16 %v686
    %v2305 = vunpack.c.h.b16 %v686
    %v2306 = vunpack.c.l.b16 %v687
    %v2307 = vunpack.c.h.b16 %v687
    %v2308 = vunpack.c.l.b16 %v688
    %v2309 = vunpack.c.h.b16 %v688
    %v2310 = vunpack.c.l.b16 %v689
    %v2311 = vunpack.c.h.b16 %v689
    %v2312 = vunpack.c.l.b16 %v690
    %v2313 = vunpack.c.h.b16 %v690
    %v2314 = vunpack.c.l.b16 %v691
    %v2315 = vunpack.c.h.b16 %v691
    %v2316 = vunpack.c.l.b16 %v692
    %v2317 = vunpack.c.h.b16 %v692
    %v2318 = vunpack.c.l.b16 %v693
    %v2319 = vunpack.c.h.b16 %v693
    %v2320 = vunpack.c.l.b16 %v694
    %v2321 = vunpack.c.h.b16 %v694
    %v2322 = vunpack.c.l.b16 %v695
    %v2323 = vunpack.c.h.b16 %v695
    %v2324 = vunpack.c.l.b16 %v696
    %v2325 = vunpack.c.h.b16 %v696
    %v2326 = vunpack.c.l.b16 %v697
    %v2327 = vunpack.c.h.b16 %v697
    %v2328 = vunpack.c.l.b16 %v698
    %v2329 = vunpack.c.h.b16 %v698
    %v2330 = vunpack.c.l.b16 %v699
    %v2331 = vunpack.c.h.b16 %v699
    %v2332 = vunpack.c.l.b16 %v700
    %v2333 = vunpack.c.h.b16 %v700
    %v2334 = vunpack.c.l.b16 %v701
    %v2335 = vunpack.c.h.b16 %v701
    %v2336 = vunpack.c.l.b16 %v702
    %v2337 = vunpack.c.h.b16 %v702
    %v2338 = vunpack.c.l.b16 %v703
    %v2339 = vunpack.c.h.b16 %v703
    %v2340 = vpack.c.b16 %v1324, %v1316
    %v2341 = vpack.c.b16 %v1325, %v1317
    %v2342 = vpack.c.b16 %v1326, %v1318
    %v2343 = vpack.c.b16 %v1327, %v1319
    %v2344 = vpack.c.b16 %v1328, %v1320
    %v2345 = vpack.c.b16 %v1329, %v1321
    %v2346 = vpack.c.b16 %v1330, %v1322
    %v2347 = vpack.c.b16 %v1331, %v1323
    %v2348 = vpack.c.b16 %v1340, %v1332
    %v2349 = vpack.c.b16 %v1341, %v1333
    %v2350 = vpack.c.b16 %v1342, %v1334
    %v2351 = vpack.c.b16 %v1343, %v1335
    %v2352 = vpack.c.b16 %v1344, %v1336
    %v2353 = vpack.c.b16 %v1345, %v1337
    %v2354 = vpack.c.b16 %v1346, %v1338
    %v2355 = vpack.c.b16 %v1347, %v1339
    %v2356 = vpack.c.b16 %v1356, %v1348
    %v2357 = vpack.c.b16 %v1357, %v1349
    %v2358 = vpack.c.b16 %v1358, %v1350
    %v2359 = vpack.c.b16 %v1359, %v1351
    %v2360 = vpack.c.b16 %v1360, %v1352
    %v2361 = vpack.c.b16 %v1361, %v1353
    %v2362 = vpack.c.b16 %v1362, %v1354
    %v2363 = vpack.c.b16 %v1363, %v1355
    %v2364 = vpack.c.b16 %v1372, %v1364
    %v2365 = vpack.c.b16 %v1373, %v1365
    %v2366 = vpack.c.b16 %v1374, %v1366
    %v2367 = vpack.c.b16 %v1375, %v1367
    %v2368 = vpack.c.b16 %v1376, %v1368
    %v2369 = vpack.c.b16 %v1377, %v1369
    %v2370 = vpack.c.b16 %v1378, %v1370
    %v2371 = vpack.c.b16 %v1379, %v1371
    %v2372 = vpack.c.b16 %v1388, %v1380
    %v2373 = vpack.c.b16 %v1389, %v1381
    %v2374 = vpack.c.b16 %v1390, %v1382
    %v2375 = vpack.c.b16 %v1391, %v1383
    %v2376 = vpack.c.b16 %v1392, %v1384
    %v2377 = vpack.c.b16 %v1393, %v1385
    %v2378 = vpack.c.b16 %v1394, %v1386
    %v2379 = vpack.c.b16 %v1395, %v1387
    %v2380 = vpack.c.b16 %v1404, %v1396
    %v2381 = vpack.c.b16 %v1405, %v1397
    %v2382 = vpack.c.b16 %v1406, %v1398
    %v2383 = vpack.c.b16 %v1407, %v1399
    %v2384 = vpack.c.b16 %v1408, %v1400
    %v2385 = vpack.c.b16 %v1409, %v1401
    %v2386 = vpack.c.b16 %v1410, %v1402
    %v2387 = vpack.c.b16 %v1411, %v1403
    %v2388 = vpack.c.b16 %v1420, %v1412
    %v2389 = vpack.c.b16 %v1421, %v1413
    %v2390 = vpack.c.b16 %v1422, %v1414
    %v2391 = vpack.c.b16 %v1423, %v1415
    %v2392 = vpack.c.b16 %v1424, %v1416
    %v2393 = vpack.c.b16 %v1425, %v1417
    %v2394 = vpack.c.b16 %v1426, %v1418
    %v2395 = vpack.c.b16 %v1427, %v1419
    %v2396 = vpack.c.b16 %v1436, %v1428
    %v2397 = vpack.c.b16 %v1437, %v1429
    %v2398 = vpack.c.b16 %v1438, %v1430
    %v2399 = vpack.c.b16 %v1439, %v1431
    %v2400 = vpack.c.b16 %v1440, %v1432
    %v2401 = vpack.c.b16 %v1441, %v1433
    %v2402 = vpack.c.b16 %v1442, %v1434
    %v2403 = vpack.c.b16 %v1443, %v1435
    %v2404 = vpack.c.b16 %v1452, %v1444
    %v2405 = vpack.c.b16 %v1453, %v1445
    %v2406 = vpack.c.b16 %v1454, %v1446
    %v2407 = vpack.c.b16 %v1455, %v1447
    %v2408 = vpack.c.b16 %v1456, %v1448
    %v2409 = vpack.c.b16 %v1457, %v1449
    %v2410 = vpack.c.b16 %v1458, %v1450
    %v2411 = vpack.c.b16 %v1459, %v1451
    %v2412 = vpack.c.b16 %v1468, %v1460
    %v2413 = vpack.c.b16 %v1469, %v1461
    %v2414 = vpack.c.b16 %v1470, %v1462
    %v2415 = vpack.c.b16 %v1471, %v1463
    %v2416 = vpack.c.b16 %v1472, %v1464
    %v2417 = vpack.c.b16 %v1473, %v1465
    %v2418 = vpack.c.b16 %v1474, %v1466
    %v2419 = vpack.c.b16 %v1475, %v1467
    %v2420 = vpack.c.b16 %v1484, %v1476
    %v2421 = vpack.c.b16 %v1485, %v1477
    %v2422 = vpack.c.b16 %v1486, %v1478
    %v2423 = vpack.c.b16 %v1487, %v1479
    %v2424 = vpack.c.b16 %v1488, %v1480
    %v2425 = vpack.c.b16 %v1489, %v1481
    %v2426 = vpack.c.b16 %v1490, %v1482
    %v2427 = vpack.c.b16 %v1491, %v1483
    %v2428 = vpack.c.b16 %v1500, %v1492
    %v2429 = vpack.c.b16 %v1501, %v1493
    %v2430 = vpack.c.b16 %v1502, %v1494
    %v2431 = vpack.c.b16 %v1503, %v1495
    %v2432 = vpack.c.b16 %v1504, %v1496
    %v2433 = vpack.c.b16 %v1505, %v1497
    %v2434 = vpack.c.b16 %v1506, %v1498
    %v2435 = vpack.c.b16 %v1507, %v1499
    %v2436 = vpack.c.b16 %v1516, %v1508
    %v2437 = vpack.c.b16 %v1517, %v1509
    %v2438 = vpack.c.b16 %v1518, %v1510
    %v2439 = vpack.c.b16 %v1519, %v1511
    %v2440 = vpack.c.b16 %v1520, %v1512
    %v2441 = vpack.c.b16 %v1521, %v1513
    %v2442 = vpack.c.b16 %v1522, %v1514
    %v2443 = vpack.c.b16 %v1523, %v1515
    %v2444 = vpack.c.b16 %v1532, %v1524
    %v2445 = vpack.c.b16 %v1533, %v1525
    %v2446 = vpack.c.b16 %v1534, %v1526
    %v2447 = vpack.c.b16 %v1535, %v1527
    %v2448 = vpack.c.b16 %v1536, %v1528
    %v2449 = vpack.c.b16 %v1537, %v1529
    %v2450 = vpack.c.b16 %v1538, %v1530
    %v2451 = vpack.c.b16 %v1539, %v1531
    %v2452 = vpack.c.b16 %v1548, %v1540
    %v2453 = vpack.c.b16 %v1549, %v1541
    %v2454 = vpack.c.b16 %v1550, %v1542
    %v2455 = vpack.c.b16 %v1551, %v1543
    %v2456 = vpack.c.b16 %v1552, %v1544
    %v2457 = vpack.c.b16 %v1553, %v1545
    %v2458 = vpack.c.b16 %v1554, %v1546
    %v2459 = vpack.c.b16 %v1555, %v1547
    %v2460 = vpack.c.b16 %v1564, %v1556
    %v2461 = vpack.c.b16 %v1565, %v1557
    %v2462 = vpack.c.b16 %v1566, %v1558
    %v2463 = vpack.c.b16 %v1567, %v1559
    %v2464 = vpack.c.b16 %v1568, %v1560
    %v2465 = vpack.c.b16 %v1569, %v1561
    %v2466 = vpack.c.b16 %v1570, %v1562
    %v2467 = vpack.c.b16 %v1571, %v1563
    %v2468 = vpack.c.b16 %v1580, %v1572
    %v2469 = vpack.c.b16 %v1581, %v1573
    %v2470 = vpack.c.b16 %v1582, %v1574
    %v2471 = vpack.c.b16 %v1583, %v1575
    %v2472 = vpack.c.b16 %v1584, %v1576
    %v2473 = vpack.c.b16 %v1585, %v1577
    %v2474 = vpack.c.b16 %v1586, %v1578
    %v2475 = vpack.c.b16 %v1587, %v1579
    %v2476 = vpack.c.b16 %v1596, %v1588
    %v2477 = vpack.c.b16 %v1597, %v1589
    %v2478 = vpack.c.b16 %v1598, %v1590
    %v2479 = vpack.c.b16 %v1599, %v1591
    %v2480 = vpack.c.b16 %v1600, %v1592
    %v2481 = vpack.c.b16 %v1601, %v1593
    %v2482 = vpack.c.b16 %v1602, %v1594
    %v2483 = vpack.c.b16 %v1603, %v1595
    %v2484 = vpack.c.b16 %v1612, %v1604
    %v2485 = vpack.c.b16 %v1613, %v1605
    %v2486 = vpack.c.b16 %v1614, %v1606
    %v2487 = vpack.c.b16 %v1615, %v1607
    %v2488 = vpack.c.b16 %v1616, %v1608
    %v2489 = vpack.c.b16 %v1617, %v1609
    %v2490 = vpack.c.b16 %v1618, %v1610
    %v2491 = vpack.c.b16 %v1619, %v1611
    %v2492 = vpack.c.b16 %v1628, %v1620
    %v2493 = vpack.c.b16 %v1629, %v1621
    %v2494 = vpack.c.b16 %v1630, %v1622
    %v2495 = vpack.c.b16 %v1631, %v1623
    %v2496 = vpack.c.b16 %v1632, %v1624
    %v2497 = vpack.c.b16 %v1633, %v1625
    %v2498 = vpack.c.b16 %v1634, %v1626
    %v2499 = vpack.c.b16 %v1635, %v1627
    %v2500 = vpack.c.b16 %v1644, %v1636
    %v2501 = vpack.c.b16 %v1645, %v1637
    %v2502 = vpack.c.b16 %v1646, %v1638
    %v2503 = vpack.c.b16 %v1647, %v1639
    %v2504 = vpack.c.b16 %v1648, %v1640
    %v2505 = vpack.c.b16 %v1649, %v1641
    %v2506 = vpack.c.b16 %v1650, %v1642
    %v2507 = vpack.c.b16 %v1651, %v1643
    %v2508 = vpack.c.b16 %v1660, %v1652
    %v2509 = vpack.c.b16 %v1661, %v1653
    %v2510 = vpack.c.b16 %v1662, %v1654
    %v2511 = vpack.c.b16 %v1663, %v1655
    %v2512 = vpack.c.b16 %v1664, %v1656
    %v2513 = vpack.c.b16 %v1665, %v1657
    %v2514 = vpack.c.b16 %v1666, %v1658
    %v2515 = vpack.c.b16 %v1667, %v1659
    %v2516 = vpack.c.b16 %v1676, %v1668
    %v2517 = vpack.c.b16 %v1677, %v1669
    %v2518 = vpack.c.b16 %v1678, %v1670
    %v2519 = vpack.c.b16 %v1679, %v1671
    %v2520 = vpack.c.b16 %v1680, %v1672
    %v2521 = vpack.c.b16 %v1681, %v1673
    %v2522 = vpack.c.b16 %v1682, %v1674
    %v2523 = vpack.c.b16 %v1683, %v1675
    %v2524 = vpack.c.b16 %v1692, %v1684
    %v2525 = vpack.c.b16 %v1693, %v1685
    %v2526 = vpack.c.b16 %v1694, %v1686
    %v2527 = vpack.c.b16 %v1695, %v1687
    %v2528 = vpack.c.b16 %v1696, %v1688
    %v2529 = vpack.c.b16 %v1697, %v1689
    %v2530 = vpack.c.b16 %v1698, %v1690
    %v2531 = vpack.c.b16 %v1699, %v1691
    %v2532 = vpack.c.b16 %v1708, %v1700
    %v2533 = vpack.c.b16 %v1709, %v1701
    %v2534 = vpack.c.b16 %v1710, %v1702
    %v2535 = vpack.c.b16 %v1711, %v1703
    %v2536 = vpack.c.b16 %v1712, %v1704
    %v2537 = vpack.c.b16 %v1713, %v1705
    %v2538 = vpack.c.b16 %v1714, %v1706
    %v2539 = vpack.c.b16 %v1715, %v1707
    %v2540 = vpack.c.b16 %v1724, %v1716
    %v2541 = vpack.c.b16 %v1725, %v1717
    %v2542 = vpack.c.b16 %v1726, %v1718
    %v2543 = vpack.c.b16 %v1727, %v1719
    %v2544 = vpack.c.b16 %v1728, %v1720
    %v2545 = vpack.c.b16 %v1729, %v1721
    %v2546 = vpack.c.b16 %v1730, %v1722
    %v2547 = vpack.c.b16 %v1731, %v1723
    %v2548 = vpack.c.b16 %v1740, %v1732
    %v2549 = vpack.c.b16 %v1741, %v1733
    %v2550 = vpack.c.b16 %v1742, %v1734
    %v2551 = vpack.c.b16 %v1743, %v1735
    %v2552 = vpack.c.b16 %v1744, %v1736
    %v2553 = vpack.c.b16 %v1745, %v1737
    %v2554 = vpack.c.b16 %v1746, %v1738
    %v2555 = vpack.c.b16 %v1747, %v1739
    %v2556 = vpack.c.b16 %v1756, %v1748
    %v2557 = vpack.c.b16 %v1757, %v1749
    %v2558 = vpack.c.b16 %v1758, %v1750
    %v2559 = vpack.c.b16 %v1759, %v1751
    %v2560 = vpack.c.b16 %v1760, %v1752
    %v2561 = vpack.c.b16 %v1761, %v1753
    %v2562 = vpack.c.b16 %v1762, %v1754
    %v2563 = vpack.c.b16 %v1763, %v1755
    %v2564 = vpack.c.b16 %v1772, %v1764
    %v2565 = vpack.c.b16 %v1773, %v1765
    %v2566 = vpack.c.b16 %v1774, %v1766
    %v2567 = vpack.c.b16 %v1775, %v1767
    %v2568 = vpack.c.b16 %v1776, %v1768
    %v2569 = vpack.c.b16 %v1777, %v1769
    %v2570 = vpack.c.b16 %v1778, %v1770
    %v2571 = vpack.c.b16 %v1779, %v1771
    %v2572 = vpack.c.b16 %v1788, %v1780
    %v2573 = vpack.c.b16 %v1789, %v1781
    %v2574 = vpack.c.b16 %v1790, %v1782
    %v2575 = vpack.c.b16 %v1791, %v1783
    %v2576 = vpack.c.b16 %v1792, %v1784
    %v2577 = vpack.c.b16 %v1793, %v1785
    %v2578 = vpack.c.b16 %v1794, %v1786
    %v2579 = vpack.c.b16 %v1795, %v1787
    %v2580 = vpack.c.b16 %v1804, %v1796
    %v2581 = vpack.c.b16 %v1805, %v1797
    %v2582 = vpack.c.b16 %v1806, %v1798
    %v2583 = vpack.c.b16 %v1807, %v1799
    %v2584 = vpack.c.b16 %v1808, %v1800
    %v2585 = vpack.c.b16 %v1809, %v1801
    %v2586 = vpack.c.b16 %v1810, %v1802
    %v2587 = vpack.c.b16 %v1811, %v1803
    %v2588 = vpack.c.b16 %v1820, %v1812
    %v2589 = vpack.c.b16 %v1821, %v1813
    %v2590 = vpack.c.b16 %v1822, %v1814
    %v2591 = vpack.c.b16 %v1823, %v1815
    %v2592 = vpack.c.b16 %v1824, %v1816
    %v2593 = vpack.c.b16 %v1825, %v1817
    %v2594 = vpack.c.b16 %v1826, %v1818
    %v2595 = vpack.c.b16 %v1827, %v1819
    %v2596 = vpack.c.b16 %v1836, %v1828
    %v2597 = vpack.c.b16 %v1837, %v1829
    %v2598 = vpack.c.b16 %v1838, %v1830
    %v2599 = vpack.c.b16 %v1839, %v1831
    %v2600 = vpack.c.b16 %v1840, %v1832
    %v2601 = vpack.c.b16 %v1841, %v1833
    %v2602 = vpack.c.b16 %v1842, %v1834
    %v2603 = vpack.c.b16 %v1843, %v1835
    %v2604 = vpack.c.b16 %v1852, %v1844
    %v2605 = vpack.c.b16 %v1853, %v1845
    %v2606 = vpack.c.b16 %v1854, %v1846
    %v2607 = vpack.c.b16 %v1855, %v1847
    %v2608 = vpack.c.b16 %v1856, %v1848
    %v2609 = vpack.c.b16 %v1857, %v1849
    %v2610 = vpack.c.b16 %v1858, %v1850
    %v2611 = vpack.c.b16 %v1859, %v1851
    %v2612 = vpack.c.b16 %v1868, %v1860
    %v2613 = vpack.c.b16 %v1869, %v1861
    %v2614 = vpack.c.b16 %v1870, %v1862
    %v2615 = vpack.c.b16 %v1871, %v1863
    %v2616 = vpack.c.b16 %v1872, %v1864
    %v2617 = vpack.c.b16 %v1873, %v1865
    %v2618 = vpack.c.b16 %v1874, %v1866
    %v2619 = vpack.c.b16 %v1875, %v1867
    %v2620 = vpack.c.b16 %v1884, %v1876
    %v2621 = vpack.c.b16 %v1885, %v1877
    %v2622 = vpack.c.b16 %v1886, %v1878
    %v2623 = vpack.c.b16 %v1887, %v1879
    %v2624 = vpack.c.b16 %v1888, %v1880
    %v2625 = vpack.c.b16 %v1889, %v1881
    %v2626 = vpack.c.b16 %v1890, %v1882
    %v2627 = vpack.c.b16 %v1891, %v1883
    %v2628 = vpack.c.b16 %v1900, %v1892
    %v2629 = vpack.c.b16 %v1901, %v1893
    %v2630 = vpack.c.b16 %v1902, %v1894
    %v2631 = vpack.c.b16 %v1903, %v1895
    %v2632 = vpack.c.b16 %v1904, %v1896
    %v2633 = vpack.c.b16 %v1905, %v1897
    %v2634 = vpack.c.b16 %v1906, %v1898
    %v2635 = vpack.c.b16 %v1907, %v1899
    %v2636 = vpack.c.b16 %v1916, %v1908
    %v2637 = vpack.c.b16 %v1917, %v1909
    %v2638 = vpack.c.b16 %v1918, %v1910
    %v2639 = vpack.c.b16 %v1919, %v1911
    %v2640 = vpack.c.b16 %v1920, %v1912
    %v2641 = vpack.c.b16 %v1921, %v1913
    %v2642 = vpack.c.b16 %v1922, %v1914
    %v2643 = vpack.c.b16 %v1923, %v1915
    %v2644 = vpack.c.b16 %v1932, %v1924
    %v2645 = vpack.c.b16 %v1933, %v1925
    %v2646 = vpack.c.b16 %v1934, %v1926
    %v2647 = vpack.c.b16 %v1935, %v1927
    %v2648 = vpack.c.b16 %v1936, %v1928
    %v2649 = vpack.c.b16 %v1937, %v1929
    %v2650 = vpack.c.b16 %v1938, %v1930
    %v2651 = vpack.c.b16 %v1939, %v1931
    %v2652 = vpack.c.b16 %v1948, %v1940
    %v2653 = vpack.c.b16 %v1949, %v1941
    %v2654 = vpack.c.b16 %v1950, %v1942
    %v2655 = vpack.c.b16 %v1951, %v1943
    %v2656 = vpack.c.b16 %v1952, %v1944
    %v2657 = vpack.c.b16 %v1953, %v1945
    %v2658 = vpack.c.b16 %v1954, %v1946
    %v2659 = vpack.c.b16 %v1955, %v1947
    %v2660 = vpack.c.b16 %v1964, %v1956
    %v2661 = vpack.c.b16 %v1965, %v1957
    %v2662 = vpack.c.b16 %v1966, %v1958
    %v2663 = vpack.c.b16 %v1967, %v1959
    %v2664 = vpack.c.b16 %v1968, %v1960
    %v2665 = vpack.c.b16 %v1969, %v1961
    %v2666 = vpack.c.b16 %v1970, %v1962
    %v2667 = vpack.c.b16 %v1971, %v1963
    %v2668 = vpack.c.b16 %v1980, %v1972
    %v2669 = vpack.c.b16 %v1981, %v1973
    %v2670 = vpack.c.b16 %v1982, %v1974
    %v2671 = vpack.c.b16 %v1983, %v1975
    %v2672 = vpack.c.b16 %v1984, %v1976
    %v2673 = vpack.c.b16 %v1985, %v1977
    %v2674 = vpack.c.b16 %v1986, %v1978
    %v2675 = vpack.c.b16 %v1987, %v1979
    %v2676 = vpack.c.b16 %v1996, %v1988
    %v2677 = vpack.c.b16 %v1997, %v1989
    %v2678 = vpack.c.b16 %v1998, %v1990
    %v2679 = vpack.c.b16 %v1999, %v1991
    %v2680 = vpack.c.b16 %v2000, %v1992
    %v2681 = vpack.c.b16 %v2001, %v1993
    %v2682 = vpack.c.b16 %v2002, %v1994
    %v2683 = vpack.c.b16 %v2003, %v1995
    %v2684 = vpack.c.b16 %v2012, %v2004
    %v2685 = vpack.c.b16 %v2013, %v2005
    %v2686 = vpack.c.b16 %v2014, %v2006
    %v2687 = vpack.c.b16 %v2015, %v2007
    %v2688 = vpack.c.b16 %v2016, %v2008
    %v2689 = vpack.c.b16 %v2017, %v2009
    %v2690 = vpack.c.b16 %v2018, %v2010
    %v2691 = vpack.c.b16 %v2019, %v2011
    %v2692 = vpack.c.b16 %v2028, %v2020
    %v2693 = vpack.c.b16 %v2029, %v2021
    %v2694 = vpack.c.b16 %v2030, %v2022
    %v2695 = vpack.c.b16 %v2031, %v2023
    %v2696 = vpack.c.b16 %v2032, %v2024
    %v2697 = vpack.c.b16 %v2033, %v2025
    %v2698 = vpack.c.b16 %v2034, %v2026
    %v2699 = vpack.c.b16 %v2035, %v2027
    %v2700 = vpack.c.b16 %v2044, %v2036
    %v2701 = vpack.c.b16 %v2045, %v2037
    %v2702 = vpack.c.b16 %v2046, %v2038
    %v2703 = vpack.c.b16 %v2047, %v2039
    %v2704 = vpack.c.b16 %v2048, %v2040
    %v2705 = vpack.c.b16 %v2049, %v2041
    %v2706 = vpack.c.b16 %v2050, %v2042
    %v2707 = vpack.c.b16 %v2051, %v2043
    %v2708 = vpack.c.b16 %v2060, %v2052
    %v2709 = vpack.c.b16 %v2061, %v2053
    %v2710 = vpack.c.b16 %v2062, %v2054
    %v2711 = vpack.c.b16 %v2063, %v2055
    %v2712 = vpack.c.b16 %v2064, %v2056
    %v2713 = vpack.c.b16 %v2065, %v2057
    %v2714 = vpack.c.b16 %v2066, %v2058
    %v2715 = vpack.c.b16 %v2067, %v2059
    %v2716 = vpack.c.b16 %v2076, %v2068
    %v2717 = vpack.c.b16 %v2077, %v2069
    %v2718 = vpack.c.b16 %v2078, %v2070
    %v2719 = vpack.c.b16 %v2079, %v2071
    %v2720 = vpack.c.b16 %v2080, %v2072
    %v2721 = vpack.c.b16 %v2081, %v2073
    %v2722 = vpack.c.b16 %v2082, %v2074
    %v2723 = vpack.c.b16 %v2083, %v2075
    %v2724 = vpack.c.b16 %v2092, %v2084
    %v2725 = vpack.c.b16 %v2093, %v2085
    %v2726 = vpack.c.b16 %v2094, %v2086
    %v2727 = vpack.c.b16 %v2095, %v2087
    %v2728 = vpack.c.b16 %v2096, %v2088
    %v2729 = vpack.c.b16 %v2097, %v2089
    %v2730 = vpack.c.b16 %v2098, %v2090
    %v2731 = vpack.c.b16 %v2099, %v2091
    %v2732 = vpack.c.b16 %v2108, %v2100
    %v2733 = vpack.c.b16 %v2109, %v2101
    %v2734 = vpack.c.b16 %v2110, %v2102
    %v2735 = vpack.c.b16 %v2111, %v2103
    %v2736 = vpack.c.b16 %v2112, %v2104
    %v2737 = vpack.c.b16 %v2113, %v2105
    %v2738 = vpack.c.b16 %v2114, %v2106
    %v2739 = vpack.c.b16 %v2115, %v2107
    %v2740 = vpack.c.b16 %v2124, %v2116
    %v2741 = vpack.c.b16 %v2125, %v2117
    %v2742 = vpack.c.b16 %v2126, %v2118
    %v2743 = vpack.c.b16 %v2127, %v2119
    %v2744 = vpack.c.b16 %v2128, %v2120
    %v2745 = vpack.c.b16 %v2129, %v2121
    %v2746 = vpack.c.b16 %v2130, %v2122
    %v2747 = vpack.c.b16 %v2131, %v2123
    %v2748 = vpack.c.b16 %v2140, %v2132
    %v2749 = vpack.c.b16 %v2141, %v2133
    %v2750 = vpack.c.b16 %v2142, %v2134
    %v2751 = vpack.c.b16 %v2143, %v2135
    %v2752 = vpack.c.b16 %v2144, %v2136
    %v2753 = vpack.c.b16 %v2145, %v2137
    %v2754 = vpack.c.b16 %v2146, %v2138
    %v2755 = vpack.c.b16 %v2147, %v2139
    %v2756 = vpack.c.b16 %v2156, %v2148
    %v2757 = vpack.c.b16 %v2157, %v2149
    %v2758 = vpack.c.b16 %v2158, %v2150
    %v2759 = vpack.c.b16 %v2159, %v2151
    %v2760 = vpack.c.b16 %v2160, %v2152
    %v2761 = vpack.c.b16 %v2161, %v2153
    %v2762 = vpack.c.b16 %v2162, %v2154
    %v2763 = vpack.c.b16 %v2163, %v2155
    %v2764 = vpack.c.b16 %v2172, %v2164
    %v2765 = vpack.c.b16 %v2173, %v2165
    %v2766 = vpack.c.b16 %v2174, %v2166
    %v2767 = vpack.c.b16 %v2175, %v2167
    %v2768 = vpack.c.b16 %v2176, %v2168
    %v2769 = vpack.c.b16 %v2177, %v2169
    %v2770 = vpack.c.b16 %v2178, %v2170
    %v2771 = vpack.c.b16 %v2179, %v2171
    %v2772 = vpack.c.b16 %v2188, %v2180
    %v2773 = vpack.c.b16 %v2189, %v2181
    %v2774 = vpack.c.b16 %v2190, %v2182
    %v2775 = vpack.c.b16 %v2191, %v2183
    %v2776 = vpack.c.b16 %v2192, %v2184
    %v2777 = vpack.c.b16 %v2193, %v2185
    %v2778 = vpack.c.b16 %v2194, %v2186
    %v2779 = vpack.c.b16 %v2195, %v2187
    %v2780 = vpack.c.b16 %v2204, %v2196
    %v2781 = vpack.c.b16 %v2205, %v2197
    %v2782 = vpack.c.b16 %v2206, %v2198
    %v2783 = vpack.c.b16 %v2207, %v2199
    %v2784 = vpack.c.b16 %v2208, %v2200
    %v2785 = vpack.c.b16 %v2209, %v2201
    %v2786 = vpack.c.b16 %v2210, %v2202
    %v2787 = vpack.c.b16 %v2211, %v2203
    %v2788 = vpack.c.b16 %v2220, %v2212
    %v2789 = vpack.c.b16 %v2221, %v2213
    %v2790 = vpack.c.b16 %v2222, %v2214
    %v2791 = vpack.c.b16 %v2223, %v2215
    %v2792 = vpack.c.b16 %v2224, %v2216
    %v2793 = vpack.c.b16 %v2225, %v2217
    %v2794 = vpack.c.b16 %v2226, %v2218
    %v2795 = vpack.c.b16 %v2227, %v2219
    %v2796 = vpack.c.b16 %v2236, %v2228
    %v2797 = vpack.c.b16 %v2237, %v2229
    %v2798 = vpack.c.b16 %v2238, %v2230
    %v2799 = vpack.c.b16 %v2239, %v2231
    %v2800 = vpack.c.b16 %v2240, %v2232
    %v2801 = vpack.c.b16 %v2241, %v2233
    %v2802 = vpack.c.b16 %v2242, %v2234
    %v2803 = vpack.c.b16 %v2243, %v2235
    %v2804 = vpack.c.b16 %v2252, %v2244
    %v2805 = vpack.c.b16 %v2253, %v2245
    %v2806 = vpack.c.b16 %v2254, %v2246
    %v2807 = vpack.c.b16 %v2255, %v2247
    %v2808 = vpack.c.b16 %v2256, %v2248
    %v2809 = vpack.c.b16 %v2257, %v2249
    %v2810 = vpack.c.b16 %v2258, %v2250
    %v2811 = vpack.c.b16 %v2259, %v2251
    %v2812 = vpack.c.b16 %v2268, %v2260
    %v2813 = vpack.c.b16 %v2269, %v2261
    %v2814 = vpack.c.b16 %v2270, %v2262
    %v2815 = vpack.c.b16 %v2271, %v2263
    %v2816 = vpack.c.b16 %v2272, %v2264
    %v2817 = vpack.c.b16 %v2273, %v2265
    %v2818 = vpack.c.b16 %v2274, %v2266
    %v2819 = vpack.c.b16 %v2275, %v2267
    %v2820 = vpack.c.b16 %v2284, %v2276
    %v2821 = vpack.c.b16 %v2285, %v2277
    %v2822 = vpack.c.b16 %v2286, %v2278
    %v2823 = vpack.c.b16 %v2287, %v2279
    %v2824 = vpack.c.b16 %v2288, %v2280
    %v2825 = vpack.c.b16 %v2289, %v2281
    %v2826 = vpack.c.b16 %v2290, %v2282
    %v2827 = vpack.c.b16 %v2291, %v2283
    %v2828 = vpack.c.b16 %v2300, %v2292
    %v2829 = vpack.c.b16 %v2301, %v2293
    %v2830 = vpack.c.b16 %v2302, %v2294
    %v2831 = vpack.c.b16 %v2303, %v2295
    %v2832 = vpack.c.b16 %v2304, %v2296
    %v2833 = vpack.c.b16 %v2305, %v2297
    %v2834 = vpack.c.b16 %v2306, %v2298
    %v2835 = vpack.c.b16 %v2307, %v2299
    %v2836 = vpack.c.b16 %v2316, %v2308
    %v2837 = vpack.c.b16 %v2317, %v2309
    %v2838 = vpack.c.b16 %v2318, %v2310
    %v2839 = vpack.c.b16 %v2319, %v2311
    %v2840 = vpack.c.b16 %v2320, %v2312
    %v2841 = vpack.c.b16 %v2321, %v2313
    %v2842 = vpack.c.b16 %v2322, %v2314
    %v2843 = vpack.c.b16 %v2323, %v2315
    %v2844 = vpack.c.b16 %v2332, %v2324
    %v2845 = vpack.c.b16 %v2333, %v2325
    %v2846 = vpack.c.b16 %v2334, %v2326
    %v2847 = vpack.c.b16 %v2335, %v2327
    %v2848 = vpack.c.b16 %v2336, %v2328
    %v2849 = vpack.c.b16 %v2337, %v2329
    %v2850 = vpack.c.b16 %v2338, %v2330
    %v2851 = vpack.c.b16 %v2339, %v2331
    %3364 = vmatprep.subr.bf16.mxu0 %v2397
    %3365 = vmatpush1.bf16.msra.mxu0 %v2396
    %3366 = vmatprep.subr.bf16.mxu0 %v2389
    %3367 = vmatpush1.bf16.msra.mxu0 %v2388
    %3368 = vmatprep.subr.bf16.mxu0 %v2381
    %3369 = vmatpush1.bf16.msra.mxu0 %v2380
    %3370 = vmatprep.subr.bf16.mxu0 %v2373
    %3371 = vmatpush1.bf16.msra.mxu0 %v2372
    %3372 = vmatprep.subr.bf16.mxu0 %v2365
    %3373 = vmatpush1.bf16.msra.mxu0 %v2364
    %3374 = vmatprep.subr.bf16.mxu0 %v2357
    %3375 = vmatpush1.bf16.msra.mxu0 %v2356
    %3376 = vmatprep.subr.bf16.mxu0 %v2349
    %3377 = vmatpush1.bf16.msra.mxu0 %v2348
    %3378 = vmatprep.subr.bf16.mxu0 %v2341
    %3379 = vmatpush1.bf16.msra.mxu0 %v2340
    %3380 = vmatprep.subr.bf16.mxu0 %v2461
    %3381 = vmatpush2.bf16.msra.mxu0 %v2460
    %3382 = vmatprep.subr.bf16.mxu0 %v2453
    %3383 = vmatpush2.bf16.msra.mxu0 %v2452
    %3384 = vmatprep.subr.bf16.mxu0 %v2445
    %3385 = vmatpush2.bf16.msra.mxu0 %v2444
    %3386 = vmatprep.subr.bf16.mxu0 %v2437
    %3387 = vmatpush2.bf16.msra.mxu0 %v2436
    %3388 = vmatprep.subr.bf16.mxu0 %v2429
    %3389 = vmatpush2.bf16.msra.mxu0 %v2428
    %3390 = vmatprep.subr.bf16.mxu0 %v2421
    %3391 = vmatpush2.bf16.msra.mxu0 %v2420
    %3392 = vmatprep.subr.bf16.mxu0 %v2413
    %3393 = vmatpush2.bf16.msra.mxu0 %v2412
    %3394 = vmatprep.subr.bf16.mxu0 %v2405
    %3395 = vmatpush2.bf16.msra.mxu0 %v2404
    %3396 = vmatprep.mubr.bf16.mxu0 %v784
    %3397 = vmatmul.mubr.bf16.gmra.mxu0 %v770
    %v3398 = vpop.f32.mrf.mxu0
    %v3399 = vadd.f32 %v709, %v3398
    %v3400 = vpop.f32.mrf.mxu0
    %v3401 = vadd.f32 %v713, %v3400
    %v3402 = vpop.f32.mrf.mxu0
    %v3403 = vpop.f32.mrf.mxu0
    %3404 = vdwg.mxu0
    %3405 = vmatprep.subr.bf16.mxu0 %v2525
    %3406 = vmatpush1.bf16.msra.mxu0 %v2524
    %3407 = vmatprep.subr.bf16.mxu0 %v2517
    %3408 = vmatpush1.bf16.msra.mxu0 %v2516
    %3409 = vmatprep.subr.bf16.mxu0 %v2509
    %3410 = vmatpush1.bf16.msra.mxu0 %v2508
    %3411 = vmatprep.subr.bf16.mxu0 %v2501
    %3412 = vmatpush1.bf16.msra.mxu0 %v2500
    %3413 = vmatprep.subr.bf16.mxu0 %v2493
    %3414 = vmatpush1.bf16.msra.mxu0 %v2492
    %3415 = vmatprep.subr.bf16.mxu0 %v2485
    %3416 = vmatpush1.bf16.msra.mxu0 %v2484
    %3417 = vmatprep.subr.bf16.mxu0 %v2477
    %3418 = vmatpush1.bf16.msra.mxu0 %v2476
    %3419 = vmatprep.subr.bf16.mxu0 %v2469
    %3420 = vmatpush1.bf16.msra.mxu0 %v2468
    %3421 = vmatprep.subr.bf16.mxu0 %v2589
    %3422 = vmatpush2.bf16.msra.mxu0 %v2588
    %3423 = vmatprep.subr.bf16.mxu0 %v2581
    %3424 = vmatpush2.bf16.msra.mxu0 %v2580
    %3425 = vmatprep.subr.bf16.mxu0 %v2573
    %3426 = vmatpush2.bf16.msra.mxu0 %v2572
    %3427 = vmatprep.subr.bf16.mxu0 %v2565
    %3428 = vmatpush2.bf16.msra.mxu0 %v2564
    %3429 = vmatprep.subr.bf16.mxu0 %v2557
    %3430 = vmatpush2.bf16.msra.mxu0 %v2556
    %3431 = vmatprep.subr.bf16.mxu0 %v2549
    %3432 = vmatpush2.bf16.msra.mxu0 %v2548
    %3433 = vmatprep.subr.bf16.mxu0 %v2541
    %3434 = vmatpush2.bf16.msra.mxu0 %v2540
    %3435 = vmatprep.subr.bf16.mxu0 %v2533
    %3436 = vmatpush2.bf16.msra.mxu0 %v2532
    %3437 = vmatprep.mubr.bf16.mxu0 %v794
    %3438 = vmatmul.mubr.bf16.gmra.mxu0 %v792
    %v3439 = vpop.f32.mrf.mxu0
    %v3440 = vadd.f32 %v3399, %v3439
    %v3441 = vpop.f32.mrf.mxu0
    %v3442 = vadd.f32 %v3401, %v3441
    %v3443 = vpop.f32.mrf.mxu0
    %v3444 = vpop.f32.mrf.mxu0
    %3445 = vdwg.mxu0
    %3446 = vmatprep.subr.bf16.mxu0 %v2653
    %3447 = vmatpush1.bf16.msra.mxu0 %v2652
    %3448 = vmatprep.subr.bf16.mxu0 %v2645
    %3449 = vmatpush1.bf16.msra.mxu0 %v2644
    %3450 = vmatprep.subr.bf16.mxu0 %v2637
    %3451 = vmatpush1.bf16.msra.mxu0 %v2636
    %3452 = vmatprep.subr.bf16.mxu0 %v2629
    %3453 = vmatpush1.bf16.msra.mxu0 %v2628
    %3454 = vmatprep.subr.bf16.mxu0 %v2621
    %3455 = vmatpush1.bf16.msra.mxu0 %v2620
    %3456 = vmatprep.subr.bf16.mxu0 %v2613
    %3457 = vmatpush1.bf16.msra.mxu0 %v2612
    %3458 = vmatprep.subr.bf16.mxu0 %v2605
    %3459 = vmatpush1.bf16.msra.mxu0 %v2604
    %3460 = vmatprep.subr.bf16.mxu0 %v2597
    %3461 = vmatpush1.bf16.msra.mxu0 %v2596
    %3462 = vmatprep.subr.bf16.mxu0 %v2717
    %3463 = vmatpush2.bf16.msra.mxu0 %v2716
    %3464 = vmatprep.subr.bf16.mxu0 %v2709
    %3465 = vmatpush2.bf16.msra.mxu0 %v2708
    %3466 = vmatprep.subr.bf16.mxu0 %v2701
    %3467 = vmatpush2.bf16.msra.mxu0 %v2700
    %3468 = vmatprep.subr.bf16.mxu0 %v2693
    %3469 = vmatpush2.bf16.msra.mxu0 %v2692
    %3470 = vmatprep.subr.bf16.mxu0 %v2685
    %3471 = vmatpush2.bf16.msra.mxu0 %v2684
    %3472 = vmatprep.subr.bf16.mxu0 %v2677
    %3473 = vmatpush2.bf16.msra.mxu0 %v2676
    %3474 = vmatprep.subr.bf16.mxu0 %v2669
    %3475 = vmatpush2.bf16.msra.mxu0 %v2668
    %3476 = vmatprep.subr.bf16.mxu0 %v2661
    %3477 = vmatpush2.bf16.msra.mxu0 %v2660
    %3478 = vmatprep.mubr.bf16.mxu0 %v791
    %3479 = vmatmul.mubr.bf16.gmra.mxu0 %v777
    %v3480 = vpop.f32.mrf.mxu0
    %v3481 = vadd.f32 %v3440, %v3480
    %v3482 = vpop.f32.mrf.mxu0
    %v3483 = vadd.f32 %v3442, %v3482
    %v3484 = vpop.f32.mrf.mxu0
    %v3485 = vpop.f32.mrf.mxu0
    %3486 = vdwg.mxu0
    %3487 = vmatprep.subr.bf16.mxu0 %v2781
    %3488 = vmatpush1.bf16.msra.mxu0 %v2780
    %3489 = vmatprep.subr.bf16.mxu0 %v2773
    %3490 = vmatpush1.bf16.msra.mxu0 %v2772
    %3491 = vmatprep.subr.bf16.mxu0 %v2765
    %3492 = vmatpush1.bf16.msra.mxu0 %v2764
    %3493 = vmatprep.subr.bf16.mxu0 %v2757
    %3494 = vmatpush1.bf16.msra.mxu0 %v2756
    %3495 = vmatprep.subr.bf16.mxu0 %v2749
    %3496 = vmatpush1.bf16.msra.mxu0 %v2748
    %3497 = vmatprep.subr.bf16.mxu0 %v2741
    %3498 = vmatpush1.bf16.msra.mxu0 %v2740
    %3499 = vmatprep.subr.bf16.mxu0 %v2733
    %3500 = vmatpush1.bf16.msra.mxu0 %v2732
    %3501 = vmatprep.subr.bf16.mxu0 %v2725
    %3502 = vmatpush1.bf16.msra.mxu0 %v2724
    %3503 = vmatprep.subr.bf16.mxu0 %v2845
    %3504 = vmatpush2.bf16.msra.mxu0 %v2844
    %3505 = vmatprep.subr.bf16.mxu0 %v2837
    %3506 = vmatpush2.bf16.msra.mxu0 %v2836
    %3507 = vmatprep.subr.bf16.mxu0 %v2829
    %3508 = vmatpush2.bf16.msra.mxu0 %v2828
    %3509 = vmatprep.subr.bf16.mxu0 %v2821
    %3510 = vmatpush2.bf16.msra.mxu0 %v2820
    %3511 = vmatprep.subr.bf16.mxu0 %v2813
    %3512 = vmatpush2.bf16.msra.mxu0 %v2812
    %3513 = vmatprep.subr.bf16.mxu0 %v2805
    %3514 = vmatpush2.bf16.msra.mxu0 %v2804
    %3515 = vmatprep.subr.bf16.mxu0 %v2797
    %3516 = vmatpush2.bf16.msra.mxu0 %v2796
    %3517 = vmatprep.subr.bf16.mxu0 %v2789
    %3518 = vmatpush2.bf16.msra.mxu0 %v2788
    %3519 = vmatprep.mubr.bf16.mxu0 %v795
    %3520 = vmatmul.mubr.bf16.gmra.mxu0 %v793
    %v3521 = vpop.f32.mrf.mxu0
    %v3522 = vadd.f32 %v3481, %v3521
    %v3523 = vpop.f32.mrf.mxu0
    %v3524 = vadd.f32 %v3483, %v3523
    %v3525 = vpop.f32.mrf.mxu0
    %v3526 = vpop.f32.mrf.mxu0
    %3527 = vdwg.mxu0
    %3528 = vmatprep.subr.bf16.mxu0 %v2399
    %3529 = vmatpush1.bf16.msra.mxu0 %v2398
    %3530 = vmatprep.subr.bf16.mxu0 %v2391
    %3531 = vmatpush1.bf16.msra.mxu0 %v2390
    %3532 = vmatprep.subr.bf16.mxu0 %v2383
    %3533 = vmatpush1.bf16.msra.mxu0 %v2382
    %3534 = vmatprep.subr.bf16.mxu0 %v2375
    %3535 = vmatpush1.bf16.msra.mxu0 %v2374
    %3536 = vmatprep.subr.bf16.mxu0 %v2367
    %3537 = vmatpush1.bf16.msra.mxu0 %v2366
    %3538 = vmatprep.subr.bf16.mxu0 %v2359
    %3539 = vmatpush1.bf16.msra.mxu0 %v2358
    %3540 = vmatprep.subr.bf16.mxu0 %v2351
    %3541 = vmatpush1.bf16.msra.mxu0 %v2350
    %3542 = vmatprep.subr.bf16.mxu0 %v2343
    %3543 = vmatpush1.bf16.msra.mxu0 %v2342
    %3544 = vmatprep.subr.bf16.mxu0 %v2463
    %3545 = vmatpush2.bf16.msra.mxu0 %v2462
    %3546 = vmatprep.subr.bf16.mxu0 %v2455
    %3547 = vmatpush2.bf16.msra.mxu0 %v2454
    %3548 = vmatprep.subr.bf16.mxu0 %v2447
    %3549 = vmatpush2.bf16.msra.mxu0 %v2446
    %3550 = vmatprep.subr.bf16.mxu0 %v2439
    %3551 = vmatpush2.bf16.msra.mxu0 %v2438
    %3552 = vmatprep.subr.bf16.mxu0 %v2431
    %3553 = vmatpush2.bf16.msra.mxu0 %v2430
    %3554 = vmatprep.subr.bf16.mxu0 %v2423
    %3555 = vmatpush2.bf16.msra.mxu0 %v2422
    %3556 = vmatprep.subr.bf16.mxu0 %v2415
    %3557 = vmatpush2.bf16.msra.mxu0 %v2414
    %3558 = vmatprep.subr.bf16.mxu0 %v2407
    %3559 = vmatpush2.bf16.msra.mxu0 %v2406
    %3560 = vmatprep.mubr.bf16.mxu0 %v784
    %3561 = vmatmul.mubr.bf16.gmra.mxu0 %v770
    %v3562 = vpop.f32.mrf.mxu0
    %v3563 = vadd.f32 %v717, %v3562
    %v3564 = vpop.f32.mrf.mxu0
    %v3565 = vadd.f32 %v721, %v3564
    %v3566 = vpop.f32.mrf.mxu0
    %v3567 = vpop.f32.mrf.mxu0
    %3568 = vdwg.mxu0
    %3569 = vmatprep.subr.bf16.mxu0 %v2527
    %3570 = vmatpush1.bf16.msra.mxu0 %v2526
    %3571 = vmatprep.subr.bf16.mxu0 %v2519
    %3572 = vmatpush1.bf16.msra.mxu0 %v2518
    %3573 = vmatprep.subr.bf16.mxu0 %v2511
    %3574 = vmatpush1.bf16.msra.mxu0 %v2510
    %3575 = vmatprep.subr.bf16.mxu0 %v2503
    %3576 = vmatpush1.bf16.msra.mxu0 %v2502
    %3577 = vmatprep.subr.bf16.mxu0 %v2495
    %3578 = vmatpush1.bf16.msra.mxu0 %v2494
    %3579 = vmatprep.subr.bf16.mxu0 %v2487
    %3580 = vmatpush1.bf16.msra.mxu0 %v2486
    %3581 = vmatprep.subr.bf16.mxu0 %v2479
    %3582 = vmatpush1.bf16.msra.mxu0 %v2478
    %3583 = vmatprep.subr.bf16.mxu0 %v2471
    %3584 = vmatpush1.bf16.msra.mxu0 %v2470
    %3585 = vmatprep.subr.bf16.mxu0 %v2591
    %3586 = vmatpush2.bf16.msra.mxu0 %v2590
    %3587 = vmatprep.subr.bf16.mxu0 %v2583
    %3588 = vmatpush2.bf16.msra.mxu0 %v2582
    %3589 = vmatprep.subr.bf16.mxu0 %v2575
    %3590 = vmatpush2.bf16.msra.mxu0 %v2574
    %3591 = vmatprep.subr.bf16.mxu0 %v2567
    %3592 = vmatpush2.bf16.msra.mxu0 %v2566
    %3593 = vmatprep.subr.bf16.mxu0 %v2559
    %3594 = vmatpush2.bf16.msra.mxu0 %v2558
    %3595 = vmatprep.subr.bf16.mxu0 %v2551
    %3596 = vmatpush2.bf16.msra.mxu0 %v2550
    %3597 = vmatprep.subr.bf16.mxu0 %v2543
    %3598 = vmatpush2.bf16.msra.mxu0 %v2542
    %3599 = vmatprep.subr.bf16.mxu0 %v2535
    %3600 = vmatpush2.bf16.msra.mxu0 %v2534
    %3601 = vmatprep.mubr.bf16.mxu0 %v794
    %3602 = vmatmul.mubr.bf16.gmra.mxu0 %v792
    %v3603 = vpop.f32.mrf.mxu0
    %v3604 = vadd.f32 %v3563, %v3603
    %v3605 = vpop.f32.mrf.mxu0
    %v3606 = vadd.f32 %v3565, %v3605
    %v3607 = vpop.f32.mrf.mxu0
    %v3608 = vpop.f32.mrf.mxu0
    %3609 = vdwg.mxu0
    %3610 = vmatprep.subr.bf16.mxu0 %v2655
    %3611 = vmatpush1.bf16.msra.mxu0 %v2654
    %3612 = vmatprep.subr.bf16.mxu0 %v2647
    %3613 = vmatpush1.bf16.msra.mxu0 %v2646
    %3614 = vmatprep.subr.bf16.mxu0 %v2639
    %3615 = vmatpush1.bf16.msra.mxu0 %v2638
    %3616 = vmatprep.subr.bf16.mxu0 %v2631
    %3617 = vmatpush1.bf16.msra.mxu0 %v2630
    %3618 = vmatprep.subr.bf16.mxu0 %v2623
    %3619 = vmatpush1.bf16.msra.mxu0 %v2622
    %3620 = vmatprep.subr.bf16.mxu0 %v2615
    %3621 = vmatpush1.bf16.msra.mxu0 %v2614
    %3622 = vmatprep.subr.bf16.mxu0 %v2607
    %3623 = vmatpush1.bf16.msra.mxu0 %v2606
    %3624 = vmatprep.subr.bf16.mxu0 %v2599
    %3625 = vmatpush1.bf16.msra.mxu0 %v2598
    %3626 = vmatprep.subr.bf16.mxu0 %v2719
    %3627 = vmatpush2.bf16.msra.mxu0 %v2718
    %3628 = vmatprep.subr.bf16.mxu0 %v2711
    %3629 = vmatpush2.bf16.msra.mxu0 %v2710
    %3630 = vmatprep.subr.bf16.mxu0 %v2703
    %3631 = vmatpush2.bf16.msra.mxu0 %v2702
    %3632 = vmatprep.subr.bf16.mxu0 %v2695
    %3633 = vmatpush2.bf16.msra.mxu0 %v2694
    %3634 = vmatprep.subr.bf16.mxu0 %v2687
    %3635 = vmatpush2.bf16.msra.mxu0 %v2686
    %3636 = vmatprep.subr.bf16.mxu0 %v2679
    %3637 = vmatpush2.bf16.msra.mxu0 %v2678
    %3638 = vmatprep.subr.bf16.mxu0 %v2671
    %3639 = vmatpush2.bf16.msra.mxu0 %v2670
    %3640 = vmatprep.subr.bf16.mxu0 %v2663
    %3641 = vmatpush2.bf16.msra.mxu0 %v2662
    %3642 = vmatprep.mubr.bf16.mxu0 %v791
    %3643 = vmatmul.mubr.bf16.gmra.mxu0 %v777
    %v3644 = vpop.f32.mrf.mxu0
    %v3645 = vadd.f32 %v3604, %v3644
    %v3646 = vpop.f32.mrf.mxu0
    %v3647 = vadd.f32 %v3606, %v3646
    %v3648 = vpop.f32.mrf.mxu0
    %v3649 = vpop.f32.mrf.mxu0
    %3650 = vdwg.mxu0
    %3651 = vmatprep.subr.bf16.mxu0 %v2783
    %3652 = vmatpush1.bf16.msra.mxu0 %v2782
    %3653 = vmatprep.subr.bf16.mxu0 %v2775
    %3654 = vmatpush1.bf16.msra.mxu0 %v2774
    %3655 = vmatprep.subr.bf16.mxu0 %v2767
    %3656 = vmatpush1.bf16.msra.mxu0 %v2766
    %3657 = vmatprep.subr.bf16.mxu0 %v2759
    %3658 = vmatpush1.bf16.msra.mxu0 %v2758
    %3659 = vmatprep.subr.bf16.mxu0 %v2751
    %3660 = vmatpush1.bf16.msra.mxu0 %v2750
    %3661 = vmatprep.subr.bf16.mxu0 %v2743
    %3662 = vmatpush1.bf16.msra.mxu0 %v2742
    %3663 = vmatprep.subr.bf16.mxu0 %v2735
    %3664 = vmatpush1.bf16.msra.mxu0 %v2734
    %3665 = vmatprep.subr.bf16.mxu0 %v2727
    %3666 = vmatpush1.bf16.msra.mxu0 %v2726
    %3667 = vmatprep.subr.bf16.mxu0 %v2847
    %3668 = vmatpush2.bf16.msra.mxu0 %v2846
    %3669 = vmatprep.subr.bf16.mxu0 %v2839
    %3670 = vmatpush2.bf16.msra.mxu0 %v2838
    %3671 = vmatprep.subr.bf16.mxu0 %v2831
    %3672 = vmatpush2.bf16.msra.mxu0 %v2830
    %3673 = vmatprep.subr.bf16.mxu0 %v2823
    %3674 = vmatpush2.bf16.msra.mxu0 %v2822
    %3675 = vmatprep.subr.bf16.mxu0 %v2815
    %3676 = vmatpush2.bf16.msra.mxu0 %v2814
    %3677 = vmatprep.subr.bf16.mxu0 %v2807
    %3678 = vmatpush2.bf16.msra.mxu0 %v2806
    %3679 = vmatprep.subr.bf16.mxu0 %v2799
    %3680 = vmatpush2.bf16.msra.mxu0 %v2798
    %3681 = vmatprep.subr.bf16.mxu0 %v2791
    %3682 = vmatpush2.bf16.msra.mxu0 %v2790
    %3683 = vmatprep.mubr.bf16.mxu0 %v795
    %3684 = vmatmul.mubr.bf16.gmra.mxu0 %v793
    %v3685 = vpop.f32.mrf.mxu0
    %v3686 = vadd.f32 %v3645, %v3685
    %v3687 = vpop.f32.mrf.mxu0
    %v3688 = vadd.f32 %v3647, %v3687
    %v3689 = vpop.f32.mrf.mxu0
    %v3690 = vpop.f32.mrf.mxu0
    %3691 = vdwg.mxu0
    %3692 = vmatprep.subr.bf16.mxu0 %v2401
    %3693 = vmatpush1.bf16.msra.mxu0 %v2400
    %3694 = vmatprep.subr.bf16.mxu0 %v2393
    %3695 = vmatpush1.bf16.msra.mxu0 %v2392
    %3696 = vmatprep.subr.bf16.mxu0 %v2385
    %3697 = vmatpush1.bf16.msra.mxu0 %v2384
    %3698 = vmatprep.subr.bf16.mxu0 %v2377
    %3699 = vmatpush1.bf16.msra.mxu0 %v2376
    %3700 = vmatprep.subr.bf16.mxu0 %v2369
    %3701 = vmatpush1.bf16.msra.mxu0 %v2368
    %3702 = vmatprep.subr.bf16.mxu0 %v2361
    %3703 = vmatpush1.bf16.msra.mxu0 %v2360
    %3704 = vmatprep.subr.bf16.mxu0 %v2353
    %3705 = vmatpush1.bf16.msra.mxu0 %v2352
    %3706 = vmatprep.subr.bf16.mxu0 %v2345
    %3707 = vmatpush1.bf16.msra.mxu0 %v2344
    %3708 = vmatprep.subr.bf16.mxu0 %v2465
    %3709 = vmatpush2.bf16.msra.mxu0 %v2464
    %3710 = vmatprep.subr.bf16.mxu0 %v2457
    %3711 = vmatpush2.bf16.msra.mxu0 %v2456
    %3712 = vmatprep.subr.bf16.mxu0 %v2449
    %3713 = vmatpush2.bf16.msra.mxu0 %v2448
    %3714 = vmatprep.subr.bf16.mxu0 %v2441
    %3715 = vmatpush2.bf16.msra.mxu0 %v2440
    %3716 = vmatprep.subr.bf16.mxu0 %v2433
    %3717 = vmatpush2.bf16.msra.mxu0 %v2432
    %3718 = vmatprep.subr.bf16.mxu0 %v2425
    %3719 = vmatpush2.bf16.msra.mxu0 %v2424
    %3720 = vmatprep.subr.bf16.mxu0 %v2417
    %3721 = vmatpush2.bf16.msra.mxu0 %v2416
    %3722 = vmatprep.subr.bf16.mxu0 %v2409
    %3723 = vmatpush2.bf16.msra.mxu0 %v2408
    %3724 = vmatprep.mubr.bf16.mxu0 %v784
    %3725 = vmatmul.mubr.bf16.gmra.mxu0 %v770
    %v3726 = vpop.f32.mrf.mxu0
    %v3727 = vadd.f32 %v725, %v3726
    %v3728 = vpop.f32.mrf.mxu0
    %v3729 = vadd.f32 %v729, %v3728
    %v3730 = vpop.f32.mrf.mxu0
    %v3731 = vpop.f32.mrf.mxu0
    %3732 = vdwg.mxu0
    %3733 = vmatprep.subr.bf16.mxu0 %v2529
    %3734 = vmatpush1.bf16.msra.mxu0 %v2528
    %3735 = vmatprep.subr.bf16.mxu0 %v2521
    %3736 = vmatpush1.bf16.msra.mxu0 %v2520
    %3737 = vmatprep.subr.bf16.mxu0 %v2513
    %3738 = vmatpush1.bf16.msra.mxu0 %v2512
    %3739 = vmatprep.subr.bf16.mxu0 %v2505
    %3740 = vmatpush1.bf16.msra.mxu0 %v2504
    %3741 = vmatprep.subr.bf16.mxu0 %v2497
    %3742 = vmatpush1.bf16.msra.mxu0 %v2496
    %3743 = vmatprep.subr.bf16.mxu0 %v2489
    %3744 = vmatpush1.bf16.msra.mxu0 %v2488
    %3745 = vmatprep.subr.bf16.mxu0 %v2481
    %3746 = vmatpush1.bf16.msra.mxu0 %v2480
    %3747 = vmatprep.subr.bf16.mxu0 %v2473
    %3748 = vmatpush1.bf16.msra.mxu0 %v2472
    %3749 = vmatprep.subr.bf16.mxu0 %v2593
    %3750 = vmatpush2.bf16.msra.mxu0 %v2592
    %3751 = vmatprep.subr.bf16.mxu0 %v2585
    %3752 = vmatpush2.bf16.msra.mxu0 %v2584
    %3753 = vmatprep.subr.bf16.mxu0 %v2577
    %3754 = vmatpush2.bf16.msra.mxu0 %v2576
    %3755 = vmatprep.subr.bf16.mxu0 %v2569
    %3756 = vmatpush2.bf16.msra.mxu0 %v2568
    %3757 = vmatprep.subr.bf16.mxu0 %v2561
    %3758 = vmatpush2.bf16.msra.mxu0 %v2560
    %3759 = vmatprep.subr.bf16.mxu0 %v2553
    %3760 = vmatpush2.bf16.msra.mxu0 %v2552
    %3761 = vmatprep.subr.bf16.mxu0 %v2545
    %3762 = vmatpush2.bf16.msra.mxu0 %v2544
    %3763 = vmatprep.subr.bf16.mxu0 %v2537
    %3764 = vmatpush2.bf16.msra.mxu0 %v2536
    %3765 = vmatprep.mubr.bf16.mxu0 %v794
    %3766 = vmatmul.mubr.bf16.gmra.mxu0 %v792
    %v3767 = vpop.f32.mrf.mxu0
    %v3768 = vadd.f32 %v3727, %v3767
    %v3769 = vpop.f32.mrf.mxu0
    %v3770 = vadd.f32 %v3729, %v3769
    %v3771 = vpop.f32.mrf.mxu0
    %v3772 = vpop.f32.mrf.mxu0
    %3773 = vdwg.mxu0
    %3774 = vmatprep.subr.bf16.mxu0 %v2657
    %3775 = vmatpush1.bf16.msra.mxu0 %v2656
    %3776 = vmatprep.subr.bf16.mxu0 %v2649
    %3777 = vmatpush1.bf16.msra.mxu0 %v2648
    %3778 = vmatprep.subr.bf16.mxu0 %v2641
    %3779 = vmatpush1.bf16.msra.mxu0 %v2640
    %3780 = vmatprep.subr.bf16.mxu0 %v2633
    %3781 = vmatpush1.bf16.msra.mxu0 %v2632
    %3782 = vmatprep.subr.bf16.mxu0 %v2625
    %3783 = vmatpush1.bf16.msra.mxu0 %v2624
    %3784 = vmatprep.subr.bf16.mxu0 %v2617
    %3785 = vmatpush1.bf16.msra.mxu0 %v2616
    %3786 = vmatprep.subr.bf16.mxu0 %v2609
    %3787 = vmatpush1.bf16.msra.mxu0 %v2608
    %3788 = vmatprep.subr.bf16.mxu0 %v2601
    %3789 = vmatpush1.bf16.msra.mxu0 %v2600
    %3790 = vmatprep.subr.bf16.mxu0 %v2721
    %3791 = vmatpush2.bf16.msra.mxu0 %v2720
    %3792 = vmatprep.subr.bf16.mxu0 %v2713
    %3793 = vmatpush2.bf16.msra.mxu0 %v2712
    %3794 = vmatprep.subr.bf16.mxu0 %v2705
    %3795 = vmatpush2.bf16.msra.mxu0 %v2704
    %3796 = vmatprep.subr.bf16.mxu0 %v2697
    %3797 = vmatpush2.bf16.msra.mxu0 %v2696
    %3798 = vmatprep.subr.bf16.mxu0 %v2689
    %3799 = vmatpush2.bf16.msra.mxu0 %v2688
    %3800 = vmatprep.subr.bf16.mxu0 %v2681
    %3801 = vmatpush2.bf16.msra.mxu0 %v2680
    %3802 = vmatprep.subr.bf16.mxu0 %v2673
    %3803 = vmatpush2.bf16.msra.mxu0 %v2672
    %3804 = vmatprep.subr.bf16.mxu0 %v2665
    %3805 = vmatpush2.bf16.msra.mxu0 %v2664
    %3806 = vmatprep.mubr.bf16.mxu0 %v791
    %3807 = vmatmul.mubr.bf16.gmra.mxu0 %v777
    %v3808 = vpop.f32.mrf.mxu0
    %v3809 = vadd.f32 %v3768, %v3808
    %v3810 = vpop.f32.mrf.mxu0
    %v3811 = vadd.f32 %v3770, %v3810
    %v3812 = vpop.f32.mrf.mxu0
    %v3813 = vpop.f32.mrf.mxu0
    %3814 = vdwg.mxu0
    %3815 = vmatprep.subr.bf16.mxu0 %v2785
    %3816 = vmatpush1.bf16.msra.mxu0 %v2784
    %3817 = vmatprep.subr.bf16.mxu0 %v2777
    %3818 = vmatpush1.bf16.msra.mxu0 %v2776
    %3819 = vmatprep.subr.bf16.mxu0 %v2769
    %3820 = vmatpush1.bf16.msra.mxu0 %v2768
    %3821 = vmatprep.subr.bf16.mxu0 %v2761
    %3822 = vmatpush1.bf16.msra.mxu0 %v2760
    %3823 = vmatprep.subr.bf16.mxu0 %v2753
    %3824 = vmatpush1.bf16.msra.mxu0 %v2752
    %3825 = vmatprep.subr.bf16.mxu0 %v2745
    %3826 = vmatpush1.bf16.msra.mxu0 %v2744
    %3827 = vmatprep.subr.bf16.mxu0 %v2737
    %3828 = vmatpush1.bf16.msra.mxu0 %v2736
    %3829 = vmatprep.subr.bf16.mxu0 %v2729
    %3830 = vmatpush1.bf16.msra.mxu0 %v2728
    %3831 = vmatprep.subr.bf16.mxu0 %v2849
    %3832 = vmatpush2.bf16.msra.mxu0 %v2848
    %3833 = vmatprep.subr.bf16.mxu0 %v2841
    %3834 = vmatpush2.bf16.msra.mxu0 %v2840
    %3835 = vmatprep.subr.bf16.mxu0 %v2833
    %3836 = vmatpush2.bf16.msra.mxu0 %v2832
    %3837 = vmatprep.subr.bf16.mxu0 %v2825
    %3838 = vmatpush2.bf16.msra.mxu0 %v2824
    %3839 = vmatprep.subr.bf16.mxu0 %v2817
    %3840 = vmatpush2.bf16.msra.mxu0 %v2816
    %3841 = vmatprep.subr.bf16.mxu0 %v2809
    %3842 = vmatpush2.bf16.msra.mxu0 %v2808
    %3843 = vmatprep.subr.bf16.mxu0 %v2801
    %3844 = vmatpush2.bf16.msra.mxu0 %v2800
    %3845 = vmatprep.subr.bf16.mxu0 %v2793
    %3846 = vmatpush2.bf16.msra.mxu0 %v2792
    %3847 = vmatprep.mubr.bf16.mxu0 %v795
    %3848 = vmatmul.mubr.bf16.gmra.mxu0 %v793
    %v3849 = vpop.f32.mrf.mxu0
    %v3850 = vadd.f32 %v3809, %v3849
    %v3851 = vpop.f32.mrf.mxu0
    %v3852 = vadd.f32 %v3811, %v3851
    %v3853 = vpop.f32.mrf.mxu0
    %v3854 = vpop.f32.mrf.mxu0
    %3855 = vdwg.mxu0
    %3856 = vmatprep.subr.bf16.mxu0 %v2403
    %3857 = vmatpush1.bf16.msra.mxu0 %v2402
    %3858 = vmatprep.subr.bf16.mxu0 %v2395
    %3859 = vmatpush1.bf16.msra.mxu0 %v2394
    %3860 = vmatprep.subr.bf16.mxu0 %v2387
    %3861 = vmatpush1.bf16.msra.mxu0 %v2386
    %3862 = vmatprep.subr.bf16.mxu0 %v2379
    %3863 = vmatpush1.bf16.msra.mxu0 %v2378
    %3864 = vmatprep.subr.bf16.mxu0 %v2371
    %3865 = vmatpush1.bf16.msra.mxu0 %v2370
    %3866 = vmatprep.subr.bf16.mxu0 %v2363
    %3867 = vmatpush1.bf16.msra.mxu0 %v2362
    %3868 = vmatprep.subr.bf16.mxu0 %v2355
    %3869 = vmatpush1.bf16.msra.mxu0 %v2354
    %3870 = vmatprep.subr.bf16.mxu0 %v2347
    %3871 = vmatpush1.bf16.msra.mxu0 %v2346
    %3872 = vmatprep.subr.bf16.mxu0 %v2467
    %3873 = vmatpush2.bf16.msra.mxu0 %v2466
    %3874 = vmatprep.subr.bf16.mxu0 %v2459
    %3875 = vmatpush2.bf16.msra.mxu0 %v2458
    %3876 = vmatprep.subr.bf16.mxu0 %v2451
    %3877 = vmatpush2.bf16.msra.mxu0 %v2450
    %3878 = vmatprep.subr.bf16.mxu0 %v2443
    %3879 = vmatpush2.bf16.msra.mxu0 %v2442
    %3880 = vmatprep.subr.bf16.mxu0 %v2435
    %3881 = vmatpush2.bf16.msra.mxu0 %v2434
    %3882 = vmatprep.subr.bf16.mxu0 %v2427
    %3883 = vmatpush2.bf16.msra.mxu0 %v2426
    %3884 = vmatprep.subr.bf16.mxu0 %v2419
    %3885 = vmatpush2.bf16.msra.mxu0 %v2418
    %3886 = vmatprep.subr.bf16.mxu0 %v2411
    %3887 = vmatpush2.bf16.msra.mxu0 %v2410
    %3888 = vmatprep.mubr.bf16.mxu0 %v784
    %3889 = vmatmul.mubr.bf16.gmra.mxu0 %v770
    %v3890 = vpop.f32.mrf.mxu0
    %v3891 = vadd.f32 %v733, %v3890
    %v3892 = vpop.f32.mrf.mxu0
    %v3893 = vadd.f32 %v737, %v3892
    %v3894 = vpop.f32.mrf.mxu0
    %v3895 = vpop.f32.mrf.mxu0
    %3896 = vdwg.mxu0
    %3897 = vmatprep.subr.bf16.mxu0 %v2531
    %3898 = vmatpush1.bf16.msra.mxu0 %v2530
    %3899 = vmatprep.subr.bf16.mxu0 %v2523
    %3900 = vmatpush1.bf16.msra.mxu0 %v2522
    %3901 = vmatprep.subr.bf16.mxu0 %v2515
    %3902 = vmatpush1.bf16.msra.mxu0 %v2514
    %3903 = vmatprep.subr.bf16.mxu0 %v2507
    %3904 = vmatpush1.bf16.msra.mxu0 %v2506
    %3905 = vmatprep.subr.bf16.mxu0 %v2499
    %3906 = vmatpush1.bf16.msra.mxu0 %v2498
    %3907 = vmatprep.subr.bf16.mxu0 %v2491
    %3908 = vmatpush1.bf16.msra.mxu0 %v2490
    %3909 = vmatprep.subr.bf16.mxu0 %v2483
    %3910 = vmatpush1.bf16.msra.mxu0 %v2482
    %3911 = vmatprep.subr.bf16.mxu0 %v2475
    %3912 = vmatpush1.bf16.msra.mxu0 %v2474
    %3913 = vmatprep.subr.bf16.mxu0 %v2595
    %3914 = vmatpush2.bf16.msra.mxu0 %v2594
    %3915 = vmatprep.subr.bf16.mxu0 %v2587
    %3916 = vmatpush2.bf16.msra.mxu0 %v2586
    %3917 = vmatprep.subr.bf16.mxu0 %v2579
    %3918 = vmatpush2.bf16.msra.mxu0 %v2578
    %3919 = vmatprep.subr.bf16.mxu0 %v2571
    %3920 = vmatpush2.bf16.msra.mxu0 %v2570
    %3921 = vmatprep.subr.bf16.mxu0 %v2563
    %3922 = vmatpush2.bf16.msra.mxu0 %v2562
    %3923 = vmatprep.subr.bf16.mxu0 %v2555
    %3924 = vmatpush2.bf16.msra.mxu0 %v2554
    %3925 = vmatprep.subr.bf16.mxu0 %v2547
    %3926 = vmatpush2.bf16.msra.mxu0 %v2546
    %3927 = vmatprep.subr.bf16.mxu0 %v2539
    %3928 = vmatpush2.bf16.msra.mxu0 %v2538
    %3929 = vmatprep.mubr.bf16.mxu0 %v794
    %3930 = vmatmul.mubr.bf16.gmra.mxu0 %v792
    %v3931 = vpop.f32.mrf.mxu0
    %v3932 = vadd.f32 %v3891, %v3931
    %v3933 = vpop.f32.mrf.mxu0
    %v3934 = vadd.f32 %v3893, %v3933
    %v3935 = vpop.f32.mrf.mxu0
    %v3936 = vpop.f32.mrf.mxu0
    %3937 = vdwg.mxu0
    %3938 = vmatprep.subr.bf16.mxu0 %v2659
    %3939 = vmatpush1.bf16.msra.mxu0 %v2658
    %3940 = vmatprep.subr.bf16.mxu0 %v2651
    %3941 = vmatpush1.bf16.msra.mxu0 %v2650
    %3942 = vmatprep.subr.bf16.mxu0 %v2643
    %3943 = vmatpush1.bf16.msra.mxu0 %v2642
    %3944 = vmatprep.subr.bf16.mxu0 %v2635
    %3945 = vmatpush1.bf16.msra.mxu0 %v2634
    %3946 = vmatprep.subr.bf16.mxu0 %v2627
    %3947 = vmatpush1.bf16.msra.mxu0 %v2626
    %3948 = vmatprep.subr.bf16.mxu0 %v2619
    %3949 = vmatpush1.bf16.msra.mxu0 %v2618
    %3950 = vmatprep.subr.bf16.mxu0 %v2611
    %3951 = vmatpush1.bf16.msra.mxu0 %v2610
    %3952 = vmatprep.subr.bf16.mxu0 %v2603
    %3953 = vmatpush1.bf16.msra.mxu0 %v2602
    %3954 = vmatprep.subr.bf16.mxu0 %v2723
    %3955 = vmatpush2.bf16.msra.mxu0 %v2722
    %3956 = vmatprep.subr.bf16.mxu0 %v2715
    %3957 = vmatpush2.bf16.msra.mxu0 %v2714
    %3958 = vmatprep.subr.bf16.mxu0 %v2707
    %3959 = vmatpush2.bf16.msra.mxu0 %v2706
    %3960 = vmatprep.subr.bf16.mxu0 %v2699
    %3961 = vmatpush2.bf16.msra.mxu0 %v2698
    %3962 = vmatprep.subr.bf16.mxu0 %v2691
    %3963 = vmatpush2.bf16.msra.mxu0 %v2690
    %3964 = vmatprep.subr.bf16.mxu0 %v2683
    %3965 = vmatpush2.bf16.msra.mxu0 %v2682
    %3966 = vmatprep.subr.bf16.mxu0 %v2675
    %3967 = vmatpush2.bf16.msra.mxu0 %v2674
    %3968 = vmatprep.subr.bf16.mxu0 %v2667
    %3969 = vmatpush2.bf16.msra.mxu0 %v2666
    %3970 = vmatprep.mubr.bf16.mxu0 %v791
    %3971 = vmatmul.mubr.bf16.gmra.mxu0 %v777
    %v3972 = vpop.f32.mrf.mxu0
    %v3973 = vadd.f32 %v3932, %v3972
    %v3974 = vpop.f32.mrf.mxu0
    %v3975 = vadd.f32 %v3934, %v3974
    %v3976 = vpop.f32.mrf.mxu0
    %v3977 = vpop.f32.mrf.mxu0
    %3978 = vdwg.mxu0
    %3979 = vmatprep.subr.bf16.mxu0 %v2787
    %3980 = vmatpush1.bf16.msra.mxu0 %v2786
    %3981 = vmatprep.subr.bf16.mxu0 %v2779
    %3982 = vmatpush1.bf16.msra.mxu0 %v2778
    %3983 = vmatprep.subr.bf16.mxu0 %v2771
    %3984 = vmatpush1.bf16.msra.mxu0 %v2770
    %3985 = vmatprep.subr.bf16.mxu0 %v2763
    %3986 = vmatpush1.bf16.msra.mxu0 %v2762
    %3987 = vmatprep.subr.bf16.mxu0 %v2755
    %3988 = vmatpush1.bf16.msra.mxu0 %v2754
    %3989 = vmatprep.subr.bf16.mxu0 %v2747
    %3990 = vmatpush1.bf16.msra.mxu0 %v2746
    %3991 = vmatprep.subr.bf16.mxu0 %v2739
    %3992 = vmatpush1.bf16.msra.mxu0 %v2738
    %3993 = vmatprep.subr.bf16.mxu0 %v2731
    %3994 = vmatpush1.bf16.msra.mxu0 %v2730
    %3995 = vmatprep.subr.bf16.mxu0 %v2851
    %3996 = vmatpush2.bf16.msra.mxu0 %v2850
    %3997 = vmatprep.subr.bf16.mxu0 %v2843
    %3998 = vmatpush2.bf16.msra.mxu0 %v2842
    %3999 = vmatprep.subr.bf16.mxu0 %v2835
    %4000 = vmatpush2.bf16.msra.mxu0 %v2834
    %4001 = vmatprep.subr.bf16.mxu0 %v2827
    %4002 = vmatpush2.bf16.msra.mxu0 %v2826
    %4003 = vmatprep.subr.bf16.mxu0 %v2819
    %4004 = vmatpush2.bf16.msra.mxu0 %v2818
    %4005 = vmatprep.subr.bf16.mxu0 %v2811
    %4006 = vmatpush2.bf16.msra.mxu0 %v2810
    %4007 = vmatprep.subr.bf16.mxu0 %v2803
    %4008 = vmatpush2.bf16.msra.mxu0 %v2802
    %4009 = vmatprep.subr.bf16.mxu0 %v2795
    %4010 = vmatpush2.bf16.msra.mxu0 %v2794
    %4011 = vmatprep.mubr.bf16.mxu0 %v795
    %4012 = vmatmul.mubr.bf16.gmra.mxu0 %v793
    %v4013 = vpop.f32.mrf.mxu0
    %v4014 = vadd.f32 %v3973, %v4013
    %v4015 = vpop.f32.mrf.mxu0
    %v4016 = vadd.f32 %v3975, %v4015
    %v4017 = vpop.f32.mrf.mxu0
    %v4018 = vpop.f32.mrf.mxu0
    %4019 = vdwg.mxu0
    %vm4020 = vcmp.gt.f32.partialorder %v3522, 0.0
    %vm4021 = vcmp.gt.f32.partialorder %v3524, 0.0
    %vm4022 = vcmp.gt.f32.partialorder %v3686, 0.0
    %vm4023 = vcmp.gt.f32.partialorder %v3688, 0.0
    %vm4024 = vcmp.gt.f32.partialorder %v3850, 0.0
    %vm4025 = vcmp.gt.f32.partialorder %v3852, 0.0
    %vm4026 = vcmp.gt.f32.partialorder %v4014, 0.0
    %vm4027 = vcmp.gt.f32.partialorder %v4016, 0.0
    %v4028 = vmul.f32 %v3522, 0.2
    %v4029 = vmul.f32 %v3524, 0.2
    %v4030 = vmul.f32 %v3686, 0.2
    %v4031 = vmul.f32 %v3688, 0.2
    %v4032 = vmul.f32 %v3850, 0.2
    %v4033 = vmul.f32 %v3852, 0.2
    %v4034 = vmul.f32 %v4014, 0.2
    %v4035 = vmul.f32 %v4016, 0.2
    %v4036 = vsel %vm4020, %v3522, %v4028
    %v4037 = vsel %vm4021, %v3524, %v4029
    %v4038 = vsel %vm4022, %v3686, %v4030
    %v4039 = vsel %vm4023, %v3688, %v4031
    %v4040 = vsel %vm4024, %v3850, %v4032
    %v4041 = vsel %vm4025, %v3852, %v4033
    %v4042 = vsel %vm4026, %v4014, %v4034
    %v4043 = vsel %vm4027, %v4016, %v4035
    %v4044 = vpack.c.bf16 %v4036, %v4036
    %v4045 = vpack.c.bf16 %v4037, %v4037
    %v4046 = vpack.c.bf16 %v4038, %v4038
    %v4047 = vpack.c.bf16 %v4039, %v4039
    %v4048 = vpack.c.bf16 %v4040, %v4040
    %v4049 = vpack.c.bf16 %v4041, %v4041
    %v4050 = vpack.c.bf16 %v4042, %v4042
    %v4051 = vpack.c.bf16 %v4043, %v4043
    %v4052 = vld [vmem:[%s5] sm:$0xff]
    %v4053 = vld [vmem:[%s5 + $0x8] sm:$0xff]
    %v4054 = vld [vmem:[%s5 + $0x10] sm:$0xff]
    %v4055 = vld [vmem:[%s5 + $0x18] sm:$0xff]
    %v4056 = vld [vmem:[%s5 + $0x20] sm:$0xff]
    %v4057 = vld [vmem:[%s5 + $0x28] sm:$0xff]
    %v4058 = vld [vmem:[%s5 + $0x30] sm:$0xff]
    %v4059 = vld [vmem:[%s5 + $0x38] sm:$0xff]
    %v4060 = vld [vmem:[%s5 + $0x40] sm:$0xff]
    %v4061 = vld [vmem:[%s5 + $0x48] sm:$0xff]
    %v4062 = vld [vmem:[%s5 + $0x50] sm:$0xff]
    %v4063 = vld [vmem:[%s5 + $0x58] sm:$0xff]
    %v4064 = vld [vmem:[%s5 + $0x60] sm:$0xff]
    %v4065 = vld [vmem:[%s5 + $0x68] sm:$0xff]
    %v4066 = vld [vmem:[%s5 + $0x70] sm:$0xff]
    %v4067 = vld [vmem:[%s5 + $0x78] sm:$0xff]
    %v4068 = vld [vmem:[%s5 + $0x80] sm:$0xff]
    %v4069 = vld [vmem:[%s5 + $0x88] sm:$0xff]
    %v4070 = vld [vmem:[%s5 + $0x90] sm:$0xff]
    %v4071 = vld [vmem:[%s5 + $0x98] sm:$0xff]
    %v4072 = vld [vmem:[%s5 + $0xa0] sm:$0xff]
    %v4073 = vld [vmem:[%s5 + $0xa8] sm:$0xff]
    %v4074 = vld [vmem:[%s5 + $0xb0] sm:$0xff]
    %v4075 = vld [vmem:[%s5 + $0xb8] sm:$0xff]
    %v4076 = vld [vmem:[%s5 + $0xc0] sm:$0xff]
    %v4077 = vld [vmem:[%s5 + $0xc8] sm:$0xff]
    %v4078 = vld [vmem:[%s5 + $0xd0] sm:$0xff]
    %v4079 = vld [vmem:[%s5 + $0xd8] sm:$0xff]
    %v4080 = vld [vmem:[%s5 + $0xe0] sm:$0xff]
    %v4081 = vld [vmem:[%s5 + $0xe8] sm:$0xff]
    %v4082 = vld [vmem:[%s5 + $0xf0] sm:$0xff]
    %v4083 = vld [vmem:[%s5 + $0xf8] sm:$0xff]
    %v4084 = vld [vmem:[%s5 + $0x100] sm:$0xff]
    %v4085 = vld [vmem:[%s5 + $0x108] sm:$0xff]
    %v4086 = vld [vmem:[%s5 + $0x110] sm:$0xff]
    %v4087 = vld [vmem:[%s5 + $0x118] sm:$0xff]
    %v4088 = vld [vmem:[%s5 + $0x120] sm:$0xff]
    %v4089 = vld [vmem:[%s5 + $0x128] sm:$0xff]
    %v4090 = vld [vmem:[%s5 + $0x130] sm:$0xff]
    %v4091 = vld [vmem:[%s5 + $0x138] sm:$0xff]
    %v4092 = vld [vmem:[%s5 + $0x140] sm:$0xff]
    %v4093 = vld [vmem:[%s5 + $0x148] sm:$0xff]
    %v4094 = vld [vmem:[%s5 + $0x150] sm:$0xff]
    %v4095 = vld [vmem:[%s5 + $0x158] sm:$0xff]
    %v4096 = vld [vmem:[%s5 + $0x160] sm:$0xff]
    %v4097 = vld [vmem:[%s5 + $0x168] sm:$0xff]
    %v4098 = vld [vmem:[%s5 + $0x170] sm:$0xff]
    %v4099 = vld [vmem:[%s5 + $0x178] sm:$0xff]
    %v4100 = vld [vmem:[%s5 + $0x180] sm:$0xff]
    %v4101 = vld [vmem:[%s5 + $0x188] sm:$0xff]
    %v4102 = vld [vmem:[%s5 + $0x190] sm:$0xff]
    %v4103 = vld [vmem:[%s5 + $0x198] sm:$0xff]
    %v4104 = vld [vmem:[%s5 + $0x1a0] sm:$0xff]
    %v4105 = vld [vmem:[%s5 + $0x1a8] sm:$0xff]
    %v4106 = vld [vmem:[%s5 + $0x1b0] sm:$0xff]
    %v4107 = vld [vmem:[%s5 + $0x1b8] sm:$0xff]
    %v4108 = vld [vmem:[%s5 + $0x1c0] sm:$0xff]
    %v4109 = vld [vmem:[%s5 + $0x1c8] sm:$0xff]
    %v4110 = vld [vmem:[%s5 + $0x1d0] sm:$0xff]
    %v4111 = vld [vmem:[%s5 + $0x1d8] sm:$0xff]
    %v4112 = vld [vmem:[%s5 + $0x1e0] sm:$0xff]
    %v4113 = vld [vmem:[%s5 + $0x1e8] sm:$0xff]
    %v4114 = vld [vmem:[%s5 + $0x1f0] sm:$0xff]
    %v4115 = vld [vmem:[%s5 + $0x1f8] sm:$0xff]
    %v4116 = vld [vmem:[%s5 + $0x200] sm:$0xff]
    %v4117 = vld [vmem:[%s5 + $0x208] sm:$0xff]
    %v4118 = vld [vmem:[%s5 + $0x210] sm:$0xff]
    %v4119 = vld [vmem:[%s5 + $0x218] sm:$0xff]
    %v4120 = vld [vmem:[%s5 + $0x220] sm:$0xff]
    %v4121 = vld [vmem:[%s5 + $0x228] sm:$0xff]
    %v4122 = vld [vmem:[%s5 + $0x230] sm:$0xff]
    %v4123 = vld [vmem:[%s5 + $0x238] sm:$0xff]
    %v4124 = vld [vmem:[%s5 + $0x240] sm:$0xff]
    %v4125 = vld [vmem:[%s5 + $0x248] sm:$0xff]
    %v4126 = vld [vmem:[%s5 + $0x250] sm:$0xff]
    %v4127 = vld [vmem:[%s5 + $0x258] sm:$0xff]
    %v4128 = vld [vmem:[%s5 + $0x260] sm:$0xff]
    %v4129 = vld [vmem:[%s5 + $0x268] sm:$0xff]
    %v4130 = vld [vmem:[%s5 + $0x270] sm:$0xff]
    %v4131 = vld [vmem:[%s5 + $0x278] sm:$0xff]
    %v4132 = vld [vmem:[%s5 + $0x280] sm:$0xff]
    %v4133 = vld [vmem:[%s5 + $0x288] sm:$0xff]
    %v4134 = vld [vmem:[%s5 + $0x290] sm:$0xff]
    %v4135 = vld [vmem:[%s5 + $0x298] sm:$0xff]
    %v4136 = vld [vmem:[%s5 + $0x2a0] sm:$0xff]
    %v4137 = vld [vmem:[%s5 + $0x2a8] sm:$0xff]
    %v4138 = vld [vmem:[%s5 + $0x2b0] sm:$0xff]
    %v4139 = vld [vmem:[%s5 + $0x2b8] sm:$0xff]
    %v4140 = vld [vmem:[%s5 + $0x2c0] sm:$0xff]
    %v4141 = vld [vmem:[%s5 + $0x2c8] sm:$0xff]
    %v4142 = vld [vmem:[%s5 + $0x2d0] sm:$0xff]
    %v4143 = vld [vmem:[%s5 + $0x2d8] sm:$0xff]
    %v4144 = vld [vmem:[%s5 + $0x2e0] sm:$0xff]
    %v4145 = vld [vmem:[%s5 + $0x2e8] sm:$0xff]
    %v4146 = vld [vmem:[%s5 + $0x2f0] sm:$0xff]
    %v4147 = vld [vmem:[%s5 + $0x2f8] sm:$0xff]
    %v4148 = vld [vmem:[%s5 + $0x300] sm:$0xff]
    %v4149 = vld [vmem:[%s5 + $0x308] sm:$0xff]
    %v4150 = vld [vmem:[%s5 + $0x310] sm:$0xff]
    %v4151 = vld [vmem:[%s5 + $0x318] sm:$0xff]
    %v4152 = vld [vmem:[%s5 + $0x320] sm:$0xff]
    %v4153 = vld [vmem:[%s5 + $0x328] sm:$0xff]
    %v4154 = vld [vmem:[%s5 + $0x330] sm:$0xff]
    %v4155 = vld [vmem:[%s5 + $0x338] sm:$0xff]
    %v4156 = vld [vmem:[%s5 + $0x340] sm:$0xff]
    %v4157 = vld [vmem:[%s5 + $0x348] sm:$0xff]
    %v4158 = vld [vmem:[%s5 + $0x350] sm:$0xff]
    %v4159 = vld [vmem:[%s5 + $0x358] sm:$0xff]
    %v4160 = vld [vmem:[%s5 + $0x360] sm:$0xff]
    %v4161 = vld [vmem:[%s5 + $0x368] sm:$0xff]
    %v4162 = vld [vmem:[%s5 + $0x370] sm:$0xff]
    %v4163 = vld [vmem:[%s5 + $0x378] sm:$0xff]
    %v4164 = vld [vmem:[%s5 + $0x380] sm:$0xff]
    %v4165 = vld [vmem:[%s5 + $0x388] sm:$0xff]
    %v4166 = vld [vmem:[%s5 + $0x390] sm:$0xff]
    %v4167 = vld [vmem:[%s5 + $0x398] sm:$0xff]
    %v4168 = vld [vmem:[%s5 + $0x3a0] sm:$0xff]
    %v4169 = vld [vmem:[%s5 + $0x3a8] sm:$0xff]
    %v4170 = vld [vmem:[%s5 + $0x3b0] sm:$0xff]
    %v4171 = vld [vmem:[%s5 + $0x3b8] sm:$0xff]
    %v4172 = vld [vmem:[%s5 + $0x3c0] sm:$0xff]
    %v4173 = vld [vmem:[%s5 + $0x3c8] sm:$0xff]
    %v4174 = vld [vmem:[%s5 + $0x3d0] sm:$0xff]
    %v4175 = vld [vmem:[%s5 + $0x3d8] sm:$0xff]
    %v4176 = vld [vmem:[%s5 + $0x3e0] sm:$0xff]
    %v4177 = vld [vmem:[%s5 + $0x3e8] sm:$0xff]
    %v4178 = vld [vmem:[%s5 + $0x3f0] sm:$0xff]
    %v4179 = vld [vmem:[%s5 + $0x3f8] sm:$0xff]
    %v4180 = vld [vmem:[%s5 + $0x400] sm:$0xff]
    %v4181 = vld [vmem:[%s5 + $0x408] sm:$0xff]
    %v4182 = vld [vmem:[%s5 + $0x410] sm:$0xff]
    %v4183 = vld [vmem:[%s5 + $0x418] sm:$0xff]
    %v4184 = vld [vmem:[%s5 + $0x420] sm:$0xff]
    %v4185 = vld [vmem:[%s5 + $0x428] sm:$0xff]
    %v4186 = vld [vmem:[%s5 + $0x430] sm:$0xff]
    %v4187 = vld [vmem:[%s5 + $0x438] sm:$0xff]
    %v4188 = vld [vmem:[%s5 + $0x440] sm:$0xff]
    %v4189 = vld [vmem:[%s5 + $0x448] sm:$0xff]
    %v4190 = vld [vmem:[%s5 + $0x450] sm:$0xff]
    %v4191 = vld [vmem:[%s5 + $0x458] sm:$0xff]
    %v4192 = vld [vmem:[%s5 + $0x460] sm:$0xff]
    %v4193 = vld [vmem:[%s5 + $0x468] sm:$0xff]
    %v4194 = vld [vmem:[%s5 + $0x470] sm:$0xff]
    %v4195 = vld [vmem:[%s5 + $0x478] sm:$0xff]
    %v4196 = vld [vmem:[%s5 + $0x480] sm:$0xff]
    %v4197 = vld [vmem:[%s5 + $0x488] sm:$0xff]
    %v4198 = vld [vmem:[%s5 + $0x490] sm:$0xff]
    %v4199 = vld [vmem:[%s5 + $0x498] sm:$0xff]
    %v4200 = vld [vmem:[%s5 + $0x4a0] sm:$0xff]
    %v4201 = vld [vmem:[%s5 + $0x4a8] sm:$0xff]
    %v4202 = vld [vmem:[%s5 + $0x4b0] sm:$0xff]
    %v4203 = vld [vmem:[%s5 + $0x4b8] sm:$0xff]
    %v4204 = vld [vmem:[%s5 + $0x4c0] sm:$0xff]
    %v4205 = vld [vmem:[%s5 + $0x4c8] sm:$0xff]
    %v4206 = vld [vmem:[%s5 + $0x4d0] sm:$0xff]
    %v4207 = vld [vmem:[%s5 + $0x4d8] sm:$0xff]
    %v4208 = vld [vmem:[%s5 + $0x4e0] sm:$0xff]
    %v4209 = vld [vmem:[%s5 + $0x4e8] sm:$0xff]
    %v4210 = vld [vmem:[%s5 + $0x4f0] sm:$0xff]
    %v4211 = vld [vmem:[%s5 + $0x4f8] sm:$0xff]
    %v4212 = vld [vmem:[%s5 + $0x500] sm:$0xff]
    %v4213 = vld [vmem:[%s5 + $0x508] sm:$0xff]
    %v4214 = vld [vmem:[%s5 + $0x510] sm:$0xff]
    %v4215 = vld [vmem:[%s5 + $0x518] sm:$0xff]
    %v4216 = vld [vmem:[%s5 + $0x520] sm:$0xff]
    %v4217 = vld [vmem:[%s5 + $0x528] sm:$0xff]
    %v4218 = vld [vmem:[%s5 + $0x530] sm:$0xff]
    %v4219 = vld [vmem:[%s5 + $0x538] sm:$0xff]
    %v4220 = vld [vmem:[%s5 + $0x540] sm:$0xff]
    %v4221 = vld [vmem:[%s5 + $0x548] sm:$0xff]
    %v4222 = vld [vmem:[%s5 + $0x550] sm:$0xff]
    %v4223 = vld [vmem:[%s5 + $0x558] sm:$0xff]
    %v4224 = vld [vmem:[%s5 + $0x560] sm:$0xff]
    %v4225 = vld [vmem:[%s5 + $0x568] sm:$0xff]
    %v4226 = vld [vmem:[%s5 + $0x570] sm:$0xff]
    %v4227 = vld [vmem:[%s5 + $0x578] sm:$0xff]
    %v4228 = vld [vmem:[%s5 + $0x580] sm:$0xff]
    %v4229 = vld [vmem:[%s5 + $0x588] sm:$0xff]
    %v4230 = vld [vmem:[%s5 + $0x590] sm:$0xff]
    %v4231 = vld [vmem:[%s5 + $0x598] sm:$0xff]
    %v4232 = vld [vmem:[%s5 + $0x5a0] sm:$0xff]
    %v4233 = vld [vmem:[%s5 + $0x5a8] sm:$0xff]
    %v4234 = vld [vmem:[%s5 + $0x5b0] sm:$0xff]
    %v4235 = vld [vmem:[%s5 + $0x5b8] sm:$0xff]
    %v4236 = vld [vmem:[%s5 + $0x5c0] sm:$0xff]
    %v4237 = vld [vmem:[%s5 + $0x5c8] sm:$0xff]
    %v4238 = vld [vmem:[%s5 + $0x5d0] sm:$0xff]
    %v4239 = vld [vmem:[%s5 + $0x5d8] sm:$0xff]
    %v4240 = vld [vmem:[%s5 + $0x5e0] sm:$0xff]
    %v4241 = vld [vmem:[%s5 + $0x5e8] sm:$0xff]
    %v4242 = vld [vmem:[%s5 + $0x5f0] sm:$0xff]
    %v4243 = vld [vmem:[%s5 + $0x5f8] sm:$0xff]
    %v4244 = vld [vmem:[%s5 + $0x600] sm:$0xff]
    %v4245 = vld [vmem:[%s5 + $0x608] sm:$0xff]
    %v4246 = vld [vmem:[%s5 + $0x610] sm:$0xff]
    %v4247 = vld [vmem:[%s5 + $0x618] sm:$0xff]
    %v4248 = vld [vmem:[%s5 + $0x620] sm:$0xff]
    %v4249 = vld [vmem:[%s5 + $0x628] sm:$0xff]
    %v4250 = vld [vmem:[%s5 + $0x630] sm:$0xff]
    %v4251 = vld [vmem:[%s5 + $0x638] sm:$0xff]
    %v4252 = vld [vmem:[%s5 + $0x640] sm:$0xff]
    %v4253 = vld [vmem:[%s5 + $0x648] sm:$0xff]
    %v4254 = vld [vmem:[%s5 + $0x650] sm:$0xff]
    %v4255 = vld [vmem:[%s5 + $0x658] sm:$0xff]
    %v4256 = vld [vmem:[%s5 + $0x660] sm:$0xff]
    %v4257 = vld [vmem:[%s5 + $0x668] sm:$0xff]
    %v4258 = vld [vmem:[%s5 + $0x670] sm:$0xff]
    %v4259 = vld [vmem:[%s5 + $0x678] sm:$0xff]
    %v4260 = vld [vmem:[%s5 + $0x680] sm:$0xff]
    %v4261 = vld [vmem:[%s5 + $0x688] sm:$0xff]
    %v4262 = vld [vmem:[%s5 + $0x690] sm:$0xff]
    %v4263 = vld [vmem:[%s5 + $0x698] sm:$0xff]
    %v4264 = vld [vmem:[%s5 + $0x6a0] sm:$0xff]
    %v4265 = vld [vmem:[%s5 + $0x6a8] sm:$0xff]
    %v4266 = vld [vmem:[%s5 + $0x6b0] sm:$0xff]
    %v4267 = vld [vmem:[%s5 + $0x6b8] sm:$0xff]
    %v4268 = vld [vmem:[%s5 + $0x6c0] sm:$0xff]
    %v4269 = vld [vmem:[%s5 + $0x6c8] sm:$0xff]
    %v4270 = vld [vmem:[%s5 + $0x6d0] sm:$0xff]
    %v4271 = vld [vmem:[%s5 + $0x6d8] sm:$0xff]
    %v4272 = vld [vmem:[%s5 + $0x6e0] sm:$0xff]
    %v4273 = vld [vmem:[%s5 + $0x6e8] sm:$0xff]
    %v4274 = vld [vmem:[%s5 + $0x6f0] sm:$0xff]
    %v4275 = vld [vmem:[%s5 + $0x6f8] sm:$0xff]
    %v4276 = vld [vmem:[%s5 + $0x700] sm:$0xff]
    %v4277 = vld [vmem:[%s5 + $0x708] sm:$0xff]
    %v4278 = vld [vmem:[%s5 + $0x710] sm:$0xff]
    %v4279 = vld [vmem:[%s5 + $0x718] sm:$0xff]
    %v4280 = vld [vmem:[%s5 + $0x720] sm:$0xff]
    %v4281 = vld [vmem:[%s5 + $0x728] sm:$0xff]
    %v4282 = vld [vmem:[%s5 + $0x730] sm:$0xff]
    %v4283 = vld [vmem:[%s5 + $0x738] sm:$0xff]
    %v4284 = vld [vmem:[%s5 + $0x740] sm:$0xff]
    %v4285 = vld [vmem:[%s5 + $0x748] sm:$0xff]
    %v4286 = vld [vmem:[%s5 + $0x750] sm:$0xff]
    %v4287 = vld [vmem:[%s5 + $0x758] sm:$0xff]
    %v4288 = vld [vmem:[%s5 + $0x760] sm:$0xff]
    %v4289 = vld [vmem:[%s5 + $0x768] sm:$0xff]
    %v4290 = vld [vmem:[%s5 + $0x770] sm:$0xff]
    %v4291 = vld [vmem:[%s5 + $0x778] sm:$0xff]
    %v4292 = vld [vmem:[%s5 + $0x780] sm:$0xff]
    %v4293 = vld [vmem:[%s5 + $0x788] sm:$0xff]
    %v4294 = vld [vmem:[%s5 + $0x790] sm:$0xff]
    %v4295 = vld [vmem:[%s5 + $0x798] sm:$0xff]
    %v4296 = vld [vmem:[%s5 + $0x7a0] sm:$0xff]
    %v4297 = vld [vmem:[%s5 + $0x7a8] sm:$0xff]
    %v4298 = vld [vmem:[%s5 + $0x7b0] sm:$0xff]
    %v4299 = vld [vmem:[%s5 + $0x7b8] sm:$0xff]
    %v4300 = vld [vmem:[%s5 + $0x7c0] sm:$0xff]
    %v4301 = vld [vmem:[%s5 + $0x7c8] sm:$0xff]
    %v4302 = vld [vmem:[%s5 + $0x7d0] sm:$0xff]
    %v4303 = vld [vmem:[%s5 + $0x7d8] sm:$0xff]
    %v4304 = vld [vmem:[%s5 + $0x7e0] sm:$0xff]
    %v4305 = vld [vmem:[%s5 + $0x7e8] sm:$0xff]
    %v4306 = vld [vmem:[%s5 + $0x7f0] sm:$0xff]
    %v4307 = vld [vmem:[%s5 + $0x7f8] sm:$0xff]
    %v4308 = vld [vmem:[%s6] sm:$0xf]
    %v4310 = vlaneseq
    %v4311 = vshrl.u32 %v4310, 7
    %v4312 = vsub.s32 0, %v4311
    %v4313 = vrot.slane %v4308, %v4312
    %v4314 = vlaneseq
    %v4315 = vshrl.u32 %v4314, 7
    %v4316 = vsub.s32 1, %v4315
    %v4317 = vrot.slane %v4308, %v4316
    %v4318 = vlaneseq
    %v4319 = vshrl.u32 %v4318, 7
    %v4320 = vsub.s32 2, %v4319
    %v4321 = vrot.slane %v4308, %v4320
    %v4322 = vlaneseq
    %v4323 = vshrl.u32 %v4322, 7
    %v4324 = vsub.s32 3, %v4323
    %v4325 = vrot.slane %v4308, %v4324
    %v4586 = vunpack.c.l.b16 %v4052
    %v4587 = vunpack.c.h.b16 %v4052
    %v4588 = vunpack.c.l.b16 %v4053
    %v4589 = vunpack.c.h.b16 %v4053
    %v4590 = vunpack.c.l.b16 %v4054
    %v4591 = vunpack.c.h.b16 %v4054
    %v4592 = vunpack.c.l.b16 %v4055
    %v4593 = vunpack.c.h.b16 %v4055
    %v4594 = vunpack.c.l.b16 %v4056
    %v4595 = vunpack.c.h.b16 %v4056
    %v4596 = vunpack.c.l.b16 %v4057
    %v4597 = vunpack.c.h.b16 %v4057
    %v4598 = vunpack.c.l.b16 %v4058
    %v4599 = vunpack.c.h.b16 %v4058
    %v4600 = vunpack.c.l.b16 %v4059
    %v4601 = vunpack.c.h.b16 %v4059
    %v4602 = vunpack.c.l.b16 %v4060
    %v4603 = vunpack.c.h.b16 %v4060
    %v4604 = vunpack.c.l.b16 %v4061
    %v4605 = vunpack.c.h.b16 %v4061
    %v4606 = vunpack.c.l.b16 %v4062
    %v4607 = vunpack.c.h.b16 %v4062
    %v4608 = vunpack.c.l.b16 %v4063
    %v4609 = vunpack.c.h.b16 %v4063
    %v4610 = vunpack.c.l.b16 %v4064
    %v4611 = vunpack.c.h.b16 %v4064
    %v4612 = vunpack.c.l.b16 %v4065
    %v4613 = vunpack.c.h.b16 %v4065
    %v4614 = vunpack.c.l.b16 %v4066
    %v4615 = vunpack.c.h.b16 %v4066
    %v4616 = vunpack.c.l.b16 %v4067
    %v4617 = vunpack.c.h.b16 %v4067
    %v4618 = vunpack.c.l.b16 %v4068
    %v4619 = vunpack.c.h.b16 %v4068
    %v4620 = vunpack.c.l.b16 %v4069
    %v4621 = vunpack.c.h.b16 %v4069
    %v4622 = vunpack.c.l.b16 %v4070
    %v4623 = vunpack.c.h.b16 %v4070
    %v4624 = vunpack.c.l.b16 %v4071
    %v4625 = vunpack.c.h.b16 %v4071
    %v4626 = vunpack.c.l.b16 %v4072
    %v4627 = vunpack.c.h.b16 %v4072
    %v4628 = vunpack.c.l.b16 %v4073
    %v4629 = vunpack.c.h.b16 %v4073
    %v4630 = vunpack.c.l.b16 %v4074
    %v4631 = vunpack.c.h.b16 %v4074
    %v4632 = vunpack.c.l.b16 %v4075
    %v4633 = vunpack.c.h.b16 %v4075
    %v4634 = vunpack.c.l.b16 %v4076
    %v4635 = vunpack.c.h.b16 %v4076
    %v4636 = vunpack.c.l.b16 %v4077
    %v4637 = vunpack.c.h.b16 %v4077
    %v4638 = vunpack.c.l.b16 %v4078
    %v4639 = vunpack.c.h.b16 %v4078
    %v4640 = vunpack.c.l.b16 %v4079
    %v4641 = vunpack.c.h.b16 %v4079
    %v4642 = vunpack.c.l.b16 %v4080
    %v4643 = vunpack.c.h.b16 %v4080
    %v4644 = vunpack.c.l.b16 %v4081
    %v4645 = vunpack.c.h.b16 %v4081
    %v4646 = vunpack.c.l.b16 %v4082
    %v4647 = vunpack.c.h.b16 %v4082
    %v4648 = vunpack.c.l.b16 %v4083
    %v4649 = vunpack.c.h.b16 %v4083
    %v4650 = vunpack.c.l.b16 %v4084
    %v4651 = vunpack.c.h.b16 %v4084
    %v4652 = vunpack.c.l.b16 %v4085
    %v4653 = vunpack.c.h.b16 %v4085
    %v4654 = vunpack.c.l.b16 %v4086
    %v4655 = vunpack.c.h.b16 %v4086
    %v4656 = vunpack.c.l.b16 %v4087
    %v4657 = vunpack.c.h.b16 %v4087
    %v4658 = vunpack.c.l.b16 %v4088
    %v4659 = vunpack.c.h.b16 %v4088
    %v4660 = vunpack.c.l.b16 %v4089
    %v4661 = vunpack.c.h.b16 %v4089
    %v4662 = vunpack.c.l.b16 %v4090
    %v4663 = vunpack.c.h.b16 %v4090
    %v4664 = vunpack.c.l.b16 %v4091
    %v4665 = vunpack.c.h.b16 %v4091
    %v4666 = vunpack.c.l.b16 %v4092
    %v4667 = vunpack.c.h.b16 %v4092
    %v4668 = vunpack.c.l.b16 %v4093
    %v4669 = vunpack.c.h.b16 %v4093
    %v4670 = vunpack.c.l.b16 %v4094
    %v4671 = vunpack.c.h.b16 %v4094
    %v4672 = vunpack.c.l.b16 %v4095
    %v4673 = vunpack.c.h.b16 %v4095
    %v4674 = vunpack.c.l.b16 %v4096
    %v4675 = vunpack.c.h.b16 %v4096
    %v4676 = vunpack.c.l.b16 %v4097
    %v4677 = vunpack.c.h.b16 %v4097
    %v4678 = vunpack.c.l.b16 %v4098
    %v4679 = vunpack.c.h.b16 %v4098
    %v4680 = vunpack.c.l.b16 %v4099
    %v4681 = vunpack.c.h.b16 %v4099
    %v4682 = vunpack.c.l.b16 %v4100
    %v4683 = vunpack.c.h.b16 %v4100
    %v4684 = vunpack.c.l.b16 %v4101
    %v4685 = vunpack.c.h.b16 %v4101
    %v4686 = vunpack.c.l.b16 %v4102
    %v4687 = vunpack.c.h.b16 %v4102
    %v4688 = vunpack.c.l.b16 %v4103
    %v4689 = vunpack.c.h.b16 %v4103
    %v4690 = vunpack.c.l.b16 %v4104
    %v4691 = vunpack.c.h.b16 %v4104
    %v4692 = vunpack.c.l.b16 %v4105
    %v4693 = vunpack.c.h.b16 %v4105
    %v4694 = vunpack.c.l.b16 %v4106
    %v4695 = vunpack.c.h.b16 %v4106
    %v4696 = vunpack.c.l.b16 %v4107
    %v4697 = vunpack.c.h.b16 %v4107
    %v4698 = vunpack.c.l.b16 %v4108
    %v4699 = vunpack.c.h.b16 %v4108
    %v4700 = vunpack.c.l.b16 %v4109
    %v4701 = vunpack.c.h.b16 %v4109
    %v4702 = vunpack.c.l.b16 %v4110
    %v4703 = vunpack.c.h.b16 %v4110
    %v4704 = vunpack.c.l.b16 %v4111
    %v4705 = vunpack.c.h.b16 %v4111
    %v4706 = vunpack.c.l.b16 %v4112
    %v4707 = vunpack.c.h.b16 %v4112
    %v4708 = vunpack.c.l.b16 %v4113
    %v4709 = vunpack.c.h.b16 %v4113
    %v4710 = vunpack.c.l.b16 %v4114
    %v4711 = vunpack.c.h.b16 %v4114
    %v4712 = vunpack.c.l.b16 %v4115
    %v4713 = vunpack.c.h.b16 %v4115
    %v4714 = vunpack.c.l.b16 %v4116
    %v4715 = vunpack.c.h.b16 %v4116
    %v4716 = vunpack.c.l.b16 %v4117
    %v4717 = vunpack.c.h.b16 %v4117
    %v4718 = vunpack.c.l.b16 %v4118
    %v4719 = vunpack.c.h.b16 %v4118
    %v4720 = vunpack.c.l.b16 %v4119
    %v4721 = vunpack.c.h.b16 %v4119
    %v4722 = vunpack.c.l.b16 %v4120
    %v4723 = vunpack.c.h.b16 %v4120
    %v4724 = vunpack.c.l.b16 %v4121
    %v4725 = vunpack.c.h.b16 %v4121
    %v4726 = vunpack.c.l.b16 %v4122
    %v4727 = vunpack.c.h.b16 %v4122
    %v4728 = vunpack.c.l.b16 %v4123
    %v4729 = vunpack.c.h.b16 %v4123
    %v4730 = vunpack.c.l.b16 %v4124
    %v4731 = vunpack.c.h.b16 %v4124
    %v4732 = vunpack.c.l.b16 %v4125
    %v4733 = vunpack.c.h.b16 %v4125
    %v4734 = vunpack.c.l.b16 %v4126
    %v4735 = vunpack.c.h.b16 %v4126
    %v4736 = vunpack.c.l.b16 %v4127
    %v4737 = vunpack.c.h.b16 %v4127
    %v4738 = vunpack.c.l.b16 %v4128
    %v4739 = vunpack.c.h.b16 %v4128
    %v4740 = vunpack.c.l.b16 %v4129
    %v4741 = vunpack.c.h.b16 %v4129
    %v4742 = vunpack.c.l.b16 %v4130
    %v4743 = vunpack.c.h.b16 %v4130
    %v4744 = vunpack.c.l.b16 %v4131
    %v4745 = vunpack.c.h.b16 %v4131
    %v4746 = vunpack.c.l.b16 %v4132
    %v4747 = vunpack.c.h.b16 %v4132
    %v4748 = vunpack.c.l.b16 %v4133
    %v4749 = vunpack.c.h.b16 %v4133
    %v4750 = vunpack.c.l.b16 %v4134
    %v4751 = vunpack.c.h.b16 %v4134
    %v4752 = vunpack.c.l.b16 %v4135
    %v4753 = vunpack.c.h.b16 %v4135
    %v4754 = vunpack.c.l.b16 %v4136
    %v4755 = vunpack.c.h.b16 %v4136
    %v4756 = vunpack.c.l.b16 %v4137
    %v4757 = vunpack.c.h.b16 %v4137
    %v4758 = vunpack.c.l.b16 %v4138
    %v4759 = vunpack.c.h.b16 %v4138
    %v4760 = vunpack.c.l.b16 %v4139
    %v4761 = vunpack.c.h.b16 %v4139
    %v4762 = vunpack.c.l.b16 %v4140
    %v4763 = vunpack.c.h.b16 %v4140
    %v4764 = vunpack.c.l.b16 %v4141
    %v4765 = vunpack.c.h.b16 %v4141
    %v4766 = vunpack.c.l.b16 %v4142
    %v4767 = vunpack.c.h.b16 %v4142
    %v4768 = vunpack.c.l.b16 %v4143
    %v4769 = vunpack.c.h.b16 %v4143
    %v4770 = vunpack.c.l.b16 %v4144
    %v4771 = vunpack.c.h.b16 %v4144
    %v4772 = vunpack.c.l.b16 %v4145
    %v4773 = vunpack.c.h.b16 %v4145
    %v4774 = vunpack.c.l.b16 %v4146
    %v4775 = vunpack.c.h.b16 %v4146
    %v4776 = vunpack.c.l.b16 %v4147
    %v4777 = vunpack.c.h.b16 %v4147
    %v4778 = vunpack.c.l.b16 %v4148
    %v4779 = vunpack.c.h.b16 %v4148
    %v4780 = vunpack.c.l.b16 %v4149
    %v4781 = vunpack.c.h.b16 %v4149
    %v4782 = vunpack.c.l.b16 %v4150
    %v4783 = vunpack.c.h.b16 %v4150
    %v4784 = vunpack.c.l.b16 %v4151
    %v4785 = vunpack.c.h.b16 %v4151
    %v4786 = vunpack.c.l.b16 %v4152
    %v4787 = vunpack.c.h.b16 %v4152
    %v4788 = vunpack.c.l.b16 %v4153
    %v4789 = vunpack.c.h.b16 %v4153
    %v4790 = vunpack.c.l.b16 %v4154
    %v4791 = vunpack.c.h.b16 %v4154
    %v4792 = vunpack.c.l.b16 %v4155
    %v4793 = vunpack.c.h.b16 %v4155
    %v4794 = vunpack.c.l.b16 %v4156
    %v4795 = vunpack.c.h.b16 %v4156
    %v4796 = vunpack.c.l.b16 %v4157
    %v4797 = vunpack.c.h.b16 %v4157
    %v4798 = vunpack.c.l.b16 %v4158
    %v4799 = vunpack.c.h.b16 %v4158
    %v4800 = vunpack.c.l.b16 %v4159
    %v4801 = vunpack.c.h.b16 %v4159
    %v4802 = vunpack.c.l.b16 %v4160
    %v4803 = vunpack.c.h.b16 %v4160
    %v4804 = vunpack.c.l.b16 %v4161
    %v4805 = vunpack.c.h.b16 %v4161
    %v4806 = vunpack.c.l.b16 %v4162
    %v4807 = vunpack.c.h.b16 %v4162
    %v4808 = vunpack.c.l.b16 %v4163
    %v4809 = vunpack.c.h.b16 %v4163
    %v4810 = vunpack.c.l.b16 %v4164
    %v4811 = vunpack.c.h.b16 %v4164
    %v4812 = vunpack.c.l.b16 %v4165
    %v4813 = vunpack.c.h.b16 %v4165
    %v4814 = vunpack.c.l.b16 %v4166
    %v4815 = vunpack.c.h.b16 %v4166
    %v4816 = vunpack.c.l.b16 %v4167
    %v4817 = vunpack.c.h.b16 %v4167
    %v4818 = vunpack.c.l.b16 %v4168
    %v4819 = vunpack.c.h.b16 %v4168
    %v4820 = vunpack.c.l.b16 %v4169
    %v4821 = vunpack.c.h.b16 %v4169
    %v4822 = vunpack.c.l.b16 %v4170
    %v4823 = vunpack.c.h.b16 %v4170
    %v4824 = vunpack.c.l.b16 %v4171
    %v4825 = vunpack.c.h.b16 %v4171
    %v4826 = vunpack.c.l.b16 %v4172
    %v4827 = vunpack.c.h.b16 %v4172
    %v4828 = vunpack.c.l.b16 %v4173
    %v4829 = vunpack.c.h.b16 %v4173
    %v4830 = vunpack.c.l.b16 %v4174
    %v4831 = vunpack.c.h.b16 %v4174
    %v4832 = vunpack.c.l.b16 %v4175
    %v4833 = vunpack.c.h.b16 %v4175
    %v4834 = vunpack.c.l.b16 %v4176
    %v4835 = vunpack.c.h.b16 %v4176
    %v4836 = vunpack.c.l.b16 %v4177
    %v4837 = vunpack.c.h.b16 %v4177
    %v4838 = vunpack.c.l.b16 %v4178
    %v4839 = vunpack.c.h.b16 %v4178
    %v4840 = vunpack.c.l.b16 %v4179
    %v4841 = vunpack.c.h.b16 %v4179
    %v4842 = vunpack.c.l.b16 %v4180
    %v4843 = vunpack.c.h.b16 %v4180
    %v4844 = vunpack.c.l.b16 %v4181
    %v4845 = vunpack.c.h.b16 %v4181
    %v4846 = vunpack.c.l.b16 %v4182
    %v4847 = vunpack.c.h.b16 %v4182
    %v4848 = vunpack.c.l.b16 %v4183
    %v4849 = vunpack.c.h.b16 %v4183
    %v4850 = vunpack.c.l.b16 %v4184
    %v4851 = vunpack.c.h.b16 %v4184
    %v4852 = vunpack.c.l.b16 %v4185
    %v4853 = vunpack.c.h.b16 %v4185
    %v4854 = vunpack.c.l.b16 %v4186
    %v4855 = vunpack.c.h.b16 %v4186
    %v4856 = vunpack.c.l.b16 %v4187
    %v4857 = vunpack.c.h.b16 %v4187
    %v4858 = vunpack.c.l.b16 %v4188
    %v4859 = vunpack.c.h.b16 %v4188
    %v4860 = vunpack.c.l.b16 %v4189
    %v4861 = vunpack.c.h.b16 %v4189
    %v4862 = vunpack.c.l.b16 %v4190
    %v4863 = vunpack.c.h.b16 %v4190
    %v4864 = vunpack.c.l.b16 %v4191
    %v4865 = vunpack.c.h.b16 %v4191
    %v4866 = vunpack.c.l.b16 %v4192
    %v4867 = vunpack.c.h.b16 %v4192
    %v4868 = vunpack.c.l.b16 %v4193
    %v4869 = vunpack.c.h.b16 %v4193
    %v4870 = vunpack.c.l.b16 %v4194
    %v4871 = vunpack.c.h.b16 %v4194
    %v4872 = vunpack.c.l.b16 %v4195
    %v4873 = vunpack.c.h.b16 %v4195
    %v4874 = vunpack.c.l.b16 %v4196
    %v4875 = vunpack.c.h.b16 %v4196
    %v4876 = vunpack.c.l.b16 %v4197
    %v4877 = vunpack.c.h.b16 %v4197
    %v4878 = vunpack.c.l.b16 %v4198
    %v4879 = vunpack.c.h.b16 %v4198
    %v4880 = vunpack.c.l.b16 %v4199
    %v4881 = vunpack.c.h.b16 %v4199
    %v4882 = vunpack.c.l.b16 %v4200
    %v4883 = vunpack.c.h.b16 %v4200
    %v4884 = vunpack.c.l.b16 %v4201
    %v4885 = vunpack.c.h.b16 %v4201
    %v4886 = vunpack.c.l.b16 %v4202
    %v4887 = vunpack.c.h.b16 %v4202
    %v4888 = vunpack.c.l.b16 %v4203
    %v4889 = vunpack.c.h.b16 %v4203
    %v4890 = vunpack.c.l.b16 %v4204
    %v4891 = vunpack.c.h.b16 %v4204
    %v4892 = vunpack.c.l.b16 %v4205
    %v4893 = vunpack.c.h.b16 %v4205
    %v4894 = vunpack.c.l.b16 %v4206
    %v4895 = vunpack.c.h.b16 %v4206
    %v4896 = vunpack.c.l.b16 %v4207
    %v4897 = vunpack.c.h.b16 %v4207
    %v4898 = vunpack.c.l.b16 %v4208
    %v4899 = vunpack.c.h.b16 %v4208
    %v4900 = vunpack.c.l.b16 %v4209
    %v4901 = vunpack.c.h.b16 %v4209
    %v4902 = vunpack.c.l.b16 %v4210
    %v4903 = vunpack.c.h.b16 %v4210
    %v4904 = vunpack.c.l.b16 %v4211
    %v4905 = vunpack.c.h.b16 %v4211
    %v4906 = vunpack.c.l.b16 %v4212
    %v4907 = vunpack.c.h.b16 %v4212
    %v4908 = vunpack.c.l.b16 %v4213
    %v4909 = vunpack.c.h.b16 %v4213
    %v4910 = vunpack.c.l.b16 %v4214
    %v4911 = vunpack.c.h.b16 %v4214
    %v4912 = vunpack.c.l.b16 %v4215
    %v4913 = vunpack.c.h.b16 %v4215
    %v4914 = vunpack.c.l.b16 %v4216
    %v4915 = vunpack.c.h.b16 %v4216
    %v4916 = vunpack.c.l.b16 %v4217
    %v4917 = vunpack.c.h.b16 %v4217
    %v4918 = vunpack.c.l.b16 %v4218
    %v4919 = vunpack.c.h.b16 %v4218
    %v4920 = vunpack.c.l.b16 %v4219
    %v4921 = vunpack.c.h.b16 %v4219
    %v4922 = vunpack.c.l.b16 %v4220
    %v4923 = vunpack.c.h.b16 %v4220
    %v4924 = vunpack.c.l.b16 %v4221
    %v4925 = vunpack.c.h.b16 %v4221
    %v4926 = vunpack.c.l.b16 %v4222
    %v4927 = vunpack.c.h.b16 %v4222
    %v4928 = vunpack.c.l.b16 %v4223
    %v4929 = vunpack.c.h.b16 %v4223
    %v4930 = vunpack.c.l.b16 %v4224
    %v4931 = vunpack.c.h.b16 %v4224
    %v4932 = vunpack.c.l.b16 %v4225
    %v4933 = vunpack.c.h.b16 %v4225
    %v4934 = vunpack.c.l.b16 %v4226
    %v4935 = vunpack.c.h.b16 %v4226
    %v4936 = vunpack.c.l.b16 %v4227
    %v4937 = vunpack.c.h.b16 %v4227
    %v4938 = vunpack.c.l.b16 %v4228
    %v4939 = vunpack.c.h.b16 %v4228
    %v4940 = vunpack.c.l.b16 %v4229
    %v4941 = vunpack.c.h.b16 %v4229
    %v4942 = vunpack.c.l.b16 %v4230
    %v4943 = vunpack.c.h.b16 %v4230
    %v4944 = vunpack.c.l.b16 %v4231
    %v4945 = vunpack.c.h.b16 %v4231
    %v4946 = vunpack.c.l.b16 %v4232
    %v4947 = vunpack.c.h.b16 %v4232
    %v4948 = vunpack.c.l.b16 %v4233
    %v4949 = vunpack.c.h.b16 %v4233
    %v4950 = vunpack.c.l.b16 %v4234
    %v4951 = vunpack.c.h.b16 %v4234
    %v4952 = vunpack.c.l.b16 %v4235
    %v4953 = vunpack.c.h.b16 %v4235
    %v4954 = vunpack.c.l.b16 %v4236
    %v4955 = vunpack.c.h.b16 %v4236
    %v4956 = vunpack.c.l.b16 %v4237
    %v4957 = vunpack.c.h.b16 %v4237
    %v4958 = vunpack.c.l.b16 %v4238
    %v4959 = vunpack.c.h.b16 %v4238
    %v4960 = vunpack.c.l.b16 %v4239
    %v4961 = vunpack.c.h.b16 %v4239
    %v4962 = vunpack.c.l.b16 %v4240
    %v4963 = vunpack.c.h.b16 %v4240
    %v4964 = vunpack.c.l.b16 %v4241
    %v4965 = vunpack.c.h.b16 %v4241
    %v4966 = vunpack.c.l.b16 %v4242
    %v4967 = vunpack.c.h.b16 %v4242
    %v4968 = vunpack.c.l.b16 %v4243
    %v4969 = vunpack.c.h.b16 %v4243
    %v4970 = vunpack.c.l.b16 %v4244
    %v4971 = vunpack.c.h.b16 %v4244
    %v4972 = vunpack.c.l.b16 %v4245
    %v4973 = vunpack.c.h.b16 %v4245
    %v4974 = vunpack.c.l.b16 %v4246
    %v4975 = vunpack.c.h.b16 %v4246
    %v4976 = vunpack.c.l.b16 %v4247
    %v4977 = vunpack.c.h.b16 %v4247
    %v4978 = vunpack.c.l.b16 %v4248
    %v4979 = vunpack.c.h.b16 %v4248
    %v4980 = vunpack.c.l.b16 %v4249
    %v4981 = vunpack.c.h.b16 %v4249
    %v4982 = vunpack.c.l.b16 %v4250
    %v4983 = vunpack.c.h.b16 %v4250
    %v4984 = vunpack.c.l.b16 %v4251
    %v4985 = vunpack.c.h.b16 %v4251
    %v4986 = vunpack.c.l.b16 %v4252
    %v4987 = vunpack.c.h.b16 %v4252
    %v4988 = vunpack.c.l.b16 %v4253
    %v4989 = vunpack.c.h.b16 %v4253
    %v4990 = vunpack.c.l.b16 %v4254
    %v4991 = vunpack.c.h.b16 %v4254
    %v4992 = vunpack.c.l.b16 %v4255
    %v4993 = vunpack.c.h.b16 %v4255
    %v4994 = vunpack.c.l.b16 %v4256
    %v4995 = vunpack.c.h.b16 %v4256
    %v4996 = vunpack.c.l.b16 %v4257
    %v4997 = vunpack.c.h.b16 %v4257
    %v4998 = vunpack.c.l.b16 %v4258
    %v4999 = vunpack.c.h.b16 %v4258
    %v5000 = vunpack.c.l.b16 %v4259
    %v5001 = vunpack.c.h.b16 %v4259
    %v5002 = vunpack.c.l.b16 %v4260
    %v5003 = vunpack.c.h.b16 %v4260
    %v5004 = vunpack.c.l.b16 %v4261
    %v5005 = vunpack.c.h.b16 %v4261
    %v5006 = vunpack.c.l.b16 %v4262
    %v5007 = vunpack.c.h.b16 %v4262
    %v5008 = vunpack.c.l.b16 %v4263
    %v5009 = vunpack.c.h.b16 %v4263
    %v5010 = vunpack.c.l.b16 %v4264
    %v5011 = vunpack.c.h.b16 %v4264
    %v5012 = vunpack.c.l.b16 %v4265
    %v5013 = vunpack.c.h.b16 %v4265
    %v5014 = vunpack.c.l.b16 %v4266
    %v5015 = vunpack.c.h.b16 %v4266
    %v5016 = vunpack.c.l.b16 %v4267
    %v5017 = vunpack.c.h.b16 %v4267
    %v5018 = vunpack.c.l.b16 %v4268
    %v5019 = vunpack.c.h.b16 %v4268
    %v5020 = vunpack.c.l.b16 %v4269
    %v5021 = vunpack.c.h.b16 %v4269
    %v5022 = vunpack.c.l.b16 %v4270
    %v5023 = vunpack.c.h.b16 %v4270
    %v5024 = vunpack.c.l.b16 %v4271
    %v5025 = vunpack.c.h.b16 %v4271
    %v5026 = vunpack.c.l.b16 %v4272
    %v5027 = vunpack.c.h.b16 %v4272
    %v5028 = vunpack.c.l.b16 %v4273
    %v5029 = vunpack.c.h.b16 %v4273
    %v5030 = vunpack.c.l.b16 %v4274
    %v5031 = vunpack.c.h.b16 %v4274
    %v5032 = vunpack.c.l.b16 %v4275
    %v5033 = vunpack.c.h.b16 %v4275
    %v5034 = vunpack.c.l.b16 %v4276
    %v5035 = vunpack.c.h.b16 %v4276
    %v5036 = vunpack.c.l.b16 %v4277
    %v5037 = vunpack.c.h.b16 %v4277
    %v5038 = vunpack.c.l.b16 %v4278
    %v5039 = vunpack.c.h.b16 %v4278
    %v5040 = vunpack.c.l.b16 %v4279
    %v5041 = vunpack.c.h.b16 %v4279
    %v5042 = vunpack.c.l.b16 %v4280
    %v5043 = vunpack.c.h.b16 %v4280
    %v5044 = vunpack.c.l.b16 %v4281
    %v5045 = vunpack.c.h.b16 %v4281
    %v5046 = vunpack.c.l.b16 %v4282
    %v5047 = vunpack.c.h.b16 %v4282
    %v5048 = vunpack.c.l.b16 %v4283
    %v5049 = vunpack.c.h.b16 %v4283
    %v5050 = vunpack.c.l.b16 %v4284
    %v5051 = vunpack.c.h.b16 %v4284
    %v5052 = vunpack.c.l.b16 %v4285
    %v5053 = vunpack.c.h.b16 %v4285
    %v5054 = vunpack.c.l.b16 %v4286
    %v5055 = vunpack.c.h.b16 %v4286
    %v5056 = vunpack.c.l.b16 %v4287
    %v5057 = vunpack.c.h.b16 %v4287
    %v5058 = vunpack.c.l.b16 %v4288
    %v5059 = vunpack.c.h.b16 %v4288
    %v5060 = vunpack.c.l.b16 %v4289
    %v5061 = vunpack.c.h.b16 %v4289
    %v5062 = vunpack.c.l.b16 %v4290
    %v5063 = vunpack.c.h.b16 %v4290
    %v5064 = vunpack.c.l.b16 %v4291
    %v5065 = vunpack.c.h.b16 %v4291
    %v5066 = vunpack.c.l.b16 %v4292
    %v5067 = vunpack.c.h.b16 %v4292
    %v5068 = vunpack.c.l.b16 %v4293
    %v5069 = vunpack.c.h.b16 %v4293
    %v5070 = vunpack.c.l.b16 %v4294
    %v5071 = vunpack.c.h.b16 %v4294
    %v5072 = vunpack.c.l.b16 %v4295
    %v5073 = vunpack.c.h.b16 %v4295
    %v5074 = vunpack.c.l.b16 %v4296
    %v5075 = vunpack.c.h.b16 %v4296
    %v5076 = vunpack.c.l.b16 %v4297
    %v5077 = vunpack.c.h.b16 %v4297
    %v5078 = vunpack.c.l.b16 %v4298
    %v5079 = vunpack.c.h.b16 %v4298
    %v5080 = vunpack.c.l.b16 %v4299
    %v5081 = vunpack.c.h.b16 %v4299
    %v5082 = vunpack.c.l.b16 %v4300
    %v5083 = vunpack.c.h.b16 %v4300
    %v5084 = vunpack.c.l.b16 %v4301
    %v5085 = vunpack.c.h.b16 %v4301
    %v5086 = vunpack.c.l.b16 %v4302
    %v5087 = vunpack.c.h.b16 %v4302
    %v5088 = vunpack.c.l.b16 %v4303
    %v5089 = vunpack.c.h.b16 %v4303
    %v5090 = vunpack.c.l.b16 %v4304
    %v5091 = vunpack.c.h.b16 %v4304
    %v5092 = vunpack.c.l.b16 %v4305
    %v5093 = vunpack.c.h.b16 %v4305
    %v5094 = vunpack.c.l.b16 %v4306
    %v5095 = vunpack.c.h.b16 %v4306
    %v5096 = vunpack.c.l.b16 %v4307
    %v5097 = vunpack.c.h.b16 %v4307
    %v5098 = vpack.c.b16 %v4590, %v4586
    %v5099 = vpack.c.b16 %v4591, %v4587
    %v5100 = vpack.c.b16 %v4592, %v4588
    %v5101 = vpack.c.b16 %v4593, %v4589
    %v5102 = vpack.c.b16 %v4598, %v4594
    %v5103 = vpack.c.b16 %v4599, %v4595
    %v5104 = vpack.c.b16 %v4600, %v4596
    %v5105 = vpack.c.b16 %v4601, %v4597
    %v5106 = vpack.c.b16 %v4606, %v4602
    %v5107 = vpack.c.b16 %v4607, %v4603
    %v5108 = vpack.c.b16 %v4608, %v4604
    %v5109 = vpack.c.b16 %v4609, %v4605
    %v5110 = vpack.c.b16 %v4614, %v4610
    %v5111 = vpack.c.b16 %v4615, %v4611
    %v5112 = vpack.c.b16 %v4616, %v4612
    %v5113 = vpack.c.b16 %v4617, %v4613
    %v5114 = vpack.c.b16 %v4622, %v4618
    %v5115 = vpack.c.b16 %v4623, %v4619
    %v5116 = vpack.c.b16 %v4624, %v4620
    %v5117 = vpack.c.b16 %v4625, %v4621
    %v5118 = vpack.c.b16 %v4630, %v4626
    %v5119 = vpack.c.b16 %v4631, %v4627
    %v5120 = vpack.c.b16 %v4632, %v4628
    %v5121 = vpack.c.b16 %v4633, %v4629
    %v5122 = vpack.c.b16 %v4638, %v4634
    %v5123 = vpack.c.b16 %v4639, %v4635
    %v5124 = vpack.c.b16 %v4640, %v4636
    %v5125 = vpack.c.b16 %v4641, %v4637
    %v5126 = vpack.c.b16 %v4646, %v4642
    %v5127 = vpack.c.b16 %v4647, %v4643
    %v5128 = vpack.c.b16 %v4648, %v4644
    %v5129 = vpack.c.b16 %v4649, %v4645
    %v5130 = vpack.c.b16 %v4654, %v4650
    %v5131 = vpack.c.b16 %v4655, %v4651
    %v5132 = vpack.c.b16 %v4656, %v4652
    %v5133 = vpack.c.b16 %v4657, %v4653
    %v5134 = vpack.c.b16 %v4662, %v4658
    %v5135 = vpack.c.b16 %v4663, %v4659
    %v5136 = vpack.c.b16 %v4664, %v4660
    %v5137 = vpack.c.b16 %v4665, %v4661
    %v5138 = vpack.c.b16 %v4670, %v4666
    %v5139 = vpack.c.b16 %v4671, %v4667
    %v5140 = vpack.c.b16 %v4672, %v4668
    %v5141 = vpack.c.b16 %v4673, %v4669
    %v5142 = vpack.c.b16 %v4678, %v4674
    %v5143 = vpack.c.b16 %v4679, %v4675
    %v5144 = vpack.c.b16 %v4680, %v4676
    %v5145 = vpack.c.b16 %v4681, %v4677
    %v5146 = vpack.c.b16 %v4686, %v4682
    %v5147 = vpack.c.b16 %v4687, %v4683
    %v5148 = vpack.c.b16 %v4688, %v4684
    %v5149 = vpack.c.b16 %v4689, %v4685
    %v5150 = vpack.c.b16 %v4694, %v4690
    %v5151 = vpack.c.b16 %v4695, %v4691
    %v5152 = vpack.c.b16 %v4696, %v4692
    %v5153 = vpack.c.b16 %v4697, %v4693
    %v5154 = vpack.c.b16 %v4702, %v4698
    %v5155 = vpack.c.b16 %v4703, %v4699
    %v5156 = vpack.c.b16 %v4704, %v4700
    %v5157 = vpack.c.b16 %v4705, %v4701
    %v5158 = vpack.c.b16 %v4710, %v4706
    %v5159 = vpack.c.b16 %v4711, %v4707
    %v5160 = vpack.c.b16 %v4712, %v4708
    %v5161 = vpack.c.b16 %v4713, %v4709
    %v5162 = vpack.c.b16 %v4718, %v4714
    %v5163 = vpack.c.b16 %v4719, %v4715
    %v5164 = vpack.c.b16 %v4720, %v4716
    %v5165 = vpack.c.b16 %v4721, %v4717
    %v5166 = vpack.c.b16 %v4726, %v4722
    %v5167 = vpack.c.b16 %v4727, %v4723
    %v5168 = vpack.c.b16 %v4728, %v4724
    %v5169 = vpack.c.b16 %v4729, %v4725
    %v5170 = vpack.c.b16 %v4734, %v4730
    %v5171 = vpack.c.b16 %v4735, %v4731
    %v5172 = vpack.c.b16 %v4736, %v4732
    %v5173 = vpack.c.b16 %v4737, %v4733
    %v5174 = vpack.c.b16 %v4742, %v4738
    %v5175 = vpack.c.b16 %v4743, %v4739
    %v5176 = vpack.c.b16 %v4744, %v4740
    %v5177 = vpack.c.b16 %v4745, %v4741
    %v5178 = vpack.c.b16 %v4750, %v4746
    %v5179 = vpack.c.b16 %v4751, %v4747
    %v5180 = vpack.c.b16 %v4752, %v4748
    %v5181 = vpack.c.b16 %v4753, %v4749
    %v5182 = vpack.c.b16 %v4758, %v4754
    %v5183 = vpack.c.b16 %v4759, %v4755
    %v5184 = vpack.c.b16 %v4760, %v4756
    %v5185 = vpack.c.b16 %v4761, %v4757
    %v5186 = vpack.c.b16 %v4766, %v4762
    %v5187 = vpack.c.b16 %v4767, %v4763
    %v5188 = vpack.c.b16 %v4768, %v4764
    %v5189 = vpack.c.b16 %v4769, %v4765
    %v5190 = vpack.c.b16 %v4774, %v4770
    %v5191 = vpack.c.b16 %v4775, %v4771
    %v5192 = vpack.c.b16 %v4776, %v4772
    %v5193 = vpack.c.b16 %v4777, %v4773
    %v5194 = vpack.c.b16 %v4782, %v4778
    %v5195 = vpack.c.b16 %v4783, %v4779
    %v5196 = vpack.c.b16 %v4784, %v4780
    %v5197 = vpack.c.b16 %v4785, %v4781
    %v5198 = vpack.c.b16 %v4790, %v4786
    %v5199 = vpack.c.b16 %v4791, %v4787
    %v5200 = vpack.c.b16 %v4792, %v4788
    %v5201 = vpack.c.b16 %v4793, %v4789
    %v5202 = vpack.c.b16 %v4798, %v4794
    %v5203 = vpack.c.b16 %v4799, %v4795
    %v5204 = vpack.c.b16 %v4800, %v4796
    %v5205 = vpack.c.b16 %v4801, %v4797
    %v5206 = vpack.c.b16 %v4806, %v4802
    %v5207 = vpack.c.b16 %v4807, %v4803
    %v5208 = vpack.c.b16 %v4808, %v4804
    %v5209 = vpack.c.b16 %v4809, %v4805
    %v5210 = vpack.c.b16 %v4814, %v4810
    %v5211 = vpack.c.b16 %v4815, %v4811
    %v5212 = vpack.c.b16 %v4816, %v4812
    %v5213 = vpack.c.b16 %v4817, %v4813
    %v5214 = vpack.c.b16 %v4822, %v4818
    %v5215 = vpack.c.b16 %v4823, %v4819
    %v5216 = vpack.c.b16 %v4824, %v4820
    %v5217 = vpack.c.b16 %v4825, %v4821
    %v5218 = vpack.c.b16 %v4830, %v4826
    %v5219 = vpack.c.b16 %v4831, %v4827
    %v5220 = vpack.c.b16 %v4832, %v4828
    %v5221 = vpack.c.b16 %v4833, %v4829
    %v5222 = vpack.c.b16 %v4838, %v4834
    %v5223 = vpack.c.b16 %v4839, %v4835
    %v5224 = vpack.c.b16 %v4840, %v4836
    %v5225 = vpack.c.b16 %v4841, %v4837
    %v5226 = vpack.c.b16 %v4846, %v4842
    %v5227 = vpack.c.b16 %v4847, %v4843
    %v5228 = vpack.c.b16 %v4848, %v4844
    %v5229 = vpack.c.b16 %v4849, %v4845
    %v5230 = vpack.c.b16 %v4854, %v4850
    %v5231 = vpack.c.b16 %v4855, %v4851
    %v5232 = vpack.c.b16 %v4856, %v4852
    %v5233 = vpack.c.b16 %v4857, %v4853
    %v5234 = vpack.c.b16 %v4862, %v4858
    %v5235 = vpack.c.b16 %v4863, %v4859
    %v5236 = vpack.c.b16 %v4864, %v4860
    %v5237 = vpack.c.b16 %v4865, %v4861
    %v5238 = vpack.c.b16 %v4870, %v4866
    %v5239 = vpack.c.b16 %v4871, %v4867
    %v5240 = vpack.c.b16 %v4872, %v4868
    %v5241 = vpack.c.b16 %v4873, %v4869
    %v5242 = vpack.c.b16 %v4878, %v4874
    %v5243 = vpack.c.b16 %v4879, %v4875
    %v5244 = vpack.c.b16 %v4880, %v4876
    %v5245 = vpack.c.b16 %v4881, %v4877
    %v5246 = vpack.c.b16 %v4886, %v4882
    %v5247 = vpack.c.b16 %v4887, %v4883
    %v5248 = vpack.c.b16 %v4888, %v4884
    %v5249 = vpack.c.b16 %v4889, %v4885
    %v5250 = vpack.c.b16 %v4894, %v4890
    %v5251 = vpack.c.b16 %v4895, %v4891
    %v5252 = vpack.c.b16 %v4896, %v4892
    %v5253 = vpack.c.b16 %v4897, %v4893
    %v5254 = vpack.c.b16 %v4902, %v4898
    %v5255 = vpack.c.b16 %v4903, %v4899
    %v5256 = vpack.c.b16 %v4904, %v4900
    %v5257 = vpack.c.b16 %v4905, %v4901
    %v5258 = vpack.c.b16 %v4910, %v4906
    %v5259 = vpack.c.b16 %v4911, %v4907
    %v5260 = vpack.c.b16 %v4912, %v4908
    %v5261 = vpack.c.b16 %v4913, %v4909
    %v5262 = vpack.c.b16 %v4918, %v4914
    %v5263 = vpack.c.b16 %v4919, %v4915
    %v5264 = vpack.c.b16 %v4920, %v4916
    %v5265 = vpack.c.b16 %v4921, %v4917
    %v5266 = vpack.c.b16 %v4926, %v4922
    %v5267 = vpack.c.b16 %v4927, %v4923
    %v5268 = vpack.c.b16 %v4928, %v4924
    %v5269 = vpack.c.b16 %v4929, %v4925
    %v5270 = vpack.c.b16 %v4934, %v4930
    %v5271 = vpack.c.b16 %v4935, %v4931
    %v5272 = vpack.c.b16 %v4936, %v4932
    %v5273 = vpack.c.b16 %v4937, %v4933
    %v5274 = vpack.c.b16 %v4942, %v4938
    %v5275 = vpack.c.b16 %v4943, %v4939
    %v5276 = vpack.c.b16 %v4944, %v4940
    %v5277 = vpack.c.b16 %v4945, %v4941
    %v5278 = vpack.c.b16 %v4950, %v4946
    %v5279 = vpack.c.b16 %v4951, %v4947
    %v5280 = vpack.c.b16 %v4952, %v4948
    %v5281 = vpack.c.b16 %v4953, %v4949
    %v5282 = vpack.c.b16 %v4958, %v4954
    %v5283 = vpack.c.b16 %v4959, %v4955
    %v5284 = vpack.c.b16 %v4960, %v4956
    %v5285 = vpack.c.b16 %v4961, %v4957
    %v5286 = vpack.c.b16 %v4966, %v4962
    %v5287 = vpack.c.b16 %v4967, %v4963
    %v5288 = vpack.c.b16 %v4968, %v4964
    %v5289 = vpack.c.b16 %v4969, %v4965
    %v5290 = vpack.c.b16 %v4974, %v4970
    %v5291 = vpack.c.b16 %v4975, %v4971
    %v5292 = vpack.c.b16 %v4976, %v4972
    %v5293 = vpack.c.b16 %v4977, %v4973
    %v5294 = vpack.c.b16 %v4982, %v4978
    %v5295 = vpack.c.b16 %v4983, %v4979
    %v5296 = vpack.c.b16 %v4984, %v4980
    %v5297 = vpack.c.b16 %v4985, %v4981
    %v5298 = vpack.c.b16 %v4990, %v4986
    %v5299 = vpack.c.b16 %v4991, %v4987
    %v5300 = vpack.c.b16 %v4992, %v4988
    %v5301 = vpack.c.b16 %v4993, %v4989
    %v5302 = vpack.c.b16 %v4998, %v4994
    %v5303 = vpack.c.b16 %v4999, %v4995
    %v5304 = vpack.c.b16 %v5000, %v4996
    %v5305 = vpack.c.b16 %v5001, %v4997
    %v5306 = vpack.c.b16 %v5006, %v5002
    %v5307 = vpack.c.b16 %v5007, %v5003
    %v5308 = vpack.c.b16 %v5008, %v5004
    %v5309 = vpack.c.b16 %v5009, %v5005
    %v5310 = vpack.c.b16 %v5014, %v5010
    %v5311 = vpack.c.b16 %v5015, %v5011
    %v5312 = vpack.c.b16 %v5016, %v5012
    %v5313 = vpack.c.b16 %v5017, %v5013
    %v5314 = vpack.c.b16 %v5022, %v5018
    %v5315 = vpack.c.b16 %v5023, %v5019
    %v5316 = vpack.c.b16 %v5024, %v5020
    %v5317 = vpack.c.b16 %v5025, %v5021
    %v5318 = vpack.c.b16 %v5030, %v5026
    %v5319 = vpack.c.b16 %v5031, %v5027
    %v5320 = vpack.c.b16 %v5032, %v5028
    %v5321 = vpack.c.b16 %v5033, %v5029
    %v5322 = vpack.c.b16 %v5038, %v5034
    %v5323 = vpack.c.b16 %v5039, %v5035
    %v5324 = vpack.c.b16 %v5040, %v5036
    %v5325 = vpack.c.b16 %v5041, %v5037
    %v5326 = vpack.c.b16 %v5046, %v5042
    %v5327 = vpack.c.b16 %v5047, %v5043
    %v5328 = vpack.c.b16 %v5048, %v5044
    %v5329 = vpack.c.b16 %v5049, %v5045
    %v5330 = vpack.c.b16 %v5054, %v5050
    %v5331 = vpack.c.b16 %v5055, %v5051
    %v5332 = vpack.c.b16 %v5056, %v5052
    %v5333 = vpack.c.b16 %v5057, %v5053
    %v5334 = vpack.c.b16 %v5062, %v5058
    %v5335 = vpack.c.b16 %v5063, %v5059
    %v5336 = vpack.c.b16 %v5064, %v5060
    %v5337 = vpack.c.b16 %v5065, %v5061
    %v5338 = vpack.c.b16 %v5070, %v5066
    %v5339 = vpack.c.b16 %v5071, %v5067
    %v5340 = vpack.c.b16 %v5072, %v5068
    %v5341 = vpack.c.b16 %v5073, %v5069
    %v5342 = vpack.c.b16 %v5078, %v5074
    %v5343 = vpack.c.b16 %v5079, %v5075
    %v5344 = vpack.c.b16 %v5080, %v5076
    %v5345 = vpack.c.b16 %v5081, %v5077
    %v5346 = vpack.c.b16 %v5086, %v5082
    %v5347 = vpack.c.b16 %v5087, %v5083
    %v5348 = vpack.c.b16 %v5088, %v5084
    %v5349 = vpack.c.b16 %v5089, %v5085
    %v5350 = vpack.c.b16 %v5094, %v5090
    %v5351 = vpack.c.b16 %v5095, %v5091
    %v5352 = vpack.c.b16 %v5096, %v5092
    %v5353 = vpack.c.b16 %v5097, %v5093
    %5610 = vmatprep.subr.bf16.mxu0 %v5127
    %5611 = vmatpush1.bf16.msra.mxu0 %v5126
    %5612 = vmatprep.subr.bf16.mxu0 %v5123
    %5613 = vmatpush1.bf16.msra.mxu0 %v5122
    %5614 = vmatprep.subr.bf16.mxu0 %v5119
    %5615 = vmatpush1.bf16.msra.mxu0 %v5118
    %5616 = vmatprep.subr.bf16.mxu0 %v5115
    %5617 = vmatpush1.bf16.msra.mxu0 %v5114
    %5618 = vmatprep.subr.bf16.mxu0 %v5111
    %5619 = vmatpush1.bf16.msra.mxu0 %v5110
    %5620 = vmatprep.subr.bf16.mxu0 %v5107
    %5621 = vmatpush1.bf16.msra.mxu0 %v5106
    %5622 = vmatprep.subr.bf16.mxu0 %v5103
    %5623 = vmatpush1.bf16.msra.mxu0 %v5102
    %5624 = vmatprep.subr.bf16.mxu0 %v5099
    %5625 = vmatpush1.bf16.msra.mxu0 %v5098
    %5626 = vmatprep.subr.bf16.mxu0 %v5159
    %5627 = vmatpush2.bf16.msra.mxu0 %v5158
    %5628 = vmatprep.subr.bf16.mxu0 %v5155
    %5629 = vmatpush2.bf16.msra.mxu0 %v5154
    %5630 = vmatprep.subr.bf16.mxu0 %v5151
    %5631 = vmatpush2.bf16.msra.mxu0 %v5150
    %5632 = vmatprep.subr.bf16.mxu0 %v5147
    %5633 = vmatpush2.bf16.msra.mxu0 %v5146
    %5634 = vmatprep.subr.bf16.mxu0 %v5143
    %5635 = vmatpush2.bf16.msra.mxu0 %v5142
    %5636 = vmatprep.subr.bf16.mxu0 %v5139
    %5637 = vmatpush2.bf16.msra.mxu0 %v5138
    %5638 = vmatprep.subr.bf16.mxu0 %v5135
    %5639 = vmatpush2.bf16.msra.mxu0 %v5134
    %5640 = vmatprep.subr.bf16.mxu0 %v5131
    %5641 = vmatpush2.bf16.msra.mxu0 %v5130
    %5642 = vmatprep.mubr.bf16.mxu0 %v4045
    %5643 = vmatmul.mubr.bf16.gmra.mxu0 %v4044
    %v5644 = vpop.f32.mrf.mxu0
    %v5645 = vadd.f32 %v4313, %v5644
    %v5646 = vpop.f32.mrf.mxu0
    %v5647 = vadd.f32 %v4317, %v5646
    %v5648 = vpop.f32.mrf.mxu0
    %v5649 = vpop.f32.mrf.mxu0
    %5650 = vdwg.mxu0
    %5651 = vmatprep.subr.bf16.mxu0 %v5191
    %5652 = vmatpush1.bf16.msra.mxu0 %v5190
    %5653 = vmatprep.subr.bf16.mxu0 %v5187
    %5654 = vmatpush1.bf16.msra.mxu0 %v5186
    %5655 = vmatprep.subr.bf16.mxu0 %v5183
    %5656 = vmatpush1.bf16.msra.mxu0 %v5182
    %5657 = vmatprep.subr.bf16.mxu0 %v5179
    %5658 = vmatpush1.bf16.msra.mxu0 %v5178
    %5659 = vmatprep.subr.bf16.mxu0 %v5175
    %5660 = vmatpush1.bf16.msra.mxu0 %v5174
    %5661 = vmatprep.subr.bf16.mxu0 %v5171
    %5662 = vmatpush1.bf16.msra.mxu0 %v5170
    %5663 = vmatprep.subr.bf16.mxu0 %v5167
    %5664 = vmatpush1.bf16.msra.mxu0 %v5166
    %5665 = vmatprep.subr.bf16.mxu0 %v5163
    %5666 = vmatpush1.bf16.msra.mxu0 %v5162
    %5667 = vmatprep.subr.bf16.mxu0 %v5223
    %5668 = vmatpush2.bf16.msra.mxu0 %v5222
    %5669 = vmatprep.subr.bf16.mxu0 %v5219
    %5670 = vmatpush2.bf16.msra.mxu0 %v5218
    %5671 = vmatprep.subr.bf16.mxu0 %v5215
    %5672 = vmatpush2.bf16.msra.mxu0 %v5214
    %5673 = vmatprep.subr.bf16.mxu0 %v5211
    %5674 = vmatpush2.bf16.msra.mxu0 %v5210
    %5675 = vmatprep.subr.bf16.mxu0 %v5207
    %5676 = vmatpush2.bf16.msra.mxu0 %v5206
    %5677 = vmatprep.subr.bf16.mxu0 %v5203
    %5678 = vmatpush2.bf16.msra.mxu0 %v5202
    %5679 = vmatprep.subr.bf16.mxu0 %v5199
    %5680 = vmatpush2.bf16.msra.mxu0 %v5198
    %5681 = vmatprep.subr.bf16.mxu0 %v5195
    %5682 = vmatpush2.bf16.msra.mxu0 %v5194
    %5683 = vmatprep.mubr.bf16.mxu0 %v4047
    %5684 = vmatmul.mubr.bf16.gmra.mxu0 %v4046
    %v5685 = vpop.f32.mrf.mxu0
    %v5686 = vadd.f32 %v5645, %v5685
    %v5687 = vpop.f32.mrf.mxu0
    %v5688 = vadd.f32 %v5647, %v5687
    %v5689 = vpop.f32.mrf.mxu0
    %v5690 = vpop.f32.mrf.mxu0
    %5691 = vdwg.mxu0
    %5692 = vmatprep.subr.bf16.mxu0 %v5255
    %5693 = vmatpush1.bf16.msra.mxu0 %v5254
    %5694 = vmatprep.subr.bf16.mxu0 %v5251
    %5695 = vmatpush1.bf16.msra.mxu0 %v5250
    %5696 = vmatprep.subr.bf16.mxu0 %v5247
    %5697 = vmatpush1.bf16.msra.mxu0 %v5246
    %5698 = vmatprep.subr.bf16.mxu0 %v5243
    %5699 = vmatpush1.bf16.msra.mxu0 %v5242
    %5700 = vmatprep.subr.bf16.mxu0 %v5239
    %5701 = vmatpush1.bf16.msra.mxu0 %v5238
    %5702 = vmatprep.subr.bf16.mxu0 %v5235
    %5703 = vmatpush1.bf16.msra.mxu0 %v5234
    %5704 = vmatprep.subr.bf16.mxu0 %v5231
    %5705 = vmatpush1.bf16.msra.mxu0 %v5230
    %5706 = vmatprep.subr.bf16.mxu0 %v5227
    %5707 = vmatpush1.bf16.msra.mxu0 %v5226
    %5708 = vmatprep.subr.bf16.mxu0 %v5287
    %5709 = vmatpush2.bf16.msra.mxu0 %v5286
    %5710 = vmatprep.subr.bf16.mxu0 %v5283
    %5711 = vmatpush2.bf16.msra.mxu0 %v5282
    %5712 = vmatprep.subr.bf16.mxu0 %v5279
    %5713 = vmatpush2.bf16.msra.mxu0 %v5278
    %5714 = vmatprep.subr.bf16.mxu0 %v5275
    %5715 = vmatpush2.bf16.msra.mxu0 %v5274
    %5716 = vmatprep.subr.bf16.mxu0 %v5271
    %5717 = vmatpush2.bf16.msra.mxu0 %v5270
    %5718 = vmatprep.subr.bf16.mxu0 %v5267
    %5719 = vmatpush2.bf16.msra.mxu0 %v5266
    %5720 = vmatprep.subr.bf16.mxu0 %v5263
    %5721 = vmatpush2.bf16.msra.mxu0 %v5262
    %5722 = vmatprep.subr.bf16.mxu0 %v5259
    %5723 = vmatpush2.bf16.msra.mxu0 %v5258
    %5724 = vmatprep.mubr.bf16.mxu0 %v4049
    %5725 = vmatmul.mubr.bf16.gmra.mxu0 %v4048
    %v5726 = vpop.f32.mrf.mxu0
    %v5727 = vadd.f32 %v5686, %v5726
    %v5728 = vpop.f32.mrf.mxu0
    %v5729 = vadd.f32 %v5688, %v5728
    %v5730 = vpop.f32.mrf.mxu0
    %v5731 = vpop.f32.mrf.mxu0
    %5732 = vdwg.mxu0
    %5733 = vmatprep.subr.bf16.mxu0 %v5319
    %5734 = vmatpush1.bf16.msra.mxu0 %v5318
    %5735 = vmatprep.subr.bf16.mxu0 %v5315
    %5736 = vmatpush1.bf16.msra.mxu0 %v5314
    %5737 = vmatprep.subr.bf16.mxu0 %v5311
    %5738 = vmatpush1.bf16.msra.mxu0 %v5310
    %5739 = vmatprep.subr.bf16.mxu0 %v5307
    %5740 = vmatpush1.bf16.msra.mxu0 %v5306
    %5741 = vmatprep.subr.bf16.mxu0 %v5303
    %5742 = vmatpush1.bf16.msra.mxu0 %v5302
    %5743 = vmatprep.subr.bf16.mxu0 %v5299
    %5744 = vmatpush1.bf16.msra.mxu0 %v5298
    %5745 = vmatprep.subr.bf16.mxu0 %v5295
    %5746 = vmatpush1.bf16.msra.mxu0 %v5294
    %5747 = vmatprep.subr.bf16.mxu0 %v5291
    %5748 = vmatpush1.bf16.msra.mxu0 %v5290
    %5749 = vmatprep.subr.bf16.mxu0 %v5351
    %5750 = vmatpush2.bf16.msra.mxu0 %v5350
    %5751 = vmatprep.subr.bf16.mxu0 %v5347
    %5752 = vmatpush2.bf16.msra.mxu0 %v5346
    %5753 = vmatprep.subr.bf16.mxu0 %v5343
    %5754 = vmatpush2.bf16.msra.mxu0 %v5342
    %5755 = vmatprep.subr.bf16.mxu0 %v5339
    %5756 = vmatpush2.bf16.msra.mxu0 %v5338
    %5757 = vmatprep.subr.bf16.mxu0 %v5335
    %5758 = vmatpush2.bf16.msra.mxu0 %v5334
    %5759 = vmatprep.subr.bf16.mxu0 %v5331
    %5760 = vmatpush2.bf16.msra.mxu0 %v5330
    %5761 = vmatprep.subr.bf16.mxu0 %v5327
    %5762 = vmatpush2.bf16.msra.mxu0 %v5326
    %5763 = vmatprep.subr.bf16.mxu0 %v5323
    %5764 = vmatpush2.bf16.msra.mxu0 %v5322
    %5765 = vmatprep.mubr.bf16.mxu0 %v4051
    %5766 = vmatmul.mubr.bf16.gmra.mxu0 %v4050
    %v5767 = vpop.f32.mrf.mxu0
    %v5768 = vadd.f32 %v5727, %v5767
    %v5769 = vpop.f32.mrf.mxu0
    %v5770 = vadd.f32 %v5729, %v5769
    %v5771 = vpop.f32.mrf.mxu0
    %v5772 = vpop.f32.mrf.mxu0
    %5773 = vdwg.mxu0
    %5774 = vmatprep.subr.bf16.mxu0 %v5129
    %5775 = vmatpush1.bf16.msra.mxu0 %v5128
    %5776 = vmatprep.subr.bf16.mxu0 %v5125
    %5777 = vmatpush1.bf16.msra.mxu0 %v5124
    %5778 = vmatprep.subr.bf16.mxu0 %v5121
    %5779 = vmatpush1.bf16.msra.mxu0 %v5120
    %5780 = vmatprep.subr.bf16.mxu0 %v5117
    %5781 = vmatpush1.bf16.msra.mxu0 %v5116
    %5782 = vmatprep.subr.bf16.mxu0 %v5113
    %5783 = vmatpush1.bf16.msra.mxu0 %v5112
    %5784 = vmatprep.subr.bf16.mxu0 %v5109
    %5785 = vmatpush1.bf16.msra.mxu0 %v5108
    %5786 = vmatprep.subr.bf16.mxu0 %v5105
    %5787 = vmatpush1.bf16.msra.mxu0 %v5104
    %5788 = vmatprep.subr.bf16.mxu0 %v5101
    %5789 = vmatpush1.bf16.msra.mxu0 %v5100
    %5790 = vmatprep.subr.bf16.mxu0 %v5161
    %5791 = vmatpush2.bf16.msra.mxu0 %v5160
    %5792 = vmatprep.subr.bf16.mxu0 %v5157
    %5793 = vmatpush2.bf16.msra.mxu0 %v5156
    %5794 = vmatprep.subr.bf16.mxu0 %v5153
    %5795 = vmatpush2.bf16.msra.mxu0 %v5152
    %5796 = vmatprep.subr.bf16.mxu0 %v5149
    %5797 = vmatpush2.bf16.msra.mxu0 %v5148
    %5798 = vmatprep.subr.bf16.mxu0 %v5145
    %5799 = vmatpush2.bf16.msra.mxu0 %v5144
    %5800 = vmatprep.subr.bf16.mxu0 %v5141
    %5801 = vmatpush2.bf16.msra.mxu0 %v5140
    %5802 = vmatprep.subr.bf16.mxu0 %v5137
    %5803 = vmatpush2.bf16.msra.mxu0 %v5136
    %5804 = vmatprep.subr.bf16.mxu0 %v5133
    %5805 = vmatpush2.bf16.msra.mxu0 %v5132
    %5806 = vmatprep.mubr.bf16.mxu0 %v4045
    %5807 = vmatmul.mubr.bf16.gmra.mxu0 %v4044
    %v5808 = vpop.f32.mrf.mxu0
    %v5809 = vadd.f32 %v4321, %v5808
    %v5810 = vpop.f32.mrf.mxu0
    %v5811 = vadd.f32 %v4325, %v5810
    %v5812 = vpop.f32.mrf.mxu0
    %v5813 = vpop.f32.mrf.mxu0
    %5814 = vdwg.mxu0
    %5815 = vmatprep.subr.bf16.mxu0 %v5193
    %5816 = vmatpush1.bf16.msra.mxu0 %v5192
    %5817 = vmatprep.subr.bf16.mxu0 %v5189
    %5818 = vmatpush1.bf16.msra.mxu0 %v5188
    %5819 = vmatprep.subr.bf16.mxu0 %v5185
    %5820 = vmatpush1.bf16.msra.mxu0 %v5184
    %5821 = vmatprep.subr.bf16.mxu0 %v5181
    %5822 = vmatpush1.bf16.msra.mxu0 %v5180
    %5823 = vmatprep.subr.bf16.mxu0 %v5177
    %5824 = vmatpush1.bf16.msra.mxu0 %v5176
    %5825 = vmatprep.subr.bf16.mxu0 %v5173
    %5826 = vmatpush1.bf16.msra.mxu0 %v5172
    %5827 = vmatprep.subr.bf16.mxu0 %v5169
    %5828 = vmatpush1.bf16.msra.mxu0 %v5168
    %5829 = vmatprep.subr.bf16.mxu0 %v5165
    %5830 = vmatpush1.bf16.msra.mxu0 %v5164
    %5831 = vmatprep.subr.bf16.mxu0 %v5225
    %5832 = vmatpush2.bf16.msra.mxu0 %v5224
    %5833 = vmatprep.subr.bf16.mxu0 %v5221
    %5834 = vmatpush2.bf16.msra.mxu0 %v5220
    %5835 = vmatprep.subr.bf16.mxu0 %v5217
    %5836 = vmatpush2.bf16.msra.mxu0 %v5216
    %5837 = vmatprep.subr.bf16.mxu0 %v5213
    %5838 = vmatpush2.bf16.msra.mxu0 %v5212
    %5839 = vmatprep.subr.bf16.mxu0 %v5209
    %5840 = vmatpush2.bf16.msra.mxu0 %v5208
    %5841 = vmatprep.subr.bf16.mxu0 %v5205
    %5842 = vmatpush2.bf16.msra.mxu0 %v5204
    %5843 = vmatprep.subr.bf16.mxu0 %v5201
    %5844 = vmatpush2.bf16.msra.mxu0 %v5200
    %5845 = vmatprep.subr.bf16.mxu0 %v5197
    %5846 = vmatpush2.bf16.msra.mxu0 %v5196
    %5847 = vmatprep.mubr.bf16.mxu0 %v4047
    %5848 = vmatmul.mubr.bf16.gmra.mxu0 %v4046
    %v5849 = vpop.f32.mrf.mxu0
    %v5850 = vadd.f32 %v5809, %v5849
    %v5851 = vpop.f32.mrf.mxu0
    %v5852 = vadd.f32 %v5811, %v5851
    %v5853 = vpop.f32.mrf.mxu0
    %v5854 = vpop.f32.mrf.mxu0
    %5855 = vdwg.mxu0
    %5856 = vmatprep.subr.bf16.mxu0 %v5257
    %5857 = vmatpush1.bf16.msra.mxu0 %v5256
    %5858 = vmatprep.subr.bf16.mxu0 %v5253
    %5859 = vmatpush1.bf16.msra.mxu0 %v5252
    %5860 = vmatprep.subr.bf16.mxu0 %v5249
    %5861 = vmatpush1.bf16.msra.mxu0 %v5248
    %5862 = vmatprep.subr.bf16.mxu0 %v5245
    %5863 = vmatpush1.bf16.msra.mxu0 %v5244
    %5864 = vmatprep.subr.bf16.mxu0 %v5241
    %5865 = vmatpush1.bf16.msra.mxu0 %v5240
    %5866 = vmatprep.subr.bf16.mxu0 %v5237
    %5867 = vmatpush1.bf16.msra.mxu0 %v5236
    %5868 = vmatprep.subr.bf16.mxu0 %v5233
    %5869 = vmatpush1.bf16.msra.mxu0 %v5232
    %5870 = vmatprep.subr.bf16.mxu0 %v5229
    %5871 = vmatpush1.bf16.msra.mxu0 %v5228
    %5872 = vmatprep.subr.bf16.mxu0 %v5289
    %5873 = vmatpush2.bf16.msra.mxu0 %v5288
    %5874 = vmatprep.subr.bf16.mxu0 %v5285
    %5875 = vmatpush2.bf16.msra.mxu0 %v5284
    %5876 = vmatprep.subr.bf16.mxu0 %v5281
    %5877 = vmatpush2.bf16.msra.mxu0 %v5280
    %5878 = vmatprep.subr.bf16.mxu0 %v5277
    %5879 = vmatpush2.bf16.msra.mxu0 %v5276
    %5880 = vmatprep.subr.bf16.mxu0 %v5273
    %5881 = vmatpush2.bf16.msra.mxu0 %v5272
    %5882 = vmatprep.subr.bf16.mxu0 %v5269
    %5883 = vmatpush2.bf16.msra.mxu0 %v5268
    %5884 = vmatprep.subr.bf16.mxu0 %v5265
    %5885 = vmatpush2.bf16.msra.mxu0 %v5264
    %5886 = vmatprep.subr.bf16.mxu0 %v5261
    %5887 = vmatpush2.bf16.msra.mxu0 %v5260
    %5888 = vmatprep.mubr.bf16.mxu0 %v4049
    %5889 = vmatmul.mubr.bf16.gmra.mxu0 %v4048
    %v5890 = vpop.f32.mrf.mxu0
    %v5891 = vadd.f32 %v5850, %v5890
    %v5892 = vpop.f32.mrf.mxu0
    %v5893 = vadd.f32 %v5852, %v5892
    %v5894 = vpop.f32.mrf.mxu0
    %v5895 = vpop.f32.mrf.mxu0
    %5896 = vdwg.mxu0
    %5897 = vmatprep.subr.bf16.mxu0 %v5321
    %5898 = vmatpush1.bf16.msra.mxu0 %v5320
    %5899 = vmatprep.subr.bf16.mxu0 %v5317
    %5900 = vmatpush1.bf16.msra.mxu0 %v5316
    %5901 = vmatprep.subr.bf16.mxu0 %v5313
    %5902 = vmatpush1.bf16.msra.mxu0 %v5312
    %5903 = vmatprep.subr.bf16.mxu0 %v5309
    %5904 = vmatpush1.bf16.msra.mxu0 %v5308
    %5905 = vmatprep.subr.bf16.mxu0 %v5305
    %5906 = vmatpush1.bf16.msra.mxu0 %v5304
    %5907 = vmatprep.subr.bf16.mxu0 %v5301
    %5908 = vmatpush1.bf16.msra.mxu0 %v5300
    %5909 = vmatprep.subr.bf16.mxu0 %v5297
    %5910 = vmatpush1.bf16.msra.mxu0 %v5296
    %5911 = vmatprep.subr.bf16.mxu0 %v5293
    %5912 = vmatpush1.bf16.msra.mxu0 %v5292
    %5913 = vmatprep.subr.bf16.mxu0 %v5353
    %5914 = vmatpush2.bf16.msra.mxu0 %v5352
    %5915 = vmatprep.subr.bf16.mxu0 %v5349
    %5916 = vmatpush2.bf16.msra.mxu0 %v5348
    %5917 = vmatprep.subr.bf16.mxu0 %v5345
    %5918 = vmatpush2.bf16.msra.mxu0 %v5344
    %5919 = vmatprep.subr.bf16.mxu0 %v5341
    %5920 = vmatpush2.bf16.msra.mxu0 %v5340
    %5921 = vmatprep.subr.bf16.mxu0 %v5337
    %5922 = vmatpush2.bf16.msra.mxu0 %v5336
    %5923 = vmatprep.subr.bf16.mxu0 %v5333
    %5924 = vmatpush2.bf16.msra.mxu0 %v5332
    %5925 = vmatprep.subr.bf16.mxu0 %v5329
    %5926 = vmatpush2.bf16.msra.mxu0 %v5328
    %5927 = vmatprep.subr.bf16.mxu0 %v5325
    %5928 = vmatpush2.bf16.msra.mxu0 %v5324
    %5929 = vmatprep.mubr.bf16.mxu0 %v4051
    %5930 = vmatmul.mubr.bf16.gmra.mxu0 %v4050
    %v5931 = vpop.f32.mrf.mxu0
    %v5932 = vadd.f32 %v5891, %v5931
    %v5933 = vpop.f32.mrf.mxu0
    %v5934 = vadd.f32 %v5893, %v5933
    %v5935 = vpop.f32.mrf.mxu0
    %v5936 = vpop.f32.mrf.mxu0
    %5937 = vdwg.mxu0
    %vm5938 = vcmp.gt.f32.partialorder %v5768, 0.0
    %vm5939 = vcmp.gt.f32.partialorder %v5770, 0.0
    %vm5940 = vcmp.gt.f32.partialorder %v5932, 0.0
    %vm5941 = vcmp.gt.f32.partialorder %v5934, 0.0
    %v5942 = vmul.f32 %v5768, 0.2
    %v5943 = vmul.f32 %v5770, 0.2
    %v5944 = vmul.f32 %v5932, 0.2
    %v5945 = vmul.f32 %v5934, 0.2
    %v5946 = vsel %vm5938, %v5768, %v5942
    %v5947 = vsel %vm5939, %v5770, %v5943
    %v5948 = vsel %vm5940, %v5932, %v5944
    %v5949 = vsel %vm5941, %v5934, %v5945
    %v5950 = vpack.c.bf16 %v5946, %v5946
    %v5951 = vpack.c.bf16 %v5947, %v5947
    %v5952 = vpack.c.bf16 %v5948, %v5948
    %v5953 = vpack.c.bf16 %v5949, %v5949
    %v5954 = vld [vmem:[%s7] sm:$0xf]
    %v5955 = vld [vmem:[%s7 + $0x4] sm:$0xf]
    %v5956 = vld [vmem:[%s7 + $0x8] sm:$0xf]
    %v5957 = vld [vmem:[%s7 + $0xc] sm:$0xf]
    %v5958 = vld [vmem:[%s7 + $0x10] sm:$0xf]
    %v5959 = vld [vmem:[%s7 + $0x14] sm:$0xf]
    %v5960 = vld [vmem:[%s7 + $0x18] sm:$0xf]
    %v5961 = vld [vmem:[%s7 + $0x1c] sm:$0xf]
    %v5962 = vld [vmem:[%s7 + $0x20] sm:$0xf]
    %v5963 = vld [vmem:[%s7 + $0x24] sm:$0xf]
    %v5964 = vld [vmem:[%s7 + $0x28] sm:$0xf]
    %v5965 = vld [vmem:[%s7 + $0x2c] sm:$0xf]
    %v5966 = vld [vmem:[%s7 + $0x30] sm:$0xf]
    %v5967 = vld [vmem:[%s7 + $0x34] sm:$0xf]
    %v5968 = vld [vmem:[%s7 + $0x38] sm:$0xf]
    %v5969 = vld [vmem:[%s7 + $0x3c] sm:$0xf]
    %v5970 = vld [vmem:[%s7 + $0x40] sm:$0xf]
    %v5971 = vld [vmem:[%s7 + $0x44] sm:$0xf]
    %v5972 = vld [vmem:[%s7 + $0x48] sm:$0xf]
    %v5973 = vld [vmem:[%s7 + $0x4c] sm:$0xf]
    %v5974 = vld [vmem:[%s7 + $0x50] sm:$0xf]
    %v5975 = vld [vmem:[%s7 + $0x54] sm:$0xf]
    %v5976 = vld [vmem:[%s7 + $0x58] sm:$0xf]
    %v5977 = vld [vmem:[%s7 + $0x5c] sm:$0xf]
    %v5978 = vld [vmem:[%s7 + $0x60] sm:$0xf]
    %v5979 = vld [vmem:[%s7 + $0x64] sm:$0xf]
    %v5980 = vld [vmem:[%s7 + $0x68] sm:$0xf]
    %v5981 = vld [vmem:[%s7 + $0x6c] sm:$0xf]
    %v5982 = vld [vmem:[%s7 + $0x70] sm:$0xf]
    %v5983 = vld [vmem:[%s7 + $0x74] sm:$0xf]
    %v5984 = vld [vmem:[%s7 + $0x78] sm:$0xf]
    %v5985 = vld [vmem:[%s7 + $0x7c] sm:$0xf]
    %v5986 = vld [vmem:[%s7 + $0x80] sm:$0xf]
    %v5987 = vld [vmem:[%s7 + $0x84] sm:$0xf]
    %v5988 = vld [vmem:[%s7 + $0x88] sm:$0xf]
    %v5989 = vld [vmem:[%s7 + $0x8c] sm:$0xf]
    %v5990 = vld [vmem:[%s7 + $0x90] sm:$0xf]
    %v5991 = vld [vmem:[%s7 + $0x94] sm:$0xf]
    %v5992 = vld [vmem:[%s7 + $0x98] sm:$0xf]
    %v5993 = vld [vmem:[%s7 + $0x9c] sm:$0xf]
    %v5994 = vld [vmem:[%s7 + $0xa0] sm:$0xf]
    %v5995 = vld [vmem:[%s7 + $0xa4] sm:$0xf]
    %v5996 = vld [vmem:[%s7 + $0xa8] sm:$0xf]
    %v5997 = vld [vmem:[%s7 + $0xac] sm:$0xf]
    %v5998 = vld [vmem:[%s7 + $0xb0] sm:$0xf]
    %v5999 = vld [vmem:[%s7 + $0xb4] sm:$0xf]
    %v6000 = vld [vmem:[%s7 + $0xb8] sm:$0xf]
    %v6001 = vld [vmem:[%s7 + $0xbc] sm:$0xf]
    %v6002 = vld [vmem:[%s7 + $0xc0] sm:$0xf]
    %v6003 = vld [vmem:[%s7 + $0xc4] sm:$0xf]
    %v6004 = vld [vmem:[%s7 + $0xc8] sm:$0xf]
    %v6005 = vld [vmem:[%s7 + $0xcc] sm:$0xf]
    %v6006 = vld [vmem:[%s7 + $0xd0] sm:$0xf]
    %v6007 = vld [vmem:[%s7 + $0xd4] sm:$0xf]
    %v6008 = vld [vmem:[%s7 + $0xd8] sm:$0xf]
    %v6009 = vld [vmem:[%s7 + $0xdc] sm:$0xf]
    %v6010 = vld [vmem:[%s7 + $0xe0] sm:$0xf]
    %v6011 = vld [vmem:[%s7 + $0xe4] sm:$0xf]
    %v6012 = vld [vmem:[%s7 + $0xe8] sm:$0xf]
    %v6013 = vld [vmem:[%s7 + $0xec] sm:$0xf]
    %v6014 = vld [vmem:[%s7 + $0xf0] sm:$0xf]
    %v6015 = vld [vmem:[%s7 + $0xf4] sm:$0xf]
    %v6016 = vld [vmem:[%s7 + $0xf8] sm:$0xf]
    %v6017 = vld [vmem:[%s7 + $0xfc] sm:$0xf]
    %v6018 = vld [vmem:[%s8] sm:$0x1]
    %v6020 = vlaneseq
    %v6021 = vshrl.u32 %v6020, 7
    %v6022 = vsub.s32 0, %v6021
    %v6023 = vrot.slane %v6018, %v6022
    %v6089 = vunpack.c.l.b16 %v5954
    %v6090 = vunpack.c.l.b16 %v5955
    %v6091 = vunpack.c.l.b16 %v5956
    %v6092 = vunpack.c.l.b16 %v5957
    %v6093 = vunpack.c.l.b16 %v5958
    %v6094 = vunpack.c.l.b16 %v5959
    %v6095 = vunpack.c.l.b16 %v5960
    %v6096 = vunpack.c.l.b16 %v5961
    %v6097 = vunpack.c.l.b16 %v5962
    %v6098 = vunpack.c.l.b16 %v5963
    %v6099 = vunpack.c.l.b16 %v5964
    %v6100 = vunpack.c.l.b16 %v5965
    %v6101 = vunpack.c.l.b16 %v5966
    %v6102 = vunpack.c.l.b16 %v5967
    %v6103 = vunpack.c.l.b16 %v5968
    %v6104 = vunpack.c.l.b16 %v5969
    %v6105 = vunpack.c.l.b16 %v5970
    %v6106 = vunpack.c.l.b16 %v5971
    %v6107 = vunpack.c.l.b16 %v5972
    %v6108 = vunpack.c.l.b16 %v5973
    %v6109 = vunpack.c.l.b16 %v5974
    %v6110 = vunpack.c.l.b16 %v5975
    %v6111 = vunpack.c.l.b16 %v5976
    %v6112 = vunpack.c.l.b16 %v5977
    %v6113 = vunpack.c.l.b16 %v5978
    %v6114 = vunpack.c.l.b16 %v5979
    %v6115 = vunpack.c.l.b16 %v5980
    %v6116 = vunpack.c.l.b16 %v5981
    %v6117 = vunpack.c.l.b16 %v5982
    %v6118 = vunpack.c.l.b16 %v5983
    %v6119 = vunpack.c.l.b16 %v5984
    %v6120 = vunpack.c.l.b16 %v5985
    %v6121 = vunpack.c.l.b16 %v5986
    %v6122 = vunpack.c.l.b16 %v5987
    %v6123 = vunpack.c.l.b16 %v5988
    %v6124 = vunpack.c.l.b16 %v5989
    %v6125 = vunpack.c.l.b16 %v5990
    %v6126 = vunpack.c.l.b16 %v5991
    %v6127 = vunpack.c.l.b16 %v5992
    %v6128 = vunpack.c.l.b16 %v5993
    %v6129 = vunpack.c.l.b16 %v5994
    %v6130 = vunpack.c.l.b16 %v5995
    %v6131 = vunpack.c.l.b16 %v5996
    %v6132 = vunpack.c.l.b16 %v5997
    %v6133 = vunpack.c.l.b16 %v5998
    %v6134 = vunpack.c.l.b16 %v5999
    %v6135 = vunpack.c.l.b16 %v6000
    %v6136 = vunpack.c.l.b16 %v6001
    %v6137 = vunpack.c.l.b16 %v6002
    %v6138 = vunpack.c.l.b16 %v6003
    %v6139 = vunpack.c.l.b16 %v6004
    %v6140 = vunpack.c.l.b16 %v6005
    %v6141 = vunpack.c.l.b16 %v6006
    %v6142 = vunpack.c.l.b16 %v6007
    %v6143 = vunpack.c.l.b16 %v6008
    %v6144 = vunpack.c.l.b16 %v6009
    %v6145 = vunpack.c.l.b16 %v6010
    %v6146 = vunpack.c.l.b16 %v6011
    %v6147 = vunpack.c.l.b16 %v6012
    %v6148 = vunpack.c.l.b16 %v6013
    %v6149 = vunpack.c.l.b16 %v6014
    %v6150 = vunpack.c.l.b16 %v6015
    %v6151 = vunpack.c.l.b16 %v6016
    %v6152 = vunpack.c.l.b16 %v6017
    %v6153 = vpack.c.b16 %v6090, %v6089
    %v6154 = vpack.c.b16 %v6092, %v6091
    %v6155 = vpack.c.b16 %v6094, %v6093
    %v6156 = vpack.c.b16 %v6096, %v6095
    %v6157 = vpack.c.b16 %v6098, %v6097
    %v6158 = vpack.c.b16 %v6100, %v6099
    %v6159 = vpack.c.b16 %v6102, %v6101
    %v6160 = vpack.c.b16 %v6104, %v6103
    %v6161 = vpack.c.b16 %v6106, %v6105
    %v6162 = vpack.c.b16 %v6108, %v6107
    %v6163 = vpack.c.b16 %v6110, %v6109
    %v6164 = vpack.c.b16 %v6112, %v6111
    %v6165 = vpack.c.b16 %v6114, %v6113
    %v6166 = vpack.c.b16 %v6116, %v6115
    %v6167 = vpack.c.b16 %v6118, %v6117
    %v6168 = vpack.c.b16 %v6120, %v6119
    %v6169 = vpack.c.b16 %v6122, %v6121
    %v6170 = vpack.c.b16 %v6124, %v6123
    %v6171 = vpack.c.b16 %v6126, %v6125
    %v6172 = vpack.c.b16 %v6128, %v6127
    %v6173 = vpack.c.b16 %v6130, %v6129
    %v6174 = vpack.c.b16 %v6132, %v6131
    %v6175 = vpack.c.b16 %v6134, %v6133
    %v6176 = vpack.c.b16 %v6136, %v6135
    %v6177 = vpack.c.b16 %v6138, %v6137
    %v6178 = vpack.c.b16 %v6140, %v6139
    %v6179 = vpack.c.b16 %v6142, %v6141
    %v6180 = vpack.c.b16 %v6144, %v6143
    %v6181 = vpack.c.b16 %v6146, %v6145
    %v6182 = vpack.c.b16 %v6148, %v6147
    %v6183 = vpack.c.b16 %v6150, %v6149
    %v6184 = vpack.c.b16 %v6152, %v6151
    %6217 = vmatprep.subr.bf16.mxu0 0
    %6218 = vmatpush1.bf16.msra.mxu0 %v6160
    %6219 = vmatprep.subr.bf16.mxu0 0
    %6220 = vmatpush1.bf16.msra.mxu0 %v6159
    %6221 = vmatprep.subr.bf16.mxu0 0
    %6222 = vmatpush1.bf16.msra.mxu0 %v6158
    %6223 = vmatprep.subr.bf16.mxu0 0
    %6224 = vmatpush1.bf16.msra.mxu0 %v6157
    %6225 = vmatprep.subr.bf16.mxu0 0
    %6226 = vmatpush1.bf16.msra.mxu0 %v6156
    %6227 = vmatprep.subr.bf16.mxu0 0
    %6228 = vmatpush1.bf16.msra.mxu0 %v6155
    %6229 = vmatprep.subr.bf16.mxu0 0
    %6230 = vmatpush1.bf16.msra.mxu0 %v6154
    %6231 = vmatprep.subr.bf16.mxu0 0
    %6232 = vmatpush1.bf16.msra.mxu0 %v6153
    %6233 = vmatprep.subr.bf16.mxu0 0
    %6234 = vmatpush2.bf16.msra.mxu0 %v6168
    %6235 = vmatprep.subr.bf16.mxu0 0
    %6236 = vmatpush2.bf16.msra.mxu0 %v6167
    %6237 = vmatprep.subr.bf16.mxu0 0
    %6238 = vmatpush2.bf16.msra.mxu0 %v6166
    %6239 = vmatprep.subr.bf16.mxu0 0
    %6240 = vmatpush2.bf16.msra.mxu0 %v6165
    %6241 = vmatprep.subr.bf16.mxu0 0
    %6242 = vmatpush2.bf16.msra.mxu0 %v6164
    %6243 = vmatprep.subr.bf16.mxu0 0
    %6244 = vmatpush2.bf16.msra.mxu0 %v6163
    %6245 = vmatprep.subr.bf16.mxu0 0
    %6246 = vmatpush2.bf16.msra.mxu0 %v6162
    %6247 = vmatprep.subr.bf16.mxu0 0
    %6248 = vmatpush2.bf16.msra.mxu0 %v6161
    %6249 = vmatprep.mubr.bf16.mxu0 %v5951
    %6250 = vmatmul.mubr.bf16.gmra.mxu0 %v5950
    %v6251 = vpop.f32.mrf.mxu0
    %v6252 = vadd.f32 %v6023, %v6251
    %v6253 = vpop.f32.mrf.mxu0
    %v6254 = vpop.f32.mrf.mxu0
    %v6255 = vpop.f32.mrf.mxu0
    %6256 = vdwg.mxu0
    %6257 = vmatprep.subr.bf16.mxu0 0
    %6258 = vmatpush1.bf16.msra.mxu0 %v6176
    %6259 = vmatprep.subr.bf16.mxu0 0
    %6260 = vmatpush1.bf16.msra.mxu0 %v6175
    %6261 = vmatprep.subr.bf16.mxu0 0
    %6262 = vmatpush1.bf16.msra.mxu0 %v6174
    %6263 = vmatprep.subr.bf16.mxu0 0
    %6264 = vmatpush1.bf16.msra.mxu0 %v6173
    %6265 = vmatprep.subr.bf16.mxu0 0
    %6266 = vmatpush1.bf16.msra.mxu0 %v6172
    %6267 = vmatprep.subr.bf16.mxu0 0
    %6268 = vmatpush1.bf16.msra.mxu0 %v6171
    %6269 = vmatprep.subr.bf16.mxu0 0
    %6270 = vmatpush1.bf16.msra.mxu0 %v6170
    %6271 = vmatprep.subr.bf16.mxu0 0
    %6272 = vmatpush1.bf16.msra.mxu0 %v6169
    %6273 = vmatprep.subr.bf16.mxu0 0
    %6274 = vmatpush2.bf16.msra.mxu0 %v6184
    %6275 = vmatprep.subr.bf16.mxu0 0
    %6276 = vmatpush2.bf16.msra.mxu0 %v6183
    %6277 = vmatprep.subr.bf16.mxu0 0
    %6278 = vmatpush2.bf16.msra.mxu0 %v6182
    %6279 = vmatprep.subr.bf16.mxu0 0
    %6280 = vmatpush2.bf16.msra.mxu0 %v6181
    %6281 = vmatprep.subr.bf16.mxu0 0
    %6282 = vmatpush2.bf16.msra.mxu0 %v6180
    %6283 = vmatprep.subr.bf16.mxu0 0
    %6284 = vmatpush2.bf16.msra.mxu0 %v6179
    %6285 = vmatprep.subr.bf16.mxu0 0
    %6286 = vmatpush2.bf16.msra.mxu0 %v6178
    %6287 = vmatprep.subr.bf16.mxu0 0
    %6288 = vmatpush2.bf16.msra.mxu0 %v6177
    %6289 = vmatprep.mubr.bf16.mxu0 %v5953
    %6290 = vmatmul.mubr.bf16.gmra.mxu0 %v5952
    %v6291 = vpop.f32.mrf.mxu0
    %v6292 = vadd.f32 %v6252, %v6291
    %v6293 = vpop.f32.mrf.mxu0
    %v6294 = vpop.f32.mrf.mxu0
    %v6295 = vpop.f32.mrf.mxu0
    %6296 = vdwg.mxu0
    %vm6297 = vcmask 214016
    %6298 = vst.msk [vmem:[#allocation3] sm:$0x3] %vm6297, %v6292
    // Predicated region
    $region38: #{discriminator_forward.9} parent=1 // pred_check
      _
    $region39: #{discriminator_forward.9} parent=1 // pred_check_branch
      %6300 = sbr.rel (0) target = $region41
    $region40: #{discriminator_forward.9} parent=1 // pred_region
      _
    $region41: #{discriminator_forward.9} parent=1 // pred_fallthru
      _
    // Predicated region
    $region42: #{discriminator_forward.9} parent=1 // pred_check
      _
    $region43: #{discriminator_forward.9} parent=1 // pred_check_branch
      %6302 = sbr.rel (0) target = $region45
    $region44: #{discriminator_forward.9} parent=1 // pred_region
      %s6304 = ssub.s32 32, 32
      %6305 = vsyncadd [#allocation4], %s6304
      %s6307 = sshll.u32 [#allocation3], 4
      %s6308 = int_to_ptr.vmem [resolvable:$true] %s6307
      %6310 = dma.vmem_to_hbm [thread:$0]  %s6308, 32, %s10, [#allocation4]
    $region45: #{discriminator_forward.9} parent=1 // pred_fallthru
      _
    // Predicated region
    $region46: #{discriminator_forward.9} parent=1 // pred_check
      _
    $region47: #{discriminator_forward.9} parent=1 // pred_check_branch
      %6312 = sbr.rel (0) target = $region49
    $region48: #{discriminator_forward.9} parent=1 // pred_region
      _
    $region49: #{discriminator_forward.9} parent=1 // pred_fallthru
      _
    // Predicated region
    $region50: #{discriminator_forward.9} parent=1 // pred_check
      _
    $region51: #{discriminator_forward.9} parent=1 // pred_check_branch
      %6314 = sbr.rel (0) target = $region53
    $region52: #{discriminator_forward.9} parent=1 // pred_region
      %6315 = dma.done [#allocation4], 32
    $region53: #{discriminator_forward.9} parent=1 // pred_fallthru
      _
    %6316 = vsyncpa [#allocation4], 1

</llo_original>
